<compile_context>
chip_gen: v6e
topology: v6e:2x2x1
jax: 0.10.0
libtpu: 0.0.40
codegen_flags: <defaults>
</compile_context>

<pallas_src>
import functools
import math

import jax
import jax.numpy as jnp
from jax import lax
from jax.experimental import pallas as pl
from jax.experimental.pallas import tpu as pltpu

BN_EPS = 1e-5

C1, C2 = 6, 16          # real conv channel counts
C_PAD = 128             # lane-padded channel / hidden width
K1_PAD = 32             # conv1 contraction: 1*5*5 = 25  -> 32
K2_PAD = 256            # conv2 contraction: 6*5*5 = 150 -> 256
H_FC, H_FC1 = 120, 84   # real hidden dims of fc / fc1

_VMEM = pl.BlockSpec(memory_space=pltpu.MemorySpace.VMEM)


# ---------------------------------------------------------------------------
# Pallas kernels
# ---------------------------------------------------------------------------
def _conv1_kernel(p_ref, w_ref, g_ref, b_ref, o_ref, *, q, inv_m):
    # p_ref: (4*q, K1_PAD) bf16 im2col patches, rows ordered (pool_offset, n, h2, w2)
    # w_ref: (K1_PAD, 128) bf16 conv weight; g_ref/b_ref: (1, 128) f32 BN gamma/beta
    # o_ref: (q, 128) bf16 pooled activation, rows ordered (n, h2, w2)
    y = jnp.dot(p_ref[...], w_ref[...], preferred_element_type=jnp.float32)
    # One-pass BN stats (train mode, biased variance) over the real conv rows.
    # Zero (batch-pad) rows contribute 0 to both sums; inv_m = 1/real_row_count.
    s = jnp.sum(y, axis=0, keepdims=True)
    ss = jnp.sum(y * y, axis=0, keepdims=True)
    mu = s * inv_m
    var = ss * inv_m - mu * mu
    scale = g_ref[...] * lax.rsqrt(var + BN_EPS)
    shift = b_ref[...] - mu * scale
    # Pool FIRST on the raw matmul output (max/min over the 4 pool-offset row
    # blocks), then apply the monotone BN affine + ReLU on the pooled rows only.
    y0 = y[0:q, :]
    y1 = y[q:2 * q, :]
    y2 = y[2 * q:3 * q, :]
    y3 = y[3 * q:4 * q, :]
    ymax = jnp.maximum(jnp.maximum(y0, y1), jnp.maximum(y2, y3))
    ymin = jnp.minimum(jnp.minimum(y0, y1), jnp.minimum(y2, y3))
    ysel = jnp.where(scale >= 0.0, ymax, ymin)
    o_ref[...] = jnp.maximum(ysel * scale + shift, 0.0).astype(o_ref.dtype)


def _conv2_mlp_kernel(p_ref, w2_ref, g2_ref, b2_ref, wfc_ref, bfc_ref,
                      wfc1_ref, bfc1_ref, wh_ref, bh_ref, e_ref, o_ref,
                      fc_scr, *, n_blk, inv_m):
    # p_ref : (4*25*n_blk, K2_PAD) bf16 conv2 patches, rows (pool_offset, hw, n_blk)
    # wfc_ref: (25*128, 128) bf16 flattened fc weight (row hw*128 + c).
    # fc_scr: (n_blk, 25*128) f32 lane-major fc input scratch.
    y = jnp.dot(p_ref[...], w2_ref[...], preferred_element_type=jnp.float32)
    s = jnp.sum(y, axis=0, keepdims=True)
    ss = jnp.sum(y * y, axis=0, keepdims=True)
    mu = s * inv_m
    var = ss * inv_m - mu * mu
    scale = g2_ref[...] * lax.rsqrt(var + BN_EPS)
    shift = b2_ref[...] - mu * scale
    take_max = scale >= 0.0

    q = 25 * n_blk
    # All row offsets are multiples of 8 (n_blk is a multiple of 8), so every
    # slice below is an aligned, relayout-free view of y.
    for hw in range(25):
        r = hw * n_blk
        y0 = y[r:r + n_blk, :]
        y1 = y[q + r:q + r + n_blk, :]
        y2 = y[2 * q + r:2 * q + r + n_blk, :]
        y3 = y[3 * q + r:3 * q + r + n_blk, :]
        ymax = jnp.maximum(jnp.maximum(y0, y1), jnp.maximum(y2, y3))
        ymin = jnp.minimum(jnp.minimum(y0, y1), jnp.minimum(y2, y3))
        act = jnp.maximum(jnp.where(take_max, ymax, ymin) * scale + shift, 0.0)
        fc_scr[:, hw * C_PAD:(hw + 1) * C_PAD] = act     # lane-aligned store

    # One long-K fc matmul instead of 25 tiny ones.
    h = jnp.maximum(
        jnp.dot(fc_scr[...].astype(jnp.bfloat16), wfc_ref[...],
                preferred_element_type=jnp.float32) + bfc_ref[...], 0.0)
    e = jnp.maximum(
        jnp.dot(h.astype(jnp.bfloat16), wfc1_ref[...],
                preferred_element_type=jnp.float32) + bfc1_ref[...], 0.0)
    e_ref[...] = e                                        # embedding e1 (padded)
    o_ref[...] = (jnp.dot(e.astype(jnp.bfloat16), wh_ref[...],
                          preferred_element_type=jnp.float32) + bh_ref[...])


# ---------------------------------------------------------------------------
# Glue: im2col with pool-offset-major row ordering (plain JAX / XLA)
# ---------------------------------------------------------------------------
def _patches_conv1(x):
    """x: (N,1,32,32) f32 -> (4*N*196, 32) bf16 conv1 patches.
    Rows ordered (pool_offset a*2+b, n, h2, w2) with conv pixel (2*h2+a, 2*w2+b)."""
    n = x.shape[0]
    xs = x[:, 0]                                              # (N,32,32)
    cols = [xs[:, ki:ki + 28, kj:kj + 28]
            for ki in range(5) for kj in range(5)]
    p = jnp.stack(cols, axis=-1)                              # (N,28,28,25), feat=(ki,kj)
    p = p.reshape(n, 14, 2, 14, 2, 25)                        # h = 2*h2+a, w = 2*w2+b
    p = p.transpose(2, 4, 0, 1, 3, 5)                         # (a,b,n,h2,w2,25)
    p = p.reshape(4 * n * 196, 25)
    p = jnp.pad(p, ((0, 0), (0, K1_PAD - 25)))                # K: 25 -> 32
    return p.astype(jnp.bfloat16)


def _patches_conv2(h1, n, n_pad):
    """h1: (n*196,128) bf16 pooled conv1 activation (real images only), rows (n,h,w).
    Returns (4*25*n_pad, 256) bf16 conv2 patches, rows (pool_offset, hw, n_pad);
    rows for padded images are exactly zero."""
    t = h1[:, :C1].reshape(n, 14, 14, C1)                     # real 6 channels
    cols = [t[:, ki:ki + 10, kj:kj + 10, :]
            for ki in range(5) for kj in range(5)]
    p = jnp.concatenate(cols, axis=-1)                        # (n,10,10,150), feat=(ki,kj,cin)
    p = p.reshape(n, 5, 2, 5, 2, 150)                         # h = 2*h2+a, w = 2*w2+b
    p = p.transpose(2, 4, 1, 3, 0, 5)                         # (a,b,h2,w2,n,150)
    p = p.reshape(4, 25, n, 150)
    p = jnp.pad(p, ((0, 0), (0, 0), (0, n_pad - n), (0, K2_PAD - 150)))
    return p.reshape(4 * 25 * n_pad, K2_PAD)


# ---------------------------------------------------------------------------
# pallas_call wrappers
# ---------------------------------------------------------------------------
def _nbytes(a):
    return math.prod(a.shape) * jnp.dtype(a.dtype).itemsize


def _vmem_cap_bytes():
    try:
        cap = getattr(pltpu.get_tpu_info(), "vmem_capacity_bytes", 0)
        if cap:
            return int(cap)
    except Exception:
        pass
    return 64 << 20    # conservative: smallest current per-core VMEM (v7x)


def _vmem_limit(buffer_bytes):
    need = int(sum(buffer_bytes))
    cap = _vmem_cap_bytes()
    hi = max(cap - (8 << 20), 16 << 20)      # always leave headroom below physical
    # Grid-less call (single step, no double-buffering): 1.5x + 4 MiB margin
    # for compiler temporaries, clamped to [16 MiB, cap - 8 MiB].
    return int(min(max((3 * need) // 2 + (4 << 20), 16 << 20), hi))


def conv1_block(patches, w, g, beta, *, n_real):
    m = patches.shape[0]
    q = m // 4
    kernel = functools.partial(_conv1_kernel, q=q, inv_m=1.0 / float(n_real * 784))
    bufs = [_nbytes(a) for a in (patches, w, g, beta)]
    bufs += [q * C_PAD * 2, 3 * m * C_PAD * 4]                # output + f32 temporaries
    return pl.pallas_call(
        kernel,
        out_shape=jax.ShapeDtypeStruct((q, C_PAD), jnp.bfloat16),
        in_specs=[_VMEM] * 4,
        out_specs=_VMEM,
        compiler_params=pltpu.CompilerParams(vmem_limit_bytes=_vmem_limit(bufs)),
    )(patches, w, g, beta)


def conv2_mlp_block(patches, params, *, n_real, n_pad):
    m = patches.shape[0]
    kernel = functools.partial(_conv2_mlp_kernel, n_blk=n_pad,
                               inv_m=1.0 / float(n_real * 100))
    args = (patches, params["w_conv2"], params["g_bn2"], params["beta_bn2"],
            params["w_fc"], params["b_fc"], params["w_fc1"], params["b_fc1"],
            params["w_head"], params["b_head"])
    bufs = [_nbytes(a) for a in args]
    bufs += [3 * m * C_PAD * 4, n_pad * 25 * C_PAD * 4, 2 * n_pad * C_PAD * 4]
    return pl.pallas_call(
        kernel,
        out_shape=(jax.ShapeDtypeStruct((n_pad, C_PAD), jnp.float32),   # e1 (padded)
                   jax.ShapeDtypeStruct((n_pad, C_PAD), jnp.float32)),  # logits (padded)
        in_specs=[_VMEM] * len(args),
        out_specs=(_VMEM, _VMEM),
        scratch_shapes=[pltpu.VMEM((n_pad, 25 * C_PAD), jnp.float32)],
        compiler_params=pltpu.CompilerParams(vmem_limit_bytes=_vmem_limit(bufs)),
    )(*args)


# ---------------------------------------------------------------------------
# Parameters (deterministic, synthetic, pre-padded) and the full forward
# ---------------------------------------------------------------------------
def _embed(a, shape):
    """Zero-pad `a` into the top-left corner of a zeros(shape) buffer."""
    out = jnp.zeros(shape, a.dtype)
    return out.at[tuple(slice(0, s) for s in a.shape)].set(a)


def init_params(key, num_classes=10):
    ks = jax.random.split(key, 12)
    rnd = lambda k, shape, s=0.1: (s * jax.random.normal(k, shape)).astype(jnp.float32)
    bf16 = lambda a: a.astype(jnp.bfloat16)
    # Give some channels negative gamma so both the max- and min-select pooling
    # branches of the kernels are exercised by the self-check.
    sgn1 = jnp.where(jnp.arange(C1) % 3 == 2, -1.0, 1.0).astype(jnp.float32)
    sgn2 = jnp.where(jnp.arange(C2) % 4 == 3, -1.0, 1.0).astype(jnp.float32)
    return {
        # conv1: torch weight (6,1,5,5) -> rows ki*5+kj, cols cout; K 25->32, C 6->128.
        # (conv bias omitted: cancelled exactly by the train-mode BN mean subtraction.)
        "w_conv1": bf16(_embed(rnd(ks[0], (25, C1)), (K1_PAD, C_PAD))),
        "g_bn1": _embed(((1.0 + rnd(ks[1], (C1,))) * sgn1)[None, :], (1, C_PAD)),
        "beta_bn1": _embed(rnd(ks[2], (1, C1)), (1, C_PAD)),
        # conv2: torch weight (16,6,5,5) -> rows (ki*5+kj)*6+cin; K 150->256, C 16->128.
        "w_conv2": bf16(_embed(rnd(ks[3], (150, C2)), (K2_PAD, C_PAD))),
        "g_bn2": _embed(((1.0 + rnd(ks[4], (C2,))) * sgn2)[None, :], (1, C_PAD)),
        "beta_bn2": _embed(rnd(ks[5], (1, C2)), (1, C_PAD)),
        # fc (400->120) flattened lane-major: row hw*128 + c  <->  torch col c*25+hw,
        # padded to (25*128, 128) so kernel 2 does a single K=3200 matmul.
        "w_fc": bf16(_embed(rnd(ks[6], (25, C2, H_FC)),
                            (25, C_PAD, C_PAD)).reshape(25 * C_PAD, C_PAD)),
        "b_fc": _embed(rnd(ks[7], (1, H_FC), 0.01), (1, C_PAD)),
        # fc1 (120->84) and fc_head (84->num_classes), padded to 128x128.
        "w_fc1": bf16(_embed(rnd(ks[8], (H_FC, H_FC1)), (C_PAD, C_PAD))),
        "b_fc1": _embed(rnd(ks[9], (1, H_FC1), 0.01), (1, C_PAD)),
        "w_head": bf16(_embed(rnd(ks[10], (H_FC1, num_classes)), (C_PAD, C_PAD))),
        "b_head": _embed(rnd(ks[11], (1, num_classes), 0.01), (1, C_PAD)),
    }


def lenet5_forward(params, x, num_classes=10):
    """x: (N, 1, 32, 32) float32 (NCHW like PyTorch).  Returns (logits, e1)."""
    n = x.shape[0]
    # Kernel-1 pool-offset row blocks (196*n rows) must be 8-row aligned -> even batch.
    n1 = n + (n % 2)
    if n1 != n:
        x = jnp.pad(x, ((0, n1 - n), (0, 0), (0, 0), (0, 0)))
    # Kernel-2 per-(pool_offset, hw) row blocks are padded to a sublane multiple.
    n_pad = max(8 * ((n + 7) // 8), 8)

    p1 = _patches_conv1(x)                                    # (4*n1*196, 32) bf16
    h1 = conv1_block(p1, params["w_conv1"], params["g_bn1"],
                     params["beta_bn1"], n_real=n)            # (n1*196, 128) bf16
    p2 = _patches_conv2(h1[:n * 196], n, n_pad)               # (4*25*n_pad, 256) bf16
    e_pad, o_pad = conv2_mlp_block(p2, params, n_real=n, n_pad=n_pad)
    return o_pad[:n, :num_classes], e_pad[:n, :H_FC1]


# ---------------------------------------------------------------------------
# Pure-JAX reference (mirrors the bf16 casts and one-pass BN stats);
# uses the naive normalize->ReLU->pool order to validate the pool-first trick.
# ---------------------------------------------------------------------------
def _reference_forward(params, x, num_classes=10):
    bf = jnp.bfloat16
    n = x.shape[0]

    def bn_relu(y, g, b):
        m = y.shape[0] * y.shape[1] * y.shape[2]
        s = jnp.sum(y, axis=(0, 1, 2), keepdims=True)
        ss = jnp.sum(y * y, axis=(0, 1, 2), keepdims=True)
        mu = s / m
        var = ss / m - mu * mu
        return jnp.maximum((y - mu) * lax.rsqrt(var + BN_EPS) * g + b, 0.0)

    def pool(y):
        nb, hh, ww, c = y.shape
        return jnp.max(y.reshape(nb, hh // 2, 2, ww // 2, 2, c), axis=(2, 4))

    dot32 = lambda eq, a, b: jnp.einsum(eq, a, b, preferred_element_type=jnp.float32)

    cols = [x[:, 0, ki:ki + 28, kj:kj + 28] for ki in range(5) for kj in range(5)]
    p = jnp.stack(cols, axis=-1).astype(bf)
    y = dot32("nhwk,kc->nhwc", p, params["w_conv1"][:25, :C1])
    y = pool(bn_relu(y, params["g_bn1"][0, :C1], params["beta_bn1"][0, :C1])).astype(bf)

    cols = [y[:, ki:ki + 10, kj:kj + 10, :] for ki in range(5) for kj in range(5)]
    p = jnp.concatenate(cols, axis=-1)
    z = dot32("nhwk,kc->nhwc", p, params["w_conv2"][:150, :C2])
    z = pool(bn_relu(z, params["g_bn2"][0, :C2], params["beta_bn2"][0, :C2])).astype(bf)

    flat = z.reshape(n, 25, C2)
    wf = params["w_fc"].reshape(25, C_PAD, C_PAD)[:, :C2, :H_FC]
    h = dot32("nsc,scj->nj", flat, wf) + params["b_fc"][0, :H_FC]
    h = jnp.maximum(h, 0.0).astype(bf)
    e = jnp.maximum(dot32("nk,kj->nj", h, params["w_fc1"][:H_FC, :H_FC1])
                    + params["b_fc1"][0, :H_FC1], 0.0)
    o = (dot32("nk,kj->nj", e.astype(bf), params["w_head"][:H_FC1, :num_classes])
         + params["b_head"][0, :num_classes])
    return o, e


if __name__ == "__main__":
    key = jax.random.PRNGKey(0)
    pkey, xkey = jax.random.split(key)
    params = init_params(pkey, num_classes=10)
    # LeNet5 with fc(400) implies a 32x32 single-channel input; small batch=2.
    x = jax.random.normal(xkey, (2, 1, 32, 32), dtype=jnp.float32)

    logits, e1 = jax.jit(lenet5_forward)(params, x)
    jax.block_until_ready((logits, e1))

    assert logits.shape == (2, 10) and e1.shape == (2, 84)
    assert bool(jnp.all(jnp.isfinite(logits))) and bool(jnp.all(jnp.isfinite(e1)))

    ref_logits, ref_e1 = _reference_forward(params, x)
    assert float(jnp.max(jnp.abs(logits - ref_logits))) < 2e-2
    assert float(jnp.max(jnp.abs(e1 - ref_e1))) < 2e-2

    print("KERNEL_OK")
</pallas_src>

<mosaic_0001>
module attributes {stable_mosaic.version = 11 : i64} {
  func.func @_conv1_kernel(%arg0: memref<1568x32xbf16, #tpu.memory_space<vmem>>, %arg1: memref<32x128xbf16, #tpu.memory_space<vmem>>, %arg2: memref<1x128xf32, #tpu.memory_space<vmem>>, %arg3: memref<1x128xf32, #tpu.memory_space<vmem>>, %arg4: memref<392x128xbf16, #tpu.memory_space<vmem>>) attributes {dimension_semantics = [], scalar_prefetch = 0 : i64, scratch_operands = 0 : i64, tpu.core_type = #tpu.core_type<tc>} {
    %c0 = arith.constant 0 : index
    %c0_0 = arith.constant 0 : index
    %0 = vector.load %arg0[%c0, %c0_0] : memref<1568x32xbf16, #tpu.memory_space<vmem>>, vector<1568x32xbf16>
    %c0_1 = arith.constant 0 : index
    %c0_2 = arith.constant 0 : index
    %1 = vector.load %arg1[%c0_1, %c0_2] : memref<32x128xbf16, #tpu.memory_space<vmem>>, vector<32x128xbf16>
    %cst = arith.constant dense<0.000000e+00> : vector<1568x128xf32>
    %2 = tpu.matmul %0, %1, %cst {dimension_numbers = #tpu.dot_dimension_numbers<[1], [0], [0], [1], [0, 0, 1, 1], [], []>} : vector<1568x32xbf16>, vector<32x128xbf16>, vector<1568x128xf32> -> vector<1568x128xf32>
    %cst_3 = arith.constant dense<0.000000e+00> : vector<128xf32>
    %3 = vector.multi_reduction <add>, %2, %cst_3 [0] : vector<1568x128xf32> to vector<128xf32>
    %4 = vector.shape_cast %3 : vector<128xf32> to vector<1x128xf32>
    %5 = arith.mulf %2, %2 : vector<1568x128xf32>
    %cst_4 = arith.constant dense<0.000000e+00> : vector<128xf32>
    %6 = vector.multi_reduction <add>, %5, %cst_4 [0] : vector<1568x128xf32> to vector<128xf32>
    %7 = vector.shape_cast %6 : vector<128xf32> to vector<1x128xf32>
    %cst_5 = arith.constant 6.37755089E-4 : f32
    %8 = vector.broadcast %cst_5 : f32 to vector<1x128xf32>
    %9 = arith.mulf %4, %8 : vector<1x128xf32>
    %cst_6 = arith.constant 6.37755089E-4 : f32
    %10 = vector.broadcast %cst_6 : f32 to vector<1x128xf32>
    %11 = arith.mulf %7, %10 : vector<1x128xf32>
    %12 = arith.mulf %9, %9 : vector<1x128xf32>
    %13 = arith.subf %11, %12 : vector<1x128xf32>
    %c0_7 = arith.constant 0 : index
    %c0_8 = arith.constant 0 : index
    %14 = vector.load %arg2[%c0_7, %c0_8] : memref<1x128xf32, #tpu.memory_space<vmem>>, vector<1x128xf32>
    %cst_9 = arith.constant 9.99999974E-6 : f32
    %15 = vector.broadcast %cst_9 : f32 to vector<1x128xf32>
    %16 = arith.addf %13, %15 : vector<1x128xf32>
    %17 = math.rsqrt %16 : vector<1x128xf32>
    %18 = arith.mulf %14, %17 : vector<1x128xf32>
    %c0_10 = arith.constant 0 : index
    %c0_11 = arith.constant 0 : index
    %19 = vector.load %arg3[%c0_10, %c0_11] : memref<1x128xf32, #tpu.memory_space<vmem>>, vector<1x128xf32>
    %20 = arith.mulf %9, %18 : vector<1x128xf32>
    %21 = arith.subf %19, %20 : vector<1x128xf32>
    %22 = vector.extract_strided_slice %2 {offsets = [0, 0], sizes = [392, 128], strides = [1, 1]} : vector<1568x128xf32> to vector<392x128xf32>
    %23 = vector.extract_strided_slice %2 {offsets = [392, 0], sizes = [392, 128], strides = [1, 1]} : vector<1568x128xf32> to vector<392x128xf32>
    %24 = vector.extract_strided_slice %2 {offsets = [784, 0], sizes = [392, 128], strides = [1, 1]} : vector<1568x128xf32> to vector<392x128xf32>
    %25 = vector.extract_strided_slice %2 {offsets = [1176, 0], sizes = [392, 128], strides = [1, 1]} : vector<1568x128xf32> to vector<392x128xf32>
    %26 = arith.maximumf %22, %23 : vector<392x128xf32>
    %27 = arith.maximumf %24, %25 : vector<392x128xf32>
    %28 = arith.maximumf %26, %27 : vector<392x128xf32>
    %29 = arith.minimumf %22, %23 : vector<392x128xf32>
    %30 = arith.minimumf %24, %25 : vector<392x128xf32>
    %31 = arith.minimumf %29, %30 : vector<392x128xf32>
    %cst_12 = arith.constant 0.000000e+00 : f32
    %32 = vector.broadcast %cst_12 : f32 to vector<1x128xf32>
    %33 = arith.cmpf oge, %18, %32 : vector<1x128xf32>
    %34 = vector.shape_cast %33 : vector<1x128xi1> to vector<1x128xi1>
    %35 = vector.broadcast %34 : vector<1x128xi1> to vector<392x128xi1>
    %36 = arith.select %35, %28, %31 : vector<392x128xi1>, vector<392x128xf32>
    %37 = vector.broadcast %18 : vector<1x128xf32> to vector<392x128xf32>
    %38 = arith.mulf %36, %37 : vector<392x128xf32>
    %39 = vector.broadcast %21 : vector<1x128xf32> to vector<392x128xf32>
    %40 = arith.addf %38, %39 : vector<392x128xf32>
    %cst_13 = arith.constant 0.000000e+00 : f32
    %41 = vector.broadcast %cst_13 : f32 to vector<392x128xf32>
    %42 = arith.maximumf %40, %41 : vector<392x128xf32>
    %43 = arith.truncf %42 : vector<392x128xf32> to vector<392x128xbf16>
    %c0_14 = arith.constant 0 : index
    %c0_15 = arith.constant 0 : index
    %44 = vector.load %arg4[%c0_14, %c0_15] : memref<392x128xbf16, #tpu.memory_space<vmem>>, vector<392x128xbf16>
    tpu.vector_store %arg4[%c0_14, %c0_15], %43 {strides = array<i32>} : memref<392x128xbf16, #tpu.memory_space<vmem>>, vector<392x128xbf16>,
    return
  }
}

module attributes {stable_mosaic.version = 11 : i64} {
  func.func @_conv2_mlp_kernel(%arg0: memref<800x256xbf16, #tpu.memory_space<vmem>>, %arg1: memref<256x128xbf16, #tpu.memory_space<vmem>>, %arg2: memref<1x128xf32, #tpu.memory_space<vmem>>, %arg3: memref<1x128xf32, #tpu.memory_space<vmem>>, %arg4: memref<3200x128xbf16, #tpu.memory_space<vmem>>, %arg5: memref<1x128xf32, #tpu.memory_space<vmem>>, %arg6: memref<128x128xbf16, #tpu.memory_space<vmem>>, %arg7: memref<1x128xf32, #tpu.memory_space<vmem>>, %arg8: memref<128x128xbf16, #tpu.memory_space<vmem>>, %arg9: memref<1x128xf32, #tpu.memory_space<vmem>>, %arg10: memref<8x128xf32, #tpu.memory_space<vmem>>, %arg11: memref<8x128xf32, #tpu.memory_space<vmem>>, %arg12: memref<8x3200xf32, #tpu.memory_space<vmem>>) attributes {dimension_semantics = [], scalar_prefetch = 0 : i64, scratch_operands = 1 : i64, tpu.core_type = #tpu.core_type<tc>} {
    %c0 = arith.constant 0 : index
    %c0_0 = arith.constant 0 : index
    %0 = vector.load %arg0[%c0, %c0_0] : memref<800x256xbf16, #tpu.memory_space<vmem>>, vector<800x256xbf16>
    %c0_1 = arith.constant 0 : index
    %c0_2 = arith.constant 0 : index
    %1 = vector.load %arg1[%c0_1, %c0_2] : memref<256x128xbf16, #tpu.memory_space<vmem>>, vector<256x128xbf16>
    %cst = arith.constant dense<0.000000e+00> : vector<800x128xf32>
    %2 = tpu.matmul %0, %1, %cst {dimension_numbers = #tpu.dot_dimension_numbers<[1], [0], [0], [1], [0, 0, 1, 1], [], []>} : vector<800x256xbf16>, vector<256x128xbf16>, vector<800x128xf32> -> vector<800x128xf32>
    %cst_3 = arith.constant dense<0.000000e+00> : vector<128xf32>
    %3 = vector.multi_reduction <add>, %2, %cst_3 [0] : vector<800x128xf32> to vector<128xf32>
    %4 = vector.shape_cast %3 : vector<128xf32> to vector<1x128xf32>
    %5 = arith.mulf %2, %2 : vector<800x128xf32>
    %cst_4 = arith.constant dense<0.000000e+00> : vector<128xf32>
    %6 = vector.multi_reduction <add>, %5, %cst_4 [0] : vector<800x128xf32> to vector<128xf32>
    %7 = vector.shape_cast %6 : vector<128xf32> to vector<1x128xf32>
    %cst_5 = arith.constant 5.000000e-03 : f32
    %8 = vector.broadcast %cst_5 : f32 to vector<1x128xf32>
    %9 = arith.mulf %4, %8 : vector<1x128xf32>
    %cst_6 = arith.constant 5.000000e-03 : f32
    %10 = vector.broadcast %cst_6 : f32 to vector<1x128xf32>
    %11 = arith.mulf %7, %10 : vector<1x128xf32>
    %12 = arith.mulf %9, %9 : vector<1x128xf32>
    %13 = arith.subf %11, %12 : vector<1x128xf32>
    %c0_7 = arith.constant 0 : index
    %c0_8 = arith.constant 0 : index
    %14 = vector.load %arg2[%c0_7, %c0_8] : memref<1x128xf32, #tpu.memory_space<vmem>>, vector<1x128xf32>
    %cst_9 = arith.constant 9.99999974E-6 : f32
    %15 = vector.broadcast %cst_9 : f32 to vector<1x128xf32>
    %16 = arith.addf %13, %15 : vector<1x128xf32>
    %17 = math.rsqrt %16 : vector<1x128xf32>
    %18 = arith.mulf %14, %17 : vector<1x128xf32>
    %c0_10 = arith.constant 0 : index
    %c0_11 = arith.constant 0 : index
    %19 = vector.load %arg3[%c0_10, %c0_11] : memref<1x128xf32, #tpu.memory_space<vmem>>, vector<1x128xf32>
    %20 = arith.mulf %9, %18 : vector<1x128xf32>
    %21 = arith.subf %19, %20 : vector<1x128xf32>
    %cst_12 = arith.constant 0.000000e+00 : f32
    %22 = vector.broadcast %cst_12 : f32 to vector<1x128xf32>
    %23 = arith.cmpf oge, %18, %22 : vector<1x128xf32>
    %24 = vector.extract_strided_slice %2 {offsets = [0, 0], sizes = [8, 128], strides = [1, 1]} : vector<800x128xf32> to vector<8x128xf32>
    %25 = vector.extract_strided_slice %2 {offsets = [200, 0], sizes = [8, 128], strides = [1, 1]} : vector<800x128xf32> to vector<8x128xf32>
    %26 = vector.extract_strided_slice %2 {offsets = [400, 0], sizes = [8, 128], strides = [1, 1]} : vector<800x128xf32> to vector<8x128xf32>
    %27 = vector.extract_strided_slice %2 {offsets = [600, 0], sizes = [8, 128], strides = [1, 1]} : vector<800x128xf32> to vector<8x128xf32>
    %28 = arith.maximumf %24, %25 : vector<8x128xf32>
    %29 = arith.maximumf %26, %27 : vector<8x128xf32>
    %30 = arith.maximumf %28, %29 : vector<8x128xf32>
    %31 = arith.minimumf %24, %25 : vector<8x128xf32>
    %32 = arith.minimumf %26, %27 : vector<8x128xf32>
    %33 = arith.minimumf %31, %32 : vector<8x128xf32>
    %34 = vector.shape_cast %23 : vector<1x128xi1> to vector<1x128xi1>
    %35 = vector.broadcast %34 : vector<1x128xi1> to vector<8x128xi1>
    %36 = arith.select %35, %30, %33 : vector<8x128xi1>, vector<8x128xf32>
    %37 = vector.broadcast %18 : vector<1x128xf32> to vector<8x128xf32>
    %38 = arith.mulf %36, %37 : vector<8x128xf32>
    %39 = vector.broadcast %21 : vector<1x128xf32> to vector<8x128xf32>
    %40 = arith.addf %38, %39 : vector<8x128xf32>
    %cst_13 = arith.constant 0.000000e+00 : f32
    %41 = vector.broadcast %cst_13 : f32 to vector<8x128xf32>
    %42 = arith.maximumf %40, %41 : vector<8x128xf32>
    %c0_14 = arith.constant 0 : index
    %c0_15 = arith.constant 0 : index
    %43 = vector.load %arg12[%c0_14, %c0_15] : memref<8x3200xf32, #tpu.memory_space<vmem>>, vector<8x128xf32>
    tpu.vector_store %arg12[%c0_14, %c0_15], %42 {strides = array<i32>} : memref<8x3200xf32, #tpu.memory_space<vmem>>, vector<8x128xf32>,
    %44 = vector.extract_strided_slice %2 {offsets = [8, 0], sizes = [8, 128], strides = [1, 1]} : vector<800x128xf32> to vector<8x128xf32>
    %45 = vector.extract_strided_slice %2 {offsets = [208, 0], sizes = [8, 128], strides = [1, 1]} : vector<800x128xf32> to vector<8x128xf32>
    %46 = vector.extract_strided_slice %2 {offsets = [408, 0], sizes = [8, 128], strides = [1, 1]} : vector<800x128xf32> to vector<8x128xf32>
    %47 = vector.extract_strided_slice %2 {offsets = [608, 0], sizes = [8, 128], strides = [1, 1]} : vector<800x128xf32> to vector<8x128xf32>
    %48 = arith.maximumf %44, %45 : vector<8x128xf32>
    %49 = arith.maximumf %46, %47 : vector<8x128xf32>
    %50 = arith.maximumf %48, %49 : vector<8x128xf32>
    %51 = arith.minimumf %44, %45 : vector<8x128xf32>
    %52 = arith.minimumf %46, %47 : vector<8x128xf32>
    %53 = arith.minimumf %51, %52 : vector<8x128xf32>
    %54 = vector.shape_cast %23 : vector<1x128xi1> to vector<1x128xi1>
    %55 = vector.broadcast %54 : vector<1x128xi1> to vector<8x128xi1>
    %56 = arith.select %55, %50, %53 : vector<8x128xi1>, vector<8x128xf32>
    %57 = vector.broadcast %18 : vector<1x128xf32> to vector<8x128xf32>
    %58 = arith.mulf %56, %57 : vector<8x128xf32>
    %59 = vector.broadcast %21 : vector<1x128xf32> to vector<8x128xf32>
    %60 = arith.addf %58, %59 : vector<8x128xf32>
    %cst_16 = arith.constant 0.000000e+00 : f32
    %61 = vector.broadcast %cst_16 : f32 to vector<8x128xf32>
    %62 = arith.maximumf %60, %61 : vector<8x128xf32>
    %c0_17 = arith.constant 0 : index
    %c128 = arith.constant 128 : index
    %63 = vector.load %arg12[%c0_17, %c128] : memref<8x3200xf32, #tpu.memory_space<vmem>>, vector<8x128xf32>
    tpu.vector_store %arg12[%c0_17, %c128], %62 {strides = array<i32>} : memref<8x3200xf32, #tpu.memory_space<vmem>>, vector<8x128xf32>,
    %64 = vector.extract_strided_slice %2 {offsets = [16, 0], sizes = [8, 128], strides = [1, 1]} : vector<800x128xf32> to vector<8x128xf32>
    %65 = vector.extract_strided_slice %2 {offsets = [216, 0], sizes = [8, 128], strides = [1, 1]} : vector<800x128xf32> to vector<8x128xf32>
    %66 = vector.extract_strided_slice %2 {offsets = [416, 0], sizes = [8, 128], strides = [1, 1]} : vector<800x128xf32> to vector<8x128xf32>
    %67 = vector.extract_strided_slice %2 {offsets = [616, 0], sizes = [8, 128], strides = [1, 1]} : vector<800x128xf32> to vector<8x128xf32>
    %68 = arith.maximumf %64, %65 : vector<8x128xf32>
    %69 = arith.maximumf %66, %67 : vector<8x128xf32>
    %70 = arith.maximumf %68, %69 : vector<8x128xf32>
    %71 = arith.minimumf %64, %65 : vector<8x128xf32>
    %72 = arith.minimumf %66, %67 : vector<8x128xf32>
    %73 = arith.minimumf %71, %72 : vector<8x128xf32>
    %74 = vector.shape_cast %23 : vector<1x128xi1> to vector<1x128xi1>
    %75 = vector.broadcast %74 : vector<1x128xi1> to vector<8x128xi1>
    %76 = arith.select %75, %70, %73 : vector<8x128xi1>, vector<8x128xf32>
    %77 = vector.broadcast %18 : vector<1x128xf32> to vector<8x128xf32>
    %78 = arith.mulf %76, %77 : vector<8x128xf32>
    %79 = vector.broadcast %21 : vector<1x128xf32> to vector<8x128xf32>
    %80 = arith.addf %78, %79 : vector<8x128xf32>
    %cst_18 = arith.constant 0.000000e+00 : f32
    %81 = vector.broadcast %cst_18 : f32 to vector<8x128xf32>
    %82 = arith.maximumf %80, %81 : vector<8x128xf32>
    %c0_19 = arith.constant 0 : index
    %c256 = arith.constant 256 : index
    %83 = vector.load %arg12[%c0_19, %c256] : memref<8x3200xf32, #tpu.memory_space<vmem>>, vector<8x128xf32>
    tpu.vector_store %arg12[%c0_19, %c256], %82 {strides = array<i32>} : memref<8x3200xf32, #tpu.memory_space<vmem>>, vector<8x128xf32>,
    %84 = vector.extract_strided_slice %2 {offsets = [24, 0], sizes = [8, 128], strides = [1, 1]} : vector<800x128xf32> to vector<8x128xf32>
    %85 = vector.extract_strided_slice %2 {offsets = [224, 0], sizes = [8, 128], strides = [1, 1]} : vector<800x128xf32> to vector<8x128xf32>
    %86 = vector.extract_strided_slice %2 {offsets = [424, 0], sizes = [8, 128], strides = [1, 1]} : vector<800x128xf32> to vector<8x128xf32>
    %87 = vector.extract_strided_slice %2 {offsets = [624, 0], sizes = [8, 128], strides = [1, 1]} : vector<800x128xf32> to vector<8x128xf32>
    %88 = arith.maximumf %84, %85 : vector<8x128xf32>
    %89 = arith.maximumf %86, %87 : vector<8x128xf32>
    %90 = arith.maximumf %88, %89 : vector<8x128xf32>
    %91 = arith.minimumf %84, %85 : vector<8x128xf32>
    %92 = arith.minimumf %86, %87 : vector<8x128xf32>
    %93 = arith.minimumf %91, %92 : vector<8x128xf32>
    %94 = vector.shape_cast %23 : vector<1x128xi1> to vector<1x128xi1>
    %95 = vector.broadcast %94 : vector<1x128xi1> to vector<8x128xi1>
    %96 = arith.select %95, %90, %93 : vector<8x128xi1>, vector<8x128xf32>
    %97 = vector.broadcast %18 : vector<1x128xf32> to vector<8x128xf32>
    %98 = arith.mulf %96, %97 : vector<8x128xf32>
    %99 = vector.broadcast %21 : vector<1x128xf32> to vector<8x128xf32>
    %100 = arith.addf %98, %99 : vector<8x128xf32>
    %cst_20 = arith.constant 0.000000e+00 : f32
    %101 = vector.broadcast %cst_20 : f32 to vector<8x128xf32>
    %102 = arith.maximumf %100, %101 : vector<8x128xf32>
    %c0_21 = arith.constant 0 : index
    %c384 = arith.constant 384 : index
    %103 = vector.load %arg12[%c0_21, %c384] : memref<8x3200xf32, #tpu.memory_space<vmem>>, vector<8x128xf32>
    tpu.vector_store %arg12[%c0_21, %c384], %102 {strides = array<i32>} : memref<8x3200xf32, #tpu.memory_space<vmem>>, vector<8x128xf32>,
    %104 = vector.extract_strided_slice %2 {offsets = [32, 0], sizes = [8, 128], strides = [1, 1]} : vector<800x128xf32> to vector<8x128xf32>
    %105 = vector.extract_strided_slice %2 {offsets = [232, 0], sizes = [8, 128], strides = [1, 1]} : vector<800x128xf32> to vector<8x128xf32>
    %106 = vector.extract_strided_slice %2 {offsets = [432, 0], sizes = [8, 128], strides = [1, 1]} : vector<800x128xf32> to vector<8x128xf32>
    %107 = vector.extract_strided_slice %2 {offsets = [632, 0], sizes = [8, 128], strides = [1, 1]} : vector<800x128xf32> to vector<8x128xf32>
    %108 = arith.maximumf %104, %105 : vector<8x128xf32>
    %109 = arith.maximumf %106, %107 : vector<8x128xf32>
    %110 = arith.maximumf %108, %109 : vector<8x128xf32>
    %111 = arith.minimumf %104, %105 : vector<8x128xf32>
    %112 = arith.minimumf %106, %107 : vector<8x128xf32>
    %113 = arith.minimumf %111, %112 : vector<8x128xf32>
    %114 = vector.shape_cast %23 : vector<1x128xi1> to vector<1x128xi1>
    %115 = vector.broadcast %114 : vector<1x128xi1> to vector<8x128xi1>
    %116 = arith.select %115, %110, %113 : vector<8x128xi1>, vector<8x128xf32>
    %117 = vector.broadcast %18 : vector<1x128xf32> to vector<8x128xf32>
    %118 = arith.mulf %116, %117 : vector<8x128xf32>
    %119 = vector.broadcast %21 : vector<1x128xf32> to vector<8x128xf32>
    %120 = arith.addf %118, %119 : vector<8x128xf32>
    %cst_22 = arith.constant 0.000000e+00 : f32
    %121 = vector.broadcast %cst_22 : f32 to vector<8x128xf32>
    %122 = arith.maximumf %120, %121 : vector<8x128xf32>
    %c0_23 = arith.constant 0 : index
    %c512 = arith.constant 512 : index
    %123 = vector.load %arg12[%c0_23, %c512] : memref<8x3200xf32, #tpu.memory_space<vmem>>, vector<8x128xf32>
    tpu.vector_store %arg12[%c0_23, %c512], %122 {strides = array<i32>} : memref<8x3200xf32, #tpu.memory_space<vmem>>, vector<8x128xf32>,
    %124 = vector.extract_strided_slice %2 {offsets = [40, 0], sizes = [8, 128], strides = [1, 1]} : vector<800x128xf32> to vector<8x128xf32>
    %125 = vector.extract_strided_slice %2 {offsets = [240, 0], sizes = [8, 128], strides = [1, 1]} : vector<800x128xf32> to vector<8x128xf32>
    %126 = vector.extract_strided_slice %2 {offsets = [440, 0], sizes = [8, 128], strides = [1, 1]} : vector<800x128xf32> to vector<8x128xf32>
    %127 = vector.extract_strided_slice %2 {offsets = [640, 0], sizes = [8, 128], strides = [1, 1]} : vector<800x128xf32> to vector<8x128xf32>
    %128 = arith.maximumf %124, %125 : vector<8x128xf32>
    %129 = arith.maximumf %126, %127 : vector<8x128xf32>
    %130 = arith.maximumf %128, %129 : vector<8x128xf32>
    %131 = arith.minimumf %124, %125 : vector<8x128xf32>
    %132 = arith.minimumf %126, %127 : vector<8x128xf32>
    %133 = arith.minimumf %131, %132 : vector<8x128xf32>
    %134 = vector.shape_cast %23 : vector<1x128xi1> to vector<1x128xi1>
    %135 = vector.broadcast %134 : vector<1x128xi1> to vector<8x128xi1>
    %136 = arith.select %135, %130, %133 : vector<8x128xi1>, vector<8x128xf32>
    %137 = vector.broadcast %18 : vector<1x128xf32> to vector<8x128xf32>
    %138 = arith.mulf %136, %137 : vector<8x128xf32>
    %139 = vector.broadcast %21 : vector<1x128xf32> to vector<8x128xf32>
    %140 = arith.addf %138, %139 : vector<8x128xf32>
    %cst_24 = arith.constant 0.000000e+00 : f32
    %141 = vector.broadcast %cst_24 : f32 to vector<8x128xf32>
    %142 = arith.maximumf %140, %141 : vector<8x128xf32>
    %c0_25 = arith.constant 0 : index
    %c640 = arith.constant 640 : index
    %143 = vector.load %arg12[%c0_25, %c640] : memref<8x3200xf32, #tpu.memory_space<vmem>>, vector<8x128xf32>
    tpu.vector_store %arg12[%c0_25, %c640], %142 {strides = array<i32>} : memref<8x3200xf32, #tpu.memory_space<vmem>>, vector<8x128xf32>,
    %144 = vector.extract_strided_slice %2 {offsets = [48, 0], sizes = [8, 128], strides = [1, 1]} : vector<800x128xf32> to vector<8x128xf32>
    %145 = vector.extract_strided_slice %2 {offsets = [248, 0], sizes = [8, 128], strides = [1, 1]} : vector<800x128xf32> to vector<8x128xf32>
    %146 = vector.extract_strided_slice %2 {offsets = [448, 0], sizes = [8, 128], strides = [1, 1]} : vector<800x128xf32> to vector<8x128xf32>
    %147 = vector.extract_strided_slice %2 {offsets = [648, 0], sizes = [8, 128], strides = [1, 1]} : vector<800x128xf32> to vector<8x128xf32>
    %148 = arith.maximumf %144, %145 : vector<8x128xf32>
    %149 = arith.maximumf %146, %147 : vector<8x128xf32>
    %150 = arith.maximumf %148, %149 : vector<8x128xf32>
    %151 = arith.minimumf %144, %145 : vector<8x128xf32>
    %152 = arith.minimumf %146, %147 : vector<8x128xf32>
    %153 = arith.minimumf %151, %152 : vector<8x128xf32>
    %154 = vector.shape_cast %23 : vector<1x128xi1> to vector<1x128xi1>
    %155 = vector.broadcast %154 : vector<1x128xi1> to vector<8x128xi1>
    %156 = arith.select %155, %150, %153 : vector<8x128xi1>, vector<8x128xf32>
    %157 = vector.broadcast %18 : vector<1x128xf32> to vector<8x128xf32>
    %158 = arith.mulf %156, %157 : vector<8x128xf32>
    %159 = vector.broadcast %21 : vector<1x128xf32> to vector<8x128xf32>
    %160 = arith.addf %158, %159 : vector<8x128xf32>
    %cst_26 = arith.constant 0.000000e+00 : f32
    %161 = vector.broadcast %cst_26 : f32 to vector<8x128xf32>
    %162 = arith.maximumf %160, %161 : vector<8x128xf32>
    %c0_27 = arith.constant 0 : index
    %c768 = arith.constant 768 : index
    %163 = vector.load %arg12[%c0_27, %c768] : memref<8x3200xf32, #tpu.memory_space<vmem>>, vector<8x128xf32>
    tpu.vector_store %arg12[%c0_27, %c768], %162 {strides = array<i32>} : memref<8x3200xf32, #tpu.memory_space<vmem>>, vector<8x128xf32>,
    %164 = vector.extract_strided_slice %2 {offsets = [56, 0], sizes = [8, 128], strides = [1, 1]} : vector<800x128xf32> to vector<8x128xf32>
    %165 = vector.extract_strided_slice %2 {offsets = [256, 0], sizes = [8, 128], strides = [1, 1]} : vector<800x128xf32> to vector<8x128xf32>
    %166 = vector.extract_strided_slice %2 {offsets = [456, 0], sizes = [8, 128], strides = [1, 1]} : vector<800x128xf32> to vector<8x128xf32>
    %167 = vector.extract_strided_slice %2 {offsets = [656, 0], sizes = [8, 128], strides = [1, 1]} : vector<800x128xf32> to vector<8x128xf32>
    %168 = arith.maximumf %164, %165 : vector<8x128xf32>
    %169 = arith.maximumf %166, %167 : vector<8x128xf32>
    %170 = arith.maximumf %168, %169 : vector<8x128xf32>
    %171 = arith.minimumf %164, %165 : vector<8x128xf32>
    %172 = arith.minimumf %166, %167 : vector<8x128xf32>
    %173 = arith.minimumf %171, %172 : vector<8x128xf32>
    %174 = vector.shape_cast %23 : vector<1x128xi1> to vector<1x128xi1>
    %175 = vector.broadcast %174 : vector<1x128xi1> to vector<8x128xi1>
    %176 = arith.select %175, %170, %173 : vector<8x128xi1>, vector<8x128xf32>
    %177 = vector.broadcast %18 : vector<1x128xf32> to vector<8x128xf32>
    %178 = arith.mulf %176, %177 : vector<8x128xf32>
    %179 = vector.broadcast %21 : vector<1x128xf32> to vector<8x128xf32>
    %180 = arith.addf %178, %179 : vector<8x128xf32>
    %cst_28 = arith.constant 0.000000e+00 : f32
    %181 = vector.broadcast %cst_28 : f32 to vector<8x128xf32>
    %182 = arith.maximumf %180, %181 : vector<8x128xf32>
    %c0_29 = arith.constant 0 : index
    %c896 = arith.constant 896 : index
    %183 = vector.load %arg12[%c0_29, %c896] : memref<8x3200xf32, #tpu.memory_space<vmem>>, vector<8x128xf32>
    tpu.vector_store %arg12[%c0_29, %c896], %182 {strides = array<i32>} : memref<8x3200xf32, #tpu.memory_space<vmem>>, vector<8x128xf32>,
    %184 = vector.extract_strided_slice %2 {offsets = [64, 0], sizes = [8, 128], strides = [1, 1]} : vector<800x128xf32> to vector<8x128xf32>
    %185 = vector.extract_strided_slice %2 {offsets = [264, 0], sizes = [8, 128], strides = [1, 1]} : vector<800x128xf32> to vector<8x128xf32>
    %186 = vector.extract_strided_slice %2 {offsets = [464, 0], sizes = [8, 128], strides = [1, 1]} : vector<800x128xf32> to vector<8x128xf32>
    %187 = vector.extract_strided_slice %2 {offsets = [664, 0], sizes = [8, 128], strides = [1, 1]} : vector<800x128xf32> to vector<8x128xf32>
    %188 = arith.maximumf %184, %185 : vector<8x128xf32>
    %189 = arith.maximumf %186, %187 : vector<8x128xf32>
    %190 = arith.maximumf %188, %189 : vector<8x128xf32>
    %191 = arith.minimumf %184, %185 : vector<8x128xf32>
    %192 = arith.minimumf %186, %187 : vector<8x128xf32>
    %193 = arith.minimumf %191, %192 : vector<8x128xf32>
    %194 = vector.shape_cast %23 : vector<1x128xi1> to vector<1x128xi1>
    %195 = vector.broadcast %194 : vector<1x128xi1> to vector<8x128xi1>
    %196 = arith.select %195, %190, %193 : vector<8x128xi1>, vector<8x128xf32>
    %197 = vector.broadcast %18 : vector<1x128xf32> to vector<8x128xf32>
    %198 = arith.mulf %196, %197 : vector<8x128xf32>
    %199 = vector.broadcast %21 : vector<1x128xf32> to vector<8x128xf32>
    %200 = arith.addf %198, %199 : vector<8x128xf32>
    %cst_30 = arith.constant 0.000000e+00 : f32
    %201 = vector.broadcast %cst_30 : f32 to vector<8x128xf32>
    %202 = arith.maximumf %200, %201 : vector<8x128xf32>
    %c0_31 = arith.constant 0 : index
    %c1024 = arith.constant 1024 : index
    %203 = vector.load %arg12[%c0_31, %c1024] : memref<8x3200xf32, #tpu.memory_space<vmem>>, vector<8x128xf32>
    tpu.vector_store %arg12[%c0_31, %c1024], %202 {strides = array<i32>} : memref<8x3200xf32, #tpu.memory_space<vmem>>, vector<8x128xf32>,
    %204 = vector.extract_strided_slice %2 {offsets = [72, 0], sizes = [8, 128], strides = [1, 1]} : vector<800x128xf32> to vector<8x128xf32>
    %205 = vector.extract_strided_slice %2 {offsets = [272, 0], sizes = [8, 128], strides = [1, 1]} : vector<800x128xf32> to vector<8x128xf32>
    %206 = vector.extract_strided_slice %2 {offsets = [472, 0], sizes = [8, 128], strides = [1, 1]} : vector<800x128xf32> to vector<8x128xf32>
    %207 = vector.extract_strided_slice %2 {offsets = [672, 0], sizes = [8, 128], strides = [1, 1]} : vector<800x128xf32> to vector<8x128xf32>
    %208 = arith.maximumf %204, %205 : vector<8x128xf32>
    %209 = arith.maximumf %206, %207 : vector<8x128xf32>
    %210 = arith.maximumf %208, %209 : vector<8x128xf32>
    %211 = arith.minimumf %204, %205 : vector<8x128xf32>
    %212 = arith.minimumf %206, %207 : vector<8x128xf32>
    %213 = arith.minimumf %211, %212 : vector<8x128xf32>
    %214 = vector.shape_cast %23 : vector<1x128xi1> to vector<1x128xi1>
    %215 = vector.broadcast %214 : vector<1x128xi1> to vector<8x128xi1>
    %216 = arith.select %215, %210, %213 : vector<8x128xi1>, vector<8x128xf32>
    %217 = vector.broadcast %18 : vector<1x128xf32> to vector<8x128xf32>
    %218 = arith.mulf %216, %217 : vector<8x128xf32>
    %219 = vector.broadcast %21 : vector<1x128xf32> to vector<8x128xf32>
    %220 = arith.addf %218, %219 : vector<8x128xf32>
    %cst_32 = arith.constant 0.000000e+00 : f32
    %221 = vector.broadcast %cst_32 : f32 to vector<8x128xf32>
    %222 = arith.maximumf %220, %221 : vector<8x128xf32>
    %c0_33 = arith.constant 0 : index
    %c1152 = arith.constant 1152 : index
    %223 = vector.load %arg12[%c0_33, %c1152] : memref<8x3200xf32, #tpu.memory_space<vmem>>, vector<8x128xf32>
    tpu.vector_store %arg12[%c0_33, %c1152], %222 {strides = array<i32>} : memref<8x3200xf32, #tpu.memory_space<vmem>>, vector<8x128xf32>,
    %224 = vector.extract_strided_slice %2 {offsets = [80, 0], sizes = [8, 128], strides = [1, 1]} : vector<800x128xf32> to vector<8x128xf32>
    %225 = vector.extract_strided_slice %2 {offsets = [280, 0], sizes = [8, 128], strides = [1, 1]} : vector<800x128xf32> to vector<8x128xf32>
    %226 = vector.extract_strided_slice %2 {offsets = [480, 0], sizes = [8, 128], strides = [1, 1]} : vector<800x128xf32> to vector<8x128xf32>
    %227 = vector.extract_strided_slice %2 {offsets = [680, 0], sizes = [8, 128], strides = [1, 1]} : vector<800x128xf32> to vector<8x128xf32>
    %228 = arith.maximumf %224, %225 : vector<8x128xf32>
    %229 = arith.maximumf %226, %227 : vector<8x128xf32>
    %230 = arith.maximumf %228, %229 : vector<8x128xf32>
    %231 = arith.minimumf %224, %225 : vector<8x128xf32>
    %232 = arith.minimumf %226, %227 : vector<8x128xf32>
    %233 = arith.minimumf %231, %232 : vector<8x128xf32>
    %234 = vector.shape_cast %23 : vector<1x128xi1> to vector<1x128xi1>
    %235 = vector.broadcast %234 : vector<1x128xi1> to vector<8x128xi1>
    %236 = arith.select %235, %230, %233 : vector<8x128xi1>, vector<8x128xf32>
    %237 = vector.broadcast %18 : vector<1x128xf32> to vector<8x128xf32>
    %238 = arith.mulf %236, %237 : vector<8x128xf32>
    %239 = vector.broadcast %21 : vector<1x128xf32> to vector<8x128xf32>
    %240 = arith.addf %238, %239 : vector<8x128xf32>
    %cst_34 = arith.constant 0.000000e+00 : f32
    %241 = vector.broadcast %cst_34 : f32 to vector<8x128xf32>
    %242 = arith.maximumf %240, %241 : vector<8x128xf32>
    %c0_35 = arith.constant 0 : index
    %c1280 = arith.constant 1280 : index
    %243 = vector.load %arg12[%c0_35, %c1280] : memref<8x3200xf32, #tpu.memory_space<vmem>>, vector<8x128xf32>
    tpu.vector_store %arg12[%c0_35, %c1280], %242 {strides = array<i32>} : memref<8x3200xf32, #tpu.memory_space<vmem>>, vector<8x128xf32>,
    %244 = vector.extract_strided_slice %2 {offsets = [88, 0], sizes = [8, 128], strides = [1, 1]} : vector<800x128xf32> to vector<8x128xf32>
    %245 = vector.extract_strided_slice %2 {offsets = [288, 0], sizes = [8, 128], strides = [1, 1]} : vector<800x128xf32> to vector<8x128xf32>
    %246 = vector.extract_strided_slice %2 {offsets = [488, 0], sizes = [8, 128], strides = [1, 1]} : vector<800x128xf32> to vector<8x128xf32>
    %247 = vector.extract_strided_slice %2 {offsets = [688, 0], sizes = [8, 128], strides = [1, 1]} : vector<800x128xf32> to vector<8x128xf32>
    %248 = arith.maximumf %244, %245 : vector<8x128xf32>
    %249 = arith.maximumf %246, %247 : vector<8x128xf32>
    %250 = arith.maximumf %248, %249 : vector<8x128xf32>
    %251 = arith.minimumf %244, %245 : vector<8x128xf32>
    %252 = arith.minimumf %246, %247 : vector<8x128xf32>
    %253 = arith.minimumf %251, %252 : vector<8x128xf32>
    %254 = vector.shape_cast %23 : vector<1x128xi1> to vector<1x128xi1>
    %255 = vector.broadcast %254 : vector<1x128xi1> to vector<8x128xi1>
    %256 = arith.select %255, %250, %253 : vector<8x128xi1>, vector<8x128xf32>
    %257 = vector.broadcast %18 : vector<1x128xf32> to vector<8x128xf32>
    %258 = arith.mulf %256, %257 : vector<8x128xf32>
    %259 = vector.broadcast %21 : vector<1x128xf32> to vector<8x128xf32>
    %260 = arith.addf %258, %259 : vector<8x128xf32>
    %cst_36 = arith.constant 0.000000e+00 : f32
    %261 = vector.broadcast %cst_36 : f32 to vector<8x128xf32>
    %262 = arith.maximumf %260, %261 : vector<8x128xf32>
    %c0_37 = arith.constant 0 : index
    %c1408 = arith.constant 1408 : index
    %263 = vector.load %arg12[%c0_37, %c1408] : memref<8x3200xf32, #tpu.memory_space<vmem>>, vector<8x128xf32>
    tpu.vector_store %arg12[%c0_37, %c1408], %262 {strides = array<i32>} : memref<8x3200xf32, #tpu.memory_space<vmem>>, vector<8x128xf32>,
    %264 = vector.extract_strided_slice %2 {offsets = [96, 0], sizes = [8, 128], strides = [1, 1]} : vector<800x128xf32> to vector<8x128xf32>
    %265 = vector.extract_strided_slice %2 {offsets = [296, 0], sizes = [8, 128], strides = [1, 1]} : vector<800x128xf32> to vector<8x128xf32>
    %266 = vector.extract_strided_slice %2 {offsets = [496, 0], sizes = [8, 128], strides = [1, 1]} : vector<800x128xf32> to vector<8x128xf32>
    %267 = vector.extract_strided_slice %2 {offsets = [696, 0], sizes = [8, 128], strides = [1, 1]} : vector<800x128xf32> to vector<8x128xf32>
    %268 = arith.maximumf %264, %265 : vector<8x128xf32>
    %269 = arith.maximumf %266, %267 : vector<8x128xf32>
    %270 = arith.maximumf %268, %269 : vector<8x128xf32>
    %271 = arith.minimumf %264, %265 : vector<8x128xf32>
    %272 = arith.minimumf %266, %267 : vector<8x128xf32>
    %273 = arith.minimumf %271, %272 : vector<8x128xf32>
    %274 = vector.shape_cast %23 : vector<1x128xi1> to vector<1x128xi1>
    %275 = vector.broadcast %274 : vector<1x128xi1> to vector<8x128xi1>
    %276 = arith.select %275, %270, %273 : vector<8x128xi1>, vector<8x128xf32>
    %277 = vector.broadcast %18 : vector<1x128xf32> to vector<8x128xf32>
    %278 = arith.mulf %276, %277 : vector<8x128xf32>
    %279 = vector.broadcast %21 : vector<1x128xf32> to vector<8x128xf32>
    %280 = arith.addf %278, %279 : vector<8x128xf32>
    %cst_38 = arith.constant 0.000000e+00 : f32
    %281 = vector.broadcast %cst_38 : f32 to vector<8x128xf32>
    %282 = arith.maximumf %280, %281 : vector<8x128xf32>
    %c0_39 = arith.constant 0 : index
    %c1536 = arith.constant 1536 : index
    %283 = vector.load %arg12[%c0_39, %c1536] : memref<8x3200xf32, #tpu.memory_space<vmem>>, vector<8x128xf32>
    tpu.vector_store %arg12[%c0_39, %c1536], %282 {strides = array<i32>} : memref<8x3200xf32, #tpu.memory_space<vmem>>, vector<8x128xf32>,
    %284 = vector.extract_strided_slice %2 {offsets = [104, 0], sizes = [8, 128], strides = [1, 1]} : vector<800x128xf32> to vector<8x128xf32>
    %285 = vector.extract_strided_slice %2 {offsets = [304, 0], sizes = [8, 128], strides = [1, 1]} : vector<800x128xf32> to vector<8x128xf32>
    %286 = vector.extract_strided_slice %2 {offsets = [504, 0], sizes = [8, 128], strides = [1, 1]} : vector<800x128xf32> to vector<8x128xf32>
    %287 = vector.extract_strided_slice %2 {offsets = [704, 0], sizes = [8, 128], strides = [1, 1]} : vector<800x128xf32> to vector<8x128xf32>
    %288 = arith.maximumf %284, %285 : vector<8x128xf32>
    %289 = arith.maximumf %286, %287 : vector<8x128xf32>
    %290 = arith.maximumf %288, %289 : vector<8x128xf32>
    %291 = arith.minimumf %284, %285 : vector<8x128xf32>
    %292 = arith.minimumf %286, %287 : vector<8x128xf32>
    %293 = arith.minimumf %291, %292 : vector<8x128xf32>
    %294 = vector.shape_cast %23 : vector<1x128xi1> to vector<1x128xi1>
    %295 = vector.broadcast %294 : vector<1x128xi1> to vector<8x128xi1>
    %296 = arith.select %295, %290, %293 : vector<8x128xi1>, vector<8x128xf32>
    %297 = vector.broadcast %18 : vector<1x128xf32> to vector<8x128xf32>
    %298 = arith.mulf %296, %297 : vector<8x128xf32>
    %299 = vector.broadcast %21 : vector<1x128xf32> to vector<8x128xf32>
    %300 = arith.addf %298, %299 : vector<8x128xf32>
    %cst_40 = arith.constant 0.000000e+00 : f32
    %301 = vector.broadcast %cst_40 : f32 to vector<8x128xf32>
    %302 = arith.maximumf %300, %301 : vector<8x128xf32>
    %c0_41 = arith.constant 0 : index
    %c1664 = arith.constant 1664 : index
    %303 = vector.load %arg12[%c0_41, %c1664] : memref<8x3200xf32, #tpu.memory_space<vmem>>, vector<8x128xf32>
    tpu.vector_store %arg12[%c0_41, %c1664], %302 {strides = array<i32>} : memref<8x3200xf32, #tpu.memory_space<vmem>>, vector<8x128xf32>,
    %304 = vector.extract_strided_slice %2 {offsets = [112, 0], sizes = [8, 128], strides = [1, 1]} : vector<800x128xf32> to vector<8x128xf32>
    %305 = vector.extract_strided_slice %2 {offsets = [312, 0], sizes = [8, 128], strides = [1, 1]} : vector<800x128xf32> to vector<8x128xf32>
    %306 = vector.extract_strided_slice %2 {offsets = [512, 0], sizes = [8, 128], strides = [1, 1]} : vector<800x128xf32> to vector<8x128xf32>
    %307 = vector.extract_strided_slice %2 {offsets = [712, 0], sizes = [8, 128], strides = [1, 1]} : vector<800x128xf32> to vector<8x128xf32>
    %308 = arith.maximumf %304, %305 : vector<8x128xf32>
    %309 = arith.maximumf %306, %307 : vector<8x128xf32>
    %310 = arith.maximumf %308, %309 : vector<8x128xf32>
    %311 = arith.minimumf %304, %305 : vector<8x128xf32>
    %312 = arith.minimumf %306, %307 : vector<8x128xf32>
    %313 = arith.minimumf %311, %312 : vector<8x128xf32>
    %314 = vector.shape_cast %23 : vector<1x128xi1> to vector<1x128xi1>
    %315 = vector.broadcast %314 : vector<1x128xi1> to vector<8x128xi1>
    %316 = arith.select %315, %310, %313 : vector<8x128xi1>, vector<8x128xf32>
    %317 = vector.broadcast %18 : vector<1x128xf32> to vector<8x128xf32>
    %318 = arith.mulf %316, %317 : vector<8x128xf32>
    %319 = vector.broadcast %21 : vector<1x128xf32> to vector<8x128xf32>
    %320 = arith.addf %318, %319 : vector<8x128xf32>
    %cst_42 = arith.constant 0.000000e+00 : f32
    %321 = vector.broadcast %cst_42 : f32 to vector<8x128xf32>
    %322 = arith.maximumf %320, %321 : vector<8x128xf32>
    %c0_43 = arith.constant 0 : index
    %c1792 = arith.constant 1792 : index
    %323 = vector.load %arg12[%c0_43, %c1792] : memref<8x3200xf32, #tpu.memory_space<vmem>>, vector<8x128xf32>
    tpu.vector_store %arg12[%c0_43, %c1792], %322 {strides = array<i32>} : memref<8x3200xf32, #tpu.memory_space<vmem>>, vector<8x128xf32>,
    %324 = vector.extract_strided_slice %2 {offsets = [120, 0], sizes = [8, 128], strides = [1, 1]} : vector<800x128xf32> to vector<8x128xf32>
    %325 = vector.extract_strided_slice %2 {offsets = [320, 0], sizes = [8, 128], strides = [1, 1]} : vector<800x128xf32> to vector<8x128xf32>
    %326 = vector.extract_strided_slice %2 {offsets = [520, 0], sizes = [8, 128], strides = [1, 1]} : vector<800x128xf32> to vector<8x128xf32>
    %327 = vector.extract_strided_slice %2 {offsets = [720, 0], sizes = [8, 128], strides = [1, 1]} : vector<800x128xf32> to vector<8x128xf32>
    %328 = arith.maximumf %324, %325 : vector<8x128xf32>
    %329 = arith.maximumf %326, %327 : vector<8x128xf32>
    %330 = arith.maximumf %328, %329 : vector<8x128xf32>
    %331 = arith.minimumf %324, %325 : vector<8x128xf32>
    %332 = arith.minimumf %326, %327 : vector<8x128xf32>
    %333 = arith.minimumf %331, %332 : vector<8x128xf32>
    %334 = vector.shape_cast %23 : vector<1x128xi1> to vector<1x128xi1>
    %335 = vector.broadcast %334 : vector<1x128xi1> to vector<8x128xi1>
    %336 = arith.select %335, %330, %333 : vector<8x128xi1>, vector<8x128xf32>
    %337 = vector.broadcast %18 : vector<1x128xf32> to vector<8x128xf32>
    %338 = arith.mulf %336, %337 : vector<8x128xf32>
    %339 = vector.broadcast %21 : vector<1x128xf32> to vector<8x128xf32>
    %340 = arith.addf %338, %339 : vector<8x128xf32>
    %cst_44 = arith.constant 0.000000e+00 : f32
    %341 = vector.broadcast %cst_44 : f32 to vector<8x128xf32>
    %342 = arith.maximumf %340, %341 : vector<8x128xf32>
    %c0_45 = arith.constant 0 : index
    %c1920 = arith.constant 1920 : index
    %343 = vector.load %arg12[%c0_45, %c1920] : memref<8x3200xf32, #tpu.memory_space<vmem>>, vector<8x128xf32>
    tpu.vector_store %arg12[%c0_45, %c1920], %342 {strides = array<i32>} : memref<8x3200xf32, #tpu.memory_space<vmem>>, vector<8x128xf32>,
    %344 = vector.extract_strided_slice %2 {offsets = [128, 0], sizes = [8, 128], strides = [1, 1]} : vector<800x128xf32> to vector<8x128xf32>
    %345 = vector.extract_strided_slice %2 {offsets = [328, 0], sizes = [8, 128], strides = [1, 1]} : vector<800x128xf32> to vector<8x128xf32>
    %346 = vector.extract_strided_slice %2 {offsets = [528, 0], sizes = [8, 128], strides = [1, 1]} : vector<800x128xf32> to vector<8x128xf32>
    %347 = vector.extract_strided_slice %2 {offsets = [728, 0], sizes = [8, 128], strides = [1, 1]} : vector<800x128xf32> to vector<8x128xf32>
    %348 = arith.maximumf %344, %345 : vector<8x128xf32>
    %349 = arith.maximumf %346, %347 : vector<8x128xf32>
    %350 = arith.maximumf %348, %349 : vector<8x128xf32>
    %351 = arith.minimumf %344, %345 : vector<8x128xf32>
    %352 = arith.minimumf %346, %347 : vector<8x128xf32>
    %353 = arith.minimumf %351, %352 : vector<8x128xf32>
    %354 = vector.shape_cast %23 : vector<1x128xi1> to vector<1x128xi1>
    %355 = vector.broadcast %354 : vector<1x128xi1> to vector<8x128xi1>
    %356 = arith.select %355, %350, %353 : vector<8x128xi1>, vector<8x128xf32>
    %357 = vector.broadcast %18 : vector<1x128xf32> to vector<8x128xf32>
    %358 = arith.mulf %356, %357 : vector<8x128xf32>
    %359 = vector.broadcast %21 : vector<1x128xf32> to vector<8x128xf32>
    %360 = arith.addf %358, %359 : vector<8x128xf32>
    %cst_46 = arith.constant 0.000000e+00 : f32
    %361 = vector.broadcast %cst_46 : f32 to vector<8x128xf32>
    %362 = arith.maximumf %360, %361 : vector<8x128xf32>
    %c0_47 = arith.constant 0 : index
    %c2048 = arith.constant 2048 : index
    %363 = vector.load %arg12[%c0_47, %c2048] : memref<8x3200xf32, #tpu.memory_space<vmem>>, vector<8x128xf32>
    tpu.vector_store %arg12[%c0_47, %c2048], %362 {strides = array<i32>} : memref<8x3200xf32, #tpu.memory_space<vmem>>, vector<8x128xf32>,
    %364 = vector.extract_strided_slice %2 {offsets = [136, 0], sizes = [8, 128], strides = [1, 1]} : vector<800x128xf32> to vector<8x128xf32>
    %365 = vector.extract_strided_slice %2 {offsets = [336, 0], sizes = [8, 128], strides = [1, 1]} : vector<800x128xf32> to vector<8x128xf32>
    %366 = vector.extract_strided_slice %2 {offsets = [536, 0], sizes = [8, 128], strides = [1, 1]} : vector<800x128xf32> to vector<8x128xf32>
    %367 = vector.extract_strided_slice %2 {offsets = [736, 0], sizes = [8, 128], strides = [1, 1]} : vector<800x128xf32> to vector<8x128xf32>
    %368 = arith.maximumf %364, %365 : vector<8x128xf32>
    %369 = arith.maximumf %366, %367 : vector<8x128xf32>
    %370 = arith.maximumf %368, %369 : vector<8x128xf32>
    %371 = arith.minimumf %364, %365 : vector<8x128xf32>
    %372 = arith.minimumf %366, %367 : vector<8x128xf32>
    %373 = arith.minimumf %371, %372 : vector<8x128xf32>
    %374 = vector.shape_cast %23 : vector<1x128xi1> to vector<1x128xi1>
    %375 = vector.broadcast %374 : vector<1x128xi1> to vector<8x128xi1>
    %376 = arith.select %375, %370, %373 : vector<8x128xi1>, vector<8x128xf32>
    %377 = vector.broadcast %18 : vector<1x128xf32> to vector<8x128xf32>
    %378 = arith.mulf %376, %377 : vector<8x128xf32>
    %379 = vector.broadcast %21 : vector<1x128xf32> to vector<8x128xf32>
    %380 = arith.addf %378, %379 : vector<8x128xf32>
    %cst_48 = arith.constant 0.000000e+00 : f32
    %381 = vector.broadcast %cst_48 : f32 to vector<8x128xf32>
    %382 = arith.maximumf %380, %381 : vector<8x128xf32>
    %c0_49 = arith.constant 0 : index
    %c2176 = arith.constant 2176 : index
    %383 = vector.load %arg12[%c0_49, %c2176] : memref<8x3200xf32, #tpu.memory_space<vmem>>, vector<8x128xf32>
    tpu.vector_store %arg12[%c0_49, %c2176], %382 {strides = array<i32>} : memref<8x3200xf32, #tpu.memory_space<vmem>>, vector<8x128xf32>,
    %384 = vector.extract_strided_slice %2 {offsets = [144, 0], sizes = [8, 128], strides = [1, 1]} : vector<800x128xf32> to vector<8x128xf32>
    %385 = vector.extract_strided_slice %2 {offsets = [344, 0], sizes = [8, 128], strides = [1, 1]} : vector<800x128xf32> to vector<8x128xf32>
    %386 = vector.extract_strided_slice %2 {offsets = [544, 0], sizes = [8, 128], strides = [1, 1]} : vector<800x128xf32> to vector<8x128xf32>
    %387 = vector.extract_strided_slice %2 {offsets = [744, 0], sizes = [8, 128], strides = [1, 1]} : vector<800x128xf32> to vector<8x128xf32>
    %388 = arith.maximumf %384, %385 : vector<8x128xf32>
    %389 = arith.maximumf %386, %387 : vector<8x128xf32>
    %390 = arith.maximumf %388, %389 : vector<8x128xf32>
    %391 = arith.minimumf %384, %385 : vector<8x128xf32>
    %392 = arith.minimumf %386, %387 : vector<8x128xf32>
    %393 = arith.minimumf %391, %392 : vector<8x128xf32>
    %394 = vector.shape_cast %23 : vector<1x128xi1> to vector<1x128xi1>
    %395 = vector.broadcast %394 : vector<1x128xi1> to vector<8x128xi1>
    %396 = arith.select %395, %390, %393 : vector<8x128xi1>, vector<8x128xf32>
    %397 = vector.broadcast %18 : vector<1x128xf32> to vector<8x128xf32>
    %398 = arith.mulf %396, %397 : vector<8x128xf32>
    %399 = vector.broadcast %21 : vector<1x128xf32> to vector<8x128xf32>
    %400 = arith.addf %398, %399 : vector<8x128xf32>
    %cst_50 = arith.constant 0.000000e+00 : f32
    %401 = vector.broadcast %cst_50 : f32 to vector<8x128xf32>
    %402 = arith.maximumf %400, %401 : vector<8x128xf32>
    %c0_51 = arith.constant 0 : index
    %c2304 = arith.constant 2304 : index
    %403 = vector.load %arg12[%c0_51, %c2304] : memref<8x3200xf32, #tpu.memory_space<vmem>>, vector<8x128xf32>
    tpu.vector_store %arg12[%c0_51, %c2304], %402 {strides = array<i32>} : memref<8x3200xf32, #tpu.memory_space<vmem>>, vector<8x128xf32>,
    %404 = vector.extract_strided_slice %2 {offsets = [152, 0], sizes = [8, 128], strides = [1, 1]} : vector<800x128xf32> to vector<8x128xf32>
    %405 = vector.extract_strided_slice %2 {offsets = [352, 0], sizes = [8, 128], strides = [1, 1]} : vector<800x128xf32> to vector<8x128xf32>
    %406 = vector.extract_strided_slice %2 {offsets = [552, 0], sizes = [8, 128], strides = [1, 1]} : vector<800x128xf32> to vector<8x128xf32>
    %407 = vector.extract_strided_slice %2 {offsets = [752, 0], sizes = [8, 128], strides = [1, 1]} : vector<800x128xf32> to vector<8x128xf32>
    %408 = arith.maximumf %404, %405 : vector<8x128xf32>
    %409 = arith.maximumf %406, %407 : vector<8x128xf32>
    %410 = arith.maximumf %408, %409 : vector<8x128xf32>
    %411 = arith.minimumf %404, %405 : vector<8x128xf32>
    %412 = arith.minimumf %406, %407 : vector<8x128xf32>
    %413 = arith.minimumf %411, %412 : vector<8x128xf32>
    %414 = vector.shape_cast %23 : vector<1x128xi1> to vector<1x128xi1>
    %415 = vector.broadcast %414 : vector<1x128xi1> to vector<8x128xi1>
    %416 = arith.select %415, %410, %413 : vector<8x128xi1>, vector<8x128xf32>
    %417 = vector.broadcast %18 : vector<1x128xf32> to vector<8x128xf32>
    %418 = arith.mulf %416, %417 : vector<8x128xf32>
    %419 = vector.broadcast %21 : vector<1x128xf32> to vector<8x128xf32>
    %420 = arith.addf %418, %419 : vector<8x128xf32>
    %cst_52 = arith.constant 0.000000e+00 : f32
    %421 = vector.broadcast %cst_52 : f32 to vector<8x128xf32>
    %422 = arith.maximumf %420, %421 : vector<8x128xf32>
    %c0_53 = arith.constant 0 : index
    %c2432 = arith.constant 2432 : index
    %423 = vector.load %arg12[%c0_53, %c2432] : memref<8x3200xf32, #tpu.memory_space<vmem>>, vector<8x128xf32>
    tpu.vector_store %arg12[%c0_53, %c2432], %422 {strides = array<i32>} : memref<8x3200xf32, #tpu.memory_space<vmem>>, vector<8x128xf32>,
    %424 = vector.extract_strided_slice %2 {offsets = [160, 0], sizes = [8, 128], strides = [1, 1]} : vector<800x128xf32> to vector<8x128xf32>
    %425 = vector.extract_strided_slice %2 {offsets = [360, 0], sizes = [8, 128], strides = [1, 1]} : vector<800x128xf32> to vector<8x128xf32>
    %426 = vector.extract_strided_slice %2 {offsets = [560, 0], sizes = [8, 128], strides = [1, 1]} : vector<800x128xf32> to vector<8x128xf32>
    %427 = vector.extract_strided_slice %2 {offsets = [760, 0], sizes = [8, 128], strides = [1, 1]} : vector<800x128xf32> to vector<8x128xf32>
    %428 = arith.maximumf %424, %425 : vector<8x128xf32>
    %429 = arith.maximumf %426, %427 : vector<8x128xf32>
    %430 = arith.maximumf %428, %429 : vector<8x128xf32>
    %431 = arith.minimumf %424, %425 : vector<8x128xf32>
    %432 = arith.minimumf %426, %427 : vector<8x128xf32>
    %433 = arith.minimumf %431, %432 : vector<8x128xf32>
    %434 = vector.shape_cast %23 : vector<1x128xi1> to vector<1x128xi1>
    %435 = vector.broadcast %434 : vector<1x128xi1> to vector<8x128xi1>
    %436 = arith.select %435, %430, %433 : vector<8x128xi1>, vector<8x128xf32>
    %437 = vector.broadcast %18 : vector<1x128xf32> to vector<8x128xf32>
    %438 = arith.mulf %436, %437 : vector<8x128xf32>
    %439 = vector.broadcast %21 : vector<1x128xf32> to vector<8x128xf32>
    %440 = arith.addf %438, %439 : vector<8x128xf32>
    %cst_54 = arith.constant 0.000000e+00 : f32
    %441 = vector.broadcast %cst_54 : f32 to vector<8x128xf32>
    %442 = arith.maximumf %440, %441 : vector<8x128xf32>
    %c0_55 = arith.constant 0 : index
    %c2560 = arith.constant 2560 : index
    %443 = vector.load %arg12[%c0_55, %c2560] : memref<8x3200xf32, #tpu.memory_space<vmem>>, vector<8x128xf32>
    tpu.vector_store %arg12[%c0_55, %c2560], %442 {strides = array<i32>} : memref<8x3200xf32, #tpu.memory_space<vmem>>, vector<8x128xf32>,
    %444 = vector.extract_strided_slice %2 {offsets = [168, 0], sizes = [8, 128], strides = [1, 1]} : vector<800x128xf32> to vector<8x128xf32>
    %445 = vector.extract_strided_slice %2 {offsets = [368, 0], sizes = [8, 128], strides = [1, 1]} : vector<800x128xf32> to vector<8x128xf32>
    %446 = vector.extract_strided_slice %2 {offsets = [568, 0], sizes = [8, 128], strides = [1, 1]} : vector<800x128xf32> to vector<8x128xf32>
    %447 = vector.extract_strided_slice %2 {offsets = [768, 0], sizes = [8, 128], strides = [1, 1]} : vector<800x128xf32> to vector<8x128xf32>
    %448 = arith.maximumf %444, %445 : vector<8x128xf32>
    %449 = arith.maximumf %446, %447 : vector<8x128xf32>
    %450 = arith.maximumf %448, %449 : vector<8x128xf32>
    %451 = arith.minimumf %444, %445 : vector<8x128xf32>
    %452 = arith.minimumf %446, %447 : vector<8x128xf32>
    %453 = arith.minimumf %451, %452 : vector<8x128xf32>
    %454 = vector.shape_cast %23 : vector<1x128xi1> to vector<1x128xi1>
    %455 = vector.broadcast %454 : vector<1x128xi1> to vector<8x128xi1>
    %456 = arith.select %455, %450, %453 : vector<8x128xi1>, vector<8x128xf32>
    %457 = vector.broadcast %18 : vector<1x128xf32> to vector<8x128xf32>
    %458 = arith.mulf %456, %457 : vector<8x128xf32>
    %459 = vector.broadcast %21 : vector<1x128xf32> to vector<8x128xf32>
    %460 = arith.addf %458, %459 : vector<8x128xf32>
    %cst_56 = arith.constant 0.000000e+00 : f32
    %461 = vector.broadcast %cst_56 : f32 to vector<8x128xf32>
    %462 = arith.maximumf %460, %461 : vector<8x128xf32>
    %c0_57 = arith.constant 0 : index
    %c2688 = arith.constant 2688 : index
    %463 = vector.load %arg12[%c0_57, %c2688] : memref<8x3200xf32, #tpu.memory_space<vmem>>, vector<8x128xf32>
    tpu.vector_store %arg12[%c0_57, %c2688], %462 {strides = array<i32>} : memref<8x3200xf32, #tpu.memory_space<vmem>>, vector<8x128xf32>,
    %464 = vector.extract_strided_slice %2 {offsets = [176, 0], sizes = [8, 128], strides = [1, 1]} : vector<800x128xf32> to vector<8x128xf32>
    %465 = vector.extract_strided_slice %2 {offsets = [376, 0], sizes = [8, 128], strides = [1, 1]} : vector<800x128xf32> to vector<8x128xf32>
    %466 = vector.extract_strided_slice %2 {offsets = [576, 0], sizes = [8, 128], strides = [1, 1]} : vector<800x128xf32> to vector<8x128xf32>
    %467 = vector.extract_strided_slice %2 {offsets = [776, 0], sizes = [8, 128], strides = [1, 1]} : vector<800x128xf32> to vector<8x128xf32>
    %468 = arith.maximumf %464, %465 : vector<8x128xf32>
    %469 = arith.maximumf %466, %467 : vector<8x128xf32>
    %470 = arith.maximumf %468, %469 : vector<8x128xf32>
    %471 = arith.minimumf %464, %465 : vector<8x128xf32>
    %472 = arith.minimumf %466, %467 : vector<8x128xf32>
    %473 = arith.minimumf %471, %472 : vector<8x128xf32>
    %474 = vector.shape_cast %23 : vector<1x128xi1> to vector<1x128xi1>
    %475 = vector.broadcast %474 : vector<1x128xi1> to vector<8x128xi1>
    %476 = arith.select %475, %470, %473 : vector<8x128xi1>, vector<8x128xf32>
    %477 = vector.broadcast %18 : vector<1x128xf32> to vector<8x128xf32>
    %478 = arith.mulf %476, %477 : vector<8x128xf32>
    %479 = vector.broadcast %21 : vector<1x128xf32> to vector<8x128xf32>
    %480 = arith.addf %478, %479 : vector<8x128xf32>
    %cst_58 = arith.constant 0.000000e+00 : f32
    %481 = vector.broadcast %cst_58 : f32 to vector<8x128xf32>
    %482 = arith.maximumf %480, %481 : vector<8x128xf32>
    %c0_59 = arith.constant 0 : index
    %c2816 = arith.constant 2816 : index
    %483 = vector.load %arg12[%c0_59, %c2816] : memref<8x3200xf32, #tpu.memory_space<vmem>>, vector<8x128xf32>
    tpu.vector_store %arg12[%c0_59, %c2816], %482 {strides = array<i32>} : memref<8x3200xf32, #tpu.memory_space<vmem>>, vector<8x128xf32>,
    %484 = vector.extract_strided_slice %2 {offsets = [184, 0], sizes = [8, 128], strides = [1, 1]} : vector<800x128xf32> to vector<8x128xf32>
    %485 = vector.extract_strided_slice %2 {offsets = [384, 0], sizes = [8, 128], strides = [1, 1]} : vector<800x128xf32> to vector<8x128xf32>
    %486 = vector.extract_strided_slice %2 {offsets = [584, 0], sizes = [8, 128], strides = [1, 1]} : vector<800x128xf32> to vector<8x128xf32>
    %487 = vector.extract_strided_slice %2 {offsets = [784, 0], sizes = [8, 128], strides = [1, 1]} : vector<800x128xf32> to vector<8x128xf32>
    %488 = arith.maximumf %484, %485 : vector<8x128xf32>
    %489 = arith.maximumf %486, %487 : vector<8x128xf32>
    %490 = arith.maximumf %488, %489 : vector<8x128xf32>
    %491 = arith.minimumf %484, %485 : vector<8x128xf32>
    %492 = arith.minimumf %486, %487 : vector<8x128xf32>
    %493 = arith.minimumf %491, %492 : vector<8x128xf32>
    %494 = vector.shape_cast %23 : vector<1x128xi1> to vector<1x128xi1>
    %495 = vector.broadcast %494 : vector<1x128xi1> to vector<8x128xi1>
    %496 = arith.select %495, %490, %493 : vector<8x128xi1>, vector<8x128xf32>
    %497 = vector.broadcast %18 : vector<1x128xf32> to vector<8x128xf32>
    %498 = arith.mulf %496, %497 : vector<8x128xf32>
    %499 = vector.broadcast %21 : vector<1x128xf32> to vector<8x128xf32>
    %500 = arith.addf %498, %499 : vector<8x128xf32>
    %cst_60 = arith.constant 0.000000e+00 : f32
    %501 = vector.broadcast %cst_60 : f32 to vector<8x128xf32>
    %502 = arith.maximumf %500, %501 : vector<8x128xf32>
    %c0_61 = arith.constant 0 : index
    %c2944 = arith.constant 2944 : index
    %503 = vector.load %arg12[%c0_61, %c2944] : memref<8x3200xf32, #tpu.memory_space<vmem>>, vector<8x128xf32>
    tpu.vector_store %arg12[%c0_61, %c2944], %502 {strides = array<i32>} : memref<8x3200xf32, #tpu.memory_space<vmem>>, vector<8x128xf32>,
    %504 = vector.extract_strided_slice %2 {offsets = [192, 0], sizes = [8, 128], strides = [1, 1]} : vector<800x128xf32> to vector<8x128xf32>
    %505 = vector.extract_strided_slice %2 {offsets = [392, 0], sizes = [8, 128], strides = [1, 1]} : vector<800x128xf32> to vector<8x128xf32>
    %506 = vector.extract_strided_slice %2 {offsets = [592, 0], sizes = [8, 128], strides = [1, 1]} : vector<800x128xf32> to vector<8x128xf32>
    %507 = vector.extract_strided_slice %2 {offsets = [792, 0], sizes = [8, 128], strides = [1, 1]} : vector<800x128xf32> to vector<8x128xf32>
    %508 = arith.maximumf %504, %505 : vector<8x128xf32>
    %509 = arith.maximumf %506, %507 : vector<8x128xf32>
    %510 = arith.maximumf %508, %509 : vector<8x128xf32>
    %511 = arith.minimumf %504, %505 : vector<8x128xf32>
    %512 = arith.minimumf %506, %507 : vector<8x128xf32>
    %513 = arith.minimumf %511, %512 : vector<8x128xf32>
    %514 = vector.shape_cast %23 : vector<1x128xi1> to vector<1x128xi1>
    %515 = vector.broadcast %514 : vector<1x128xi1> to vector<8x128xi1>
    %516 = arith.select %515, %510, %513 : vector<8x128xi1>, vector<8x128xf32>
    %517 = vector.broadcast %18 : vector<1x128xf32> to vector<8x128xf32>
    %518 = arith.mulf %516, %517 : vector<8x128xf32>
    %519 = vector.broadcast %21 : vector<1x128xf32> to vector<8x128xf32>
    %520 = arith.addf %518, %519 : vector<8x128xf32>
    %cst_62 = arith.constant 0.000000e+00 : f32
    %521 = vector.broadcast %cst_62 : f32 to vector<8x128xf32>
    %522 = arith.maximumf %520, %521 : vector<8x128xf32>
    %c0_63 = arith.constant 0 : index
    %c3072 = arith.constant 3072 : index
    %523 = vector.load %arg12[%c0_63, %c3072] : memref<8x3200xf32, #tpu.memory_space<vmem>>, vector<8x128xf32>
    tpu.vector_store %arg12[%c0_63, %c3072], %522 {strides = array<i32>} : memref<8x3200xf32, #tpu.memory_space<vmem>>, vector<8x128xf32>,
    %c0_64 = arith.constant 0 : index
    %c0_65 = arith.constant 0 : index
    %524 = vector.load %arg12[%c0_64, %c0_65] : memref<8x3200xf32, #tpu.memory_space<vmem>>, vector<8x3200xf32>
    %525 = arith.truncf %524 : vector<8x3200xf32> to vector<8x3200xbf16>
    %c0_66 = arith.constant 0 : index
    %c0_67 = arith.constant 0 : index
    %526 = vector.load %arg4[%c0_66, %c0_67] : memref<3200x128xbf16, #tpu.memory_space<vmem>>, vector<3200x128xbf16>
    %cst_68 = arith.constant dense<0.000000e+00> : vector<8x128xf32>
    %527 = tpu.matmul %525, %526, %cst_68 {dimension_numbers = #tpu.dot_dimension_numbers<[1], [0], [0], [1], [0, 0, 1, 1], [], []>} : vector<8x3200xbf16>, vector<3200x128xbf16>, vector<8x128xf32> -> vector<8x128xf32>
    %c0_69 = arith.constant 0 : index
    %c0_70 = arith.constant 0 : index
    %528 = vector.load %arg5[%c0_69, %c0_70] : memref<1x128xf32, #tpu.memory_space<vmem>>, vector<1x128xf32>
    %529 = vector.broadcast %528 : vector<1x128xf32> to vector<8x128xf32>
    %530 = arith.addf %527, %529 : vector<8x128xf32>
    %cst_71 = arith.constant 0.000000e+00 : f32
    %531 = vector.broadcast %cst_71 : f32 to vector<8x128xf32>
    %532 = arith.maximumf %530, %531 : vector<8x128xf32>
    %533 = arith.truncf %532 : vector<8x128xf32> to vector<8x128xbf16>
    %c0_72 = arith.constant 0 : index
    %c0_73 = arith.constant 0 : index
    %534 = vector.load %arg6[%c0_72, %c0_73] : memref<128x128xbf16, #tpu.memory_space<vmem>>, vector<128x128xbf16>
    %cst_74 = arith.constant dense<0.000000e+00> : vector<8x128xf32>
    %535 = tpu.matmul %533, %534, %cst_74 {dimension_numbers = #tpu.dot_dimension_numbers<[1], [0], [0], [1], [0, 0, 1, 1], [], []>} : vector<8x128xbf16>, vector<128x128xbf16>, vector<8x128xf32> -> vector<8x128xf32>
    %c0_75 = arith.constant 0 : index
    %c0_76 = arith.constant 0 : index
    %536 = vector.load %arg7[%c0_75, %c0_76] : memref<1x128xf32, #tpu.memory_space<vmem>>, vector<1x128xf32>
    %537 = vector.broadcast %536 : vector<1x128xf32> to vector<8x128xf32>
    %538 = arith.addf %535, %537 : vector<8x128xf32>
    %cst_77 = arith.constant 0.000000e+00 : f32
    %539 = vector.broadcast %cst_77 : f32 to vector<8x128xf32>
    %540 = arith.maximumf %538, %539 : vector<8x128xf32>
    %c0_78 = arith.constant 0 : index
    %c0_79 = arith.constant 0 : index
    %541 = vector.load %arg10[%c0_78, %c0_79] : memref<8x128xf32, #tpu.memory_space<vmem>>, vector<8x128xf32>
    tpu.vector_store %arg10[%c0_78, %c0_79], %540 {strides = array<i32>} : memref<8x128xf32, #tpu.memory_space<vmem>>, vector<8x128xf32>,
    %542 = arith.truncf %540 : vector<8x128xf32> to vector<8x128xbf16>
    %c0_80 = arith.constant 0 : index
    %c0_81 = arith.constant 0 : index
    %543 = vector.load %arg8[%c0_80, %c0_81] : memref<128x128xbf16, #tpu.memory_space<vmem>>, vector<128x128xbf16>
    %cst_82 = arith.constant dense<0.000000e+00> : vector<8x128xf32>
    %544 = tpu.matmul %542, %543, %cst_82 {dimension_numbers = #tpu.dot_dimension_numbers<[1], [0], [0], [1], [0, 0, 1, 1], [], []>} : vector<8x128xbf16>, vector<128x128xbf16>, vector<8x128xf32> -> vector<8x128xf32>
    %c0_83 = arith.constant 0 : index
    %c0_84 = arith.constant 0 : index
    %545 = vector.load %arg9[%c0_83, %c0_84] : memref<1x128xf32, #tpu.memory_space<vmem>>, vector<1x128xf32>
    %546 = vector.broadcast %545 : vector<1x128xf32> to vector<8x128xf32>
    %547 = arith.addf %544, %546 : vector<8x128xf32>
    %c0_85 = arith.constant 0 : index
    %c0_86 = arith.constant 0 : index
    %548 = vector.load %arg11[%c0_85, %c0_86] : memref<8x128xf32, #tpu.memory_space<vmem>>, vector<8x128xf32>
    tpu.vector_store %arg11[%c0_85, %c0_86], %547 {strides = array<i32>} : memref<8x128xf32, #tpu.memory_space<vmem>>, vector<8x128xf32>,
    return
  }
}

</mosaic_0001>

<llo_original>
// kernel: lenet5_forward.2
$region0: #{lenet5_forward.2}
  #allocation0 [shape = 'u32[]', space=smem, size = 0x4, offset = 0x4, fixed_abs, tag = 'smem constant byte address 0x4 - core index']
  #allocation1 [shape = 'u32[144,128]{1,0:T(1,128)}', space=vmem, size = 0x12000, scoped, tag = 'internal scratch']
  %s0 = inlined_call_operand.vmem [shape: bf16[1568,32], index: 0, kind: input, shape index: {}]
  %s1 = inlined_call_operand.vmem [shape: bf16[32,128], index: 1, kind: input, shape index: {}]
  %s2 = inlined_call_operand.vmem [shape: f32[1,128], index: 2, kind: input, shape index: {}]
  %s3 = inlined_call_operand.vmem [shape: f32[1,128], index: 3, kind: input, shape index: {}]
  %s4 = inlined_call_operand.vmem [shape: bf16[392,128], index: 4, kind: output, shape index: {}]
  %s5 = sld [smem:[#allocation0]]
  $region26: #{lenet5_forward.2} parent=0
    _
  %s7 = ssub.s32 1, %s5
  %s8 = scalar_select 0, %s7, %s5
  // Predicated region
  $region2: #{lenet5_forward.2} parent=0 // pred_check
    _
  $region3: #{lenet5_forward.2} parent=0 // pred_check_branch
    %10 = sbr.rel (0) target = $region5
  $region4: #{lenet5_forward.2} parent=0 // pred_region
    _
  $region5: #{lenet5_forward.2} parent=0 // pred_fallthru
    _
  // Predicated region
  $region6: #{lenet5_forward.2} parent=0 // pred_check
    _
  $region7: #{lenet5_forward.2} parent=0 // pred_check_branch
    %12 = sbr.rel (0) target = $region9
  $region8: #{lenet5_forward.2} parent=0 // pred_region
    _
  $region9: #{lenet5_forward.2} parent=0 // pred_fallthru
    _
  // Predicated region
  $region10: #{lenet5_forward.2} parent=0 // pred_check
    _
  $region11: #{lenet5_forward.2} parent=0 // pred_check_branch
    %14 = sbr.rel (0) target = $region13
  $region12: #{lenet5_forward.2} parent=0 // pred_region
    _
  $region13: #{lenet5_forward.2} parent=0 // pred_fallthru
    _
  // Predicated region
  $region14: #{lenet5_forward.2} parent=0 // pred_check
    _
  $region15: #{lenet5_forward.2} parent=0 // pred_check_branch
    %16 = sbr.rel (0) target = $region17
  $region16: #{lenet5_forward.2} parent=0 // pred_region
    _
  $region17: #{lenet5_forward.2} parent=0 // pred_fallthru
    _
  %v18 = vld [vmem:[%s0] sm:$0xf]
  %v19 = vld [vmem:[%s0 + $0x4] sm:$0xf]
  %v20 = vld [vmem:[%s0 + $0x8] sm:$0xf]
  %v21 = vld [vmem:[%s0 + $0xc] sm:$0xf]
  %v22 = vld [vmem:[%s0 + $0x10] sm:$0xf]
  %v23 = vld [vmem:[%s0 + $0x14] sm:$0xf]
  %v24 = vld [vmem:[%s0 + $0x18] sm:$0xf]
  %v25 = vld [vmem:[%s0 + $0x1c] sm:$0xf]
  %v26 = vld [vmem:[%s0 + $0x20] sm:$0xf]
  %v27 = vld [vmem:[%s0 + $0x24] sm:$0xf]
  %v28 = vld [vmem:[%s0 + $0x28] sm:$0xf]
  %v29 = vld [vmem:[%s0 + $0x2c] sm:$0xf]
  %v30 = vld [vmem:[%s0 + $0x30] sm:$0xf]
  %v31 = vld [vmem:[%s0 + $0x34] sm:$0xf]
  %v32 = vld [vmem:[%s0 + $0x38] sm:$0xf]
  %v33 = vld [vmem:[%s0 + $0x3c] sm:$0xf]
  %v34 = vld [vmem:[%s0 + $0x40] sm:$0xf]
  %v35 = vld [vmem:[%s0 + $0x44] sm:$0xf]
  %v36 = vld [vmem:[%s0 + $0x48] sm:$0xf]
  %v37 = vld [vmem:[%s0 + $0x4c] sm:$0xf]
  %v38 = vld [vmem:[%s0 + $0x50] sm:$0xf]
  %v39 = vld [vmem:[%s0 + $0x54] sm:$0xf]
  %v40 = vld [vmem:[%s0 + $0x58] sm:$0xf]
  %v41 = vld [vmem:[%s0 + $0x5c] sm:$0xf]
  %v42 = vld [vmem:[%s0 + $0x60] sm:$0xf]
  %v43 = vld [vmem:[%s0 + $0x64] sm:$0xf]
  %v44 = vld [vmem:[%s0 + $0x68] sm:$0xf]
  %v45 = vld [vmem:[%s0 + $0x6c] sm:$0xf]
  %v46 = vld [vmem:[%s0 + $0x70] sm:$0xf]
  %v47 = vld [vmem:[%s0 + $0x74] sm:$0xf]
  %v48 = vld [vmem:[%s0 + $0x78] sm:$0xf]
  %v49 = vld [vmem:[%s0 + $0x7c] sm:$0xf]
  %v50 = vld [vmem:[%s0 + $0x80] sm:$0xf]
  %v51 = vld [vmem:[%s0 + $0x84] sm:$0xf]
  %v52 = vld [vmem:[%s0 + $0x88] sm:$0xf]
  %v53 = vld [vmem:[%s0 + $0x8c] sm:$0xf]
  %v54 = vld [vmem:[%s0 + $0x90] sm:$0xf]
  %v55 = vld [vmem:[%s0 + $0x94] sm:$0xf]
  %v56 = vld [vmem:[%s0 + $0x98] sm:$0xf]
  %v57 = vld [vmem:[%s0 + $0x9c] sm:$0xf]
  %v58 = vld [vmem:[%s0 + $0xa0] sm:$0xf]
  %v59 = vld [vmem:[%s0 + $0xa4] sm:$0xf]
  %v60 = vld [vmem:[%s0 + $0xa8] sm:$0xf]
  %v61 = vld [vmem:[%s0 + $0xac] sm:$0xf]
  %v62 = vld [vmem:[%s0 + $0xb0] sm:$0xf]
  %v63 = vld [vmem:[%s0 + $0xb4] sm:$0xf]
  %v64 = vld [vmem:[%s0 + $0xb8] sm:$0xf]
  %v65 = vld [vmem:[%s0 + $0xbc] sm:$0xf]
  %v66 = vld [vmem:[%s0 + $0xc0] sm:$0xf]
  %v67 = vld [vmem:[%s0 + $0xc4] sm:$0xf]
  %v68 = vld [vmem:[%s0 + $0xc8] sm:$0xf]
  %v69 = vld [vmem:[%s0 + $0xcc] sm:$0xf]
  %v70 = vld [vmem:[%s0 + $0xd0] sm:$0xf]
  %v71 = vld [vmem:[%s0 + $0xd4] sm:$0xf]
  %v72 = vld [vmem:[%s0 + $0xd8] sm:$0xf]
  %v73 = vld [vmem:[%s0 + $0xdc] sm:$0xf]
  %v74 = vld [vmem:[%s0 + $0xe0] sm:$0xf]
  %v75 = vld [vmem:[%s0 + $0xe4] sm:$0xf]
  %v76 = vld [vmem:[%s0 + $0xe8] sm:$0xf]
  %v77 = vld [vmem:[%s0 + $0xec] sm:$0xf]
  %v78 = vld [vmem:[%s0 + $0xf0] sm:$0xf]
  %v79 = vld [vmem:[%s0 + $0xf4] sm:$0xf]
  %v80 = vld [vmem:[%s0 + $0xf8] sm:$0xf]
  %v81 = vld [vmem:[%s0 + $0xfc] sm:$0xf]
  %v82 = vld [vmem:[%s0 + $0x100] sm:$0xf]
  %v83 = vld [vmem:[%s0 + $0x104] sm:$0xf]
  %v84 = vld [vmem:[%s0 + $0x108] sm:$0xf]
  %v85 = vld [vmem:[%s0 + $0x10c] sm:$0xf]
  %v86 = vld [vmem:[%s0 + $0x110] sm:$0xf]
  %v87 = vld [vmem:[%s0 + $0x114] sm:$0xf]
  %v88 = vld [vmem:[%s0 + $0x118] sm:$0xf]
  %v89 = vld [vmem:[%s0 + $0x11c] sm:$0xf]
  %v90 = vld [vmem:[%s0 + $0x120] sm:$0xf]
  %v91 = vld [vmem:[%s0 + $0x124] sm:$0xf]
  %v92 = vld [vmem:[%s0 + $0x128] sm:$0xf]
  %v93 = vld [vmem:[%s0 + $0x12c] sm:$0xf]
  %v94 = vld [vmem:[%s0 + $0x130] sm:$0xf]
  %v95 = vld [vmem:[%s0 + $0x134] sm:$0xf]
  %v96 = vld [vmem:[%s0 + $0x138] sm:$0xf]
  %v97 = vld [vmem:[%s0 + $0x13c] sm:$0xf]
  %v98 = vld [vmem:[%s0 + $0x140] sm:$0xf]
  %v99 = vld [vmem:[%s0 + $0x144] sm:$0xf]
  %v100 = vld [vmem:[%s0 + $0x148] sm:$0xf]
  %v101 = vld [vmem:[%s0 + $0x14c] sm:$0xf]
  %v102 = vld [vmem:[%s0 + $0x150] sm:$0xf]
  %v103 = vld [vmem:[%s0 + $0x154] sm:$0xf]
  %v104 = vld [vmem:[%s0 + $0x158] sm:$0xf]
  %v105 = vld [vmem:[%s0 + $0x15c] sm:$0xf]
  %v106 = vld [vmem:[%s0 + $0x160] sm:$0xf]
  %v107 = vld [vmem:[%s0 + $0x164] sm:$0xf]
  %v108 = vld [vmem:[%s0 + $0x168] sm:$0xf]
  %v109 = vld [vmem:[%s0 + $0x16c] sm:$0xf]
  %v110 = vld [vmem:[%s0 + $0x170] sm:$0xf]
  %v111 = vld [vmem:[%s0 + $0x174] sm:$0xf]
  %v112 = vld [vmem:[%s0 + $0x178] sm:$0xf]
  %v113 = vld [vmem:[%s0 + $0x17c] sm:$0xf]
  %v114 = vld [vmem:[%s0 + $0x180] sm:$0xf]
  %v115 = vld [vmem:[%s0 + $0x184] sm:$0xf]
  %v116 = vld [vmem:[%s0 + $0x188] sm:$0xf]
  %v117 = vld [vmem:[%s0 + $0x18c] sm:$0xf]
  %v118 = vld [vmem:[%s0 + $0x190] sm:$0xf]
  %v119 = vld [vmem:[%s0 + $0x194] sm:$0xf]
  %v120 = vld [vmem:[%s0 + $0x198] sm:$0xf]
  %v121 = vld [vmem:[%s0 + $0x19c] sm:$0xf]
  %v122 = vld [vmem:[%s0 + $0x1a0] sm:$0xf]
  %v123 = vld [vmem:[%s0 + $0x1a4] sm:$0xf]
  %v124 = vld [vmem:[%s0 + $0x1a8] sm:$0xf]
  %v125 = vld [vmem:[%s0 + $0x1ac] sm:$0xf]
  %v126 = vld [vmem:[%s0 + $0x1b0] sm:$0xf]
  %v127 = vld [vmem:[%s0 + $0x1b4] sm:$0xf]
  %v128 = vld [vmem:[%s0 + $0x1b8] sm:$0xf]
  %v129 = vld [vmem:[%s0 + $0x1bc] sm:$0xf]
  %v130 = vld [vmem:[%s0 + $0x1c0] sm:$0xf]
  %v131 = vld [vmem:[%s0 + $0x1c4] sm:$0xf]
  %v132 = vld [vmem:[%s0 + $0x1c8] sm:$0xf]
  %v133 = vld [vmem:[%s0 + $0x1cc] sm:$0xf]
  %v134 = vld [vmem:[%s0 + $0x1d0] sm:$0xf]
  %v135 = vld [vmem:[%s0 + $0x1d4] sm:$0xf]
  %v136 = vld [vmem:[%s0 + $0x1d8] sm:$0xf]
  %v137 = vld [vmem:[%s0 + $0x1dc] sm:$0xf]
  %v138 = vld [vmem:[%s0 + $0x1e0] sm:$0xf]
  %v139 = vld [vmem:[%s0 + $0x1e4] sm:$0xf]
  %v140 = vld [vmem:[%s0 + $0x1e8] sm:$0xf]
  %v141 = vld [vmem:[%s0 + $0x1ec] sm:$0xf]
  %v142 = vld [vmem:[%s0 + $0x1f0] sm:$0xf]
  %v143 = vld [vmem:[%s0 + $0x1f4] sm:$0xf]
  %v144 = vld [vmem:[%s0 + $0x1f8] sm:$0xf]
  %v145 = vld [vmem:[%s0 + $0x1fc] sm:$0xf]
  %v146 = vld [vmem:[%s0 + $0x200] sm:$0xf]
  %v147 = vld [vmem:[%s0 + $0x204] sm:$0xf]
  %v148 = vld [vmem:[%s0 + $0x208] sm:$0xf]
  %v149 = vld [vmem:[%s0 + $0x20c] sm:$0xf]
  %v150 = vld [vmem:[%s0 + $0x210] sm:$0xf]
  %v151 = vld [vmem:[%s0 + $0x214] sm:$0xf]
  %v152 = vld [vmem:[%s0 + $0x218] sm:$0xf]
  %v153 = vld [vmem:[%s0 + $0x21c] sm:$0xf]
  %v154 = vld [vmem:[%s0 + $0x220] sm:$0xf]
  %v155 = vld [vmem:[%s0 + $0x224] sm:$0xf]
  %v156 = vld [vmem:[%s0 + $0x228] sm:$0xf]
  %v157 = vld [vmem:[%s0 + $0x22c] sm:$0xf]
  %v158 = vld [vmem:[%s0 + $0x230] sm:$0xf]
  %v159 = vld [vmem:[%s0 + $0x234] sm:$0xf]
  %v160 = vld [vmem:[%s0 + $0x238] sm:$0xf]
  %v161 = vld [vmem:[%s0 + $0x23c] sm:$0xf]
  %v162 = vld [vmem:[%s0 + $0x240] sm:$0xf]
  %v163 = vld [vmem:[%s0 + $0x244] sm:$0xf]
  %v164 = vld [vmem:[%s0 + $0x248] sm:$0xf]
  %v165 = vld [vmem:[%s0 + $0x24c] sm:$0xf]
  %v166 = vld [vmem:[%s0 + $0x250] sm:$0xf]
  %v167 = vld [vmem:[%s0 + $0x254] sm:$0xf]
  %v168 = vld [vmem:[%s0 + $0x258] sm:$0xf]
  %v169 = vld [vmem:[%s0 + $0x25c] sm:$0xf]
  %v170 = vld [vmem:[%s0 + $0x260] sm:$0xf]
  %v171 = vld [vmem:[%s0 + $0x264] sm:$0xf]
  %v172 = vld [vmem:[%s0 + $0x268] sm:$0xf]
  %v173 = vld [vmem:[%s0 + $0x26c] sm:$0xf]
  %v174 = vld [vmem:[%s0 + $0x270] sm:$0xf]
  %v175 = vld [vmem:[%s0 + $0x274] sm:$0xf]
  %v176 = vld [vmem:[%s0 + $0x278] sm:$0xf]
  %v177 = vld [vmem:[%s0 + $0x27c] sm:$0xf]
  %v178 = vld [vmem:[%s0 + $0x280] sm:$0xf]
  %v179 = vld [vmem:[%s0 + $0x284] sm:$0xf]
  %v180 = vld [vmem:[%s0 + $0x288] sm:$0xf]
  %v181 = vld [vmem:[%s0 + $0x28c] sm:$0xf]
  %v182 = vld [vmem:[%s0 + $0x290] sm:$0xf]
  %v183 = vld [vmem:[%s0 + $0x294] sm:$0xf]
  %v184 = vld [vmem:[%s0 + $0x298] sm:$0xf]
  %v185 = vld [vmem:[%s0 + $0x29c] sm:$0xf]
  %v186 = vld [vmem:[%s0 + $0x2a0] sm:$0xf]
  %v187 = vld [vmem:[%s0 + $0x2a4] sm:$0xf]
  %v188 = vld [vmem:[%s0 + $0x2a8] sm:$0xf]
  %v189 = vld [vmem:[%s0 + $0x2ac] sm:$0xf]
  %v190 = vld [vmem:[%s0 + $0x2b0] sm:$0xf]
  %v191 = vld [vmem:[%s0 + $0x2b4] sm:$0xf]
  %v192 = vld [vmem:[%s0 + $0x2b8] sm:$0xf]
  %v193 = vld [vmem:[%s0 + $0x2bc] sm:$0xf]
  %v194 = vld [vmem:[%s0 + $0x2c0] sm:$0xf]
  %v195 = vld [vmem:[%s0 + $0x2c4] sm:$0xf]
  %v196 = vld [vmem:[%s0 + $0x2c8] sm:$0xf]
  %v197 = vld [vmem:[%s0 + $0x2cc] sm:$0xf]
  %v198 = vld [vmem:[%s0 + $0x2d0] sm:$0xf]
  %v199 = vld [vmem:[%s0 + $0x2d4] sm:$0xf]
  %v200 = vld [vmem:[%s0 + $0x2d8] sm:$0xf]
  %v201 = vld [vmem:[%s0 + $0x2dc] sm:$0xf]
  %v202 = vld [vmem:[%s0 + $0x2e0] sm:$0xf]
  %v203 = vld [vmem:[%s0 + $0x2e4] sm:$0xf]
  %v204 = vld [vmem:[%s0 + $0x2e8] sm:$0xf]
  %v205 = vld [vmem:[%s0 + $0x2ec] sm:$0xf]
  %v206 = vld [vmem:[%s0 + $0x2f0] sm:$0xf]
  %v207 = vld [vmem:[%s0 + $0x2f4] sm:$0xf]
  %v208 = vld [vmem:[%s0 + $0x2f8] sm:$0xf]
  %v209 = vld [vmem:[%s0 + $0x2fc] sm:$0xf]
  %v210 = vld [vmem:[%s0 + $0x300] sm:$0xf]
  %v211 = vld [vmem:[%s0 + $0x304] sm:$0xf]
  %v212 = vld [vmem:[%s0 + $0x308] sm:$0xf]
  %v213 = vld [vmem:[%s0 + $0x30c] sm:$0xf]
  %v214 = vld [vmem:[%s1] sm:$0xf]
  %v215 = vld [vmem:[%s1 + $0x4] sm:$0xf]
  %v216 = vld [vmem:[%s1 + $0x8] sm:$0xf]
  %v217 = vld [vmem:[%s1 + $0xc] sm:$0xf]
  %v414 = vunpack.c.l.b16 %v18
  %v415 = vunpack.c.l.b16 %v19
  %v416 = vunpack.c.l.b16 %v20
  %v417 = vunpack.c.l.b16 %v21
  %v418 = vunpack.c.l.b16 %v22
  %v419 = vunpack.c.l.b16 %v23
  %v420 = vunpack.c.l.b16 %v24
  %v421 = vunpack.c.l.b16 %v25
  %v422 = vunpack.c.l.b16 %v26
  %v423 = vunpack.c.l.b16 %v27
  %v424 = vunpack.c.l.b16 %v28
  %v425 = vunpack.c.l.b16 %v29
  %v426 = vunpack.c.l.b16 %v30
  %v427 = vunpack.c.l.b16 %v31
  %v428 = vunpack.c.l.b16 %v32
  %v429 = vunpack.c.l.b16 %v33
  %v430 = vunpack.c.l.b16 %v34
  %v431 = vunpack.c.l.b16 %v35
  %v432 = vunpack.c.l.b16 %v36
  %v433 = vunpack.c.l.b16 %v37
  %v434 = vunpack.c.l.b16 %v38
  %v435 = vunpack.c.l.b16 %v39
  %v436 = vunpack.c.l.b16 %v40
  %v437 = vunpack.c.l.b16 %v41
  %v438 = vunpack.c.l.b16 %v42
  %v439 = vunpack.c.l.b16 %v43
  %v440 = vunpack.c.l.b16 %v44
  %v441 = vunpack.c.l.b16 %v45
  %v442 = vunpack.c.l.b16 %v46
  %v443 = vunpack.c.l.b16 %v47
  %v444 = vunpack.c.l.b16 %v48
  %v445 = vunpack.c.l.b16 %v49
  %v446 = vunpack.c.l.b16 %v50
  %v447 = vunpack.c.l.b16 %v51
  %v448 = vunpack.c.l.b16 %v52
  %v449 = vunpack.c.l.b16 %v53
  %v450 = vunpack.c.l.b16 %v54
  %v451 = vunpack.c.l.b16 %v55
  %v452 = vunpack.c.l.b16 %v56
  %v453 = vunpack.c.l.b16 %v57
  %v454 = vunpack.c.l.b16 %v58
  %v455 = vunpack.c.l.b16 %v59
  %v456 = vunpack.c.l.b16 %v60
  %v457 = vunpack.c.l.b16 %v61
  %v458 = vunpack.c.l.b16 %v62
  %v459 = vunpack.c.l.b16 %v63
  %v460 = vunpack.c.l.b16 %v64
  %v461 = vunpack.c.l.b16 %v65
  %v462 = vunpack.c.l.b16 %v66
  %v463 = vunpack.c.l.b16 %v67
  %v464 = vunpack.c.l.b16 %v68
  %v465 = vunpack.c.l.b16 %v69
  %v466 = vunpack.c.l.b16 %v70
  %v467 = vunpack.c.l.b16 %v71
  %v468 = vunpack.c.l.b16 %v72
  %v469 = vunpack.c.l.b16 %v73
  %v470 = vunpack.c.l.b16 %v74
  %v471 = vunpack.c.l.b16 %v75
  %v472 = vunpack.c.l.b16 %v76
  %v473 = vunpack.c.l.b16 %v77
  %v474 = vunpack.c.l.b16 %v78
  %v475 = vunpack.c.l.b16 %v79
  %v476 = vunpack.c.l.b16 %v80
  %v477 = vunpack.c.l.b16 %v81
  %v478 = vunpack.c.l.b16 %v82
  %v479 = vunpack.c.l.b16 %v83
  %v480 = vunpack.c.l.b16 %v84
  %v481 = vunpack.c.l.b16 %v85
  %v482 = vunpack.c.l.b16 %v86
  %v483 = vunpack.c.l.b16 %v87
  %v484 = vunpack.c.l.b16 %v88
  %v485 = vunpack.c.l.b16 %v89
  %v486 = vunpack.c.l.b16 %v90
  %v487 = vunpack.c.l.b16 %v91
  %v488 = vunpack.c.l.b16 %v92
  %v489 = vunpack.c.l.b16 %v93
  %v490 = vunpack.c.l.b16 %v94
  %v491 = vunpack.c.l.b16 %v95
  %v492 = vunpack.c.l.b16 %v96
  %v493 = vunpack.c.l.b16 %v97
  %v494 = vunpack.c.l.b16 %v98
  %v495 = vunpack.c.l.b16 %v99
  %v496 = vunpack.c.l.b16 %v100
  %v497 = vunpack.c.l.b16 %v101
  %v498 = vunpack.c.l.b16 %v102
  %v499 = vunpack.c.l.b16 %v103
  %v500 = vunpack.c.l.b16 %v104
  %v501 = vunpack.c.l.b16 %v105
  %v502 = vunpack.c.l.b16 %v106
  %v503 = vunpack.c.l.b16 %v107
  %v504 = vunpack.c.l.b16 %v108
  %v505 = vunpack.c.l.b16 %v109
  %v506 = vunpack.c.l.b16 %v110
  %v507 = vunpack.c.l.b16 %v111
  %v508 = vunpack.c.l.b16 %v112
  %v509 = vunpack.c.l.b16 %v113
  %v510 = vunpack.c.l.b16 %v114
  %v511 = vunpack.c.l.b16 %v115
  %v512 = vunpack.c.l.b16 %v116
  %v513 = vunpack.c.l.b16 %v117
  %v514 = vunpack.c.l.b16 %v118
  %v515 = vunpack.c.l.b16 %v119
  %v516 = vunpack.c.l.b16 %v120
  %v517 = vunpack.c.l.b16 %v121
  %v518 = vunpack.c.l.b16 %v122
  %v519 = vunpack.c.l.b16 %v123
  %v520 = vunpack.c.l.b16 %v124
  %v521 = vunpack.c.l.b16 %v125
  %v522 = vunpack.c.l.b16 %v126
  %v523 = vunpack.c.l.b16 %v127
  %v524 = vunpack.c.l.b16 %v128
  %v525 = vunpack.c.l.b16 %v129
  %v526 = vunpack.c.l.b16 %v130
  %v527 = vunpack.c.l.b16 %v131
  %v528 = vunpack.c.l.b16 %v132
  %v529 = vunpack.c.l.b16 %v133
  %v530 = vunpack.c.l.b16 %v134
  %v531 = vunpack.c.l.b16 %v135
  %v532 = vunpack.c.l.b16 %v136
  %v533 = vunpack.c.l.b16 %v137
  %v534 = vunpack.c.l.b16 %v138
  %v535 = vunpack.c.l.b16 %v139
  %v536 = vunpack.c.l.b16 %v140
  %v537 = vunpack.c.l.b16 %v141
  %v538 = vunpack.c.l.b16 %v142
  %v539 = vunpack.c.l.b16 %v143
  %v540 = vunpack.c.l.b16 %v144
  %v541 = vunpack.c.l.b16 %v145
  %v542 = vunpack.c.l.b16 %v146
  %v543 = vunpack.c.l.b16 %v147
  %v544 = vunpack.c.l.b16 %v148
  %v545 = vunpack.c.l.b16 %v149
  %v546 = vunpack.c.l.b16 %v150
  %v547 = vunpack.c.l.b16 %v151
  %v548 = vunpack.c.l.b16 %v152
  %v549 = vunpack.c.l.b16 %v153
  %v550 = vunpack.c.l.b16 %v154
  %v551 = vunpack.c.l.b16 %v155
  %v552 = vunpack.c.l.b16 %v156
  %v553 = vunpack.c.l.b16 %v157
  %v554 = vunpack.c.l.b16 %v158
  %v555 = vunpack.c.l.b16 %v159
  %v556 = vunpack.c.l.b16 %v160
  %v557 = vunpack.c.l.b16 %v161
  %v558 = vunpack.c.l.b16 %v162
  %v559 = vunpack.c.l.b16 %v163
  %v560 = vunpack.c.l.b16 %v164
  %v561 = vunpack.c.l.b16 %v165
  %v562 = vunpack.c.l.b16 %v166
  %v563 = vunpack.c.l.b16 %v167
  %v564 = vunpack.c.l.b16 %v168
  %v565 = vunpack.c.l.b16 %v169
  %v566 = vunpack.c.l.b16 %v170
  %v567 = vunpack.c.l.b16 %v171
  %v568 = vunpack.c.l.b16 %v172
  %v569 = vunpack.c.l.b16 %v173
  %v570 = vunpack.c.l.b16 %v174
  %v571 = vunpack.c.l.b16 %v175
  %v572 = vunpack.c.l.b16 %v176
  %v573 = vunpack.c.l.b16 %v177
  %v574 = vunpack.c.l.b16 %v178
  %v575 = vunpack.c.l.b16 %v179
  %v576 = vunpack.c.l.b16 %v180
  %v577 = vunpack.c.l.b16 %v181
  %v578 = vunpack.c.l.b16 %v182
  %v579 = vunpack.c.l.b16 %v183
  %v580 = vunpack.c.l.b16 %v184
  %v581 = vunpack.c.l.b16 %v185
  %v582 = vunpack.c.l.b16 %v186
  %v583 = vunpack.c.l.b16 %v187
  %v584 = vunpack.c.l.b16 %v188
  %v585 = vunpack.c.l.b16 %v189
  %v586 = vunpack.c.l.b16 %v190
  %v587 = vunpack.c.l.b16 %v191
  %v588 = vunpack.c.l.b16 %v192
  %v589 = vunpack.c.l.b16 %v193
  %v590 = vunpack.c.l.b16 %v194
  %v591 = vunpack.c.l.b16 %v195
  %v592 = vunpack.c.l.b16 %v196
  %v593 = vunpack.c.l.b16 %v197
  %v594 = vunpack.c.l.b16 %v198
  %v595 = vunpack.c.l.b16 %v199
  %v596 = vunpack.c.l.b16 %v200
  %v597 = vunpack.c.l.b16 %v201
  %v598 = vunpack.c.l.b16 %v202
  %v599 = vunpack.c.l.b16 %v203
  %v600 = vunpack.c.l.b16 %v204
  %v601 = vunpack.c.l.b16 %v205
  %v602 = vunpack.c.l.b16 %v206
  %v603 = vunpack.c.l.b16 %v207
  %v604 = vunpack.c.l.b16 %v208
  %v605 = vunpack.c.l.b16 %v209
  %v606 = vunpack.c.l.b16 %v210
  %v607 = vunpack.c.l.b16 %v211
  %v608 = vunpack.c.l.b16 %v212
  %v609 = vunpack.c.l.b16 %v213
  %v610 = vpack.c.b16 %v415, %v414
  %v611 = vpack.c.b16 %v417, %v416
  %v612 = vpack.c.b16 %v419, %v418
  %v613 = vpack.c.b16 %v421, %v420
  %v614 = vpack.c.b16 %v423, %v422
  %v615 = vpack.c.b16 %v425, %v424
  %v616 = vpack.c.b16 %v427, %v426
  %v617 = vpack.c.b16 %v429, %v428
  %v618 = vpack.c.b16 %v431, %v430
  %v619 = vpack.c.b16 %v433, %v432
  %v620 = vpack.c.b16 %v435, %v434
  %v621 = vpack.c.b16 %v437, %v436
  %v622 = vpack.c.b16 %v439, %v438
  %v623 = vpack.c.b16 %v441, %v440
  %v624 = vpack.c.b16 %v443, %v442
  %v625 = vpack.c.b16 %v445, %v444
  %v626 = vpack.c.b16 %v447, %v446
  %v627 = vpack.c.b16 %v449, %v448
  %v628 = vpack.c.b16 %v451, %v450
  %v629 = vpack.c.b16 %v453, %v452
  %v630 = vpack.c.b16 %v455, %v454
  %v631 = vpack.c.b16 %v457, %v456
  %v632 = vpack.c.b16 %v459, %v458
  %v633 = vpack.c.b16 %v461, %v460
  %v634 = vpack.c.b16 %v463, %v462
  %v635 = vpack.c.b16 %v465, %v464
  %v636 = vpack.c.b16 %v467, %v466
  %v637 = vpack.c.b16 %v469, %v468
  %v638 = vpack.c.b16 %v471, %v470
  %v639 = vpack.c.b16 %v473, %v472
  %v640 = vpack.c.b16 %v475, %v474
  %v641 = vpack.c.b16 %v477, %v476
  %v642 = vpack.c.b16 %v479, %v478
  %v643 = vpack.c.b16 %v481, %v480
  %v644 = vpack.c.b16 %v483, %v482
  %v645 = vpack.c.b16 %v485, %v484
  %v646 = vpack.c.b16 %v487, %v486
  %v647 = vpack.c.b16 %v489, %v488
  %v648 = vpack.c.b16 %v491, %v490
  %v649 = vpack.c.b16 %v493, %v492
  %v650 = vpack.c.b16 %v495, %v494
  %v651 = vpack.c.b16 %v497, %v496
  %v652 = vpack.c.b16 %v499, %v498
  %v653 = vpack.c.b16 %v501, %v500
  %v654 = vpack.c.b16 %v503, %v502
  %v655 = vpack.c.b16 %v505, %v504
  %v656 = vpack.c.b16 %v507, %v506
  %v657 = vpack.c.b16 %v509, %v508
  %v658 = vpack.c.b16 %v511, %v510
  %v659 = vpack.c.b16 %v513, %v512
  %v660 = vpack.c.b16 %v515, %v514
  %v661 = vpack.c.b16 %v517, %v516
  %v662 = vpack.c.b16 %v519, %v518
  %v663 = vpack.c.b16 %v521, %v520
  %v664 = vpack.c.b16 %v523, %v522
  %v665 = vpack.c.b16 %v525, %v524
  %v666 = vpack.c.b16 %v527, %v526
  %v667 = vpack.c.b16 %v529, %v528
  %v668 = vpack.c.b16 %v531, %v530
  %v669 = vpack.c.b16 %v533, %v532
  %v670 = vpack.c.b16 %v535, %v534
  %v671 = vpack.c.b16 %v537, %v536
  %v672 = vpack.c.b16 %v539, %v538
  %v673 = vpack.c.b16 %v541, %v540
  %v674 = vpack.c.b16 %v543, %v542
  %v675 = vpack.c.b16 %v545, %v544
  %v676 = vpack.c.b16 %v547, %v546
  %v677 = vpack.c.b16 %v549, %v548
  %v678 = vpack.c.b16 %v551, %v550
  %v679 = vpack.c.b16 %v553, %v552
  %v680 = vpack.c.b16 %v555, %v554
  %v681 = vpack.c.b16 %v557, %v556
  %v682 = vpack.c.b16 %v559, %v558
  %v683 = vpack.c.b16 %v561, %v560
  %v684 = vpack.c.b16 %v563, %v562
  %v685 = vpack.c.b16 %v565, %v564
  %v686 = vpack.c.b16 %v567, %v566
  %v687 = vpack.c.b16 %v569, %v568
  %v688 = vpack.c.b16 %v571, %v570
  %v689 = vpack.c.b16 %v573, %v572
  %v690 = vpack.c.b16 %v575, %v574
  %v691 = vpack.c.b16 %v577, %v576
  %v692 = vpack.c.b16 %v579, %v578
  %v693 = vpack.c.b16 %v581, %v580
  %v694 = vpack.c.b16 %v583, %v582
  %v695 = vpack.c.b16 %v585, %v584
  %v696 = vpack.c.b16 %v587, %v586
  %v697 = vpack.c.b16 %v589, %v588
  %v698 = vpack.c.b16 %v591, %v590
  %v699 = vpack.c.b16 %v593, %v592
  %v700 = vpack.c.b16 %v595, %v594
  %v701 = vpack.c.b16 %v597, %v596
  %v702 = vpack.c.b16 %v599, %v598
  %v703 = vpack.c.b16 %v601, %v600
  %v704 = vpack.c.b16 %v603, %v602
  %v705 = vpack.c.b16 %v605, %v604
  %v706 = vpack.c.b16 %v607, %v606
  %v707 = vpack.c.b16 %v609, %v608
  %v712 = vunpack.c.l.b16 %v214
  %v713 = vunpack.c.l.b16 %v215
  %v714 = vunpack.c.l.b16 %v216
  %v715 = vunpack.c.l.b16 %v217
  %v716 = vpack.c.b16 %v713, %v712
  %v717 = vpack.c.b16 %v715, %v714
  %vm720 = vcmask 261120
  %v722 = vsel %vm720, %v610, 0
  %v725 = vsel %vm720, %v611, 0
  %v728 = vsel %vm720, %v612, 0
  %v731 = vsel %vm720, %v613, 0
  %v734 = vsel %vm720, %v614, 0
  %v737 = vsel %vm720, %v615, 0
  %v740 = vsel %vm720, %v616, 0
  %v743 = vsel %vm720, %v617, 0
  %v746 = vsel %vm720, %v618, 0
  %v749 = vsel %vm720, %v619, 0
  %v752 = vsel %vm720, %v620, 0
  %v755 = vsel %vm720, %v621, 0
  %v758 = vsel %vm720, %v622, 0
  %v761 = vsel %vm720, %v623, 0
  %v764 = vsel %vm720, %v624, 0
  %v767 = vsel %vm720, %v625, 0
  %v770 = vsel %vm720, %v626, 0
  %v773 = vsel %vm720, %v627, 0
  %v776 = vsel %vm720, %v628, 0
  %v779 = vsel %vm720, %v629, 0
  %v782 = vsel %vm720, %v630, 0
  %v785 = vsel %vm720, %v631, 0
  %v788 = vsel %vm720, %v632, 0
  %v791 = vsel %vm720, %v633, 0
  %v794 = vsel %vm720, %v634, 0
  %v797 = vsel %vm720, %v635, 0
  %v800 = vsel %vm720, %v636, 0
  %v803 = vsel %vm720, %v637, 0
  %v806 = vsel %vm720, %v638, 0
  %v809 = vsel %vm720, %v639, 0
  %v812 = vsel %vm720, %v640, 0
  %v815 = vsel %vm720, %v641, 0
  %v818 = vsel %vm720, %v642, 0
  %v821 = vsel %vm720, %v643, 0
  %v824 = vsel %vm720, %v644, 0
  %v827 = vsel %vm720, %v645, 0
  %v830 = vsel %vm720, %v646, 0
  %v833 = vsel %vm720, %v647, 0
  %v836 = vsel %vm720, %v648, 0
  %v839 = vsel %vm720, %v649, 0
  %v842 = vsel %vm720, %v650, 0
  %v845 = vsel %vm720, %v651, 0
  %v848 = vsel %vm720, %v652, 0
  %v851 = vsel %vm720, %v653, 0
  %v854 = vsel %vm720, %v654, 0
  %v857 = vsel %vm720, %v655, 0
  %v860 = vsel %vm720, %v656, 0
  %v863 = vsel %vm720, %v657, 0
  %v866 = vsel %vm720, %v658, 0
  %v869 = vsel %vm720, %v659, 0
  %v872 = vsel %vm720, %v660, 0
  %v875 = vsel %vm720, %v661, 0
  %v878 = vsel %vm720, %v662, 0
  %v881 = vsel %vm720, %v663, 0
  %v884 = vsel %vm720, %v664, 0
  %v887 = vsel %vm720, %v665, 0
  %v890 = vsel %vm720, %v666, 0
  %v893 = vsel %vm720, %v667, 0
  %v896 = vsel %vm720, %v668, 0
  %v899 = vsel %vm720, %v669, 0
  %v902 = vsel %vm720, %v670, 0
  %v905 = vsel %vm720, %v671, 0
  %v908 = vsel %vm720, %v672, 0
  %v911 = vsel %vm720, %v673, 0
  %v914 = vsel %vm720, %v674, 0
  %v917 = vsel %vm720, %v675, 0
  %v920 = vsel %vm720, %v676, 0
  %v923 = vsel %vm720, %v677, 0
  %v926 = vsel %vm720, %v678, 0
  %v929 = vsel %vm720, %v679, 0
  %v932 = vsel %vm720, %v680, 0
  %v935 = vsel %vm720, %v681, 0
  %v938 = vsel %vm720, %v682, 0
  %v941 = vsel %vm720, %v683, 0
  %v944 = vsel %vm720, %v684, 0
  %v947 = vsel %vm720, %v685, 0
  %v950 = vsel %vm720, %v686, 0
  %v953 = vsel %vm720, %v687, 0
  %v956 = vsel %vm720, %v688, 0
  %v959 = vsel %vm720, %v689, 0
  %v962 = vsel %vm720, %v690, 0
  %v965 = vsel %vm720, %v691, 0
  %v968 = vsel %vm720, %v692, 0
  %v971 = vsel %vm720, %v693, 0
  %v974 = vsel %vm720, %v694, 0
  %v977 = vsel %vm720, %v695, 0
  %v980 = vsel %vm720, %v696, 0
  %v983 = vsel %vm720, %v697, 0
  %v986 = vsel %vm720, %v698, 0
  %v989 = vsel %vm720, %v699, 0
  %v992 = vsel %vm720, %v700, 0
  %v995 = vsel %vm720, %v701, 0
  %v998 = vsel %vm720, %v702, 0
  %v1001 = vsel %vm720, %v703, 0
  %v1004 = vsel %vm720, %v704, 0
  %v1007 = vsel %vm720, %v705, 0
  %v1010 = vsel %vm720, %v706, 0
  %v1013 = vsel %vm720, %v707, 0
  %1015 = vmatprep.subr.bf16.mxu0 0
  %1016 = vmatpush1.bf16.msra.mxu0 0
  %1017 = vmatprep.subr.bf16.mxu0 0
  %1018 = vmatpush1.bf16.msra.mxu0 0
  %1019 = vmatprep.subr.bf16.mxu0 0
  %1020 = vmatpush1.bf16.msra.mxu0 0
  %1021 = vmatprep.subr.bf16.mxu0 0
  %1022 = vmatpush1.bf16.msra.mxu0 0
  %1023 = vmatprep.subr.bf16.mxu0 0
  %1024 = vmatpush1.bf16.msra.mxu0 0
  %1025 = vmatprep.subr.bf16.mxu0 0
  %1026 = vmatpush1.bf16.msra.mxu0 0
  %1027 = vmatprep.subr.bf16.mxu0 0
  %1028 = vmatpush1.bf16.msra.mxu0 %v717
  %1029 = vmatprep.subr.bf16.mxu0 0
  %1030 = vmatpush1.bf16.msra.mxu0 %v716
  %1031 = vmatprep.subr.bf16.mxu0 0
  %1032 = vmatpush2.bf16.msra.mxu0 0
  %1033 = vmatprep.subr.bf16.mxu0 0
  %1034 = vmatpush2.bf16.msra.mxu0 0
  %1035 = vmatprep.subr.bf16.mxu0 0
  %1036 = vmatpush2.bf16.msra.mxu0 0
  %1037 = vmatprep.subr.bf16.mxu0 0
  %1038 = vmatpush2.bf16.msra.mxu0 0
  %1039 = vmatprep.subr.bf16.mxu0 0
  %1040 = vmatpush2.bf16.msra.mxu0 0
  %1041 = vmatprep.subr.bf16.mxu0 0
  %1042 = vmatpush2.bf16.msra.mxu0 0
  %1043 = vmatprep.subr.bf16.mxu0 0
  %1044 = vmatpush2.bf16.msra.mxu0 0
  %1045 = vmatprep.subr.bf16.mxu0 0
  %1046 = vmatpush2.bf16.msra.mxu0 0
  %1047 = vmatprep.mubr.bf16.mxu0 0
  %1048 = vmatmul.mubr.bf16.gmra.mxu0 %v722
  %v1049 = vpop.f32.mrf.mxu0
  %v1050 = vadd.f32 0.0, %v1049
  %v1051 = vpop.f32.mrf.mxu0
  %v1052 = vpop.f32.mrf.mxu0
  %v1053 = vadd.f32 0.0, %v1052
  %v1054 = vpop.f32.mrf.mxu0
  %1055 = vmatprep.mubr.bf16.mxu0 0
  %1056 = vmatmul.mubr.bf16.gmra.mxu0 %v725
  %v1057 = vpop.f32.mrf.mxu0
  %v1058 = vadd.f32 0.0, %v1057
  %v1059 = vpop.f32.mrf.mxu0
  %v1060 = vpop.f32.mrf.mxu0
  %v1061 = vadd.f32 0.0, %v1060
  %v1062 = vpop.f32.mrf.mxu0
  %1063 = vmatprep.mubr.bf16.mxu0 0
  %1064 = vmatmul.mubr.bf16.gmra.mxu0 %v728
  %v1065 = vpop.f32.mrf.mxu0
  %v1066 = vadd.f32 0.0, %v1065
  %v1067 = vpop.f32.mrf.mxu0
  %v1068 = vpop.f32.mrf.mxu0
  %v1069 = vadd.f32 0.0, %v1068
  %v1070 = vpop.f32.mrf.mxu0
  %1071 = vmatprep.mubr.bf16.mxu0 0
  %1072 = vmatmul.mubr.bf16.gmra.mxu0 %v731
  %v1073 = vpop.f32.mrf.mxu0
  %v1074 = vadd.f32 0.0, %v1073
  %v1075 = vpop.f32.mrf.mxu0
  %v1076 = vpop.f32.mrf.mxu0
  %v1077 = vadd.f32 0.0, %v1076
  %v1078 = vpop.f32.mrf.mxu0
  %1079 = vmatprep.mubr.bf16.mxu0 0
  %1080 = vmatmul.mubr.bf16.gmra.mxu0 %v734
  %v1081 = vpop.f32.mrf.mxu0
  %v1082 = vadd.f32 0.0, %v1081
  %v1083 = vpop.f32.mrf.mxu0
  %v1084 = vpop.f32.mrf.mxu0
  %v1085 = vadd.f32 0.0, %v1084
  %v1086 = vpop.f32.mrf.mxu0
  %1087 = vmatprep.mubr.bf16.mxu0 0
  %1088 = vmatmul.mubr.bf16.gmra.mxu0 %v737
  %v1089 = vpop.f32.mrf.mxu0
  %v1090 = vadd.f32 0.0, %v1089
  %v1091 = vpop.f32.mrf.mxu0
  %v1092 = vpop.f32.mrf.mxu0
  %v1093 = vadd.f32 0.0, %v1092
  %v1094 = vpop.f32.mrf.mxu0
  %1095 = vmatprep.mubr.bf16.mxu0 0
  %1096 = vmatmul.mubr.bf16.gmra.mxu0 %v740
  %v1097 = vpop.f32.mrf.mxu0
  %v1098 = vadd.f32 0.0, %v1097
  %v1099 = vpop.f32.mrf.mxu0
  %v1100 = vpop.f32.mrf.mxu0
  %v1101 = vadd.f32 0.0, %v1100
  %v1102 = vpop.f32.mrf.mxu0
  %1103 = vmatprep.mubr.bf16.mxu0 0
  %1104 = vmatmul.mubr.bf16.gmra.mxu0 %v743
  %v1105 = vpop.f32.mrf.mxu0
  %v1106 = vadd.f32 0.0, %v1105
  %v1107 = vpop.f32.mrf.mxu0
  %v1108 = vpop.f32.mrf.mxu0
  %v1109 = vadd.f32 0.0, %v1108
  %v1110 = vpop.f32.mrf.mxu0
  %1111 = vmatprep.mubr.bf16.mxu0 0
  %1112 = vmatmul.mubr.bf16.gmra.mxu0 %v746
  %v1113 = vpop.f32.mrf.mxu0
  %v1114 = vadd.f32 0.0, %v1113
  %v1115 = vpop.f32.mrf.mxu0
  %v1116 = vpop.f32.mrf.mxu0
  %v1117 = vadd.f32 0.0, %v1116
  %v1118 = vpop.f32.mrf.mxu0
  %1119 = vmatprep.mubr.bf16.mxu0 0
  %1120 = vmatmul.mubr.bf16.gmra.mxu0 %v749
  %v1121 = vpop.f32.mrf.mxu0
  %v1122 = vadd.f32 0.0, %v1121
  %v1123 = vpop.f32.mrf.mxu0
  %v1124 = vpop.f32.mrf.mxu0
  %v1125 = vadd.f32 0.0, %v1124
  %v1126 = vpop.f32.mrf.mxu0
  %1127 = vmatprep.mubr.bf16.mxu0 0
  %1128 = vmatmul.mubr.bf16.gmra.mxu0 %v752
  %v1129 = vpop.f32.mrf.mxu0
  %v1130 = vadd.f32 0.0, %v1129
  %v1131 = vpop.f32.mrf.mxu0
  %v1132 = vpop.f32.mrf.mxu0
  %v1133 = vadd.f32 0.0, %v1132
  %v1134 = vpop.f32.mrf.mxu0
  %1135 = vmatprep.mubr.bf16.mxu0 0
  %1136 = vmatmul.mubr.bf16.gmra.mxu0 %v755
  %v1137 = vpop.f32.mrf.mxu0
  %v1138 = vadd.f32 0.0, %v1137
  %v1139 = vpop.f32.mrf.mxu0
  %v1140 = vpop.f32.mrf.mxu0
  %v1141 = vadd.f32 0.0, %v1140
  %v1142 = vpop.f32.mrf.mxu0
  %1143 = vmatprep.mubr.bf16.mxu0 0
  %1144 = vmatmul.mubr.bf16.gmra.mxu0 %v758
  %v1145 = vpop.f32.mrf.mxu0
  %v1146 = vadd.f32 0.0, %v1145
  %v1147 = vpop.f32.mrf.mxu0
  %v1148 = vpop.f32.mrf.mxu0
  %v1149 = vadd.f32 0.0, %v1148
  %v1150 = vpop.f32.mrf.mxu0
  %1151 = vmatprep.mubr.bf16.mxu0 0
  %1152 = vmatmul.mubr.bf16.gmra.mxu0 %v761
  %v1153 = vpop.f32.mrf.mxu0
  %v1154 = vadd.f32 0.0, %v1153
  %v1155 = vpop.f32.mrf.mxu0
  %v1156 = vpop.f32.mrf.mxu0
  %v1157 = vadd.f32 0.0, %v1156
  %v1158 = vpop.f32.mrf.mxu0
  %1159 = vmatprep.mubr.bf16.mxu0 0
  %1160 = vmatmul.mubr.bf16.gmra.mxu0 %v764
  %v1161 = vpop.f32.mrf.mxu0
  %v1162 = vadd.f32 0.0, %v1161
  %v1163 = vpop.f32.mrf.mxu0
  %v1164 = vpop.f32.mrf.mxu0
  %v1165 = vadd.f32 0.0, %v1164
  %v1166 = vpop.f32.mrf.mxu0
  %1167 = vmatprep.mubr.bf16.mxu0 0
  %1168 = vmatmul.mubr.bf16.gmra.mxu0 %v767
  %v1169 = vpop.f32.mrf.mxu0
  %v1170 = vadd.f32 0.0, %v1169
  %v1171 = vpop.f32.mrf.mxu0
  %v1172 = vpop.f32.mrf.mxu0
  %v1173 = vadd.f32 0.0, %v1172
  %v1174 = vpop.f32.mrf.mxu0
  %1175 = vmatprep.mubr.bf16.mxu0 0
  %1176 = vmatmul.mubr.bf16.gmra.mxu0 %v770
  %v1177 = vpop.f32.mrf.mxu0
  %v1178 = vadd.f32 0.0, %v1177
  %v1179 = vpop.f32.mrf.mxu0
  %v1180 = vpop.f32.mrf.mxu0
  %v1181 = vadd.f32 0.0, %v1180
  %v1182 = vpop.f32.mrf.mxu0
  %1183 = vmatprep.mubr.bf16.mxu0 0
  %1184 = vmatmul.mubr.bf16.gmra.mxu0 %v773
  %v1185 = vpop.f32.mrf.mxu0
  %v1186 = vadd.f32 0.0, %v1185
  %v1187 = vpop.f32.mrf.mxu0
  %v1188 = vpop.f32.mrf.mxu0
  %v1189 = vadd.f32 0.0, %v1188
  %v1190 = vpop.f32.mrf.mxu0
  %1191 = vmatprep.mubr.bf16.mxu0 0
  %1192 = vmatmul.mubr.bf16.gmra.mxu0 %v776
  %v1193 = vpop.f32.mrf.mxu0
  %v1194 = vadd.f32 0.0, %v1193
  %v1195 = vpop.f32.mrf.mxu0
  %v1196 = vpop.f32.mrf.mxu0
  %v1197 = vadd.f32 0.0, %v1196
  %v1198 = vpop.f32.mrf.mxu0
  %1199 = vmatprep.mubr.bf16.mxu0 0
  %1200 = vmatmul.mubr.bf16.gmra.mxu0 %v779
  %v1201 = vpop.f32.mrf.mxu0
  %v1202 = vadd.f32 0.0, %v1201
  %v1203 = vpop.f32.mrf.mxu0
  %v1204 = vpop.f32.mrf.mxu0
  %v1205 = vadd.f32 0.0, %v1204
  %v1206 = vpop.f32.mrf.mxu0
  %1207 = vmatprep.mubr.bf16.mxu0 0
  %1208 = vmatmul.mubr.bf16.gmra.mxu0 %v782
  %v1209 = vpop.f32.mrf.mxu0
  %v1210 = vadd.f32 0.0, %v1209
  %v1211 = vpop.f32.mrf.mxu0
  %v1212 = vpop.f32.mrf.mxu0
  %v1213 = vadd.f32 0.0, %v1212
  %v1214 = vpop.f32.mrf.mxu0
  %1215 = vmatprep.mubr.bf16.mxu0 0
  %1216 = vmatmul.mubr.bf16.gmra.mxu0 %v785
  %v1217 = vpop.f32.mrf.mxu0
  %v1218 = vadd.f32 0.0, %v1217
  %v1219 = vpop.f32.mrf.mxu0
  %v1220 = vpop.f32.mrf.mxu0
  %v1221 = vadd.f32 0.0, %v1220
  %v1222 = vpop.f32.mrf.mxu0
  %1223 = vmatprep.mubr.bf16.mxu0 0
  %1224 = vmatmul.mubr.bf16.gmra.mxu0 %v788
  %v1225 = vpop.f32.mrf.mxu0
  %v1226 = vadd.f32 0.0, %v1225
  %v1227 = vpop.f32.mrf.mxu0
  %v1228 = vpop.f32.mrf.mxu0
  %v1229 = vadd.f32 0.0, %v1228
  %v1230 = vpop.f32.mrf.mxu0
  %1231 = vmatprep.mubr.bf16.mxu0 0
  %1232 = vmatmul.mubr.bf16.gmra.mxu0 %v791
  %v1233 = vpop.f32.mrf.mxu0
  %v1234 = vadd.f32 0.0, %v1233
  %v1235 = vpop.f32.mrf.mxu0
  %v1236 = vpop.f32.mrf.mxu0
  %v1237 = vadd.f32 0.0, %v1236
  %v1238 = vpop.f32.mrf.mxu0
  %1239 = vmatprep.mubr.bf16.mxu0 0
  %1240 = vmatmul.mubr.bf16.gmra.mxu0 %v794
  %v1241 = vpop.f32.mrf.mxu0
  %v1242 = vadd.f32 0.0, %v1241
  %v1243 = vpop.f32.mrf.mxu0
  %v1244 = vpop.f32.mrf.mxu0
  %v1245 = vadd.f32 0.0, %v1244
  %v1246 = vpop.f32.mrf.mxu0
  %1247 = vmatprep.mubr.bf16.mxu0 0
  %1248 = vmatmul.mubr.bf16.gmra.mxu0 %v797
  %v1249 = vpop.f32.mrf.mxu0
  %v1250 = vadd.f32 0.0, %v1249
  %v1251 = vpop.f32.mrf.mxu0
  %v1252 = vpop.f32.mrf.mxu0
  %v1253 = vadd.f32 0.0, %v1252
  %v1254 = vpop.f32.mrf.mxu0
  %1255 = vmatprep.mubr.bf16.mxu0 0
  %1256 = vmatmul.mubr.bf16.gmra.mxu0 %v800
  %v1257 = vpop.f32.mrf.mxu0
  %v1258 = vadd.f32 0.0, %v1257
  %v1259 = vpop.f32.mrf.mxu0
  %v1260 = vpop.f32.mrf.mxu0
  %v1261 = vadd.f32 0.0, %v1260
  %v1262 = vpop.f32.mrf.mxu0
  %1263 = vmatprep.mubr.bf16.mxu0 0
  %1264 = vmatmul.mubr.bf16.gmra.mxu0 %v803
  %v1265 = vpop.f32.mrf.mxu0
  %v1266 = vadd.f32 0.0, %v1265
  %v1267 = vpop.f32.mrf.mxu0
  %v1268 = vpop.f32.mrf.mxu0
  %v1269 = vadd.f32 0.0, %v1268
  %v1270 = vpop.f32.mrf.mxu0
  %1271 = vmatprep.mubr.bf16.mxu0 0
  %1272 = vmatmul.mubr.bf16.gmra.mxu0 %v806
  %v1273 = vpop.f32.mrf.mxu0
  %v1274 = vadd.f32 0.0, %v1273
  %v1275 = vpop.f32.mrf.mxu0
  %v1276 = vpop.f32.mrf.mxu0
  %v1277 = vadd.f32 0.0, %v1276
  %v1278 = vpop.f32.mrf.mxu0
  %1279 = vmatprep.mubr.bf16.mxu0 0
  %1280 = vmatmul.mubr.bf16.gmra.mxu0 %v809
  %v1281 = vpop.f32.mrf.mxu0
  %v1282 = vadd.f32 0.0, %v1281
  %v1283 = vpop.f32.mrf.mxu0
  %v1284 = vpop.f32.mrf.mxu0
  %v1285 = vadd.f32 0.0, %v1284
  %v1286 = vpop.f32.mrf.mxu0
  %1287 = vmatprep.mubr.bf16.mxu0 0
  %1288 = vmatmul.mubr.bf16.gmra.mxu0 %v812
  %v1289 = vpop.f32.mrf.mxu0
  %v1290 = vadd.f32 0.0, %v1289
  %v1291 = vpop.f32.mrf.mxu0
  %v1292 = vpop.f32.mrf.mxu0
  %v1293 = vadd.f32 0.0, %v1292
  %v1294 = vpop.f32.mrf.mxu0
  %1295 = vmatprep.mubr.bf16.mxu0 0
  %1296 = vmatmul.mubr.bf16.gmra.mxu0 %v815
  %v1297 = vpop.f32.mrf.mxu0
  %v1298 = vadd.f32 0.0, %v1297
  %v1299 = vpop.f32.mrf.mxu0
  %v1300 = vpop.f32.mrf.mxu0
  %v1301 = vadd.f32 0.0, %v1300
  %v1302 = vpop.f32.mrf.mxu0
  %1303 = vmatprep.mubr.bf16.mxu0 0
  %1304 = vmatmul.mubr.bf16.gmra.mxu0 %v818
  %v1305 = vpop.f32.mrf.mxu0
  %v1306 = vadd.f32 0.0, %v1305
  %v1307 = vpop.f32.mrf.mxu0
  %v1308 = vpop.f32.mrf.mxu0
  %v1309 = vadd.f32 0.0, %v1308
  %v1310 = vpop.f32.mrf.mxu0
  %1311 = vmatprep.mubr.bf16.mxu0 0
  %1312 = vmatmul.mubr.bf16.gmra.mxu0 %v821
  %v1313 = vpop.f32.mrf.mxu0
  %v1314 = vadd.f32 0.0, %v1313
  %v1315 = vpop.f32.mrf.mxu0
  %v1316 = vpop.f32.mrf.mxu0
  %v1317 = vadd.f32 0.0, %v1316
  %v1318 = vpop.f32.mrf.mxu0
  %1319 = vmatprep.mubr.bf16.mxu0 0
  %1320 = vmatmul.mubr.bf16.gmra.mxu0 %v824
  %v1321 = vpop.f32.mrf.mxu0
  %v1322 = vadd.f32 0.0, %v1321
  %v1323 = vpop.f32.mrf.mxu0
  %v1324 = vpop.f32.mrf.mxu0
  %v1325 = vadd.f32 0.0, %v1324
  %v1326 = vpop.f32.mrf.mxu0
  %1327 = vmatprep.mubr.bf16.mxu0 0
  %1328 = vmatmul.mubr.bf16.gmra.mxu0 %v827
  %v1329 = vpop.f32.mrf.mxu0
  %v1330 = vadd.f32 0.0, %v1329
  %v1331 = vpop.f32.mrf.mxu0
  %v1332 = vpop.f32.mrf.mxu0
  %v1333 = vadd.f32 0.0, %v1332
  %v1334 = vpop.f32.mrf.mxu0
  %1335 = vmatprep.mubr.bf16.mxu0 0
  %1336 = vmatmul.mubr.bf16.gmra.mxu0 %v830
  %v1337 = vpop.f32.mrf.mxu0
  %v1338 = vadd.f32 0.0, %v1337
  %v1339 = vpop.f32.mrf.mxu0
  %v1340 = vpop.f32.mrf.mxu0
  %v1341 = vadd.f32 0.0, %v1340
  %v1342 = vpop.f32.mrf.mxu0
  %1343 = vmatprep.mubr.bf16.mxu0 0
  %1344 = vmatmul.mubr.bf16.gmra.mxu0 %v833
  %v1345 = vpop.f32.mrf.mxu0
  %v1346 = vadd.f32 0.0, %v1345
  %v1347 = vpop.f32.mrf.mxu0
  %v1348 = vpop.f32.mrf.mxu0
  %v1349 = vadd.f32 0.0, %v1348
  %v1350 = vpop.f32.mrf.mxu0
  %1351 = vmatprep.mubr.bf16.mxu0 0
  %1352 = vmatmul.mubr.bf16.gmra.mxu0 %v836
  %v1353 = vpop.f32.mrf.mxu0
  %v1354 = vadd.f32 0.0, %v1353
  %v1355 = vpop.f32.mrf.mxu0
  %v1356 = vpop.f32.mrf.mxu0
  %v1357 = vadd.f32 0.0, %v1356
  %v1358 = vpop.f32.mrf.mxu0
  %1359 = vmatprep.mubr.bf16.mxu0 0
  %1360 = vmatmul.mubr.bf16.gmra.mxu0 %v839
  %v1361 = vpop.f32.mrf.mxu0
  %v1362 = vadd.f32 0.0, %v1361
  %v1363 = vpop.f32.mrf.mxu0
  %v1364 = vpop.f32.mrf.mxu0
  %v1365 = vadd.f32 0.0, %v1364
  %v1366 = vpop.f32.mrf.mxu0
  %1367 = vmatprep.mubr.bf16.mxu0 0
  %1368 = vmatmul.mubr.bf16.gmra.mxu0 %v842
  %v1369 = vpop.f32.mrf.mxu0
  %v1370 = vadd.f32 0.0, %v1369
  %v1371 = vpop.f32.mrf.mxu0
  %v1372 = vpop.f32.mrf.mxu0
  %v1373 = vadd.f32 0.0, %v1372
  %v1374 = vpop.f32.mrf.mxu0
  %1375 = vmatprep.mubr.bf16.mxu0 0
  %1376 = vmatmul.mubr.bf16.gmra.mxu0 %v845
  %v1377 = vpop.f32.mrf.mxu0
  %v1378 = vadd.f32 0.0, %v1377
  %v1379 = vpop.f32.mrf.mxu0
  %v1380 = vpop.f32.mrf.mxu0
  %v1381 = vadd.f32 0.0, %v1380
  %v1382 = vpop.f32.mrf.mxu0
  %1383 = vmatprep.mubr.bf16.mxu0 0
  %1384 = vmatmul.mubr.bf16.gmra.mxu0 %v848
  %v1385 = vpop.f32.mrf.mxu0
  %v1386 = vadd.f32 0.0, %v1385
  %v1387 = vpop.f32.mrf.mxu0
  %v1388 = vpop.f32.mrf.mxu0
  %v1389 = vadd.f32 0.0, %v1388
  %v1390 = vpop.f32.mrf.mxu0
  %1391 = vmatprep.mubr.bf16.mxu0 0
  %1392 = vmatmul.mubr.bf16.gmra.mxu0 %v851
  %v1393 = vpop.f32.mrf.mxu0
  %v1394 = vadd.f32 0.0, %v1393
  %v1395 = vpop.f32.mrf.mxu0
  %v1396 = vpop.f32.mrf.mxu0
  %v1397 = vadd.f32 0.0, %v1396
  %v1398 = vpop.f32.mrf.mxu0
  %1399 = vmatprep.mubr.bf16.mxu0 0
  %1400 = vmatmul.mubr.bf16.gmra.mxu0 %v854
  %v1401 = vpop.f32.mrf.mxu0
  %v1402 = vadd.f32 0.0, %v1401
  %v1403 = vpop.f32.mrf.mxu0
  %v1404 = vpop.f32.mrf.mxu0
  %v1405 = vadd.f32 0.0, %v1404
  %v1406 = vpop.f32.mrf.mxu0
  %1407 = vmatprep.mubr.bf16.mxu0 0
  %1408 = vmatmul.mubr.bf16.gmra.mxu0 %v857
  %v1409 = vpop.f32.mrf.mxu0
  %v1410 = vadd.f32 0.0, %v1409
  %v1411 = vpop.f32.mrf.mxu0
  %v1412 = vpop.f32.mrf.mxu0
  %v1413 = vadd.f32 0.0, %v1412
  %v1414 = vpop.f32.mrf.mxu0
  %1415 = vmatprep.mubr.bf16.mxu0 0
  %1416 = vmatmul.mubr.bf16.gmra.mxu0 %v860
  %v1417 = vpop.f32.mrf.mxu0
  %v1418 = vadd.f32 0.0, %v1417
  %v1419 = vpop.f32.mrf.mxu0
  %v1420 = vpop.f32.mrf.mxu0
  %v1421 = vadd.f32 0.0, %v1420
  %v1422 = vpop.f32.mrf.mxu0
  %1423 = vmatprep.mubr.bf16.mxu0 0
  %1424 = vmatmul.mubr.bf16.gmra.mxu0 %v863
  %v1425 = vpop.f32.mrf.mxu0
  %v1426 = vadd.f32 0.0, %v1425
  %v1427 = vpop.f32.mrf.mxu0
  %v1428 = vpop.f32.mrf.mxu0
  %v1429 = vadd.f32 0.0, %v1428
  %v1430 = vpop.f32.mrf.mxu0
  %1431 = vmatprep.mubr.bf16.mxu0 0
  %1432 = vmatmul.mubr.bf16.gmra.mxu0 %v866
  %v1433 = vpop.f32.mrf.mxu0
  %v1434 = vadd.f32 0.0, %v1433
  %v1435 = vpop.f32.mrf.mxu0
  %v1436 = vpop.f32.mrf.mxu0
  %v1437 = vadd.f32 0.0, %v1436
  %v1438 = vpop.f32.mrf.mxu0
  %1439 = vmatprep.mubr.bf16.mxu0 0
  %1440 = vmatmul.mubr.bf16.gmra.mxu0 %v869
  %v1441 = vpop.f32.mrf.mxu0
  %v1442 = vadd.f32 0.0, %v1441
  %v1443 = vpop.f32.mrf.mxu0
  %v1444 = vpop.f32.mrf.mxu0
  %v1445 = vadd.f32 0.0, %v1444
  %v1446 = vpop.f32.mrf.mxu0
  %1447 = vmatprep.mubr.bf16.mxu0 0
  %1448 = vmatmul.mubr.bf16.gmra.mxu0 %v872
  %v1449 = vpop.f32.mrf.mxu0
  %v1450 = vadd.f32 0.0, %v1449
  %v1451 = vpop.f32.mrf.mxu0
  %v1452 = vpop.f32.mrf.mxu0
  %v1453 = vadd.f32 0.0, %v1452
  %v1454 = vpop.f32.mrf.mxu0
  %1455 = vmatprep.mubr.bf16.mxu0 0
  %1456 = vmatmul.mubr.bf16.gmra.mxu0 %v875
  %v1457 = vpop.f32.mrf.mxu0
  %v1458 = vadd.f32 0.0, %v1457
  %v1459 = vpop.f32.mrf.mxu0
  %v1460 = vpop.f32.mrf.mxu0
  %v1461 = vadd.f32 0.0, %v1460
  %v1462 = vpop.f32.mrf.mxu0
  %1463 = vmatprep.mubr.bf16.mxu0 0
  %1464 = vmatmul.mubr.bf16.gmra.mxu0 %v878
  %v1465 = vpop.f32.mrf.mxu0
  %v1466 = vadd.f32 0.0, %v1465
  %v1467 = vpop.f32.mrf.mxu0
  %v1468 = vpop.f32.mrf.mxu0
  %v1469 = vadd.f32 0.0, %v1468
  %v1470 = vpop.f32.mrf.mxu0
  %1471 = vmatprep.mubr.bf16.mxu0 0
  %1472 = vmatmul.mubr.bf16.gmra.mxu0 %v881
  %v1473 = vpop.f32.mrf.mxu0
  %v1474 = vadd.f32 0.0, %v1473
  %v1475 = vpop.f32.mrf.mxu0
  %v1476 = vpop.f32.mrf.mxu0
  %v1477 = vadd.f32 0.0, %v1476
  %v1478 = vpop.f32.mrf.mxu0
  %1479 = vmatprep.mubr.bf16.mxu0 0
  %1480 = vmatmul.mubr.bf16.gmra.mxu0 %v884
  %v1481 = vpop.f32.mrf.mxu0
  %v1482 = vadd.f32 0.0, %v1481
  %v1483 = vpop.f32.mrf.mxu0
  %v1484 = vpop.f32.mrf.mxu0
  %v1485 = vadd.f32 0.0, %v1484
  %v1486 = vpop.f32.mrf.mxu0
  %1487 = vmatprep.mubr.bf16.mxu0 0
  %1488 = vmatmul.mubr.bf16.gmra.mxu0 %v887
  %v1489 = vpop.f32.mrf.mxu0
  %v1490 = vadd.f32 0.0, %v1489
  %v1491 = vpop.f32.mrf.mxu0
  %v1492 = vpop.f32.mrf.mxu0
  %v1493 = vadd.f32 0.0, %v1492
  %v1494 = vpop.f32.mrf.mxu0
  %1495 = vmatprep.mubr.bf16.mxu0 0
  %1496 = vmatmul.mubr.bf16.gmra.mxu0 %v890
  %v1497 = vpop.f32.mrf.mxu0
  %v1498 = vadd.f32 0.0, %v1497
  %v1499 = vpop.f32.mrf.mxu0
  %v1500 = vpop.f32.mrf.mxu0
  %v1501 = vadd.f32 0.0, %v1500
  %v1502 = vpop.f32.mrf.mxu0
  %1503 = vmatprep.mubr.bf16.mxu0 0
  %1504 = vmatmul.mubr.bf16.gmra.mxu0 %v893
  %v1505 = vpop.f32.mrf.mxu0
  %v1506 = vadd.f32 0.0, %v1505
  %v1507 = vpop.f32.mrf.mxu0
  %v1508 = vpop.f32.mrf.mxu0
  %v1509 = vadd.f32 0.0, %v1508
  %v1510 = vpop.f32.mrf.mxu0
  %1511 = vmatprep.mubr.bf16.mxu0 0
  %1512 = vmatmul.mubr.bf16.gmra.mxu0 %v896
  %v1513 = vpop.f32.mrf.mxu0
  %v1514 = vadd.f32 0.0, %v1513
  %v1515 = vpop.f32.mrf.mxu0
  %v1516 = vpop.f32.mrf.mxu0
  %v1517 = vadd.f32 0.0, %v1516
  %v1518 = vpop.f32.mrf.mxu0
  %1519 = vmatprep.mubr.bf16.mxu0 0
  %1520 = vmatmul.mubr.bf16.gmra.mxu0 %v899
  %v1521 = vpop.f32.mrf.mxu0
  %v1522 = vadd.f32 0.0, %v1521
  %v1523 = vpop.f32.mrf.mxu0
  %v1524 = vpop.f32.mrf.mxu0
  %v1525 = vadd.f32 0.0, %v1524
  %v1526 = vpop.f32.mrf.mxu0
  %1527 = vmatprep.mubr.bf16.mxu0 0
  %1528 = vmatmul.mubr.bf16.gmra.mxu0 %v902
  %v1529 = vpop.f32.mrf.mxu0
  %v1530 = vadd.f32 0.0, %v1529
  %v1531 = vpop.f32.mrf.mxu0
  %v1532 = vpop.f32.mrf.mxu0
  %v1533 = vadd.f32 0.0, %v1532
  %v1534 = vpop.f32.mrf.mxu0
  %1535 = vmatprep.mubr.bf16.mxu0 0
  %1536 = vmatmul.mubr.bf16.gmra.mxu0 %v905
  %v1537 = vpop.f32.mrf.mxu0
  %v1538 = vadd.f32 0.0, %v1537
  %v1539 = vpop.f32.mrf.mxu0
  %v1540 = vpop.f32.mrf.mxu0
  %v1541 = vadd.f32 0.0, %v1540
  %v1542 = vpop.f32.mrf.mxu0
  %1543 = vmatprep.mubr.bf16.mxu0 0
  %1544 = vmatmul.mubr.bf16.gmra.mxu0 %v908
  %v1545 = vpop.f32.mrf.mxu0
  %v1546 = vadd.f32 0.0, %v1545
  %v1547 = vpop.f32.mrf.mxu0
  %v1548 = vpop.f32.mrf.mxu0
  %v1549 = vadd.f32 0.0, %v1548
  %v1550 = vpop.f32.mrf.mxu0
  %1551 = vmatprep.mubr.bf16.mxu0 0
  %1552 = vmatmul.mubr.bf16.gmra.mxu0 %v911
  %v1553 = vpop.f32.mrf.mxu0
  %v1554 = vadd.f32 0.0, %v1553
  %v1555 = vpop.f32.mrf.mxu0
  %v1556 = vpop.f32.mrf.mxu0
  %v1557 = vadd.f32 0.0, %v1556
  %v1558 = vpop.f32.mrf.mxu0
  %1559 = vmatprep.mubr.bf16.mxu0 0
  %1560 = vmatmul.mubr.bf16.gmra.mxu0 %v914
  %v1561 = vpop.f32.mrf.mxu0
  %v1562 = vadd.f32 0.0, %v1561
  %v1563 = vpop.f32.mrf.mxu0
  %v1564 = vpop.f32.mrf.mxu0
  %v1565 = vadd.f32 0.0, %v1564
  %v1566 = vpop.f32.mrf.mxu0
  %1567 = vmatprep.mubr.bf16.mxu0 0
  %1568 = vmatmul.mubr.bf16.gmra.mxu0 %v917
  %v1569 = vpop.f32.mrf.mxu0
  %v1570 = vadd.f32 0.0, %v1569
  %v1571 = vpop.f32.mrf.mxu0
  %v1572 = vpop.f32.mrf.mxu0
  %v1573 = vadd.f32 0.0, %v1572
  %v1574 = vpop.f32.mrf.mxu0
  %1575 = vmatprep.mubr.bf16.mxu0 0
  %1576 = vmatmul.mubr.bf16.gmra.mxu0 %v920
  %v1577 = vpop.f32.mrf.mxu0
  %v1578 = vadd.f32 0.0, %v1577
  %v1579 = vpop.f32.mrf.mxu0
  %v1580 = vpop.f32.mrf.mxu0
  %v1581 = vadd.f32 0.0, %v1580
  %v1582 = vpop.f32.mrf.mxu0
  %1583 = vmatprep.mubr.bf16.mxu0 0
  %1584 = vmatmul.mubr.bf16.gmra.mxu0 %v923
  %v1585 = vpop.f32.mrf.mxu0
  %v1586 = vadd.f32 0.0, %v1585
  %v1587 = vpop.f32.mrf.mxu0
  %v1588 = vpop.f32.mrf.mxu0
  %v1589 = vadd.f32 0.0, %v1588
  %v1590 = vpop.f32.mrf.mxu0
  %1591 = vmatprep.mubr.bf16.mxu0 0
  %1592 = vmatmul.mubr.bf16.gmra.mxu0 %v926
  %v1593 = vpop.f32.mrf.mxu0
  %v1594 = vadd.f32 0.0, %v1593
  %v1595 = vpop.f32.mrf.mxu0
  %v1596 = vpop.f32.mrf.mxu0
  %v1597 = vadd.f32 0.0, %v1596
  %v1598 = vpop.f32.mrf.mxu0
  %1599 = vmatprep.mubr.bf16.mxu0 0
  %1600 = vmatmul.mubr.bf16.gmra.mxu0 %v929
  %v1601 = vpop.f32.mrf.mxu0
  %v1602 = vadd.f32 0.0, %v1601
  %v1603 = vpop.f32.mrf.mxu0
  %v1604 = vpop.f32.mrf.mxu0
  %v1605 = vadd.f32 0.0, %v1604
  %v1606 = vpop.f32.mrf.mxu0
  %1607 = vmatprep.mubr.bf16.mxu0 0
  %1608 = vmatmul.mubr.bf16.gmra.mxu0 %v932
  %v1609 = vpop.f32.mrf.mxu0
  %v1610 = vadd.f32 0.0, %v1609
  %v1611 = vpop.f32.mrf.mxu0
  %v1612 = vpop.f32.mrf.mxu0
  %v1613 = vadd.f32 0.0, %v1612
  %v1614 = vpop.f32.mrf.mxu0
  %1615 = vmatprep.mubr.bf16.mxu0 0
  %1616 = vmatmul.mubr.bf16.gmra.mxu0 %v935
  %v1617 = vpop.f32.mrf.mxu0
  %v1618 = vadd.f32 0.0, %v1617
  %v1619 = vpop.f32.mrf.mxu0
  %v1620 = vpop.f32.mrf.mxu0
  %v1621 = vadd.f32 0.0, %v1620
  %v1622 = vpop.f32.mrf.mxu0
  %1623 = vmatprep.mubr.bf16.mxu0 0
  %1624 = vmatmul.mubr.bf16.gmra.mxu0 %v938
  %v1625 = vpop.f32.mrf.mxu0
  %v1626 = vadd.f32 0.0, %v1625
  %v1627 = vpop.f32.mrf.mxu0
  %v1628 = vpop.f32.mrf.mxu0
  %v1629 = vadd.f32 0.0, %v1628
  %v1630 = vpop.f32.mrf.mxu0
  %1631 = vmatprep.mubr.bf16.mxu0 0
  %1632 = vmatmul.mubr.bf16.gmra.mxu0 %v941
  %v1633 = vpop.f32.mrf.mxu0
  %v1634 = vadd.f32 0.0, %v1633
  %v1635 = vpop.f32.mrf.mxu0
  %v1636 = vpop.f32.mrf.mxu0
  %v1637 = vadd.f32 0.0, %v1636
  %v1638 = vpop.f32.mrf.mxu0
  %1639 = vmatprep.mubr.bf16.mxu0 0
  %1640 = vmatmul.mubr.bf16.gmra.mxu0 %v944
  %v1641 = vpop.f32.mrf.mxu0
  %v1642 = vadd.f32 0.0, %v1641
  %v1643 = vpop.f32.mrf.mxu0
  %v1644 = vpop.f32.mrf.mxu0
  %v1645 = vadd.f32 0.0, %v1644
  %v1646 = vpop.f32.mrf.mxu0
  %1647 = vmatprep.mubr.bf16.mxu0 0
  %1648 = vmatmul.mubr.bf16.gmra.mxu0 %v947
  %v1649 = vpop.f32.mrf.mxu0
  %v1650 = vadd.f32 0.0, %v1649
  %v1651 = vpop.f32.mrf.mxu0
  %v1652 = vpop.f32.mrf.mxu0
  %v1653 = vadd.f32 0.0, %v1652
  %v1654 = vpop.f32.mrf.mxu0
  %1655 = vmatprep.mubr.bf16.mxu0 0
  %1656 = vmatmul.mubr.bf16.gmra.mxu0 %v950
  %v1657 = vpop.f32.mrf.mxu0
  %v1658 = vadd.f32 0.0, %v1657
  %v1659 = vpop.f32.mrf.mxu0
  %v1660 = vpop.f32.mrf.mxu0
  %v1661 = vadd.f32 0.0, %v1660
  %v1662 = vpop.f32.mrf.mxu0
  %1663 = vmatprep.mubr.bf16.mxu0 0
  %1664 = vmatmul.mubr.bf16.gmra.mxu0 %v953
  %v1665 = vpop.f32.mrf.mxu0
  %v1666 = vadd.f32 0.0, %v1665
  %v1667 = vpop.f32.mrf.mxu0
  %v1668 = vpop.f32.mrf.mxu0
  %v1669 = vadd.f32 0.0, %v1668
  %v1670 = vpop.f32.mrf.mxu0
  %1671 = vmatprep.mubr.bf16.mxu0 0
  %1672 = vmatmul.mubr.bf16.gmra.mxu0 %v956
  %v1673 = vpop.f32.mrf.mxu0
  %v1674 = vadd.f32 0.0, %v1673
  %v1675 = vpop.f32.mrf.mxu0
  %v1676 = vpop.f32.mrf.mxu0
  %v1677 = vadd.f32 0.0, %v1676
  %v1678 = vpop.f32.mrf.mxu0
  %1679 = vmatprep.mubr.bf16.mxu0 0
  %1680 = vmatmul.mubr.bf16.gmra.mxu0 %v959
  %v1681 = vpop.f32.mrf.mxu0
  %v1682 = vadd.f32 0.0, %v1681
  %v1683 = vpop.f32.mrf.mxu0
  %v1684 = vpop.f32.mrf.mxu0
  %v1685 = vadd.f32 0.0, %v1684
  %v1686 = vpop.f32.mrf.mxu0
  %1687 = vmatprep.mubr.bf16.mxu0 0
  %1688 = vmatmul.mubr.bf16.gmra.mxu0 %v962
  %v1689 = vpop.f32.mrf.mxu0
  %v1690 = vadd.f32 0.0, %v1689
  %v1691 = vpop.f32.mrf.mxu0
  %v1692 = vpop.f32.mrf.mxu0
  %v1693 = vadd.f32 0.0, %v1692
  %v1694 = vpop.f32.mrf.mxu0
  %1695 = vmatprep.mubr.bf16.mxu0 0
  %1696 = vmatmul.mubr.bf16.gmra.mxu0 %v965
  %v1697 = vpop.f32.mrf.mxu0
  %v1698 = vadd.f32 0.0, %v1697
  %v1699 = vpop.f32.mrf.mxu0
  %v1700 = vpop.f32.mrf.mxu0
  %v1701 = vadd.f32 0.0, %v1700
  %v1702 = vpop.f32.mrf.mxu0
  %1703 = vmatprep.mubr.bf16.mxu0 0
  %1704 = vmatmul.mubr.bf16.gmra.mxu0 %v968
  %v1705 = vpop.f32.mrf.mxu0
  %v1706 = vadd.f32 0.0, %v1705
  %v1707 = vpop.f32.mrf.mxu0
  %v1708 = vpop.f32.mrf.mxu0
  %v1709 = vadd.f32 0.0, %v1708
  %v1710 = vpop.f32.mrf.mxu0
  %1711 = vmatprep.mubr.bf16.mxu0 0
  %1712 = vmatmul.mubr.bf16.gmra.mxu0 %v971
  %v1713 = vpop.f32.mrf.mxu0
  %v1714 = vadd.f32 0.0, %v1713
  %v1715 = vpop.f32.mrf.mxu0
  %v1716 = vpop.f32.mrf.mxu0
  %v1717 = vadd.f32 0.0, %v1716
  %v1718 = vpop.f32.mrf.mxu0
  %1719 = vmatprep.mubr.bf16.mxu0 0
  %1720 = vmatmul.mubr.bf16.gmra.mxu0 %v974
  %v1721 = vpop.f32.mrf.mxu0
  %v1722 = vadd.f32 0.0, %v1721
  %v1723 = vpop.f32.mrf.mxu0
  %v1724 = vpop.f32.mrf.mxu0
  %v1725 = vadd.f32 0.0, %v1724
  %v1726 = vpop.f32.mrf.mxu0
  %1727 = vmatprep.mubr.bf16.mxu0 0
  %1728 = vmatmul.mubr.bf16.gmra.mxu0 %v977
  %v1729 = vpop.f32.mrf.mxu0
  %v1730 = vadd.f32 0.0, %v1729
  %v1731 = vpop.f32.mrf.mxu0
  %v1732 = vpop.f32.mrf.mxu0
  %v1733 = vadd.f32 0.0, %v1732
  %v1734 = vpop.f32.mrf.mxu0
  %1735 = vmatprep.mubr.bf16.mxu0 0
  %1736 = vmatmul.mubr.bf16.gmra.mxu0 %v980
  %v1737 = vpop.f32.mrf.mxu0
  %v1738 = vadd.f32 0.0, %v1737
  %v1739 = vpop.f32.mrf.mxu0
  %v1740 = vpop.f32.mrf.mxu0
  %v1741 = vadd.f32 0.0, %v1740
  %v1742 = vpop.f32.mrf.mxu0
  %1743 = vmatprep.mubr.bf16.mxu0 0
  %1744 = vmatmul.mubr.bf16.gmra.mxu0 %v983
  %v1745 = vpop.f32.mrf.mxu0
  %v1746 = vadd.f32 0.0, %v1745
  %v1747 = vpop.f32.mrf.mxu0
  %v1748 = vpop.f32.mrf.mxu0
  %v1749 = vadd.f32 0.0, %v1748
  %v1750 = vpop.f32.mrf.mxu0
  %1751 = vmatprep.mubr.bf16.mxu0 0
  %1752 = vmatmul.mubr.bf16.gmra.mxu0 %v986
  %v1753 = vpop.f32.mrf.mxu0
  %v1754 = vadd.f32 0.0, %v1753
  %v1755 = vpop.f32.mrf.mxu0
  %v1756 = vpop.f32.mrf.mxu0
  %v1757 = vadd.f32 0.0, %v1756
  %v1758 = vpop.f32.mrf.mxu0
  %1759 = vmatprep.mubr.bf16.mxu0 0
  %1760 = vmatmul.mubr.bf16.gmra.mxu0 %v989
  %v1761 = vpop.f32.mrf.mxu0
  %v1762 = vadd.f32 0.0, %v1761
  %v1763 = vpop.f32.mrf.mxu0
  %v1764 = vpop.f32.mrf.mxu0
  %v1765 = vadd.f32 0.0, %v1764
  %v1766 = vpop.f32.mrf.mxu0
  %1767 = vmatprep.mubr.bf16.mxu0 0
  %1768 = vmatmul.mubr.bf16.gmra.mxu0 %v992
  %v1769 = vpop.f32.mrf.mxu0
  %v1770 = vadd.f32 0.0, %v1769
  %v1771 = vpop.f32.mrf.mxu0
  %v1772 = vpop.f32.mrf.mxu0
  %v1773 = vadd.f32 0.0, %v1772
  %v1774 = vpop.f32.mrf.mxu0
  %1775 = vmatprep.mubr.bf16.mxu0 0
  %1776 = vmatmul.mubr.bf16.gmra.mxu0 %v995
  %v1777 = vpop.f32.mrf.mxu0
  %v1778 = vadd.f32 0.0, %v1777
  %v1779 = vpop.f32.mrf.mxu0
  %v1780 = vpop.f32.mrf.mxu0
  %v1781 = vadd.f32 0.0, %v1780
  %v1782 = vpop.f32.mrf.mxu0
  %1783 = vmatprep.mubr.bf16.mxu0 0
  %1784 = vmatmul.mubr.bf16.gmra.mxu0 %v998
  %v1785 = vpop.f32.mrf.mxu0
  %v1786 = vadd.f32 0.0, %v1785
  %v1787 = vpop.f32.mrf.mxu0
  %v1788 = vpop.f32.mrf.mxu0
  %v1789 = vadd.f32 0.0, %v1788
  %v1790 = vpop.f32.mrf.mxu0
  %1791 = vmatprep.mubr.bf16.mxu0 0
  %1792 = vmatmul.mubr.bf16.gmra.mxu0 %v1001
  %v1793 = vpop.f32.mrf.mxu0
  %v1794 = vadd.f32 0.0, %v1793
  %v1795 = vpop.f32.mrf.mxu0
  %v1796 = vpop.f32.mrf.mxu0
  %v1797 = vadd.f32 0.0, %v1796
  %v1798 = vpop.f32.mrf.mxu0
  %1799 = vmatprep.mubr.bf16.mxu0 0
  %1800 = vmatmul.mubr.bf16.gmra.mxu0 %v1004
  %v1801 = vpop.f32.mrf.mxu0
  %v1802 = vadd.f32 0.0, %v1801
  %v1803 = vpop.f32.mrf.mxu0
  %v1804 = vpop.f32.mrf.mxu0
  %v1805 = vadd.f32 0.0, %v1804
  %v1806 = vpop.f32.mrf.mxu0
  %1807 = vmatprep.mubr.bf16.mxu0 0
  %1808 = vmatmul.mubr.bf16.gmra.mxu0 %v1007
  %v1809 = vpop.f32.mrf.mxu0
  %v1810 = vadd.f32 0.0, %v1809
  %v1811 = vpop.f32.mrf.mxu0
  %v1812 = vpop.f32.mrf.mxu0
  %v1813 = vadd.f32 0.0, %v1812
  %v1814 = vpop.f32.mrf.mxu0
  %1815 = vmatprep.mubr.bf16.mxu0 0
  %1816 = vmatmul.mubr.bf16.gmra.mxu0 %v1010
  %v1817 = vpop.f32.mrf.mxu0
  %v1818 = vadd.f32 0.0, %v1817
  %v1819 = vpop.f32.mrf.mxu0
  %v1820 = vpop.f32.mrf.mxu0
  %v1821 = vadd.f32 0.0, %v1820
  %v1822 = vpop.f32.mrf.mxu0
  %1823 = vmatprep.mubr.bf16.mxu0 0
  %1824 = vmatmul.mubr.bf16.gmra.mxu0 %v1013
  %v1825 = vpop.f32.mrf.mxu0
  %v1826 = vadd.f32 0.0, %v1825
  %v1827 = vpop.f32.mrf.mxu0
  %v1828 = vpop.f32.mrf.mxu0
  %v1829 = vadd.f32 0.0, %v1828
  %v1830 = vpop.f32.mrf.mxu0
  %1831 = vdwg.mxu0
  %v1832 = vadd.f32 %v1050, %v1053
  %v1833 = vadd.f32 %v1832, %v1058
  %v1834 = vadd.f32 %v1833, %v1061
  %v1835 = vadd.f32 %v1834, %v1066
  %v1836 = vadd.f32 %v1835, %v1069
  %v1837 = vadd.f32 %v1836, %v1074
  %v1838 = vadd.f32 %v1837, %v1077
  %v1839 = vadd.f32 %v1838, %v1082
  %v1840 = vadd.f32 %v1839, %v1085
  %v1841 = vadd.f32 %v1840, %v1090
  %v1842 = vadd.f32 %v1841, %v1093
  %v1843 = vadd.f32 %v1842, %v1098
  %v1844 = vadd.f32 %v1843, %v1101
  %v1845 = vadd.f32 %v1844, %v1106
  %v1846 = vadd.f32 %v1845, %v1109
  %v1847 = vadd.f32 %v1846, %v1114
  %v1848 = vadd.f32 %v1847, %v1117
  %v1849 = vadd.f32 %v1848, %v1122
  %v1850 = vadd.f32 %v1849, %v1125
  %v1851 = vadd.f32 %v1850, %v1130
  %v1852 = vadd.f32 %v1851, %v1133
  %v1853 = vadd.f32 %v1852, %v1138
  %v1854 = vadd.f32 %v1853, %v1141
  %v1855 = vadd.f32 %v1854, %v1146
  %v1856 = vadd.f32 %v1855, %v1149
  %v1857 = vadd.f32 %v1856, %v1154
  %v1858 = vadd.f32 %v1857, %v1157
  %v1859 = vadd.f32 %v1858, %v1162
  %v1860 = vadd.f32 %v1859, %v1165
  %v1861 = vadd.f32 %v1860, %v1170
  %v1862 = vadd.f32 %v1861, %v1173
  %v1863 = vadd.f32 %v1862, %v1178
  %v1864 = vadd.f32 %v1863, %v1181
  %v1865 = vadd.f32 %v1864, %v1186
  %v1866 = vadd.f32 %v1865, %v1189
  %v1867 = vadd.f32 %v1866, %v1194
  %v1868 = vadd.f32 %v1867, %v1197
  %v1869 = vadd.f32 %v1868, %v1202
  %v1870 = vadd.f32 %v1869, %v1205
  %v1871 = vadd.f32 %v1870, %v1210
  %v1872 = vadd.f32 %v1871, %v1213
  %v1873 = vadd.f32 %v1872, %v1218
  %v1874 = vadd.f32 %v1873, %v1221
  %v1875 = vadd.f32 %v1874, %v1226
  %v1876 = vadd.f32 %v1875, %v1229
  %v1877 = vadd.f32 %v1876, %v1234
  %v1878 = vadd.f32 %v1877, %v1237
  %v1879 = vadd.f32 %v1878, %v1242
  %v1880 = vadd.f32 %v1879, %v1245
  %v1881 = vadd.f32 %v1880, %v1250
  %v1882 = vadd.f32 %v1881, %v1253
  %v1883 = vadd.f32 %v1882, %v1258
  %v1884 = vadd.f32 %v1883, %v1261
  %v1885 = vadd.f32 %v1884, %v1266
  %v1886 = vadd.f32 %v1885, %v1269
  %v1887 = vadd.f32 %v1886, %v1274
  %v1888 = vadd.f32 %v1887, %v1277
  %v1889 = vadd.f32 %v1888, %v1282
  %v1890 = vadd.f32 %v1889, %v1285
  %v1891 = vadd.f32 %v1890, %v1290
  %v1892 = vadd.f32 %v1891, %v1293
  %v1893 = vadd.f32 %v1892, %v1298
  %v1894 = vadd.f32 %v1893, %v1301
  %v1895 = vadd.f32 %v1894, %v1306
  %v1896 = vadd.f32 %v1895, %v1309
  %v1897 = vadd.f32 %v1896, %v1314
  %v1898 = vadd.f32 %v1897, %v1317
  %v1899 = vadd.f32 %v1898, %v1322
  %v1900 = vadd.f32 %v1899, %v1325
  %v1901 = vadd.f32 %v1900, %v1330
  %v1902 = vadd.f32 %v1901, %v1333
  %v1903 = vadd.f32 %v1902, %v1338
  %v1904 = vadd.f32 %v1903, %v1341
  %v1905 = vadd.f32 %v1904, %v1346
  %v1906 = vadd.f32 %v1905, %v1349
  %v1907 = vadd.f32 %v1906, %v1354
  %v1908 = vadd.f32 %v1907, %v1357
  %v1909 = vadd.f32 %v1908, %v1362
  %v1910 = vadd.f32 %v1909, %v1365
  %v1911 = vadd.f32 %v1910, %v1370
  %v1912 = vadd.f32 %v1911, %v1373
  %v1913 = vadd.f32 %v1912, %v1378
  %v1914 = vadd.f32 %v1913, %v1381
  %v1915 = vadd.f32 %v1914, %v1386
  %v1916 = vadd.f32 %v1915, %v1389
  %v1917 = vadd.f32 %v1916, %v1394
  %v1918 = vadd.f32 %v1917, %v1397
  %v1919 = vadd.f32 %v1918, %v1402
  %v1920 = vadd.f32 %v1919, %v1405
  %v1921 = vadd.f32 %v1920, %v1410
  %v1922 = vadd.f32 %v1921, %v1413
  %v1923 = vadd.f32 %v1922, %v1418
  %v1924 = vadd.f32 %v1923, %v1421
  %v1925 = vadd.f32 %v1924, %v1426
  %v1926 = vadd.f32 %v1925, %v1429
  %v1927 = vadd.f32 %v1926, %v1434
  %v1928 = vadd.f32 %v1927, %v1437
  %v1929 = vadd.f32 %v1928, %v1442
  %v1930 = vadd.f32 %v1929, %v1445
  %v1931 = vadd.f32 %v1930, %v1450
  %v1932 = vadd.f32 %v1931, %v1453
  %v1933 = vadd.f32 %v1932, %v1458
  %v1934 = vadd.f32 %v1933, %v1461
  %v1935 = vadd.f32 %v1934, %v1466
  %v1936 = vadd.f32 %v1935, %v1469
  %v1937 = vadd.f32 %v1936, %v1474
  %v1938 = vadd.f32 %v1937, %v1477
  %v1939 = vadd.f32 %v1938, %v1482
  %v1940 = vadd.f32 %v1939, %v1485
  %v1941 = vadd.f32 %v1940, %v1490
  %v1942 = vadd.f32 %v1941, %v1493
  %v1943 = vadd.f32 %v1942, %v1498
  %v1944 = vadd.f32 %v1943, %v1501
  %v1945 = vadd.f32 %v1944, %v1506
  %v1946 = vadd.f32 %v1945, %v1509
  %v1947 = vadd.f32 %v1946, %v1514
  %v1948 = vadd.f32 %v1947, %v1517
  %v1949 = vadd.f32 %v1948, %v1522
  %v1950 = vadd.f32 %v1949, %v1525
  %v1951 = vadd.f32 %v1950, %v1530
  %v1952 = vadd.f32 %v1951, %v1533
  %v1953 = vadd.f32 %v1952, %v1538
  %v1954 = vadd.f32 %v1953, %v1541
  %v1955 = vadd.f32 %v1954, %v1546
  %v1956 = vadd.f32 %v1955, %v1549
  %v1957 = vadd.f32 %v1956, %v1554
  %v1958 = vadd.f32 %v1957, %v1557
  %v1959 = vadd.f32 %v1958, %v1562
  %v1960 = vadd.f32 %v1959, %v1565
  %v1961 = vadd.f32 %v1960, %v1570
  %v1962 = vadd.f32 %v1961, %v1573
  %v1963 = vadd.f32 %v1962, %v1578
  %v1964 = vadd.f32 %v1963, %v1581
  %v1965 = vadd.f32 %v1964, %v1586
  %v1966 = vadd.f32 %v1965, %v1589
  %v1967 = vadd.f32 %v1966, %v1594
  %v1968 = vadd.f32 %v1967, %v1597
  %v1969 = vadd.f32 %v1968, %v1602
  %v1970 = vadd.f32 %v1969, %v1605
  %v1971 = vadd.f32 %v1970, %v1610
  %v1972 = vadd.f32 %v1971, %v1613
  %v1973 = vadd.f32 %v1972, %v1618
  %v1974 = vadd.f32 %v1973, %v1621
  %v1975 = vadd.f32 %v1974, %v1626
  %v1976 = vadd.f32 %v1975, %v1629
  %v1977 = vadd.f32 %v1976, %v1634
  %v1978 = vadd.f32 %v1977, %v1637
  %v1979 = vadd.f32 %v1978, %v1642
  %v1980 = vadd.f32 %v1979, %v1645
  %v1981 = vadd.f32 %v1980, %v1650
  %v1982 = vadd.f32 %v1981, %v1653
  %v1983 = vadd.f32 %v1982, %v1658
  %v1984 = vadd.f32 %v1983, %v1661
  %v1985 = vadd.f32 %v1984, %v1666
  %v1986 = vadd.f32 %v1985, %v1669
  %v1987 = vadd.f32 %v1986, %v1674
  %v1988 = vadd.f32 %v1987, %v1677
  %v1989 = vadd.f32 %v1988, %v1682
  %v1990 = vadd.f32 %v1989, %v1685
  %v1991 = vadd.f32 %v1990, %v1690
  %v1992 = vadd.f32 %v1991, %v1693
  %v1993 = vadd.f32 %v1992, %v1698
  %v1994 = vadd.f32 %v1993, %v1701
  %v1995 = vadd.f32 %v1994, %v1706
  %v1996 = vadd.f32 %v1995, %v1709
  %v1997 = vadd.f32 %v1996, %v1714
  %v1998 = vadd.f32 %v1997, %v1717
  %v1999 = vadd.f32 %v1998, %v1722
  %v2000 = vadd.f32 %v1999, %v1725
  %v2001 = vadd.f32 %v2000, %v1730
  %v2002 = vadd.f32 %v2001, %v1733
  %v2003 = vadd.f32 %v2002, %v1738
  %v2004 = vadd.f32 %v2003, %v1741
  %v2005 = vadd.f32 %v2004, %v1746
  %v2006 = vadd.f32 %v2005, %v1749
  %v2007 = vadd.f32 %v2006, %v1754
  %v2008 = vadd.f32 %v2007, %v1757
  %v2009 = vadd.f32 %v2008, %v1762
  %v2010 = vadd.f32 %v2009, %v1765
  %v2011 = vadd.f32 %v2010, %v1770
  %v2012 = vadd.f32 %v2011, %v1773
  %v2013 = vadd.f32 %v2012, %v1778
  %v2014 = vadd.f32 %v2013, %v1781
  %v2015 = vadd.f32 %v2014, %v1786
  %v2016 = vadd.f32 %v2015, %v1789
  %v2017 = vadd.f32 %v2016, %v1794
  %v2018 = vadd.f32 %v2017, %v1797
  %v2019 = vadd.f32 %v2018, %v1802
  %v2020 = vadd.f32 %v2019, %v1805
  %v2021 = vadd.f32 %v2020, %v1810
  %v2022 = vadd.f32 %v2021, %v1813
  %v2023 = vadd.f32 %v2022, %v1818
  %v2024 = vadd.f32 %v2023, %v1821
  %v2025 = vadd.f32 %v2024, %v1826
  %v2026 = vadd.f32 %v2025, %v1829
  %v2027 = vrot.slane %v2026, 4
  %v2028 = vadd.f32 %v2026, %v2027
  %v2029 = vrot.slane %v2028, 2
  %v2030 = vadd.f32 %v2028, %v2029
  %v2031 = vrot.slane %v2030, 1
  %v2032 = vadd.f32 %v2030, %v2031
  %v2033 = vmul.f32 %v1050, %v1050
  %v2034 = vmul.f32 %v1053, %v1053
  %v2035 = vmul.f32 %v1058, %v1058
  %v2036 = vmul.f32 %v1061, %v1061
  %v2037 = vmul.f32 %v1066, %v1066
  %v2038 = vmul.f32 %v1069, %v1069
  %v2039 = vmul.f32 %v1074, %v1074
  %v2040 = vmul.f32 %v1077, %v1077
  %v2041 = vmul.f32 %v1082, %v1082
  %v2042 = vmul.f32 %v1085, %v1085
  %v2043 = vmul.f32 %v1090, %v1090
  %v2044 = vmul.f32 %v1093, %v1093
  %v2045 = vmul.f32 %v1098, %v1098
  %v2046 = vmul.f32 %v1101, %v1101
  %v2047 = vmul.f32 %v1106, %v1106
  %v2048 = vmul.f32 %v1109, %v1109
  %v2049 = vmul.f32 %v1114, %v1114
  %v2050 = vmul.f32 %v1117, %v1117
  %v2051 = vmul.f32 %v1122, %v1122
  %v2052 = vmul.f32 %v1125, %v1125
  %v2053 = vmul.f32 %v1130, %v1130
  %v2054 = vmul.f32 %v1133, %v1133
  %v2055 = vmul.f32 %v1138, %v1138
  %v2056 = vmul.f32 %v1141, %v1141
  %v2057 = vmul.f32 %v1146, %v1146
  %v2058 = vmul.f32 %v1149, %v1149
  %v2059 = vmul.f32 %v1154, %v1154
  %v2060 = vmul.f32 %v1157, %v1157
  %v2061 = vmul.f32 %v1162, %v1162
  %v2062 = vmul.f32 %v1165, %v1165
  %v2063 = vmul.f32 %v1170, %v1170
  %v2064 = vmul.f32 %v1173, %v1173
  %v2065 = vmul.f32 %v1178, %v1178
  %v2066 = vmul.f32 %v1181, %v1181
  %v2067 = vmul.f32 %v1186, %v1186
  %v2068 = vmul.f32 %v1189, %v1189
  %v2069 = vmul.f32 %v1194, %v1194
  %v2070 = vmul.f32 %v1197, %v1197
  %v2071 = vmul.f32 %v1202, %v1202
  %v2072 = vmul.f32 %v1205, %v1205
  %v2073 = vmul.f32 %v1210, %v1210
  %v2074 = vmul.f32 %v1213, %v1213
  %v2075 = vmul.f32 %v1218, %v1218
  %v2076 = vmul.f32 %v1221, %v1221
  %v2077 = vmul.f32 %v1226, %v1226
  %v2078 = vmul.f32 %v1229, %v1229
  %v2079 = vmul.f32 %v1234, %v1234
  %v2080 = vmul.f32 %v1237, %v1237
  %v2081 = vmul.f32 %v1242, %v1242
  %v2082 = vmul.f32 %v1245, %v1245
  %v2083 = vmul.f32 %v1250, %v1250
  %v2084 = vmul.f32 %v1253, %v1253
  %v2085 = vmul.f32 %v1258, %v1258
  %v2086 = vmul.f32 %v1261, %v1261
  %v2087 = vmul.f32 %v1266, %v1266
  %v2088 = vmul.f32 %v1269, %v1269
  %v2089 = vmul.f32 %v1274, %v1274
  %v2090 = vmul.f32 %v1277, %v1277
  %v2091 = vmul.f32 %v1282, %v1282
  %v2092 = vmul.f32 %v1285, %v1285
  %v2093 = vmul.f32 %v1290, %v1290
  %v2094 = vmul.f32 %v1293, %v1293
  %v2095 = vmul.f32 %v1298, %v1298
  %v2096 = vmul.f32 %v1301, %v1301
  %v2097 = vmul.f32 %v1306, %v1306
  %v2098 = vmul.f32 %v1309, %v1309
  %v2099 = vmul.f32 %v1314, %v1314
  %v2100 = vmul.f32 %v1317, %v1317
  %v2101 = vmul.f32 %v1322, %v1322
  %v2102 = vmul.f32 %v1325, %v1325
  %v2103 = vmul.f32 %v1330, %v1330
  %v2104 = vmul.f32 %v1333, %v1333
  %v2105 = vmul.f32 %v1338, %v1338
  %v2106 = vmul.f32 %v1341, %v1341
  %v2107 = vmul.f32 %v1346, %v1346
  %v2108 = vmul.f32 %v1349, %v1349
  %v2109 = vmul.f32 %v1354, %v1354
  %v2110 = vmul.f32 %v1357, %v1357
  %v2111 = vmul.f32 %v1362, %v1362
  %v2112 = vmul.f32 %v1365, %v1365
  %v2113 = vmul.f32 %v1370, %v1370
  %v2114 = vmul.f32 %v1373, %v1373
  %v2115 = vmul.f32 %v1378, %v1378
  %v2116 = vmul.f32 %v1381, %v1381
  %v2117 = vmul.f32 %v1386, %v1386
  %v2118 = vmul.f32 %v1389, %v1389
  %v2119 = vmul.f32 %v1394, %v1394
  %v2120 = vmul.f32 %v1397, %v1397
  %v2121 = vmul.f32 %v1402, %v1402
  %v2122 = vmul.f32 %v1405, %v1405
  %v2123 = vmul.f32 %v1410, %v1410
  %v2124 = vmul.f32 %v1413, %v1413
  %v2125 = vmul.f32 %v1418, %v1418
  %v2126 = vmul.f32 %v1421, %v1421
  %v2127 = vmul.f32 %v1426, %v1426
  %v2128 = vmul.f32 %v1429, %v1429
  %v2129 = vmul.f32 %v1434, %v1434
  %v2130 = vmul.f32 %v1437, %v1437
  %v2131 = vmul.f32 %v1442, %v1442
  %v2132 = vmul.f32 %v1445, %v1445
  %v2133 = vmul.f32 %v1450, %v1450
  %v2134 = vmul.f32 %v1453, %v1453
  %v2135 = vmul.f32 %v1458, %v1458
  %v2136 = vmul.f32 %v1461, %v1461
  %v2137 = vmul.f32 %v1466, %v1466
  %v2138 = vmul.f32 %v1469, %v1469
  %v2139 = vmul.f32 %v1474, %v1474
  %v2140 = vmul.f32 %v1477, %v1477
  %v2141 = vmul.f32 %v1482, %v1482
  %v2142 = vmul.f32 %v1485, %v1485
  %v2143 = vmul.f32 %v1490, %v1490
  %v2144 = vmul.f32 %v1493, %v1493
  %v2145 = vmul.f32 %v1498, %v1498
  %v2146 = vmul.f32 %v1501, %v1501
  %v2147 = vmul.f32 %v1506, %v1506
  %v2148 = vmul.f32 %v1509, %v1509
  %v2149 = vmul.f32 %v1514, %v1514
  %v2150 = vmul.f32 %v1517, %v1517
  %v2151 = vmul.f32 %v1522, %v1522
  %v2152 = vmul.f32 %v1525, %v1525
  %v2153 = vmul.f32 %v1530, %v1530
  %v2154 = vmul.f32 %v1533, %v1533
  %v2155 = vmul.f32 %v1538, %v1538
  %v2156 = vmul.f32 %v1541, %v1541
  %v2157 = vmul.f32 %v1546, %v1546
  %v2158 = vmul.f32 %v1549, %v1549
  %v2159 = vmul.f32 %v1554, %v1554
  %v2160 = vmul.f32 %v1557, %v1557
  %v2161 = vmul.f32 %v1562, %v1562
  %v2162 = vmul.f32 %v1565, %v1565
  %v2163 = vmul.f32 %v1570, %v1570
  %v2164 = vmul.f32 %v1573, %v1573
  %v2165 = vmul.f32 %v1578, %v1578
  %v2166 = vmul.f32 %v1581, %v1581
  %v2167 = vmul.f32 %v1586, %v1586
  %v2168 = vmul.f32 %v1589, %v1589
  %v2169 = vmul.f32 %v1594, %v1594
  %v2170 = vmul.f32 %v1597, %v1597
  %v2171 = vmul.f32 %v1602, %v1602
  %v2172 = vmul.f32 %v1605, %v1605
  %v2173 = vmul.f32 %v1610, %v1610
  %v2174 = vmul.f32 %v1613, %v1613
  %v2175 = vmul.f32 %v1618, %v1618
  %v2176 = vmul.f32 %v1621, %v1621
  %v2177 = vmul.f32 %v1626, %v1626
  %v2178 = vmul.f32 %v1629, %v1629
  %v2179 = vmul.f32 %v1634, %v1634
  %v2180 = vmul.f32 %v1637, %v1637
  %v2181 = vmul.f32 %v1642, %v1642
  %v2182 = vmul.f32 %v1645, %v1645
  %v2183 = vmul.f32 %v1650, %v1650
  %v2184 = vmul.f32 %v1653, %v1653
  %v2185 = vmul.f32 %v1658, %v1658
  %v2186 = vmul.f32 %v1661, %v1661
  %v2187 = vmul.f32 %v1666, %v1666
  %v2188 = vmul.f32 %v1669, %v1669
  %v2189 = vmul.f32 %v1674, %v1674
  %v2190 = vmul.f32 %v1677, %v1677
  %v2191 = vmul.f32 %v1682, %v1682
  %v2192 = vmul.f32 %v1685, %v1685
  %v2193 = vmul.f32 %v1690, %v1690
  %v2194 = vmul.f32 %v1693, %v1693
  %v2195 = vmul.f32 %v1698, %v1698
  %v2196 = vmul.f32 %v1701, %v1701
  %v2197 = vmul.f32 %v1706, %v1706
  %v2198 = vmul.f32 %v1709, %v1709
  %v2199 = vmul.f32 %v1714, %v1714
  %v2200 = vmul.f32 %v1717, %v1717
  %v2201 = vmul.f32 %v1722, %v1722
  %v2202 = vmul.f32 %v1725, %v1725
  %v2203 = vmul.f32 %v1730, %v1730
  %v2204 = vmul.f32 %v1733, %v1733
  %v2205 = vmul.f32 %v1738, %v1738
  %v2206 = vmul.f32 %v1741, %v1741
  %v2207 = vmul.f32 %v1746, %v1746
  %v2208 = vmul.f32 %v1749, %v1749
  %v2209 = vmul.f32 %v1754, %v1754
  %v2210 = vmul.f32 %v1757, %v1757
  %v2211 = vmul.f32 %v1762, %v1762
  %v2212 = vmul.f32 %v1765, %v1765
  %v2213 = vmul.f32 %v1770, %v1770
  %v2214 = vmul.f32 %v1773, %v1773
  %v2215 = vmul.f32 %v1778, %v1778
  %v2216 = vmul.f32 %v1781, %v1781
  %v2217 = vmul.f32 %v1786, %v1786
  %v2218 = vmul.f32 %v1789, %v1789
  %v2219 = vmul.f32 %v1794, %v1794
  %v2220 = vmul.f32 %v1797, %v1797
  %v2221 = vmul.f32 %v1802, %v1802
  %v2222 = vmul.f32 %v1805, %v1805
  %v2223 = vmul.f32 %v1810, %v1810
  %v2224 = vmul.f32 %v1813, %v1813
  %v2225 = vmul.f32 %v1818, %v1818
  %v2226 = vmul.f32 %v1821, %v1821
  %v2227 = vmul.f32 %v1826, %v1826
  %v2228 = vmul.f32 %v1829, %v1829
  %v2229 = vadd.f32 %v2033, %v2034
  %v2230 = vadd.f32 %v2229, %v2035
  %v2231 = vadd.f32 %v2230, %v2036
  %v2232 = vadd.f32 %v2231, %v2037
  %v2233 = vadd.f32 %v2232, %v2038
  %v2234 = vadd.f32 %v2233, %v2039
  %v2235 = vadd.f32 %v2234, %v2040
  %v2236 = vadd.f32 %v2235, %v2041
  %v2237 = vadd.f32 %v2236, %v2042
  %v2238 = vadd.f32 %v2237, %v2043
  %v2239 = vadd.f32 %v2238, %v2044
  %v2240 = vadd.f32 %v2239, %v2045
  %v2241 = vadd.f32 %v2240, %v2046
  %v2242 = vadd.f32 %v2241, %v2047
  %v2243 = vadd.f32 %v2242, %v2048
  %v2244 = vadd.f32 %v2243, %v2049
  %v2245 = vadd.f32 %v2244, %v2050
  %v2246 = vadd.f32 %v2245, %v2051
  %v2247 = vadd.f32 %v2246, %v2052
  %v2248 = vadd.f32 %v2247, %v2053
  %v2249 = vadd.f32 %v2248, %v2054
  %v2250 = vadd.f32 %v2249, %v2055
  %v2251 = vadd.f32 %v2250, %v2056
  %v2252 = vadd.f32 %v2251, %v2057
  %v2253 = vadd.f32 %v2252, %v2058
  %v2254 = vadd.f32 %v2253, %v2059
  %v2255 = vadd.f32 %v2254, %v2060
  %v2256 = vadd.f32 %v2255, %v2061
  %v2257 = vadd.f32 %v2256, %v2062
  %v2258 = vadd.f32 %v2257, %v2063
  %v2259 = vadd.f32 %v2258, %v2064
  %v2260 = vadd.f32 %v2259, %v2065
  %v2261 = vadd.f32 %v2260, %v2066
  %v2262 = vadd.f32 %v2261, %v2067
  %v2263 = vadd.f32 %v2262, %v2068
  %v2264 = vadd.f32 %v2263, %v2069
  %v2265 = vadd.f32 %v2264, %v2070
  %v2266 = vadd.f32 %v2265, %v2071
  %v2267 = vadd.f32 %v2266, %v2072
  %v2268 = vadd.f32 %v2267, %v2073
  %v2269 = vadd.f32 %v2268, %v2074
  %v2270 = vadd.f32 %v2269, %v2075
  %v2271 = vadd.f32 %v2270, %v2076
  %v2272 = vadd.f32 %v2271, %v2077
  %v2273 = vadd.f32 %v2272, %v2078
  %v2274 = vadd.f32 %v2273, %v2079
  %v2275 = vadd.f32 %v2274, %v2080
  %v2276 = vadd.f32 %v2275, %v2081
  %v2277 = vadd.f32 %v2276, %v2082
  %v2278 = vadd.f32 %v2277, %v2083
  %v2279 = vadd.f32 %v2278, %v2084
  %v2280 = vadd.f32 %v2279, %v2085
  %v2281 = vadd.f32 %v2280, %v2086
  %v2282 = vadd.f32 %v2281, %v2087
  %v2283 = vadd.f32 %v2282, %v2088
  %v2284 = vadd.f32 %v2283, %v2089
  %v2285 = vadd.f32 %v2284, %v2090
  %v2286 = vadd.f32 %v2285, %v2091
  %v2287 = vadd.f32 %v2286, %v2092
  %v2288 = vadd.f32 %v2287, %v2093
  %v2289 = vadd.f32 %v2288, %v2094
  %v2290 = vadd.f32 %v2289, %v2095
  %v2291 = vadd.f32 %v2290, %v2096
  %v2292 = vadd.f32 %v2291, %v2097
  %v2293 = vadd.f32 %v2292, %v2098
  %v2294 = vadd.f32 %v2293, %v2099
  %v2295 = vadd.f32 %v2294, %v2100
  %v2296 = vadd.f32 %v2295, %v2101
  %v2297 = vadd.f32 %v2296, %v2102
  %v2298 = vadd.f32 %v2297, %v2103
  %v2299 = vadd.f32 %v2298, %v2104
  %v2300 = vadd.f32 %v2299, %v2105
  %v2301 = vadd.f32 %v2300, %v2106
  %v2302 = vadd.f32 %v2301, %v2107
  %v2303 = vadd.f32 %v2302, %v2108
  %v2304 = vadd.f32 %v2303, %v2109
  %v2305 = vadd.f32 %v2304, %v2110
  %v2306 = vadd.f32 %v2305, %v2111
  %v2307 = vadd.f32 %v2306, %v2112
  %v2308 = vadd.f32 %v2307, %v2113
  %v2309 = vadd.f32 %v2308, %v2114
  %v2310 = vadd.f32 %v2309, %v2115
  %v2311 = vadd.f32 %v2310, %v2116
  %v2312 = vadd.f32 %v2311, %v2117
  %v2313 = vadd.f32 %v2312, %v2118
  %v2314 = vadd.f32 %v2313, %v2119
  %v2315 = vadd.f32 %v2314, %v2120
  %v2316 = vadd.f32 %v2315, %v2121
  %v2317 = vadd.f32 %v2316, %v2122
  %v2318 = vadd.f32 %v2317, %v2123
  %v2319 = vadd.f32 %v2318, %v2124
  %v2320 = vadd.f32 %v2319, %v2125
  %v2321 = vadd.f32 %v2320, %v2126
  %v2322 = vadd.f32 %v2321, %v2127
  %v2323 = vadd.f32 %v2322, %v2128
  %v2324 = vadd.f32 %v2323, %v2129
  %v2325 = vadd.f32 %v2324, %v2130
  %v2326 = vadd.f32 %v2325, %v2131
  %v2327 = vadd.f32 %v2326, %v2132
  %v2328 = vadd.f32 %v2327, %v2133
  %v2329 = vadd.f32 %v2328, %v2134
  %v2330 = vadd.f32 %v2329, %v2135
  %v2331 = vadd.f32 %v2330, %v2136
  %v2332 = vadd.f32 %v2331, %v2137
  %v2333 = vadd.f32 %v2332, %v2138
  %v2334 = vadd.f32 %v2333, %v2139
  %v2335 = vadd.f32 %v2334, %v2140
  %v2336 = vadd.f32 %v2335, %v2141
  %v2337 = vadd.f32 %v2336, %v2142
  %v2338 = vadd.f32 %v2337, %v2143
  %v2339 = vadd.f32 %v2338, %v2144
  %v2340 = vadd.f32 %v2339, %v2145
  %v2341 = vadd.f32 %v2340, %v2146
  %v2342 = vadd.f32 %v2341, %v2147
  %v2343 = vadd.f32 %v2342, %v2148
  %v2344 = vadd.f32 %v2343, %v2149
  %v2345 = vadd.f32 %v2344, %v2150
  %v2346 = vadd.f32 %v2345, %v2151
  %v2347 = vadd.f32 %v2346, %v2152
  %v2348 = vadd.f32 %v2347, %v2153
  %v2349 = vadd.f32 %v2348, %v2154
  %v2350 = vadd.f32 %v2349, %v2155
  %v2351 = vadd.f32 %v2350, %v2156
  %v2352 = vadd.f32 %v2351, %v2157
  %v2353 = vadd.f32 %v2352, %v2158
  %v2354 = vadd.f32 %v2353, %v2159
  %v2355 = vadd.f32 %v2354, %v2160
  %v2356 = vadd.f32 %v2355, %v2161
  %v2357 = vadd.f32 %v2356, %v2162
  %v2358 = vadd.f32 %v2357, %v2163
  %v2359 = vadd.f32 %v2358, %v2164
  %v2360 = vadd.f32 %v2359, %v2165
  %v2361 = vadd.f32 %v2360, %v2166
  %v2362 = vadd.f32 %v2361, %v2167
  %v2363 = vadd.f32 %v2362, %v2168
  %v2364 = vadd.f32 %v2363, %v2169
  %v2365 = vadd.f32 %v2364, %v2170
  %v2366 = vadd.f32 %v2365, %v2171
  %v2367 = vadd.f32 %v2366, %v2172
  %v2368 = vadd.f32 %v2367, %v2173
  %v2369 = vadd.f32 %v2368, %v2174
  %v2370 = vadd.f32 %v2369, %v2175
  %v2371 = vadd.f32 %v2370, %v2176
  %v2372 = vadd.f32 %v2371, %v2177
  %v2373 = vadd.f32 %v2372, %v2178
  %v2374 = vadd.f32 %v2373, %v2179
  %v2375 = vadd.f32 %v2374, %v2180
  %v2376 = vadd.f32 %v2375, %v2181
  %v2377 = vadd.f32 %v2376, %v2182
  %v2378 = vadd.f32 %v2377, %v2183
  %v2379 = vadd.f32 %v2378, %v2184
  %v2380 = vadd.f32 %v2379, %v2185
  %v2381 = vadd.f32 %v2380, %v2186
  %v2382 = vadd.f32 %v2381, %v2187
  %v2383 = vadd.f32 %v2382, %v2188
  %v2384 = vadd.f32 %v2383, %v2189
  %v2385 = vadd.f32 %v2384, %v2190
  %v2386 = vadd.f32 %v2385, %v2191
  %v2387 = vadd.f32 %v2386, %v2192
  %v2388 = vadd.f32 %v2387, %v2193
  %v2389 = vadd.f32 %v2388, %v2194
  %v2390 = vadd.f32 %v2389, %v2195
  %v2391 = vadd.f32 %v2390, %v2196
  %v2392 = vadd.f32 %v2391, %v2197
  %v2393 = vadd.f32 %v2392, %v2198
  %v2394 = vadd.f32 %v2393, %v2199
  %v2395 = vadd.f32 %v2394, %v2200
  %v2396 = vadd.f32 %v2395, %v2201
  %v2397 = vadd.f32 %v2396, %v2202
  %v2398 = vadd.f32 %v2397, %v2203
  %v2399 = vadd.f32 %v2398, %v2204
  %v2400 = vadd.f32 %v2399, %v2205
  %v2401 = vadd.f32 %v2400, %v2206
  %v2402 = vadd.f32 %v2401, %v2207
  %v2403 = vadd.f32 %v2402, %v2208
  %v2404 = vadd.f32 %v2403, %v2209
  %v2405 = vadd.f32 %v2404, %v2210
  %v2406 = vadd.f32 %v2405, %v2211
  %v2407 = vadd.f32 %v2406, %v2212
  %v2408 = vadd.f32 %v2407, %v2213
  %v2409 = vadd.f32 %v2408, %v2214
  %v2410 = vadd.f32 %v2409, %v2215
  %v2411 = vadd.f32 %v2410, %v2216
  %v2412 = vadd.f32 %v2411, %v2217
  %v2413 = vadd.f32 %v2412, %v2218
  %v2414 = vadd.f32 %v2413, %v2219
  %v2415 = vadd.f32 %v2414, %v2220
  %v2416 = vadd.f32 %v2415, %v2221
  %v2417 = vadd.f32 %v2416, %v2222
  %v2418 = vadd.f32 %v2417, %v2223
  %v2419 = vadd.f32 %v2418, %v2224
  %v2420 = vadd.f32 %v2419, %v2225
  %v2421 = vadd.f32 %v2420, %v2226
  %v2422 = vadd.f32 %v2421, %v2227
  %v2423 = vadd.f32 %v2422, %v2228
  %v2424 = vrot.slane %v2423, 4
  %v2425 = vadd.f32 %v2423, %v2424
  %v2426 = vrot.slane %v2425, 2
  %v2427 = vadd.f32 %v2425, %v2426
  %v2428 = vrot.slane %v2427, 1
  %v2429 = vadd.f32 %v2427, %v2428
  %v2430 = vmul.f32 %v2032, 0.0006377551
  %v2431 = vmul.f32 %v2429, 0.0006377551
  %v2432 = vmul.f32 %v2430, %v2430
  %v2433 = vsub.f32 %v2431, %v2432
  %v2434 = vld [vmem:[%s2] sm:$0x1]
  %v2435 = vadd.f32 %v2433, 1e-05
  %v2436 = vrsqrt.pop %v2435
  %v2437 = vmul.f32 %v2434, %v2436
  %v2438 = vld [vmem:[%s3] sm:$0x1]
  %v2439 = vmul.f32 %v2430, %v2437
  %v2440 = vsub.f32 %v2438, %v2439
  %v2441 = vmax.f32 %v1050, %v1245
  %v2442 = vmax.f32 %v1053, %v1250
  %v2443 = vmax.f32 %v1058, %v1253
  %v2444 = vmax.f32 %v1061, %v1258
  %v2445 = vmax.f32 %v1066, %v1261
  %v2446 = vmax.f32 %v1069, %v1266
  %v2447 = vmax.f32 %v1074, %v1269
  %v2448 = vmax.f32 %v1077, %v1274
  %v2449 = vmax.f32 %v1082, %v1277
  %v2450 = vmax.f32 %v1085, %v1282
  %v2451 = vmax.f32 %v1090, %v1285
  %v2452 = vmax.f32 %v1093, %v1290
  %v2453 = vmax.f32 %v1098, %v1293
  %v2454 = vmax.f32 %v1101, %v1298
  %v2455 = vmax.f32 %v1106, %v1301
  %v2456 = vmax.f32 %v1109, %v1306
  %v2457 = vmax.f32 %v1114, %v1309
  %v2458 = vmax.f32 %v1117, %v1314
  %v2459 = vmax.f32 %v1122, %v1317
  %v2460 = vmax.f32 %v1125, %v1322
  %v2461 = vmax.f32 %v1130, %v1325
  %v2462 = vmax.f32 %v1133, %v1330
  %v2463 = vmax.f32 %v1138, %v1333
  %v2464 = vmax.f32 %v1141, %v1338
  %v2465 = vmax.f32 %v1146, %v1341
  %v2466 = vmax.f32 %v1149, %v1346
  %v2467 = vmax.f32 %v1154, %v1349
  %v2468 = vmax.f32 %v1157, %v1354
  %v2469 = vmax.f32 %v1162, %v1357
  %v2470 = vmax.f32 %v1165, %v1362
  %v2471 = vmax.f32 %v1170, %v1365
  %v2472 = vmax.f32 %v1173, %v1370
  %v2473 = vmax.f32 %v1178, %v1373
  %v2474 = vmax.f32 %v1181, %v1378
  %v2475 = vmax.f32 %v1186, %v1381
  %v2476 = vmax.f32 %v1189, %v1386
  %v2477 = vmax.f32 %v1194, %v1389
  %v2478 = vmax.f32 %v1197, %v1394
  %v2479 = vmax.f32 %v1202, %v1397
  %v2480 = vmax.f32 %v1205, %v1402
  %v2481 = vmax.f32 %v1210, %v1405
  %v2482 = vmax.f32 %v1213, %v1410
  %v2483 = vmax.f32 %v1218, %v1413
  %v2484 = vmax.f32 %v1221, %v1418
  %v2485 = vmax.f32 %v1226, %v1421
  %v2486 = vmax.f32 %v1229, %v1426
  %v2487 = vmax.f32 %v1234, %v1429
  %v2488 = vmax.f32 %v1237, %v1434
  %v2489 = vmax.f32 %v1242, %v1437
  %v2490 = vmax.f32 %v1442, %v1637
  %v2491 = vmax.f32 %v1445, %v1642
  %v2492 = vmax.f32 %v1450, %v1645
  %v2493 = vmax.f32 %v1453, %v1650
  %v2494 = vmax.f32 %v1458, %v1653
  %v2495 = vmax.f32 %v1461, %v1658
  %v2496 = vmax.f32 %v1466, %v1661
  %v2497 = vmax.f32 %v1469, %v1666
  %v2498 = vmax.f32 %v1474, %v1669
  %v2499 = vmax.f32 %v1477, %v1674
  %v2500 = vmax.f32 %v1482, %v1677
  %v2501 = vmax.f32 %v1485, %v1682
  %v2502 = vmax.f32 %v1490, %v1685
  %v2503 = vmax.f32 %v1493, %v1690
  %v2504 = vmax.f32 %v1498, %v1693
  %v2505 = vmax.f32 %v1501, %v1698
  %v2506 = vmax.f32 %v1506, %v1701
  %v2507 = vmax.f32 %v1509, %v1706
  %v2508 = vmax.f32 %v1514, %v1709
  %v2509 = vmax.f32 %v1517, %v1714
  %v2510 = vmax.f32 %v1522, %v1717
  %v2511 = vmax.f32 %v1525, %v1722
  %v2512 = vmax.f32 %v1530, %v1725
  %v2513 = vmax.f32 %v1533, %v1730
  %v2514 = vmax.f32 %v1538, %v1733
  %v2515 = vmax.f32 %v1541, %v1738
  %v2516 = vmax.f32 %v1546, %v1741
  %v2517 = vmax.f32 %v1549, %v1746
  %v2518 = vmax.f32 %v1554, %v1749
  %v2519 = vmax.f32 %v1557, %v1754
  %v2520 = vmax.f32 %v1562, %v1757
  %v2521 = vmax.f32 %v1565, %v1762
  %v2522 = vmax.f32 %v1570, %v1765
  %v2523 = vmax.f32 %v1573, %v1770
  %v2524 = vmax.f32 %v1578, %v1773
  %v2525 = vmax.f32 %v1581, %v1778
  %v2526 = vmax.f32 %v1586, %v1781
  %v2527 = vmax.f32 %v1589, %v1786
  %v2528 = vmax.f32 %v1594, %v1789
  %v2529 = vmax.f32 %v1597, %v1794
  %v2530 = vmax.f32 %v1602, %v1797
  %v2531 = vmax.f32 %v1605, %v1802
  %v2532 = vmax.f32 %v1610, %v1805
  %v2533 = vmax.f32 %v1613, %v1810
  %v2534 = vmax.f32 %v1618, %v1813
  %v2535 = vmax.f32 %v1621, %v1818
  %v2536 = vmax.f32 %v1626, %v1821
  %v2537 = vmax.f32 %v1629, %v1826
  %v2538 = vmax.f32 %v1634, %v1829
  %v2539 = vmax.f32 %v2441, %v2490
  %v2540 = vmax.f32 %v2442, %v2491
  %v2541 = vmax.f32 %v2443, %v2492
  %v2542 = vmax.f32 %v2444, %v2493
  %v2543 = vmax.f32 %v2445, %v2494
  %v2544 = vmax.f32 %v2446, %v2495
  %v2545 = vmax.f32 %v2447, %v2496
  %v2546 = vmax.f32 %v2448, %v2497
  %v2547 = vmax.f32 %v2449, %v2498
  %v2548 = vmax.f32 %v2450, %v2499
  %v2549 = vmax.f32 %v2451, %v2500
  %v2550 = vmax.f32 %v2452, %v2501
  %v2551 = vmax.f32 %v2453, %v2502
  %v2552 = vmax.f32 %v2454, %v2503
  %v2553 = vmax.f32 %v2455, %v2504
  %v2554 = vmax.f32 %v2456, %v2505
  %v2555 = vmax.f32 %v2457, %v2506
  %v2556 = vmax.f32 %v2458, %v2507
  %v2557 = vmax.f32 %v2459, %v2508
  %v2558 = vmax.f32 %v2460, %v2509
  %v2559 = vmax.f32 %v2461, %v2510
  %v2560 = vmax.f32 %v2462, %v2511
  %v2561 = vmax.f32 %v2463, %v2512
  %v2562 = vmax.f32 %v2464, %v2513
  %v2563 = vmax.f32 %v2465, %v2514
  %v2564 = vmax.f32 %v2466, %v2515
  %v2565 = vmax.f32 %v2467, %v2516
  %v2566 = vmax.f32 %v2468, %v2517
  %v2567 = vmax.f32 %v2469, %v2518
  %v2568 = vmax.f32 %v2470, %v2519
  %v2569 = vmax.f32 %v2471, %v2520
  %v2570 = vmax.f32 %v2472, %v2521
  %v2571 = vmax.f32 %v2473, %v2522
  %v2572 = vmax.f32 %v2474, %v2523
  %v2573 = vmax.f32 %v2475, %v2524
  %v2574 = vmax.f32 %v2476, %v2525
  %v2575 = vmax.f32 %v2477, %v2526
  %v2576 = vmax.f32 %v2478, %v2527
  %v2577 = vmax.f32 %v2479, %v2528
  %v2578 = vmax.f32 %v2480, %v2529
  %v2579 = vmax.f32 %v2481, %v2530
  %v2580 = vmax.f32 %v2482, %v2531
  %v2581 = vmax.f32 %v2483, %v2532
  %v2582 = vmax.f32 %v2484, %v2533
  %v2583 = vmax.f32 %v2485, %v2534
  %v2584 = vmax.f32 %v2486, %v2535
  %v2585 = vmax.f32 %v2487, %v2536
  %v2586 = vmax.f32 %v2488, %v2537
  %v2587 = vmax.f32 %v2489, %v2538
  %v2588 = vmin.f32 %v1050, %v1245
  %v2589 = vmin.f32 %v1053, %v1250
  %v2590 = vmin.f32 %v1058, %v1253
  %v2591 = vmin.f32 %v1061, %v1258
  %v2592 = vmin.f32 %v1066, %v1261
  %v2593 = vmin.f32 %v1069, %v1266
  %v2594 = vmin.f32 %v1074, %v1269
  %v2595 = vmin.f32 %v1077, %v1274
  %v2596 = vmin.f32 %v1082, %v1277
  %v2597 = vmin.f32 %v1085, %v1282
  %v2598 = vmin.f32 %v1090, %v1285
  %v2599 = vmin.f32 %v1093, %v1290
  %v2600 = vmin.f32 %v1098, %v1293
  %v2601 = vmin.f32 %v1101, %v1298
  %v2602 = vmin.f32 %v1106, %v1301
  %v2603 = vmin.f32 %v1109, %v1306
  %v2604 = vmin.f32 %v1114, %v1309
  %v2605 = vmin.f32 %v1117, %v1314
  %v2606 = vmin.f32 %v1122, %v1317
  %v2607 = vmin.f32 %v1125, %v1322
  %v2608 = vmin.f32 %v1130, %v1325
  %v2609 = vmin.f32 %v1133, %v1330
  %v2610 = vmin.f32 %v1138, %v1333
  %v2611 = vmin.f32 %v1141, %v1338
  %v2612 = vmin.f32 %v1146, %v1341
  %v2613 = vmin.f32 %v1149, %v1346
  %v2614 = vmin.f32 %v1154, %v1349
  %v2615 = vmin.f32 %v1157, %v1354
  %v2616 = vmin.f32 %v1162, %v1357
  %v2617 = vmin.f32 %v1165, %v1362
  %v2618 = vmin.f32 %v1170, %v1365
  %v2619 = vmin.f32 %v1173, %v1370
  %v2620 = vmin.f32 %v1178, %v1373
  %v2621 = vmin.f32 %v1181, %v1378
  %v2622 = vmin.f32 %v1186, %v1381
  %v2623 = vmin.f32 %v1189, %v1386
  %v2624 = vmin.f32 %v1194, %v1389
  %v2625 = vmin.f32 %v1197, %v1394
  %v2626 = vmin.f32 %v1202, %v1397
  %v2627 = vmin.f32 %v1205, %v1402
  %v2628 = vmin.f32 %v1210, %v1405
  %v2629 = vmin.f32 %v1213, %v1410
  %v2630 = vmin.f32 %v1218, %v1413
  %v2631 = vmin.f32 %v1221, %v1418
  %v2632 = vmin.f32 %v1226, %v1421
  %v2633 = vmin.f32 %v1229, %v1426
  %v2634 = vmin.f32 %v1234, %v1429
  %v2635 = vmin.f32 %v1237, %v1434
  %v2636 = vmin.f32 %v1242, %v1437
  %v2637 = vmin.f32 %v1442, %v1637
  %v2638 = vmin.f32 %v1445, %v1642
  %v2639 = vmin.f32 %v1450, %v1645
  %v2640 = vmin.f32 %v1453, %v1650
  %v2641 = vmin.f32 %v1458, %v1653
  %v2642 = vmin.f32 %v1461, %v1658
  %v2643 = vmin.f32 %v1466, %v1661
  %v2644 = vmin.f32 %v1469, %v1666
  %v2645 = vmin.f32 %v1474, %v1669
  %v2646 = vmin.f32 %v1477, %v1674
  %v2647 = vmin.f32 %v1482, %v1677
  %v2648 = vmin.f32 %v1485, %v1682
  %v2649 = vmin.f32 %v1490, %v1685
  %v2650 = vmin.f32 %v1493, %v1690
  %v2651 = vmin.f32 %v1498, %v1693
  %v2652 = vmin.f32 %v1501, %v1698
  %v2653 = vmin.f32 %v1506, %v1701
  %v2654 = vmin.f32 %v1509, %v1706
  %v2655 = vmin.f32 %v1514, %v1709
  %v2656 = vmin.f32 %v1517, %v1714
  %v2657 = vmin.f32 %v1522, %v1717
  %v2658 = vmin.f32 %v1525, %v1722
  %v2659 = vmin.f32 %v1530, %v1725
  %v2660 = vmin.f32 %v1533, %v1730
  %v2661 = vmin.f32 %v1538, %v1733
  %v2662 = vmin.f32 %v1541, %v1738
  %v2663 = vmin.f32 %v1546, %v1741
  %v2664 = vmin.f32 %v1549, %v1746
  %v2665 = vmin.f32 %v1554, %v1749
  %v2666 = vmin.f32 %v1557, %v1754
  %v2667 = vmin.f32 %v1562, %v1757
  %v2668 = vmin.f32 %v1565, %v1762
  %v2669 = vmin.f32 %v1570, %v1765
  %v2670 = vmin.f32 %v1573, %v1770
  %v2671 = vmin.f32 %v1578, %v1773
  %v2672 = vmin.f32 %v1581, %v1778
  %v2673 = vmin.f32 %v1586, %v1781
  %v2674 = vmin.f32 %v1589, %v1786
  %v2675 = vmin.f32 %v1594, %v1789
  %v2676 = vmin.f32 %v1597, %v1794
  %v2677 = vmin.f32 %v1602, %v1797
  %v2678 = vmin.f32 %v1605, %v1802
  %v2679 = vmin.f32 %v1610, %v1805
  %v2680 = vmin.f32 %v1613, %v1810
  %v2681 = vmin.f32 %v1618, %v1813
  %v2682 = vmin.f32 %v1621, %v1818
  %v2683 = vmin.f32 %v1626, %v1821
  %v2684 = vmin.f32 %v1629, %v1826
  %v2685 = vmin.f32 %v1634, %v1829
  %v2686 = vmin.f32 %v2588, %v2637
  %v2687 = vmin.f32 %v2589, %v2638
  %v2688 = vmin.f32 %v2590, %v2639
  %v2689 = vmin.f32 %v2591, %v2640
  %v2690 = vmin.f32 %v2592, %v2641
  %v2691 = vmin.f32 %v2593, %v2642
  %v2692 = vmin.f32 %v2594, %v2643
  %v2693 = vmin.f32 %v2595, %v2644
  %v2694 = vmin.f32 %v2596, %v2645
  %v2695 = vmin.f32 %v2597, %v2646
  %v2696 = vmin.f32 %v2598, %v2647
  %v2697 = vmin.f32 %v2599, %v2648
  %v2698 = vmin.f32 %v2600, %v2649
  %v2699 = vmin.f32 %v2601, %v2650
  %v2700 = vmin.f32 %v2602, %v2651
  %v2701 = vmin.f32 %v2603, %v2652
  %v2702 = vmin.f32 %v2604, %v2653
  %v2703 = vmin.f32 %v2605, %v2654
  %v2704 = vmin.f32 %v2606, %v2655
  %v2705 = vmin.f32 %v2607, %v2656
  %v2706 = vmin.f32 %v2608, %v2657
  %v2707 = vmin.f32 %v2609, %v2658
  %v2708 = vmin.f32 %v2610, %v2659
  %v2709 = vmin.f32 %v2611, %v2660
  %v2710 = vmin.f32 %v2612, %v2661
  %v2711 = vmin.f32 %v2613, %v2662
  %v2712 = vmin.f32 %v2614, %v2663
  %v2713 = vmin.f32 %v2615, %v2664
  %v2714 = vmin.f32 %v2616, %v2665
  %v2715 = vmin.f32 %v2617, %v2666
  %v2716 = vmin.f32 %v2618, %v2667
  %v2717 = vmin.f32 %v2619, %v2668
  %v2718 = vmin.f32 %v2620, %v2669
  %v2719 = vmin.f32 %v2621, %v2670
  %v2720 = vmin.f32 %v2622, %v2671
  %v2721 = vmin.f32 %v2623, %v2672
  %v2722 = vmin.f32 %v2624, %v2673
  %v2723 = vmin.f32 %v2625, %v2674
  %v2724 = vmin.f32 %v2626, %v2675
  %v2725 = vmin.f32 %v2627, %v2676
  %v2726 = vmin.f32 %v2628, %v2677
  %v2727 = vmin.f32 %v2629, %v2678
  %v2728 = vmin.f32 %v2630, %v2679
  %v2729 = vmin.f32 %v2631, %v2680
  %v2730 = vmin.f32 %v2632, %v2681
  %v2731 = vmin.f32 %v2633, %v2682
  %v2732 = vmin.f32 %v2634, %v2683
  %v2733 = vmin.f32 %v2635, %v2684
  %v2734 = vmin.f32 %v2636, %v2685
  %vm2735 = vcmp.ge.f32.partialorder %v2437, 0.0
  %v2736 = vsel %vm2735, 1, 0
  %v2737 = vlaneseq
  %v2738 = vshrl.u32 %v2737, 7
  %v2739 = vsub.s32 0, %v2738
  %v2740 = vrot.slane %v2736, %v2739
  %vm2741 = vcmp.eq.s32.totalorder %v2740, 1
  %v2742 = vsel %vm2741, %v2539, %v2686
  %v2743 = vsel %vm2741, %v2540, %v2687
  %v2744 = vsel %vm2741, %v2541, %v2688
  %v2745 = vsel %vm2741, %v2542, %v2689
  %v2746 = vsel %vm2741, %v2543, %v2690
  %v2747 = vsel %vm2741, %v2544, %v2691
  %v2748 = vsel %vm2741, %v2545, %v2692
  %v2749 = vsel %vm2741, %v2546, %v2693
  %v2750 = vsel %vm2741, %v2547, %v2694
  %v2751 = vsel %vm2741, %v2548, %v2695
  %v2752 = vsel %vm2741, %v2549, %v2696
  %v2753 = vsel %vm2741, %v2550, %v2697
  %v2754 = vsel %vm2741, %v2551, %v2698
  %v2755 = vsel %vm2741, %v2552, %v2699
  %v2756 = vsel %vm2741, %v2553, %v2700
  %v2757 = vsel %vm2741, %v2554, %v2701
  %v2758 = vsel %vm2741, %v2555, %v2702
  %v2759 = vsel %vm2741, %v2556, %v2703
  %v2760 = vsel %vm2741, %v2557, %v2704
  %v2761 = vsel %vm2741, %v2558, %v2705
  %v2762 = vsel %vm2741, %v2559, %v2706
  %v2763 = vsel %vm2741, %v2560, %v2707
  %v2764 = vsel %vm2741, %v2561, %v2708
  %v2765 = vsel %vm2741, %v2562, %v2709
  %v2766 = vsel %vm2741, %v2563, %v2710
  %v2767 = vsel %vm2741, %v2564, %v2711
  %v2768 = vsel %vm2741, %v2565, %v2712
  %v2769 = vsel %vm2741, %v2566, %v2713
  %v2770 = vsel %vm2741, %v2567, %v2714
  %v2771 = vsel %vm2741, %v2568, %v2715
  %v2772 = vsel %vm2741, %v2569, %v2716
  %v2773 = vsel %vm2741, %v2570, %v2717
  %v2774 = vsel %vm2741, %v2571, %v2718
  %v2775 = vsel %vm2741, %v2572, %v2719
  %v2776 = vsel %vm2741, %v2573, %v2720
  %v2777 = vsel %vm2741, %v2574, %v2721
  %v2778 = vsel %vm2741, %v2575, %v2722
  %v2779 = vsel %vm2741, %v2576, %v2723
  %v2780 = vsel %vm2741, %v2577, %v2724
  %v2781 = vsel %vm2741, %v2578, %v2725
  %v2782 = vsel %vm2741, %v2579, %v2726
  %v2783 = vsel %vm2741, %v2580, %v2727
  %v2784 = vsel %vm2741, %v2581, %v2728
  %v2785 = vsel %vm2741, %v2582, %v2729
  %v2786 = vsel %vm2741, %v2583, %v2730
  %v2787 = vsel %vm2741, %v2584, %v2731
  %v2788 = vsel %vm2741, %v2585, %v2732
  %v2789 = vsel %vm2741, %v2586, %v2733
  %v2790 = vsel %vm2741, %v2587, %v2734
  %v2792 = vlaneseq
  %v2793 = vshrl.u32 %v2792, 7
  %v2794 = vsub.s32 0, %v2793
  %v2795 = vrot.slane %v2437, %v2794
  %v2797 = vmul.f32 %v2742, %v2795
  %v2798 = vmul.f32 %v2743, %v2795
  %v2799 = vmul.f32 %v2744, %v2795
  %v2800 = vmul.f32 %v2745, %v2795
  %v2801 = vmul.f32 %v2746, %v2795
  %v2802 = vmul.f32 %v2747, %v2795
  %v2803 = vmul.f32 %v2748, %v2795
  %v2804 = vmul.f32 %v2749, %v2795
  %v2805 = vmul.f32 %v2750, %v2795
  %v2806 = vmul.f32 %v2751, %v2795
  %v2807 = vmul.f32 %v2752, %v2795
  %v2808 = vmul.f32 %v2753, %v2795
  %v2809 = vmul.f32 %v2754, %v2795
  %v2810 = vmul.f32 %v2755, %v2795
  %v2811 = vmul.f32 %v2756, %v2795
  %v2812 = vmul.f32 %v2757, %v2795
  %v2813 = vmul.f32 %v2758, %v2795
  %v2814 = vmul.f32 %v2759, %v2795
  %v2815 = vmul.f32 %v2760, %v2795
  %v2816 = vmul.f32 %v2761, %v2795
  %v2817 = vmul.f32 %v2762, %v2795
  %v2818 = vmul.f32 %v2763, %v2795
  %v2819 = vmul.f32 %v2764, %v2795
  %v2820 = vmul.f32 %v2765, %v2795
  %v2821 = vmul.f32 %v2766, %v2795
  %v2822 = vmul.f32 %v2767, %v2795
  %v2823 = vmul.f32 %v2768, %v2795
  %v2824 = vmul.f32 %v2769, %v2795
  %v2825 = vmul.f32 %v2770, %v2795
  %v2826 = vmul.f32 %v2771, %v2795
  %v2827 = vmul.f32 %v2772, %v2795
  %v2828 = vmul.f32 %v2773, %v2795
  %v2829 = vmul.f32 %v2774, %v2795
  %v2830 = vmul.f32 %v2775, %v2795
  %v2831 = vmul.f32 %v2776, %v2795
  %v2832 = vmul.f32 %v2777, %v2795
  %v2833 = vmul.f32 %v2778, %v2795
  %v2834 = vmul.f32 %v2779, %v2795
  %v2835 = vmul.f32 %v2780, %v2795
  %v2836 = vmul.f32 %v2781, %v2795
  %v2837 = vmul.f32 %v2782, %v2795
  %v2838 = vmul.f32 %v2783, %v2795
  %v2839 = vmul.f32 %v2784, %v2795
  %v2840 = vmul.f32 %v2785, %v2795
  %v2841 = vmul.f32 %v2786, %v2795
  %v2842 = vmul.f32 %v2787, %v2795
  %v2843 = vmul.f32 %v2788, %v2795
  %v2844 = vmul.f32 %v2789, %v2795
  %v2845 = vmul.f32 %v2790, %v2795
  %v2847 = vlaneseq
  %v2848 = vshrl.u32 %v2847, 7
  %v2849 = vsub.s32 0, %v2848
  %v2850 = vrot.slane %v2440, %v2849
  %v2852 = vadd.f32 %v2797, %v2850
  %v2853 = vadd.f32 %v2798, %v2850
  %v2854 = vadd.f32 %v2799, %v2850
  %v2855 = vadd.f32 %v2800, %v2850
  %v2856 = vadd.f32 %v2801, %v2850
  %v2857 = vadd.f32 %v2802, %v2850
  %v2858 = vadd.f32 %v2803, %v2850
  %v2859 = vadd.f32 %v2804, %v2850
  %v2860 = vadd.f32 %v2805, %v2850
  %v2861 = vadd.f32 %v2806, %v2850
  %v2862 = vadd.f32 %v2807, %v2850
  %v2863 = vadd.f32 %v2808, %v2850
  %v2864 = vadd.f32 %v2809, %v2850
  %v2865 = vadd.f32 %v2810, %v2850
  %v2866 = vadd.f32 %v2811, %v2850
  %v2867 = vadd.f32 %v2812, %v2850
  %v2868 = vadd.f32 %v2813, %v2850
  %v2869 = vadd.f32 %v2814, %v2850
  %v2870 = vadd.f32 %v2815, %v2850
  %v2871 = vadd.f32 %v2816, %v2850
  %v2872 = vadd.f32 %v2817, %v2850
  %v2873 = vadd.f32 %v2818, %v2850
  %v2874 = vadd.f32 %v2819, %v2850
  %v2875 = vadd.f32 %v2820, %v2850
  %v2876 = vadd.f32 %v2821, %v2850
  %v2877 = vadd.f32 %v2822, %v2850
  %v2878 = vadd.f32 %v2823, %v2850
  %v2879 = vadd.f32 %v2824, %v2850
  %v2880 = vadd.f32 %v2825, %v2850
  %v2881 = vadd.f32 %v2826, %v2850
  %v2882 = vadd.f32 %v2827, %v2850
  %v2883 = vadd.f32 %v2828, %v2850
  %v2884 = vadd.f32 %v2829, %v2850
  %v2885 = vadd.f32 %v2830, %v2850
  %v2886 = vadd.f32 %v2831, %v2850
  %v2887 = vadd.f32 %v2832, %v2850
  %v2888 = vadd.f32 %v2833, %v2850
  %v2889 = vadd.f32 %v2834, %v2850
  %v2890 = vadd.f32 %v2835, %v2850
  %v2891 = vadd.f32 %v2836, %v2850
  %v2892 = vadd.f32 %v2837, %v2850
  %v2893 = vadd.f32 %v2838, %v2850
  %v2894 = vadd.f32 %v2839, %v2850
  %v2895 = vadd.f32 %v2840, %v2850
  %v2896 = vadd.f32 %v2841, %v2850
  %v2897 = vadd.f32 %v2842, %v2850
  %v2898 = vadd.f32 %v2843, %v2850
  %v2899 = vadd.f32 %v2844, %v2850
  %v2900 = vadd.f32 %v2845, %v2850
  %v2901 = vmax.f32 %v2852, 0.0
  %v2902 = vmax.f32 %v2853, 0.0
  %v2903 = vmax.f32 %v2854, 0.0
  %v2904 = vmax.f32 %v2855, 0.0
  %v2905 = vmax.f32 %v2856, 0.0
  %v2906 = vmax.f32 %v2857, 0.0
  %v2907 = vmax.f32 %v2858, 0.0
  %v2908 = vmax.f32 %v2859, 0.0
  %v2909 = vmax.f32 %v2860, 0.0
  %v2910 = vmax.f32 %v2861, 0.0
  %v2911 = vmax.f32 %v2862, 0.0
  %v2912 = vmax.f32 %v2863, 0.0
  %v2913 = vmax.f32 %v2864, 0.0
  %v2914 = vmax.f32 %v2865, 0.0
  %v2915 = vmax.f32 %v2866, 0.0
  %v2916 = vmax.f32 %v2867, 0.0
  %v2917 = vmax.f32 %v2868, 0.0
  %v2918 = vmax.f32 %v2869, 0.0
  %v2919 = vmax.f32 %v2870, 0.0
  %v2920 = vmax.f32 %v2871, 0.0
  %v2921 = vmax.f32 %v2872, 0.0
  %v2922 = vmax.f32 %v2873, 0.0
  %v2923 = vmax.f32 %v2874, 0.0
  %v2924 = vmax.f32 %v2875, 0.0
  %v2925 = vmax.f32 %v2876, 0.0
  %v2926 = vmax.f32 %v2877, 0.0
  %v2927 = vmax.f32 %v2878, 0.0
  %v2928 = vmax.f32 %v2879, 0.0
  %v2929 = vmax.f32 %v2880, 0.0
  %v2930 = vmax.f32 %v2881, 0.0
  %v2931 = vmax.f32 %v2882, 0.0
  %v2932 = vmax.f32 %v2883, 0.0
  %v2933 = vmax.f32 %v2884, 0.0
  %v2934 = vmax.f32 %v2885, 0.0
  %v2935 = vmax.f32 %v2886, 0.0
  %v2936 = vmax.f32 %v2887, 0.0
  %v2937 = vmax.f32 %v2888, 0.0
  %v2938 = vmax.f32 %v2889, 0.0
  %v2939 = vmax.f32 %v2890, 0.0
  %v2940 = vmax.f32 %v2891, 0.0
  %v2941 = vmax.f32 %v2892, 0.0
  %v2942 = vmax.f32 %v2893, 0.0
  %v2943 = vmax.f32 %v2894, 0.0
  %v2944 = vmax.f32 %v2895, 0.0
  %v2945 = vmax.f32 %v2896, 0.0
  %v2946 = vmax.f32 %v2897, 0.0
  %v2947 = vmax.f32 %v2898, 0.0
  %v2948 = vmax.f32 %v2899, 0.0
  %v2949 = vmax.f32 %v2900, 0.0
  %v2950 = vpack.c.bf16 %v2902, %v2901
  %v2951 = vpack.c.bf16 %v2904, %v2903
  %v2952 = vpack.c.bf16 %v2906, %v2905
  %v2953 = vpack.c.bf16 %v2908, %v2907
  %v2954 = vpack.c.bf16 %v2910, %v2909
  %v2955 = vpack.c.bf16 %v2912, %v2911
  %v2956 = vpack.c.bf16 %v2914, %v2913
  %v2957 = vpack.c.bf16 %v2916, %v2915
  %v2958 = vpack.c.bf16 %v2918, %v2917
  %v2959 = vpack.c.bf16 %v2920, %v2919
  %v2960 = vpack.c.bf16 %v2922, %v2921
  %v2961 = vpack.c.bf16 %v2924, %v2923
  %v2962 = vpack.c.bf16 %v2926, %v2925
  %v2963 = vpack.c.bf16 %v2928, %v2927
  %v2964 = vpack.c.bf16 %v2930, %v2929
  %v2965 = vpack.c.bf16 %v2932, %v2931
  %v2966 = vpack.c.bf16 %v2934, %v2933
  %v2967 = vpack.c.bf16 %v2936, %v2935
  %v2968 = vpack.c.bf16 %v2938, %v2937
  %v2969 = vpack.c.bf16 %v2940, %v2939
  %v2970 = vpack.c.bf16 %v2942, %v2941
  %v2971 = vpack.c.bf16 %v2944, %v2943
  %v2972 = vpack.c.bf16 %v2946, %v2945
  %v2973 = vpack.c.bf16 %v2948, %v2947
  %v2974 = vpack.c.bf16 %v2949, %v2949
  %v3000 = vunpack.c.l.b16 %v2950
  %v3001 = vunpack.c.h.b16 %v2950
  %v3002 = vunpack.c.l.b16 %v2951
  %v3003 = vunpack.c.h.b16 %v2951
  %v3004 = vunpack.c.l.b16 %v2952
  %v3005 = vunpack.c.h.b16 %v2952
  %v3006 = vunpack.c.l.b16 %v2953
  %v3007 = vunpack.c.h.b16 %v2953
  %v3008 = vunpack.c.l.b16 %v2954
  %v3009 = vunpack.c.h.b16 %v2954
  %v3010 = vunpack.c.l.b16 %v2955
  %v3011 = vunpack.c.h.b16 %v2955
  %v3012 = vunpack.c.l.b16 %v2956
  %v3013 = vunpack.c.h.b16 %v2956
  %v3014 = vunpack.c.l.b16 %v2957
  %v3015 = vunpack.c.h.b16 %v2957
  %v3016 = vunpack.c.l.b16 %v2958
  %v3017 = vunpack.c.h.b16 %v2958
  %v3018 = vunpack.c.l.b16 %v2959
  %v3019 = vunpack.c.h.b16 %v2959
  %v3020 = vunpack.c.l.b16 %v2960
  %v3021 = vunpack.c.h.b16 %v2960
  %v3022 = vunpack.c.l.b16 %v2961
  %v3023 = vunpack.c.h.b16 %v2961
  %v3024 = vunpack.c.l.b16 %v2962
  %v3025 = vunpack.c.h.b16 %v2962
  %v3026 = vunpack.c.l.b16 %v2963
  %v3027 = vunpack.c.h.b16 %v2963
  %v3028 = vunpack.c.l.b16 %v2964
  %v3029 = vunpack.c.h.b16 %v2964
  %v3030 = vunpack.c.l.b16 %v2965
  %v3031 = vunpack.c.h.b16 %v2965
  %v3032 = vunpack.c.l.b16 %v2966
  %v3033 = vunpack.c.h.b16 %v2966
  %v3034 = vunpack.c.l.b16 %v2967
  %v3035 = vunpack.c.h.b16 %v2967
  %v3036 = vunpack.c.l.b16 %v2968
  %v3037 = vunpack.c.h.b16 %v2968
  %v3038 = vunpack.c.l.b16 %v2969
  %v3039 = vunpack.c.h.b16 %v2969
  %v3040 = vunpack.c.l.b16 %v2970
  %v3041 = vunpack.c.h.b16 %v2970
  %v3042 = vunpack.c.l.b16 %v2971
  %v3043 = vunpack.c.h.b16 %v2971
  %v3044 = vunpack.c.l.b16 %v2972
  %v3045 = vunpack.c.h.b16 %v2972
  %v3046 = vunpack.c.l.b16 %v2973
  %v3047 = vunpack.c.h.b16 %v2973
  %v3048 = vunpack.c.l.b16 %v2974
  %v3049 = vpack.c.b16 %v3000, %v3000
  %v3050 = vpack.c.b16 %v3001, %v3001
  %v3051 = vpack.c.b16 %v3002, %v3002
  %v3052 = vpack.c.b16 %v3003, %v3003
  %v3053 = vpack.c.b16 %v3004, %v3004
  %v3054 = vpack.c.b16 %v3005, %v3005
  %v3055 = vpack.c.b16 %v3006, %v3006
  %v3056 = vpack.c.b16 %v3007, %v3007
  %v3057 = vpack.c.b16 %v3008, %v3008
  %v3058 = vpack.c.b16 %v3009, %v3009
  %v3059 = vpack.c.b16 %v3010, %v3010
  %v3060 = vpack.c.b16 %v3011, %v3011
  %v3061 = vpack.c.b16 %v3012, %v3012
  %v3062 = vpack.c.b16 %v3013, %v3013
  %v3063 = vpack.c.b16 %v3014, %v3014
  %v3064 = vpack.c.b16 %v3015, %v3015
  %v3065 = vpack.c.b16 %v3016, %v3016
  %v3066 = vpack.c.b16 %v3017, %v3017
  %v3067 = vpack.c.b16 %v3018, %v3018
  %v3068 = vpack.c.b16 %v3019, %v3019
  %v3069 = vpack.c.b16 %v3020, %v3020
  %v3070 = vpack.c.b16 %v3021, %v3021
  %v3071 = vpack.c.b16 %v3022, %v3022
  %v3072 = vpack.c.b16 %v3023, %v3023
  %v3073 = vpack.c.b16 %v3024, %v3024
  %v3074 = vpack.c.b16 %v3025, %v3025
  %v3075 = vpack.c.b16 %v3026, %v3026
  %v3076 = vpack.c.b16 %v3027, %v3027
  %v3077 = vpack.c.b16 %v3028, %v3028
  %v3078 = vpack.c.b16 %v3029, %v3029
  %v3079 = vpack.c.b16 %v3030, %v3030
  %v3080 = vpack.c.b16 %v3031, %v3031
  %v3081 = vpack.c.b16 %v3032, %v3032
  %v3082 = vpack.c.b16 %v3033, %v3033
  %v3083 = vpack.c.b16 %v3034, %v3034
  %v3084 = vpack.c.b16 %v3035, %v3035
  %v3085 = vpack.c.b16 %v3036, %v3036
  %v3086 = vpack.c.b16 %v3037, %v3037
  %v3087 = vpack.c.b16 %v3038, %v3038
  %v3088 = vpack.c.b16 %v3039, %v3039
  %v3089 = vpack.c.b16 %v3040, %v3040
  %v3090 = vpack.c.b16 %v3041, %v3041
  %v3091 = vpack.c.b16 %v3042, %v3042
  %v3092 = vpack.c.b16 %v3043, %v3043
  %v3093 = vpack.c.b16 %v3044, %v3044
  %v3094 = vpack.c.b16 %v3045, %v3045
  %v3095 = vpack.c.b16 %v3046, %v3046
  %v3096 = vpack.c.b16 %v3047, %v3047
  %v3097 = vpack.c.b16 %v3048, %v3048
  %3147 = vst [vmem:[%s4] sm:$0xf] %v3049
  %3148 = vst [vmem:[%s4 + $0x4] sm:$0xf] %v3050
  %3149 = vst [vmem:[%s4 + $0x8] sm:$0xf] %v3051
  %3150 = vst [vmem:[%s4 + $0xc] sm:$0xf] %v3052
  %3151 = vst [vmem:[%s4 + $0x10] sm:$0xf] %v3053
  %3152 = vst [vmem:[%s4 + $0x14] sm:$0xf] %v3054
  %3153 = vst [vmem:[%s4 + $0x18] sm:$0xf] %v3055
  %3154 = vst [vmem:[%s4 + $0x1c] sm:$0xf] %v3056
  %3155 = vst [vmem:[%s4 + $0x20] sm:$0xf] %v3057
  %3156 = vst [vmem:[%s4 + $0x24] sm:$0xf] %v3058
  %3157 = vst [vmem:[%s4 + $0x28] sm:$0xf] %v3059
  %3158 = vst [vmem:[%s4 + $0x2c] sm:$0xf] %v3060
  %3159 = vst [vmem:[%s4 + $0x30] sm:$0xf] %v3061
  %3160 = vst [vmem:[%s4 + $0x34] sm:$0xf] %v3062
  %3161 = vst [vmem:[%s4 + $0x38] sm:$0xf] %v3063
  %3162 = vst [vmem:[%s4 + $0x3c] sm:$0xf] %v3064
  %3163 = vst [vmem:[%s4 + $0x40] sm:$0xf] %v3065
  %3164 = vst [vmem:[%s4 + $0x44] sm:$0xf] %v3066
  %3165 = vst [vmem:[%s4 + $0x48] sm:$0xf] %v3067
  %3166 = vst [vmem:[%s4 + $0x4c] sm:$0xf] %v3068
  %3167 = vst [vmem:[%s4 + $0x50] sm:$0xf] %v3069
  %3168 = vst [vmem:[%s4 + $0x54] sm:$0xf] %v3070
  %3169 = vst [vmem:[%s4 + $0x58] sm:$0xf] %v3071
  %3170 = vst [vmem:[%s4 + $0x5c] sm:$0xf] %v3072
  %3171 = vst [vmem:[%s4 + $0x60] sm:$0xf] %v3073
  %3172 = vst [vmem:[%s4 + $0x64] sm:$0xf] %v3074
  %3173 = vst [vmem:[%s4 + $0x68] sm:$0xf] %v3075
  %3174 = vst [vmem:[%s4 + $0x6c] sm:$0xf] %v3076
  %3175 = vst [vmem:[%s4 + $0x70] sm:$0xf] %v3077
  %3176 = vst [vmem:[%s4 + $0x74] sm:$0xf] %v3078
  %3177 = vst [vmem:[%s4 + $0x78] sm:$0xf] %v3079
  %3178 = vst [vmem:[%s4 + $0x7c] sm:$0xf] %v3080
  %3179 = vst [vmem:[%s4 + $0x80] sm:$0xf] %v3081
  %3180 = vst [vmem:[%s4 + $0x84] sm:$0xf] %v3082
  %3181 = vst [vmem:[%s4 + $0x88] sm:$0xf] %v3083
  %3182 = vst [vmem:[%s4 + $0x8c] sm:$0xf] %v3084
  %3183 = vst [vmem:[%s4 + $0x90] sm:$0xf] %v3085
  %3184 = vst [vmem:[%s4 + $0x94] sm:$0xf] %v3086
  %3185 = vst [vmem:[%s4 + $0x98] sm:$0xf] %v3087
  %3186 = vst [vmem:[%s4 + $0x9c] sm:$0xf] %v3088
  %3187 = vst [vmem:[%s4 + $0xa0] sm:$0xf] %v3089
  %3188 = vst [vmem:[%s4 + $0xa4] sm:$0xf] %v3090
  %3189 = vst [vmem:[%s4 + $0xa8] sm:$0xf] %v3091
  %3190 = vst [vmem:[%s4 + $0xac] sm:$0xf] %v3092
  %3191 = vst [vmem:[%s4 + $0xb0] sm:$0xf] %v3093
  %3192 = vst [vmem:[%s4 + $0xb4] sm:$0xf] %v3094
  %3193 = vst [vmem:[%s4 + $0xb8] sm:$0xf] %v3095
  %3194 = vst [vmem:[%s4 + $0xbc] sm:$0xf] %v3096
  %3195 = vst [vmem:[%s4 + $0xc0] sm:$0xf] %v3097
  // Predicated region
  $region18: #{lenet5_forward.2} parent=0 // pred_check
    _
  $region19: #{lenet5_forward.2} parent=0 // pred_check_branch
    %3197 = sbr.rel (0) target = $region21
  $region20: #{lenet5_forward.2} parent=0 // pred_region
    _
  $region21: #{lenet5_forward.2} parent=0 // pred_fallthru
    _
  // Predicated region
  $region22: #{lenet5_forward.2} parent=0 // pred_check
    _
  $region23: #{lenet5_forward.2} parent=0 // pred_check_branch
    %3199 = sbr.rel (0) target = $region25
  $region24: #{lenet5_forward.2} parent=0 // pred_region
    _
  $region25: #{lenet5_forward.2} parent=0 // pred_fallthru
    _

// kernel: lenet5_forward.3
$region0: #{lenet5_forward.3}
  #allocation0 [shape = 'u32[]', space=smem, size = 0x4, offset = 0x4, fixed_abs, tag = 'smem constant byte address 0x4 - core index']
  #allocation1 [shape = 'u32[144,128]{1,0:T(1,128)}', space=vmem, size = 0x12000, scoped, tag = 'internal scratch']
  #allocation2 [shape = 'f32[8,3200]{1,0:T(8,128)}', space=vmem, size = 0x19000, scoped, tag = 'scratch operand']
  %s0 = inlined_call_operand.vmem [shape: bf16[800,256], index: 0, kind: input, shape index: {}]
  %s1 = inlined_call_operand.vmem [shape: bf16[256,128], index: 1, kind: input, shape index: {}]
  %s2 = inlined_call_operand.vmem [shape: f32[1,128], index: 2, kind: input, shape index: {}]
  %s3 = inlined_call_operand.vmem [shape: f32[1,128], index: 3, kind: input, shape index: {}]
  %s4 = inlined_call_operand.vmem [shape: bf16[3200,128], index: 4, kind: input, shape index: {}]
  %s5 = inlined_call_operand.vmem [shape: f32[1,128], index: 5, kind: input, shape index: {}]
  %s6 = inlined_call_operand.vmem [shape: bf16[128,128], index: 6, kind: input, shape index: {}]
  %s7 = inlined_call_operand.vmem [shape: f32[1,128], index: 7, kind: input, shape index: {}]
  %s8 = inlined_call_operand.vmem [shape: bf16[128,128], index: 8, kind: input, shape index: {}]
  %s9 = inlined_call_operand.vmem [shape: f32[1,128], index: 9, kind: input, shape index: {}]
  %s10 = inlined_call_operand.vmem [shape: f32[8,128], index: 10, kind: output, shape index: {0}]
  %s11 = inlined_call_operand.vmem [shape: f32[8,128], index: 11, kind: output, shape index: {1}]
  %12 = xla_tuple %s10, %s11
  %s13 = sld [smem:[#allocation0]]
  $region58: #{lenet5_forward.3} parent=0
    _
  %s15 = ssub.s32 1, %s13
  %s16 = scalar_select 0, %s15, %s13
  // Predicated region
  $region2: #{lenet5_forward.3} parent=0 // pred_check
    _
  $region3: #{lenet5_forward.3} parent=0 // pred_check_branch
    %18 = sbr.rel (0) target = $region5
  $region4: #{lenet5_forward.3} parent=0 // pred_region
    _
  $region5: #{lenet5_forward.3} parent=0 // pred_fallthru
    _
  // Predicated region
  $region6: #{lenet5_forward.3} parent=0 // pred_check
    _
  $region7: #{lenet5_forward.3} parent=0 // pred_check_branch
    %20 = sbr.rel (0) target = $region9
  $region8: #{lenet5_forward.3} parent=0 // pred_region
    _
  $region9: #{lenet5_forward.3} parent=0 // pred_fallthru
    _
  // Predicated region
  $region10: #{lenet5_forward.3} parent=0 // pred_check
    _
  $region11: #{lenet5_forward.3} parent=0 // pred_check_branch
    %22 = sbr.rel (0) target = $region13
  $region12: #{lenet5_forward.3} parent=0 // pred_region
    _
  $region13: #{lenet5_forward.3} parent=0 // pred_fallthru
    _
  // Predicated region
  $region14: #{lenet5_forward.3} parent=0 // pred_check
    _
  $region15: #{lenet5_forward.3} parent=0 // pred_check_branch
    %24 = sbr.rel (0) target = $region17
  $region16: #{lenet5_forward.3} parent=0 // pred_region
    _
  $region17: #{lenet5_forward.3} parent=0 // pred_fallthru
    _
  // Predicated region
  $region18: #{lenet5_forward.3} parent=0 // pred_check
    _
  $region19: #{lenet5_forward.3} parent=0 // pred_check_branch
    %26 = sbr.rel (0) target = $region21
  $region20: #{lenet5_forward.3} parent=0 // pred_region
    _
  $region21: #{lenet5_forward.3} parent=0 // pred_fallthru
    _
  // Predicated region
  $region22: #{lenet5_forward.3} parent=0 // pred_check
    _
  $region23: #{lenet5_forward.3} parent=0 // pred_check_branch
    %28 = sbr.rel (0) target = $region25
  $region24: #{lenet5_forward.3} parent=0 // pred_region
    _
  $region25: #{lenet5_forward.3} parent=0 // pred_fallthru
    _
  // Predicated region
  $region26: #{lenet5_forward.3} parent=0 // pred_check
    _
  $region27: #{lenet5_forward.3} parent=0 // pred_check_branch
    %30 = sbr.rel (0) target = $region29
  $region28: #{lenet5_forward.3} parent=0 // pred_region
    _
  $region29: #{lenet5_forward.3} parent=0 // pred_fallthru
    _
  // Predicated region
  $region30: #{lenet5_forward.3} parent=0 // pred_check
    _
  $region31: #{lenet5_forward.3} parent=0 // pred_check_branch
    %32 = sbr.rel (0) target = $region33
  $region32: #{lenet5_forward.3} parent=0 // pred_region
    _
  $region33: #{lenet5_forward.3} parent=0 // pred_fallthru
    _
  // Predicated region
  $region34: #{lenet5_forward.3} parent=0 // pred_check
    _
  $region35: #{lenet5_forward.3} parent=0 // pred_check_branch
    %34 = sbr.rel (0) target = $region37
  $region36: #{lenet5_forward.3} parent=0 // pred_region
    _
  $region37: #{lenet5_forward.3} parent=0 // pred_fallthru
    _
  // Predicated region
  $region38: #{lenet5_forward.3} parent=0 // pred_check
    _
  $region39: #{lenet5_forward.3} parent=0 // pred_check_branch
    %36 = sbr.rel (0) target = $region41
  $region40: #{lenet5_forward.3} parent=0 // pred_region
    _
  $region41: #{lenet5_forward.3} parent=0 // pred_fallthru
    _
  %v38 = vld [vmem:[%s0] sm:$0xff]
  %v39 = vld [vmem:[%s0 + $0x8] sm:$0xff]
  %v40 = vld [vmem:[%s0 + $0x10] sm:$0xff]
  %v41 = vld [vmem:[%s0 + $0x18] sm:$0xff]
  %v42 = vld [vmem:[%s0 + $0x20] sm:$0xff]
  %v43 = vld [vmem:[%s0 + $0x28] sm:$0xff]
  %v44 = vld [vmem:[%s0 + $0x30] sm:$0xff]
  %v45 = vld [vmem:[%s0 + $0x38] sm:$0xff]
  %v46 = vld [vmem:[%s0 + $0x40] sm:$0xff]
  %v47 = vld [vmem:[%s0 + $0x48] sm:$0xff]
  %v48 = vld [vmem:[%s0 + $0x50] sm:$0xff]
  %v49 = vld [vmem:[%s0 + $0x58] sm:$0xff]
  %v50 = vld [vmem:[%s0 + $0x60] sm:$0xff]
  %v51 = vld [vmem:[%s0 + $0x68] sm:$0xff]
  %v52 = vld [vmem:[%s0 + $0x70] sm:$0xff]
  %v53 = vld [vmem:[%s0 + $0x78] sm:$0xff]
  %v54 = vld [vmem:[%s0 + $0x80] sm:$0xff]
  %v55 = vld [vmem:[%s0 + $0x88] sm:$0xff]
  %v56 = vld [vmem:[%s0 + $0x90] sm:$0xff]
  %v57 = vld [vmem:[%s0 + $0x98] sm:$0xff]
  %v58 = vld [vmem:[%s0 + $0xa0] sm:$0xff]
  %v59 = vld [vmem:[%s0 + $0xa8] sm:$0xff]
  %v60 = vld [vmem:[%s0 + $0xb0] sm:$0xff]
  %v61 = vld [vmem:[%s0 + $0xb8] sm:$0xff]
  %v62 = vld [vmem:[%s0 + $0xc0] sm:$0xff]
  %v63 = vld [vmem:[%s0 + $0xc8] sm:$0xff]
  %v64 = vld [vmem:[%s0 + $0xd0] sm:$0xff]
  %v65 = vld [vmem:[%s0 + $0xd8] sm:$0xff]
  %v66 = vld [vmem:[%s0 + $0xe0] sm:$0xff]
  %v67 = vld [vmem:[%s0 + $0xe8] sm:$0xff]
  %v68 = vld [vmem:[%s0 + $0xf0] sm:$0xff]
  %v69 = vld [vmem:[%s0 + $0xf8] sm:$0xff]
  %v70 = vld [vmem:[%s0 + $0x100] sm:$0xff]
  %v71 = vld [vmem:[%s0 + $0x108] sm:$0xff]
  %v72 = vld [vmem:[%s0 + $0x110] sm:$0xff]
  %v73 = vld [vmem:[%s0 + $0x118] sm:$0xff]
  %v74 = vld [vmem:[%s0 + $0x120] sm:$0xff]
  %v75 = vld [vmem:[%s0 + $0x128] sm:$0xff]
  %v76 = vld [vmem:[%s0 + $0x130] sm:$0xff]
  %v77 = vld [vmem:[%s0 + $0x138] sm:$0xff]
  %v78 = vld [vmem:[%s0 + $0x140] sm:$0xff]
  %v79 = vld [vmem:[%s0 + $0x148] sm:$0xff]
  %v80 = vld [vmem:[%s0 + $0x150] sm:$0xff]
  %v81 = vld [vmem:[%s0 + $0x158] sm:$0xff]
  %v82 = vld [vmem:[%s0 + $0x160] sm:$0xff]
  %v83 = vld [vmem:[%s0 + $0x168] sm:$0xff]
  %v84 = vld [vmem:[%s0 + $0x170] sm:$0xff]
  %v85 = vld [vmem:[%s0 + $0x178] sm:$0xff]
  %v86 = vld [vmem:[%s0 + $0x180] sm:$0xff]
  %v87 = vld [vmem:[%s0 + $0x188] sm:$0xff]
  %v88 = vld [vmem:[%s0 + $0x190] sm:$0xff]
  %v89 = vld [vmem:[%s0 + $0x198] sm:$0xff]
  %v90 = vld [vmem:[%s0 + $0x1a0] sm:$0xff]
  %v91 = vld [vmem:[%s0 + $0x1a8] sm:$0xff]
  %v92 = vld [vmem:[%s0 + $0x1b0] sm:$0xff]
  %v93 = vld [vmem:[%s0 + $0x1b8] sm:$0xff]
  %v94 = vld [vmem:[%s0 + $0x1c0] sm:$0xff]
  %v95 = vld [vmem:[%s0 + $0x1c8] sm:$0xff]
  %v96 = vld [vmem:[%s0 + $0x1d0] sm:$0xff]
  %v97 = vld [vmem:[%s0 + $0x1d8] sm:$0xff]
  %v98 = vld [vmem:[%s0 + $0x1e0] sm:$0xff]
  %v99 = vld [vmem:[%s0 + $0x1e8] sm:$0xff]
  %v100 = vld [vmem:[%s0 + $0x1f0] sm:$0xff]
  %v101 = vld [vmem:[%s0 + $0x1f8] sm:$0xff]
  %v102 = vld [vmem:[%s0 + $0x200] sm:$0xff]
  %v103 = vld [vmem:[%s0 + $0x208] sm:$0xff]
  %v104 = vld [vmem:[%s0 + $0x210] sm:$0xff]
  %v105 = vld [vmem:[%s0 + $0x218] sm:$0xff]
  %v106 = vld [vmem:[%s0 + $0x220] sm:$0xff]
  %v107 = vld [vmem:[%s0 + $0x228] sm:$0xff]
  %v108 = vld [vmem:[%s0 + $0x230] sm:$0xff]
  %v109 = vld [vmem:[%s0 + $0x238] sm:$0xff]
  %v110 = vld [vmem:[%s0 + $0x240] sm:$0xff]
  %v111 = vld [vmem:[%s0 + $0x248] sm:$0xff]
  %v112 = vld [vmem:[%s0 + $0x250] sm:$0xff]
  %v113 = vld [vmem:[%s0 + $0x258] sm:$0xff]
  %v114 = vld [vmem:[%s0 + $0x260] sm:$0xff]
  %v115 = vld [vmem:[%s0 + $0x268] sm:$0xff]
  %v116 = vld [vmem:[%s0 + $0x270] sm:$0xff]
  %v117 = vld [vmem:[%s0 + $0x278] sm:$0xff]
  %v118 = vld [vmem:[%s0 + $0x280] sm:$0xff]
  %v119 = vld [vmem:[%s0 + $0x288] sm:$0xff]
  %v120 = vld [vmem:[%s0 + $0x290] sm:$0xff]
  %v121 = vld [vmem:[%s0 + $0x298] sm:$0xff]
  %v122 = vld [vmem:[%s0 + $0x2a0] sm:$0xff]
  %v123 = vld [vmem:[%s0 + $0x2a8] sm:$0xff]
  %v124 = vld [vmem:[%s0 + $0x2b0] sm:$0xff]
  %v125 = vld [vmem:[%s0 + $0x2b8] sm:$0xff]
  %v126 = vld [vmem:[%s0 + $0x2c0] sm:$0xff]
  %v127 = vld [vmem:[%s0 + $0x2c8] sm:$0xff]
  %v128 = vld [vmem:[%s0 + $0x2d0] sm:$0xff]
  %v129 = vld [vmem:[%s0 + $0x2d8] sm:$0xff]
  %v130 = vld [vmem:[%s0 + $0x2e0] sm:$0xff]
  %v131 = vld [vmem:[%s0 + $0x2e8] sm:$0xff]
  %v132 = vld [vmem:[%s0 + $0x2f0] sm:$0xff]
  %v133 = vld [vmem:[%s0 + $0x2f8] sm:$0xff]
  %v134 = vld [vmem:[%s0 + $0x300] sm:$0xff]
  %v135 = vld [vmem:[%s0 + $0x308] sm:$0xff]
  %v136 = vld [vmem:[%s0 + $0x310] sm:$0xff]
  %v137 = vld [vmem:[%s0 + $0x318] sm:$0xff]
  %v138 = vld [vmem:[%s1] sm:$0xf]
  %v139 = vld [vmem:[%s1 + $0x4] sm:$0xf]
  %v140 = vld [vmem:[%s1 + $0x8] sm:$0xf]
  %v141 = vld [vmem:[%s1 + $0xc] sm:$0xf]
  %v142 = vld [vmem:[%s1 + $0x10] sm:$0xf]
  %v143 = vld [vmem:[%s1 + $0x14] sm:$0xf]
  %v144 = vld [vmem:[%s1 + $0x18] sm:$0xf]
  %v145 = vld [vmem:[%s1 + $0x1c] sm:$0xf]
  %v146 = vld [vmem:[%s1 + $0x20] sm:$0xf]
  %v147 = vld [vmem:[%s1 + $0x24] sm:$0xf]
  %v148 = vld [vmem:[%s1 + $0x28] sm:$0xf]
  %v149 = vld [vmem:[%s1 + $0x2c] sm:$0xf]
  %v150 = vld [vmem:[%s1 + $0x30] sm:$0xf]
  %v151 = vld [vmem:[%s1 + $0x34] sm:$0xf]
  %v152 = vld [vmem:[%s1 + $0x38] sm:$0xf]
  %v153 = vld [vmem:[%s1 + $0x3c] sm:$0xf]
  %v154 = vld [vmem:[%s1 + $0x40] sm:$0xf]
  %v155 = vld [vmem:[%s1 + $0x44] sm:$0xf]
  %v156 = vld [vmem:[%s1 + $0x48] sm:$0xf]
  %v157 = vld [vmem:[%s1 + $0x4c] sm:$0xf]
  %v158 = vld [vmem:[%s1 + $0x50] sm:$0xf]
  %v159 = vld [vmem:[%s1 + $0x54] sm:$0xf]
  %v160 = vld [vmem:[%s1 + $0x58] sm:$0xf]
  %v161 = vld [vmem:[%s1 + $0x5c] sm:$0xf]
  %v162 = vld [vmem:[%s1 + $0x60] sm:$0xf]
  %v163 = vld [vmem:[%s1 + $0x64] sm:$0xf]
  %v164 = vld [vmem:[%s1 + $0x68] sm:$0xf]
  %v165 = vld [vmem:[%s1 + $0x6c] sm:$0xf]
  %v166 = vld [vmem:[%s1 + $0x70] sm:$0xf]
  %v167 = vld [vmem:[%s1 + $0x74] sm:$0xf]
  %v168 = vld [vmem:[%s1 + $0x78] sm:$0xf]
  %v169 = vld [vmem:[%s1 + $0x7c] sm:$0xf]
  %v270 = vunpack.c.l.b16 %v38
  %v271 = vunpack.c.h.b16 %v38
  %v272 = vunpack.c.l.b16 %v39
  %v273 = vunpack.c.h.b16 %v39
  %v274 = vunpack.c.l.b16 %v40
  %v275 = vunpack.c.h.b16 %v40
  %v276 = vunpack.c.l.b16 %v41
  %v277 = vunpack.c.h.b16 %v41
  %v278 = vunpack.c.l.b16 %v42
  %v279 = vunpack.c.h.b16 %v42
  %v280 = vunpack.c.l.b16 %v43
  %v281 = vunpack.c.h.b16 %v43
  %v282 = vunpack.c.l.b16 %v44
  %v283 = vunpack.c.h.b16 %v44
  %v284 = vunpack.c.l.b16 %v45
  %v285 = vunpack.c.h.b16 %v45
  %v286 = vunpack.c.l.b16 %v46
  %v287 = vunpack.c.h.b16 %v46
  %v288 = vunpack.c.l.b16 %v47
  %v289 = vunpack.c.h.b16 %v47
  %v290 = vunpack.c.l.b16 %v48
  %v291 = vunpack.c.h.b16 %v48
  %v292 = vunpack.c.l.b16 %v49
  %v293 = vunpack.c.h.b16 %v49
  %v294 = vunpack.c.l.b16 %v50
  %v295 = vunpack.c.h.b16 %v50
  %v296 = vunpack.c.l.b16 %v51
  %v297 = vunpack.c.h.b16 %v51
  %v298 = vunpack.c.l.b16 %v52
  %v299 = vunpack.c.h.b16 %v52
  %v300 = vunpack.c.l.b16 %v53
  %v301 = vunpack.c.h.b16 %v53
  %v302 = vunpack.c.l.b16 %v54
  %v303 = vunpack.c.h.b16 %v54
  %v304 = vunpack.c.l.b16 %v55
  %v305 = vunpack.c.h.b16 %v55
  %v306 = vunpack.c.l.b16 %v56
  %v307 = vunpack.c.h.b16 %v56
  %v308 = vunpack.c.l.b16 %v57
  %v309 = vunpack.c.h.b16 %v57
  %v310 = vunpack.c.l.b16 %v58
  %v311 = vunpack.c.h.b16 %v58
  %v312 = vunpack.c.l.b16 %v59
  %v313 = vunpack.c.h.b16 %v59
  %v314 = vunpack.c.l.b16 %v60
  %v315 = vunpack.c.h.b16 %v60
  %v316 = vunpack.c.l.b16 %v61
  %v317 = vunpack.c.h.b16 %v61
  %v318 = vunpack.c.l.b16 %v62
  %v319 = vunpack.c.h.b16 %v62
  %v320 = vunpack.c.l.b16 %v63
  %v321 = vunpack.c.h.b16 %v63
  %v322 = vunpack.c.l.b16 %v64
  %v323 = vunpack.c.h.b16 %v64
  %v324 = vunpack.c.l.b16 %v65
  %v325 = vunpack.c.h.b16 %v65
  %v326 = vunpack.c.l.b16 %v66
  %v327 = vunpack.c.h.b16 %v66
  %v328 = vunpack.c.l.b16 %v67
  %v329 = vunpack.c.h.b16 %v67
  %v330 = vunpack.c.l.b16 %v68
  %v331 = vunpack.c.h.b16 %v68
  %v332 = vunpack.c.l.b16 %v69
  %v333 = vunpack.c.h.b16 %v69
  %v334 = vunpack.c.l.b16 %v70
  %v335 = vunpack.c.h.b16 %v70
  %v336 = vunpack.c.l.b16 %v71
  %v337 = vunpack.c.h.b16 %v71
  %v338 = vunpack.c.l.b16 %v72
  %v339 = vunpack.c.h.b16 %v72
  %v340 = vunpack.c.l.b16 %v73
  %v341 = vunpack.c.h.b16 %v73
  %v342 = vunpack.c.l.b16 %v74
  %v343 = vunpack.c.h.b16 %v74
  %v344 = vunpack.c.l.b16 %v75
  %v345 = vunpack.c.h.b16 %v75
  %v346 = vunpack.c.l.b16 %v76
  %v347 = vunpack.c.h.b16 %v76
  %v348 = vunpack.c.l.b16 %v77
  %v349 = vunpack.c.h.b16 %v77
  %v350 = vunpack.c.l.b16 %v78
  %v351 = vunpack.c.h.b16 %v78
  %v352 = vunpack.c.l.b16 %v79
  %v353 = vunpack.c.h.b16 %v79
  %v354 = vunpack.c.l.b16 %v80
  %v355 = vunpack.c.h.b16 %v80
  %v356 = vunpack.c.l.b16 %v81
  %v357 = vunpack.c.h.b16 %v81
  %v358 = vunpack.c.l.b16 %v82
  %v359 = vunpack.c.h.b16 %v82
  %v360 = vunpack.c.l.b16 %v83
  %v361 = vunpack.c.h.b16 %v83
  %v362 = vunpack.c.l.b16 %v84
  %v363 = vunpack.c.h.b16 %v84
  %v364 = vunpack.c.l.b16 %v85
  %v365 = vunpack.c.h.b16 %v85
  %v366 = vunpack.c.l.b16 %v86
  %v367 = vunpack.c.h.b16 %v86
  %v368 = vunpack.c.l.b16 %v87
  %v369 = vunpack.c.h.b16 %v87
  %v370 = vunpack.c.l.b16 %v88
  %v371 = vunpack.c.h.b16 %v88
  %v372 = vunpack.c.l.b16 %v89
  %v373 = vunpack.c.h.b16 %v89
  %v374 = vunpack.c.l.b16 %v90
  %v375 = vunpack.c.h.b16 %v90
  %v376 = vunpack.c.l.b16 %v91
  %v377 = vunpack.c.h.b16 %v91
  %v378 = vunpack.c.l.b16 %v92
  %v379 = vunpack.c.h.b16 %v92
  %v380 = vunpack.c.l.b16 %v93
  %v381 = vunpack.c.h.b16 %v93
  %v382 = vunpack.c.l.b16 %v94
  %v383 = vunpack.c.h.b16 %v94
  %v384 = vunpack.c.l.b16 %v95
  %v385 = vunpack.c.h.b16 %v95
  %v386 = vunpack.c.l.b16 %v96
  %v387 = vunpack.c.h.b16 %v96
  %v388 = vunpack.c.l.b16 %v97
  %v389 = vunpack.c.h.b16 %v97
  %v390 = vunpack.c.l.b16 %v98
  %v391 = vunpack.c.h.b16 %v98
  %v392 = vunpack.c.l.b16 %v99
  %v393 = vunpack.c.h.b16 %v99
  %v394 = vunpack.c.l.b16 %v100
  %v395 = vunpack.c.h.b16 %v100
  %v396 = vunpack.c.l.b16 %v101
  %v397 = vunpack.c.h.b16 %v101
  %v398 = vunpack.c.l.b16 %v102
  %v399 = vunpack.c.h.b16 %v102
  %v400 = vunpack.c.l.b16 %v103
  %v401 = vunpack.c.h.b16 %v103
  %v402 = vunpack.c.l.b16 %v104
  %v403 = vunpack.c.h.b16 %v104
  %v404 = vunpack.c.l.b16 %v105
  %v405 = vunpack.c.h.b16 %v105
  %v406 = vunpack.c.l.b16 %v106
  %v407 = vunpack.c.h.b16 %v106
  %v408 = vunpack.c.l.b16 %v107
  %v409 = vunpack.c.h.b16 %v107
  %v410 = vunpack.c.l.b16 %v108
  %v411 = vunpack.c.h.b16 %v108
  %v412 = vunpack.c.l.b16 %v109
  %v413 = vunpack.c.h.b16 %v109
  %v414 = vunpack.c.l.b16 %v110
  %v415 = vunpack.c.h.b16 %v110
  %v416 = vunpack.c.l.b16 %v111
  %v417 = vunpack.c.h.b16 %v111
  %v418 = vunpack.c.l.b16 %v112
  %v419 = vunpack.c.h.b16 %v112
  %v420 = vunpack.c.l.b16 %v113
  %v421 = vunpack.c.h.b16 %v113
  %v422 = vunpack.c.l.b16 %v114
  %v423 = vunpack.c.h.b16 %v114
  %v424 = vunpack.c.l.b16 %v115
  %v425 = vunpack.c.h.b16 %v115
  %v426 = vunpack.c.l.b16 %v116
  %v427 = vunpack.c.h.b16 %v116
  %v428 = vunpack.c.l.b16 %v117
  %v429 = vunpack.c.h.b16 %v117
  %v430 = vunpack.c.l.b16 %v118
  %v431 = vunpack.c.h.b16 %v118
  %v432 = vunpack.c.l.b16 %v119
  %v433 = vunpack.c.h.b16 %v119
  %v434 = vunpack.c.l.b16 %v120
  %v435 = vunpack.c.h.b16 %v120
  %v436 = vunpack.c.l.b16 %v121
  %v437 = vunpack.c.h.b16 %v121
  %v438 = vunpack.c.l.b16 %v122
  %v439 = vunpack.c.h.b16 %v122
  %v440 = vunpack.c.l.b16 %v123
  %v441 = vunpack.c.h.b16 %v123
  %v442 = vunpack.c.l.b16 %v124
  %v443 = vunpack.c.h.b16 %v124
  %v444 = vunpack.c.l.b16 %v125
  %v445 = vunpack.c.h.b16 %v125
  %v446 = vunpack.c.l.b16 %v126
  %v447 = vunpack.c.h.b16 %v126
  %v448 = vunpack.c.l.b16 %v127
  %v449 = vunpack.c.h.b16 %v127
  %v450 = vunpack.c.l.b16 %v128
  %v451 = vunpack.c.h.b16 %v128
  %v452 = vunpack.c.l.b16 %v129
  %v453 = vunpack.c.h.b16 %v129
  %v454 = vunpack.c.l.b16 %v130
  %v455 = vunpack.c.h.b16 %v130
  %v456 = vunpack.c.l.b16 %v131
  %v457 = vunpack.c.h.b16 %v131
  %v458 = vunpack.c.l.b16 %v132
  %v459 = vunpack.c.h.b16 %v132
  %v460 = vunpack.c.l.b16 %v133
  %v461 = vunpack.c.h.b16 %v133
  %v462 = vunpack.c.l.b16 %v134
  %v463 = vunpack.c.h.b16 %v134
  %v464 = vunpack.c.l.b16 %v135
  %v465 = vunpack.c.h.b16 %v135
  %v466 = vunpack.c.l.b16 %v136
  %v467 = vunpack.c.h.b16 %v136
  %v468 = vunpack.c.l.b16 %v137
  %v469 = vunpack.c.h.b16 %v137
  %v470 = vpack.c.b16 %v272, %v270
  %v471 = vpack.c.b16 %v273, %v271
  %v472 = vpack.c.b16 %v276, %v274
  %v473 = vpack.c.b16 %v277, %v275
  %v474 = vpack.c.b16 %v280, %v278
  %v475 = vpack.c.b16 %v281, %v279
  %v476 = vpack.c.b16 %v284, %v282
  %v477 = vpack.c.b16 %v285, %v283
  %v478 = vpack.c.b16 %v288, %v286
  %v479 = vpack.c.b16 %v289, %v287
  %v480 = vpack.c.b16 %v292, %v290
  %v481 = vpack.c.b16 %v293, %v291
  %v482 = vpack.c.b16 %v296, %v294
  %v483 = vpack.c.b16 %v297, %v295
  %v484 = vpack.c.b16 %v300, %v298
  %v485 = vpack.c.b16 %v301, %v299
  %v486 = vpack.c.b16 %v304, %v302
  %v487 = vpack.c.b16 %v305, %v303
  %v488 = vpack.c.b16 %v308, %v306
  %v489 = vpack.c.b16 %v309, %v307
  %v490 = vpack.c.b16 %v312, %v310
  %v491 = vpack.c.b16 %v313, %v311
  %v492 = vpack.c.b16 %v316, %v314
  %v493 = vpack.c.b16 %v317, %v315
  %v494 = vpack.c.b16 %v320, %v318
  %v495 = vpack.c.b16 %v321, %v319
  %v496 = vpack.c.b16 %v324, %v322
  %v497 = vpack.c.b16 %v325, %v323
  %v498 = vpack.c.b16 %v328, %v326
  %v499 = vpack.c.b16 %v329, %v327
  %v500 = vpack.c.b16 %v332, %v330
  %v501 = vpack.c.b16 %v333, %v331
  %v502 = vpack.c.b16 %v336, %v334
  %v503 = vpack.c.b16 %v337, %v335
  %v504 = vpack.c.b16 %v340, %v338
  %v505 = vpack.c.b16 %v341, %v339
  %v506 = vpack.c.b16 %v344, %v342
  %v507 = vpack.c.b16 %v345, %v343
  %v508 = vpack.c.b16 %v348, %v346
  %v509 = vpack.c.b16 %v349, %v347
  %v510 = vpack.c.b16 %v352, %v350
  %v511 = vpack.c.b16 %v353, %v351
  %v512 = vpack.c.b16 %v356, %v354
  %v513 = vpack.c.b16 %v357, %v355
  %v514 = vpack.c.b16 %v360, %v358
  %v515 = vpack.c.b16 %v361, %v359
  %v516 = vpack.c.b16 %v364, %v362
  %v517 = vpack.c.b16 %v365, %v363
  %v518 = vpack.c.b16 %v368, %v366
  %v519 = vpack.c.b16 %v369, %v367
  %v520 = vpack.c.b16 %v372, %v370
  %v521 = vpack.c.b16 %v373, %v371
  %v522 = vpack.c.b16 %v376, %v374
  %v523 = vpack.c.b16 %v377, %v375
  %v524 = vpack.c.b16 %v380, %v378
  %v525 = vpack.c.b16 %v381, %v379
  %v526 = vpack.c.b16 %v384, %v382
  %v527 = vpack.c.b16 %v385, %v383
  %v528 = vpack.c.b16 %v388, %v386
  %v529 = vpack.c.b16 %v389, %v387
  %v530 = vpack.c.b16 %v392, %v390
  %v531 = vpack.c.b16 %v393, %v391
  %v532 = vpack.c.b16 %v396, %v394
  %v533 = vpack.c.b16 %v397, %v395
  %v534 = vpack.c.b16 %v400, %v398
  %v535 = vpack.c.b16 %v401, %v399
  %v536 = vpack.c.b16 %v404, %v402
  %v537 = vpack.c.b16 %v405, %v403
  %v538 = vpack.c.b16 %v408, %v406
  %v539 = vpack.c.b16 %v409, %v407
  %v540 = vpack.c.b16 %v412, %v410
  %v541 = vpack.c.b16 %v413, %v411
  %v542 = vpack.c.b16 %v416, %v414
  %v543 = vpack.c.b16 %v417, %v415
  %v544 = vpack.c.b16 %v420, %v418
  %v545 = vpack.c.b16 %v421, %v419
  %v546 = vpack.c.b16 %v424, %v422
  %v547 = vpack.c.b16 %v425, %v423
  %v548 = vpack.c.b16 %v428, %v426
  %v549 = vpack.c.b16 %v429, %v427
  %v550 = vpack.c.b16 %v432, %v430
  %v551 = vpack.c.b16 %v433, %v431
  %v552 = vpack.c.b16 %v436, %v434
  %v553 = vpack.c.b16 %v437, %v435
  %v554 = vpack.c.b16 %v440, %v438
  %v555 = vpack.c.b16 %v441, %v439
  %v556 = vpack.c.b16 %v444, %v442
  %v557 = vpack.c.b16 %v445, %v443
  %v558 = vpack.c.b16 %v448, %v446
  %v559 = vpack.c.b16 %v449, %v447
  %v560 = vpack.c.b16 %v452, %v450
  %v561 = vpack.c.b16 %v453, %v451
  %v562 = vpack.c.b16 %v456, %v454
  %v563 = vpack.c.b16 %v457, %v455
  %v564 = vpack.c.b16 %v460, %v458
  %v565 = vpack.c.b16 %v461, %v459
  %v566 = vpack.c.b16 %v464, %v462
  %v567 = vpack.c.b16 %v465, %v463
  %v568 = vpack.c.b16 %v468, %v466
  %v569 = vpack.c.b16 %v469, %v467
  %v702 = vunpack.c.l.b16 %v138
  %v703 = vunpack.c.l.b16 %v139
  %v704 = vunpack.c.l.b16 %v140
  %v705 = vunpack.c.l.b16 %v141
  %v706 = vunpack.c.l.b16 %v142
  %v707 = vunpack.c.l.b16 %v143
  %v708 = vunpack.c.l.b16 %v144
  %v709 = vunpack.c.l.b16 %v145
  %v710 = vunpack.c.l.b16 %v146
  %v711 = vunpack.c.l.b16 %v147
  %v712 = vunpack.c.l.b16 %v148
  %v713 = vunpack.c.l.b16 %v149
  %v714 = vunpack.c.l.b16 %v150
  %v715 = vunpack.c.l.b16 %v151
  %v716 = vunpack.c.l.b16 %v152
  %v717 = vunpack.c.l.b16 %v153
  %v718 = vunpack.c.l.b16 %v154
  %v719 = vunpack.c.l.b16 %v155
  %v720 = vunpack.c.l.b16 %v156
  %v721 = vunpack.c.l.b16 %v157
  %v722 = vunpack.c.l.b16 %v158
  %v723 = vunpack.c.l.b16 %v159
  %v724 = vunpack.c.l.b16 %v160
  %v725 = vunpack.c.l.b16 %v161
  %v726 = vunpack.c.l.b16 %v162
  %v727 = vunpack.c.l.b16 %v163
  %v728 = vunpack.c.l.b16 %v164
  %v729 = vunpack.c.l.b16 %v165
  %v730 = vunpack.c.l.b16 %v166
  %v731 = vunpack.c.l.b16 %v167
  %v732 = vunpack.c.l.b16 %v168
  %v733 = vunpack.c.l.b16 %v169
  %v734 = vpack.c.b16 %v703, %v702
  %v735 = vpack.c.b16 %v705, %v704
  %v736 = vpack.c.b16 %v707, %v706
  %v737 = vpack.c.b16 %v709, %v708
  %v738 = vpack.c.b16 %v711, %v710
  %v739 = vpack.c.b16 %v713, %v712
  %v740 = vpack.c.b16 %v715, %v714
  %v741 = vpack.c.b16 %v717, %v716
  %v742 = vpack.c.b16 %v719, %v718
  %v743 = vpack.c.b16 %v721, %v720
  %v744 = vpack.c.b16 %v723, %v722
  %v745 = vpack.c.b16 %v725, %v724
  %v746 = vpack.c.b16 %v727, %v726
  %v747 = vpack.c.b16 %v729, %v728
  %v748 = vpack.c.b16 %v731, %v730
  %v749 = vpack.c.b16 %v733, %v732
  %766 = vmatprep.subr.bf16.mxu0 0
  %767 = vmatpush1.bf16.msra.mxu0 %v741
  %768 = vmatprep.subr.bf16.mxu0 0
  %769 = vmatpush1.bf16.msra.mxu0 %v740
  %770 = vmatprep.subr.bf16.mxu0 0
  %771 = vmatpush1.bf16.msra.mxu0 %v739
  %772 = vmatprep.subr.bf16.mxu0 0
  %773 = vmatpush1.bf16.msra.mxu0 %v738
  %774 = vmatprep.subr.bf16.mxu0 0
  %775 = vmatpush1.bf16.msra.mxu0 %v737
  %776 = vmatprep.subr.bf16.mxu0 0
  %777 = vmatpush1.bf16.msra.mxu0 %v736
  %778 = vmatprep.subr.bf16.mxu0 0
  %779 = vmatpush1.bf16.msra.mxu0 %v735
  %780 = vmatprep.subr.bf16.mxu0 0
  %781 = vmatpush1.bf16.msra.mxu0 %v734
  %782 = vmatprep.subr.bf16.mxu0 0
  %783 = vmatpush2.bf16.msra.mxu0 %v749
  %784 = vmatprep.subr.bf16.mxu0 0
  %785 = vmatpush2.bf16.msra.mxu0 %v748
  %786 = vmatprep.subr.bf16.mxu0 0
  %787 = vmatpush2.bf16.msra.mxu0 %v747
  %788 = vmatprep.subr.bf16.mxu0 0
  %789 = vmatpush2.bf16.msra.mxu0 %v746
  %790 = vmatprep.subr.bf16.mxu0 0
  %791 = vmatpush2.bf16.msra.mxu0 %v745
  %792 = vmatprep.subr.bf16.mxu0 0
  %793 = vmatpush2.bf16.msra.mxu0 %v744
  %794 = vmatprep.subr.bf16.mxu0 0
  %795 = vmatpush2.bf16.msra.mxu0 %v743
  %796 = vmatprep.subr.bf16.mxu0 0
  %797 = vmatpush2.bf16.msra.mxu0 %v742
  %798 = vmatprep.mubr.bf16.mxu0 %v471
  %799 = vmatmul.mubr.bf16.gmra.mxu0 %v470
  %v800 = vpop.f32.mrf.mxu0
  %v801 = vadd.f32 0.0, %v800
  %v802 = vpop.f32.mrf.mxu0
  %v803 = vpop.f32.mrf.mxu0
  %v804 = vadd.f32 0.0, %v803
  %v805 = vpop.f32.mrf.mxu0
  %806 = vmatprep.mubr.bf16.mxu0 %v473
  %807 = vmatmul.mubr.bf16.gmra.mxu0 %v472
  %v808 = vpop.f32.mrf.mxu0
  %v809 = vadd.f32 0.0, %v808
  %v810 = vpop.f32.mrf.mxu0
  %v811 = vpop.f32.mrf.mxu0
  %v812 = vadd.f32 0.0, %v811
  %v813 = vpop.f32.mrf.mxu0
  %814 = vmatprep.mubr.bf16.mxu0 %v475
  %815 = vmatmul.mubr.bf16.gmra.mxu0 %v474
  %v816 = vpop.f32.mrf.mxu0
  %v817 = vadd.f32 0.0, %v816
  %v818 = vpop.f32.mrf.mxu0
  %v819 = vpop.f32.mrf.mxu0
  %v820 = vadd.f32 0.0, %v819
  %v821 = vpop.f32.mrf.mxu0
  %822 = vmatprep.mubr.bf16.mxu0 %v477
  %823 = vmatmul.mubr.bf16.gmra.mxu0 %v476
  %v824 = vpop.f32.mrf.mxu0
  %v825 = vadd.f32 0.0, %v824
  %v826 = vpop.f32.mrf.mxu0
  %v827 = vpop.f32.mrf.mxu0
  %v828 = vadd.f32 0.0, %v827
  %v829 = vpop.f32.mrf.mxu0
  %830 = vmatprep.mubr.bf16.mxu0 %v479
  %831 = vmatmul.mubr.bf16.gmra.mxu0 %v478
  %v832 = vpop.f32.mrf.mxu0
  %v833 = vadd.f32 0.0, %v832
  %v834 = vpop.f32.mrf.mxu0
  %v835 = vpop.f32.mrf.mxu0
  %v836 = vadd.f32 0.0, %v835
  %v837 = vpop.f32.mrf.mxu0
  %838 = vmatprep.mubr.bf16.mxu0 %v481
  %839 = vmatmul.mubr.bf16.gmra.mxu0 %v480
  %v840 = vpop.f32.mrf.mxu0
  %v841 = vadd.f32 0.0, %v840
  %v842 = vpop.f32.mrf.mxu0
  %v843 = vpop.f32.mrf.mxu0
  %v844 = vadd.f32 0.0, %v843
  %v845 = vpop.f32.mrf.mxu0
  %846 = vmatprep.mubr.bf16.mxu0 %v483
  %847 = vmatmul.mubr.bf16.gmra.mxu0 %v482
  %v848 = vpop.f32.mrf.mxu0
  %v849 = vadd.f32 0.0, %v848
  %v850 = vpop.f32.mrf.mxu0
  %v851 = vpop.f32.mrf.mxu0
  %v852 = vadd.f32 0.0, %v851
  %v853 = vpop.f32.mrf.mxu0
  %854 = vmatprep.mubr.bf16.mxu0 %v485
  %855 = vmatmul.mubr.bf16.gmra.mxu0 %v484
  %v856 = vpop.f32.mrf.mxu0
  %v857 = vadd.f32 0.0, %v856
  %v858 = vpop.f32.mrf.mxu0
  %v859 = vpop.f32.mrf.mxu0
  %v860 = vadd.f32 0.0, %v859
  %v861 = vpop.f32.mrf.mxu0
  %862 = vmatprep.mubr.bf16.mxu0 %v487
  %863 = vmatmul.mubr.bf16.gmra.mxu0 %v486
  %v864 = vpop.f32.mrf.mxu0
  %v865 = vadd.f32 0.0, %v864
  %v866 = vpop.f32.mrf.mxu0
  %v867 = vpop.f32.mrf.mxu0
  %v868 = vadd.f32 0.0, %v867
  %v869 = vpop.f32.mrf.mxu0
  %870 = vmatprep.mubr.bf16.mxu0 %v489
  %871 = vmatmul.mubr.bf16.gmra.mxu0 %v488
  %v872 = vpop.f32.mrf.mxu0
  %v873 = vadd.f32 0.0, %v872
  %v874 = vpop.f32.mrf.mxu0
  %v875 = vpop.f32.mrf.mxu0
  %v876 = vadd.f32 0.0, %v875
  %v877 = vpop.f32.mrf.mxu0
  %878 = vmatprep.mubr.bf16.mxu0 %v491
  %879 = vmatmul.mubr.bf16.gmra.mxu0 %v490
  %v880 = vpop.f32.mrf.mxu0
  %v881 = vadd.f32 0.0, %v880
  %v882 = vpop.f32.mrf.mxu0
  %v883 = vpop.f32.mrf.mxu0
  %v884 = vadd.f32 0.0, %v883
  %v885 = vpop.f32.mrf.mxu0
  %886 = vmatprep.mubr.bf16.mxu0 %v493
  %887 = vmatmul.mubr.bf16.gmra.mxu0 %v492
  %v888 = vpop.f32.mrf.mxu0
  %v889 = vadd.f32 0.0, %v888
  %v890 = vpop.f32.mrf.mxu0
  %v891 = vpop.f32.mrf.mxu0
  %v892 = vadd.f32 0.0, %v891
  %v893 = vpop.f32.mrf.mxu0
  %894 = vmatprep.mubr.bf16.mxu0 %v495
  %895 = vmatmul.mubr.bf16.gmra.mxu0 %v494
  %v896 = vpop.f32.mrf.mxu0
  %v897 = vadd.f32 0.0, %v896
  %v898 = vpop.f32.mrf.mxu0
  %v899 = vpop.f32.mrf.mxu0
  %v900 = vadd.f32 0.0, %v899
  %v901 = vpop.f32.mrf.mxu0
  %902 = vmatprep.mubr.bf16.mxu0 %v497
  %903 = vmatmul.mubr.bf16.gmra.mxu0 %v496
  %v904 = vpop.f32.mrf.mxu0
  %v905 = vadd.f32 0.0, %v904
  %v906 = vpop.f32.mrf.mxu0
  %v907 = vpop.f32.mrf.mxu0
  %v908 = vadd.f32 0.0, %v907
  %v909 = vpop.f32.mrf.mxu0
  %910 = vmatprep.mubr.bf16.mxu0 %v499
  %911 = vmatmul.mubr.bf16.gmra.mxu0 %v498
  %v912 = vpop.f32.mrf.mxu0
  %v913 = vadd.f32 0.0, %v912
  %v914 = vpop.f32.mrf.mxu0
  %v915 = vpop.f32.mrf.mxu0
  %v916 = vadd.f32 0.0, %v915
  %v917 = vpop.f32.mrf.mxu0
  %918 = vmatprep.mubr.bf16.mxu0 %v501
  %919 = vmatmul.mubr.bf16.gmra.mxu0 %v500
  %v920 = vpop.f32.mrf.mxu0
  %v921 = vadd.f32 0.0, %v920
  %v922 = vpop.f32.mrf.mxu0
  %v923 = vpop.f32.mrf.mxu0
  %v924 = vadd.f32 0.0, %v923
  %v925 = vpop.f32.mrf.mxu0
  %926 = vmatprep.mubr.bf16.mxu0 %v503
  %927 = vmatmul.mubr.bf16.gmra.mxu0 %v502
  %v928 = vpop.f32.mrf.mxu0
  %v929 = vadd.f32 0.0, %v928
  %v930 = vpop.f32.mrf.mxu0
  %v931 = vpop.f32.mrf.mxu0
  %v932 = vadd.f32 0.0, %v931
  %v933 = vpop.f32.mrf.mxu0
  %934 = vmatprep.mubr.bf16.mxu0 %v505
  %935 = vmatmul.mubr.bf16.gmra.mxu0 %v504
  %v936 = vpop.f32.mrf.mxu0
  %v937 = vadd.f32 0.0, %v936
  %v938 = vpop.f32.mrf.mxu0
  %v939 = vpop.f32.mrf.mxu0
  %v940 = vadd.f32 0.0, %v939
  %v941 = vpop.f32.mrf.mxu0
  %942 = vmatprep.mubr.bf16.mxu0 %v507
  %943 = vmatmul.mubr.bf16.gmra.mxu0 %v506
  %v944 = vpop.f32.mrf.mxu0
  %v945 = vadd.f32 0.0, %v944
  %v946 = vpop.f32.mrf.mxu0
  %v947 = vpop.f32.mrf.mxu0
  %v948 = vadd.f32 0.0, %v947
  %v949 = vpop.f32.mrf.mxu0
  %950 = vmatprep.mubr.bf16.mxu0 %v509
  %951 = vmatmul.mubr.bf16.gmra.mxu0 %v508
  %v952 = vpop.f32.mrf.mxu0
  %v953 = vadd.f32 0.0, %v952
  %v954 = vpop.f32.mrf.mxu0
  %v955 = vpop.f32.mrf.mxu0
  %v956 = vadd.f32 0.0, %v955
  %v957 = vpop.f32.mrf.mxu0
  %958 = vmatprep.mubr.bf16.mxu0 %v511
  %959 = vmatmul.mubr.bf16.gmra.mxu0 %v510
  %v960 = vpop.f32.mrf.mxu0
  %v961 = vadd.f32 0.0, %v960
  %v962 = vpop.f32.mrf.mxu0
  %v963 = vpop.f32.mrf.mxu0
  %v964 = vadd.f32 0.0, %v963
  %v965 = vpop.f32.mrf.mxu0
  %966 = vmatprep.mubr.bf16.mxu0 %v513
  %967 = vmatmul.mubr.bf16.gmra.mxu0 %v512
  %v968 = vpop.f32.mrf.mxu0
  %v969 = vadd.f32 0.0, %v968
  %v970 = vpop.f32.mrf.mxu0
  %v971 = vpop.f32.mrf.mxu0
  %v972 = vadd.f32 0.0, %v971
  %v973 = vpop.f32.mrf.mxu0
  %974 = vmatprep.mubr.bf16.mxu0 %v515
  %975 = vmatmul.mubr.bf16.gmra.mxu0 %v514
  %v976 = vpop.f32.mrf.mxu0
  %v977 = vadd.f32 0.0, %v976
  %v978 = vpop.f32.mrf.mxu0
  %v979 = vpop.f32.mrf.mxu0
  %v980 = vadd.f32 0.0, %v979
  %v981 = vpop.f32.mrf.mxu0
  %982 = vmatprep.mubr.bf16.mxu0 %v517
  %983 = vmatmul.mubr.bf16.gmra.mxu0 %v516
  %v984 = vpop.f32.mrf.mxu0
  %v985 = vadd.f32 0.0, %v984
  %v986 = vpop.f32.mrf.mxu0
  %v987 = vpop.f32.mrf.mxu0
  %v988 = vadd.f32 0.0, %v987
  %v989 = vpop.f32.mrf.mxu0
  %990 = vmatprep.mubr.bf16.mxu0 %v519
  %991 = vmatmul.mubr.bf16.gmra.mxu0 %v518
  %v992 = vpop.f32.mrf.mxu0
  %v993 = vadd.f32 0.0, %v992
  %v994 = vpop.f32.mrf.mxu0
  %v995 = vpop.f32.mrf.mxu0
  %v996 = vadd.f32 0.0, %v995
  %v997 = vpop.f32.mrf.mxu0
  %998 = vmatprep.mubr.bf16.mxu0 %v521
  %999 = vmatmul.mubr.bf16.gmra.mxu0 %v520
  %v1000 = vpop.f32.mrf.mxu0
  %v1001 = vadd.f32 0.0, %v1000
  %v1002 = vpop.f32.mrf.mxu0
  %v1003 = vpop.f32.mrf.mxu0
  %v1004 = vadd.f32 0.0, %v1003
  %v1005 = vpop.f32.mrf.mxu0
  %1006 = vmatprep.mubr.bf16.mxu0 %v523
  %1007 = vmatmul.mubr.bf16.gmra.mxu0 %v522
  %v1008 = vpop.f32.mrf.mxu0
  %v1009 = vadd.f32 0.0, %v1008
  %v1010 = vpop.f32.mrf.mxu0
  %v1011 = vpop.f32.mrf.mxu0
  %v1012 = vadd.f32 0.0, %v1011
  %v1013 = vpop.f32.mrf.mxu0
  %1014 = vmatprep.mubr.bf16.mxu0 %v525
  %1015 = vmatmul.mubr.bf16.gmra.mxu0 %v524
  %v1016 = vpop.f32.mrf.mxu0
  %v1017 = vadd.f32 0.0, %v1016
  %v1018 = vpop.f32.mrf.mxu0
  %v1019 = vpop.f32.mrf.mxu0
  %v1020 = vadd.f32 0.0, %v1019
  %v1021 = vpop.f32.mrf.mxu0
  %1022 = vmatprep.mubr.bf16.mxu0 %v527
  %1023 = vmatmul.mubr.bf16.gmra.mxu0 %v526
  %v1024 = vpop.f32.mrf.mxu0
  %v1025 = vadd.f32 0.0, %v1024
  %v1026 = vpop.f32.mrf.mxu0
  %v1027 = vpop.f32.mrf.mxu0
  %v1028 = vadd.f32 0.0, %v1027
  %v1029 = vpop.f32.mrf.mxu0
  %1030 = vmatprep.mubr.bf16.mxu0 %v529
  %1031 = vmatmul.mubr.bf16.gmra.mxu0 %v528
  %v1032 = vpop.f32.mrf.mxu0
  %v1033 = vadd.f32 0.0, %v1032
  %v1034 = vpop.f32.mrf.mxu0
  %v1035 = vpop.f32.mrf.mxu0
  %v1036 = vadd.f32 0.0, %v1035
  %v1037 = vpop.f32.mrf.mxu0
  %1038 = vmatprep.mubr.bf16.mxu0 %v531
  %1039 = vmatmul.mubr.bf16.gmra.mxu0 %v530
  %v1040 = vpop.f32.mrf.mxu0
  %v1041 = vadd.f32 0.0, %v1040
  %v1042 = vpop.f32.mrf.mxu0
  %v1043 = vpop.f32.mrf.mxu0
  %v1044 = vadd.f32 0.0, %v1043
  %v1045 = vpop.f32.mrf.mxu0
  %1046 = vmatprep.mubr.bf16.mxu0 %v533
  %1047 = vmatmul.mubr.bf16.gmra.mxu0 %v532
  %v1048 = vpop.f32.mrf.mxu0
  %v1049 = vadd.f32 0.0, %v1048
  %v1050 = vpop.f32.mrf.mxu0
  %v1051 = vpop.f32.mrf.mxu0
  %v1052 = vadd.f32 0.0, %v1051
  %v1053 = vpop.f32.mrf.mxu0
  %1054 = vmatprep.mubr.bf16.mxu0 %v535
  %1055 = vmatmul.mubr.bf16.gmra.mxu0 %v534
  %v1056 = vpop.f32.mrf.mxu0
  %v1057 = vadd.f32 0.0, %v1056
  %v1058 = vpop.f32.mrf.mxu0
  %v1059 = vpop.f32.mrf.mxu0
  %v1060 = vadd.f32 0.0, %v1059
  %v1061 = vpop.f32.mrf.mxu0
  %1062 = vmatprep.mubr.bf16.mxu0 %v537
  %1063 = vmatmul.mubr.bf16.gmra.mxu0 %v536
  %v1064 = vpop.f32.mrf.mxu0
  %v1065 = vadd.f32 0.0, %v1064
  %v1066 = vpop.f32.mrf.mxu0
  %v1067 = vpop.f32.mrf.mxu0
  %v1068 = vadd.f32 0.0, %v1067
  %v1069 = vpop.f32.mrf.mxu0
  %1070 = vmatprep.mubr.bf16.mxu0 %v539
  %1071 = vmatmul.mubr.bf16.gmra.mxu0 %v538
  %v1072 = vpop.f32.mrf.mxu0
  %v1073 = vadd.f32 0.0, %v1072
  %v1074 = vpop.f32.mrf.mxu0
  %v1075 = vpop.f32.mrf.mxu0
  %v1076 = vadd.f32 0.0, %v1075
  %v1077 = vpop.f32.mrf.mxu0
  %1078 = vmatprep.mubr.bf16.mxu0 %v541
  %1079 = vmatmul.mubr.bf16.gmra.mxu0 %v540
  %v1080 = vpop.f32.mrf.mxu0
  %v1081 = vadd.f32 0.0, %v1080
  %v1082 = vpop.f32.mrf.mxu0
  %v1083 = vpop.f32.mrf.mxu0
  %v1084 = vadd.f32 0.0, %v1083
  %v1085 = vpop.f32.mrf.mxu0
  %1086 = vmatprep.mubr.bf16.mxu0 %v543
  %1087 = vmatmul.mubr.bf16.gmra.mxu0 %v542
  %v1088 = vpop.f32.mrf.mxu0
  %v1089 = vadd.f32 0.0, %v1088
  %v1090 = vpop.f32.mrf.mxu0
  %v1091 = vpop.f32.mrf.mxu0
  %v1092 = vadd.f32 0.0, %v1091
  %v1093 = vpop.f32.mrf.mxu0
  %1094 = vmatprep.mubr.bf16.mxu0 %v545
  %1095 = vmatmul.mubr.bf16.gmra.mxu0 %v544
  %v1096 = vpop.f32.mrf.mxu0
  %v1097 = vadd.f32 0.0, %v1096
  %v1098 = vpop.f32.mrf.mxu0
  %v1099 = vpop.f32.mrf.mxu0
  %v1100 = vadd.f32 0.0, %v1099
  %v1101 = vpop.f32.mrf.mxu0
  %1102 = vmatprep.mubr.bf16.mxu0 %v547
  %1103 = vmatmul.mubr.bf16.gmra.mxu0 %v546
  %v1104 = vpop.f32.mrf.mxu0
  %v1105 = vadd.f32 0.0, %v1104
  %v1106 = vpop.f32.mrf.mxu0
  %v1107 = vpop.f32.mrf.mxu0
  %v1108 = vadd.f32 0.0, %v1107
  %v1109 = vpop.f32.mrf.mxu0
  %1110 = vmatprep.mubr.bf16.mxu0 %v549
  %1111 = vmatmul.mubr.bf16.gmra.mxu0 %v548
  %v1112 = vpop.f32.mrf.mxu0
  %v1113 = vadd.f32 0.0, %v1112
  %v1114 = vpop.f32.mrf.mxu0
  %v1115 = vpop.f32.mrf.mxu0
  %v1116 = vadd.f32 0.0, %v1115
  %v1117 = vpop.f32.mrf.mxu0
  %1118 = vmatprep.mubr.bf16.mxu0 %v551
  %1119 = vmatmul.mubr.bf16.gmra.mxu0 %v550
  %v1120 = vpop.f32.mrf.mxu0
  %v1121 = vadd.f32 0.0, %v1120
  %v1122 = vpop.f32.mrf.mxu0
  %v1123 = vpop.f32.mrf.mxu0
  %v1124 = vadd.f32 0.0, %v1123
  %v1125 = vpop.f32.mrf.mxu0
  %1126 = vmatprep.mubr.bf16.mxu0 %v553
  %1127 = vmatmul.mubr.bf16.gmra.mxu0 %v552
  %v1128 = vpop.f32.mrf.mxu0
  %v1129 = vadd.f32 0.0, %v1128
  %v1130 = vpop.f32.mrf.mxu0
  %v1131 = vpop.f32.mrf.mxu0
  %v1132 = vadd.f32 0.0, %v1131
  %v1133 = vpop.f32.mrf.mxu0
  %1134 = vmatprep.mubr.bf16.mxu0 %v555
  %1135 = vmatmul.mubr.bf16.gmra.mxu0 %v554
  %v1136 = vpop.f32.mrf.mxu0
  %v1137 = vadd.f32 0.0, %v1136
  %v1138 = vpop.f32.mrf.mxu0
  %v1139 = vpop.f32.mrf.mxu0
  %v1140 = vadd.f32 0.0, %v1139
  %v1141 = vpop.f32.mrf.mxu0
  %1142 = vmatprep.mubr.bf16.mxu0 %v557
  %1143 = vmatmul.mubr.bf16.gmra.mxu0 %v556
  %v1144 = vpop.f32.mrf.mxu0
  %v1145 = vadd.f32 0.0, %v1144
  %v1146 = vpop.f32.mrf.mxu0
  %v1147 = vpop.f32.mrf.mxu0
  %v1148 = vadd.f32 0.0, %v1147
  %v1149 = vpop.f32.mrf.mxu0
  %1150 = vmatprep.mubr.bf16.mxu0 %v559
  %1151 = vmatmul.mubr.bf16.gmra.mxu0 %v558
  %v1152 = vpop.f32.mrf.mxu0
  %v1153 = vadd.f32 0.0, %v1152
  %v1154 = vpop.f32.mrf.mxu0
  %v1155 = vpop.f32.mrf.mxu0
  %v1156 = vadd.f32 0.0, %v1155
  %v1157 = vpop.f32.mrf.mxu0
  %1158 = vmatprep.mubr.bf16.mxu0 %v561
  %1159 = vmatmul.mubr.bf16.gmra.mxu0 %v560
  %v1160 = vpop.f32.mrf.mxu0
  %v1161 = vadd.f32 0.0, %v1160
  %v1162 = vpop.f32.mrf.mxu0
  %v1163 = vpop.f32.mrf.mxu0
  %v1164 = vadd.f32 0.0, %v1163
  %v1165 = vpop.f32.mrf.mxu0
  %1166 = vmatprep.mubr.bf16.mxu0 %v563
  %1167 = vmatmul.mubr.bf16.gmra.mxu0 %v562
  %v1168 = vpop.f32.mrf.mxu0
  %v1169 = vadd.f32 0.0, %v1168
  %v1170 = vpop.f32.mrf.mxu0
  %v1171 = vpop.f32.mrf.mxu0
  %v1172 = vadd.f32 0.0, %v1171
  %v1173 = vpop.f32.mrf.mxu0
  %1174 = vmatprep.mubr.bf16.mxu0 %v565
  %1175 = vmatmul.mubr.bf16.gmra.mxu0 %v564
  %v1176 = vpop.f32.mrf.mxu0
  %v1177 = vadd.f32 0.0, %v1176
  %v1178 = vpop.f32.mrf.mxu0
  %v1179 = vpop.f32.mrf.mxu0
  %v1180 = vadd.f32 0.0, %v1179
  %v1181 = vpop.f32.mrf.mxu0
  %1182 = vmatprep.mubr.bf16.mxu0 %v567
  %1183 = vmatmul.mubr.bf16.gmra.mxu0 %v566
  %v1184 = vpop.f32.mrf.mxu0
  %v1185 = vadd.f32 0.0, %v1184
  %v1186 = vpop.f32.mrf.mxu0
  %v1187 = vpop.f32.mrf.mxu0
  %v1188 = vadd.f32 0.0, %v1187
  %v1189 = vpop.f32.mrf.mxu0
  %1190 = vmatprep.mubr.bf16.mxu0 %v569
  %1191 = vmatmul.mubr.bf16.gmra.mxu0 %v568
  %v1192 = vpop.f32.mrf.mxu0
  %v1193 = vadd.f32 0.0, %v1192
  %v1194 = vpop.f32.mrf.mxu0
  %v1195 = vpop.f32.mrf.mxu0
  %v1196 = vadd.f32 0.0, %v1195
  %v1197 = vpop.f32.mrf.mxu0
  %1198 = vdwg.mxu0
  %v1199 = vadd.f32 %v801, %v804
  %v1200 = vadd.f32 %v1199, %v809
  %v1201 = vadd.f32 %v1200, %v812
  %v1202 = vadd.f32 %v1201, %v817
  %v1203 = vadd.f32 %v1202, %v820
  %v1204 = vadd.f32 %v1203, %v825
  %v1205 = vadd.f32 %v1204, %v828
  %v1206 = vadd.f32 %v1205, %v833
  %v1207 = vadd.f32 %v1206, %v836
  %v1208 = vadd.f32 %v1207, %v841
  %v1209 = vadd.f32 %v1208, %v844
  %v1210 = vadd.f32 %v1209, %v849
  %v1211 = vadd.f32 %v1210, %v852
  %v1212 = vadd.f32 %v1211, %v857
  %v1213 = vadd.f32 %v1212, %v860
  %v1214 = vadd.f32 %v1213, %v865
  %v1215 = vadd.f32 %v1214, %v868
  %v1216 = vadd.f32 %v1215, %v873
  %v1217 = vadd.f32 %v1216, %v876
  %v1218 = vadd.f32 %v1217, %v881
  %v1219 = vadd.f32 %v1218, %v884
  %v1220 = vadd.f32 %v1219, %v889
  %v1221 = vadd.f32 %v1220, %v892
  %v1222 = vadd.f32 %v1221, %v897
  %v1223 = vadd.f32 %v1222, %v900
  %v1224 = vadd.f32 %v1223, %v905
  %v1225 = vadd.f32 %v1224, %v908
  %v1226 = vadd.f32 %v1225, %v913
  %v1227 = vadd.f32 %v1226, %v916
  %v1228 = vadd.f32 %v1227, %v921
  %v1229 = vadd.f32 %v1228, %v924
  %v1230 = vadd.f32 %v1229, %v929
  %v1231 = vadd.f32 %v1230, %v932
  %v1232 = vadd.f32 %v1231, %v937
  %v1233 = vadd.f32 %v1232, %v940
  %v1234 = vadd.f32 %v1233, %v945
  %v1235 = vadd.f32 %v1234, %v948
  %v1236 = vadd.f32 %v1235, %v953
  %v1237 = vadd.f32 %v1236, %v956
  %v1238 = vadd.f32 %v1237, %v961
  %v1239 = vadd.f32 %v1238, %v964
  %v1240 = vadd.f32 %v1239, %v969
  %v1241 = vadd.f32 %v1240, %v972
  %v1242 = vadd.f32 %v1241, %v977
  %v1243 = vadd.f32 %v1242, %v980
  %v1244 = vadd.f32 %v1243, %v985
  %v1245 = vadd.f32 %v1244, %v988
  %v1246 = vadd.f32 %v1245, %v993
  %v1247 = vadd.f32 %v1246, %v996
  %v1248 = vadd.f32 %v1247, %v1001
  %v1249 = vadd.f32 %v1248, %v1004
  %v1250 = vadd.f32 %v1249, %v1009
  %v1251 = vadd.f32 %v1250, %v1012
  %v1252 = vadd.f32 %v1251, %v1017
  %v1253 = vadd.f32 %v1252, %v1020
  %v1254 = vadd.f32 %v1253, %v1025
  %v1255 = vadd.f32 %v1254, %v1028
  %v1256 = vadd.f32 %v1255, %v1033
  %v1257 = vadd.f32 %v1256, %v1036
  %v1258 = vadd.f32 %v1257, %v1041
  %v1259 = vadd.f32 %v1258, %v1044
  %v1260 = vadd.f32 %v1259, %v1049
  %v1261 = vadd.f32 %v1260, %v1052
  %v1262 = vadd.f32 %v1261, %v1057
  %v1263 = vadd.f32 %v1262, %v1060
  %v1264 = vadd.f32 %v1263, %v1065
  %v1265 = vadd.f32 %v1264, %v1068
  %v1266 = vadd.f32 %v1265, %v1073
  %v1267 = vadd.f32 %v1266, %v1076
  %v1268 = vadd.f32 %v1267, %v1081
  %v1269 = vadd.f32 %v1268, %v1084
  %v1270 = vadd.f32 %v1269, %v1089
  %v1271 = vadd.f32 %v1270, %v1092
  %v1272 = vadd.f32 %v1271, %v1097
  %v1273 = vadd.f32 %v1272, %v1100
  %v1274 = vadd.f32 %v1273, %v1105
  %v1275 = vadd.f32 %v1274, %v1108
  %v1276 = vadd.f32 %v1275, %v1113
  %v1277 = vadd.f32 %v1276, %v1116
  %v1278 = vadd.f32 %v1277, %v1121
  %v1279 = vadd.f32 %v1278, %v1124
  %v1280 = vadd.f32 %v1279, %v1129
  %v1281 = vadd.f32 %v1280, %v1132
  %v1282 = vadd.f32 %v1281, %v1137
  %v1283 = vadd.f32 %v1282, %v1140
  %v1284 = vadd.f32 %v1283, %v1145
  %v1285 = vadd.f32 %v1284, %v1148
  %v1286 = vadd.f32 %v1285, %v1153
  %v1287 = vadd.f32 %v1286, %v1156
  %v1288 = vadd.f32 %v1287, %v1161
  %v1289 = vadd.f32 %v1288, %v1164
  %v1290 = vadd.f32 %v1289, %v1169
  %v1291 = vadd.f32 %v1290, %v1172
  %v1292 = vadd.f32 %v1291, %v1177
  %v1293 = vadd.f32 %v1292, %v1180
  %v1294 = vadd.f32 %v1293, %v1185
  %v1295 = vadd.f32 %v1294, %v1188
  %v1296 = vadd.f32 %v1295, %v1193
  %v1297 = vadd.f32 %v1296, %v1196
  %v1298 = vrot.slane %v1297, 4
  %v1299 = vadd.f32 %v1297, %v1298
  %v1300 = vrot.slane %v1299, 2
  %v1301 = vadd.f32 %v1299, %v1300
  %v1302 = vrot.slane %v1301, 1
  %v1303 = vadd.f32 %v1301, %v1302
  %v1304 = vmul.f32 %v801, %v801
  %v1305 = vmul.f32 %v804, %v804
  %v1306 = vmul.f32 %v809, %v809
  %v1307 = vmul.f32 %v812, %v812
  %v1308 = vmul.f32 %v817, %v817
  %v1309 = vmul.f32 %v820, %v820
  %v1310 = vmul.f32 %v825, %v825
  %v1311 = vmul.f32 %v828, %v828
  %v1312 = vmul.f32 %v833, %v833
  %v1313 = vmul.f32 %v836, %v836
  %v1314 = vmul.f32 %v841, %v841
  %v1315 = vmul.f32 %v844, %v844
  %v1316 = vmul.f32 %v849, %v849
  %v1317 = vmul.f32 %v852, %v852
  %v1318 = vmul.f32 %v857, %v857
  %v1319 = vmul.f32 %v860, %v860
  %v1320 = vmul.f32 %v865, %v865
  %v1321 = vmul.f32 %v868, %v868
  %v1322 = vmul.f32 %v873, %v873
  %v1323 = vmul.f32 %v876, %v876
  %v1324 = vmul.f32 %v881, %v881
  %v1325 = vmul.f32 %v884, %v884
  %v1326 = vmul.f32 %v889, %v889
  %v1327 = vmul.f32 %v892, %v892
  %v1328 = vmul.f32 %v897, %v897
  %v1329 = vmul.f32 %v900, %v900
  %v1330 = vmul.f32 %v905, %v905
  %v1331 = vmul.f32 %v908, %v908
  %v1332 = vmul.f32 %v913, %v913
  %v1333 = vmul.f32 %v916, %v916
  %v1334 = vmul.f32 %v921, %v921
  %v1335 = vmul.f32 %v924, %v924
  %v1336 = vmul.f32 %v929, %v929
  %v1337 = vmul.f32 %v932, %v932
  %v1338 = vmul.f32 %v937, %v937
  %v1339 = vmul.f32 %v940, %v940
  %v1340 = vmul.f32 %v945, %v945
  %v1341 = vmul.f32 %v948, %v948
  %v1342 = vmul.f32 %v953, %v953
  %v1343 = vmul.f32 %v956, %v956
  %v1344 = vmul.f32 %v961, %v961
  %v1345 = vmul.f32 %v964, %v964
  %v1346 = vmul.f32 %v969, %v969
  %v1347 = vmul.f32 %v972, %v972
  %v1348 = vmul.f32 %v977, %v977
  %v1349 = vmul.f32 %v980, %v980
  %v1350 = vmul.f32 %v985, %v985
  %v1351 = vmul.f32 %v988, %v988
  %v1352 = vmul.f32 %v993, %v993
  %v1353 = vmul.f32 %v996, %v996
  %v1354 = vmul.f32 %v1001, %v1001
  %v1355 = vmul.f32 %v1004, %v1004
  %v1356 = vmul.f32 %v1009, %v1009
  %v1357 = vmul.f32 %v1012, %v1012
  %v1358 = vmul.f32 %v1017, %v1017
  %v1359 = vmul.f32 %v1020, %v1020
  %v1360 = vmul.f32 %v1025, %v1025
  %v1361 = vmul.f32 %v1028, %v1028
  %v1362 = vmul.f32 %v1033, %v1033
  %v1363 = vmul.f32 %v1036, %v1036
  %v1364 = vmul.f32 %v1041, %v1041
  %v1365 = vmul.f32 %v1044, %v1044
  %v1366 = vmul.f32 %v1049, %v1049
  %v1367 = vmul.f32 %v1052, %v1052
  %v1368 = vmul.f32 %v1057, %v1057
  %v1369 = vmul.f32 %v1060, %v1060
  %v1370 = vmul.f32 %v1065, %v1065
  %v1371 = vmul.f32 %v1068, %v1068
  %v1372 = vmul.f32 %v1073, %v1073
  %v1373 = vmul.f32 %v1076, %v1076
  %v1374 = vmul.f32 %v1081, %v1081
  %v1375 = vmul.f32 %v1084, %v1084
  %v1376 = vmul.f32 %v1089, %v1089
  %v1377 = vmul.f32 %v1092, %v1092
  %v1378 = vmul.f32 %v1097, %v1097
  %v1379 = vmul.f32 %v1100, %v1100
  %v1380 = vmul.f32 %v1105, %v1105
  %v1381 = vmul.f32 %v1108, %v1108
  %v1382 = vmul.f32 %v1113, %v1113
  %v1383 = vmul.f32 %v1116, %v1116
  %v1384 = vmul.f32 %v1121, %v1121
  %v1385 = vmul.f32 %v1124, %v1124
  %v1386 = vmul.f32 %v1129, %v1129
  %v1387 = vmul.f32 %v1132, %v1132
  %v1388 = vmul.f32 %v1137, %v1137
  %v1389 = vmul.f32 %v1140, %v1140
  %v1390 = vmul.f32 %v1145, %v1145
  %v1391 = vmul.f32 %v1148, %v1148
  %v1392 = vmul.f32 %v1153, %v1153
  %v1393 = vmul.f32 %v1156, %v1156
  %v1394 = vmul.f32 %v1161, %v1161
  %v1395 = vmul.f32 %v1164, %v1164
  %v1396 = vmul.f32 %v1169, %v1169
  %v1397 = vmul.f32 %v1172, %v1172
  %v1398 = vmul.f32 %v1177, %v1177
  %v1399 = vmul.f32 %v1180, %v1180
  %v1400 = vmul.f32 %v1185, %v1185
  %v1401 = vmul.f32 %v1188, %v1188
  %v1402 = vmul.f32 %v1193, %v1193
  %v1403 = vmul.f32 %v1196, %v1196
  %v1404 = vadd.f32 %v1304, %v1305
  %v1405 = vadd.f32 %v1404, %v1306
  %v1406 = vadd.f32 %v1405, %v1307
  %v1407 = vadd.f32 %v1406, %v1308
  %v1408 = vadd.f32 %v1407, %v1309
  %v1409 = vadd.f32 %v1408, %v1310
  %v1410 = vadd.f32 %v1409, %v1311
  %v1411 = vadd.f32 %v1410, %v1312
  %v1412 = vadd.f32 %v1411, %v1313
  %v1413 = vadd.f32 %v1412, %v1314
  %v1414 = vadd.f32 %v1413, %v1315
  %v1415 = vadd.f32 %v1414, %v1316
  %v1416 = vadd.f32 %v1415, %v1317
  %v1417 = vadd.f32 %v1416, %v1318
  %v1418 = vadd.f32 %v1417, %v1319
  %v1419 = vadd.f32 %v1418, %v1320
  %v1420 = vadd.f32 %v1419, %v1321
  %v1421 = vadd.f32 %v1420, %v1322
  %v1422 = vadd.f32 %v1421, %v1323
  %v1423 = vadd.f32 %v1422, %v1324
  %v1424 = vadd.f32 %v1423, %v1325
  %v1425 = vadd.f32 %v1424, %v1326
  %v1426 = vadd.f32 %v1425, %v1327
  %v1427 = vadd.f32 %v1426, %v1328
  %v1428 = vadd.f32 %v1427, %v1329
  %v1429 = vadd.f32 %v1428, %v1330
  %v1430 = vadd.f32 %v1429, %v1331
  %v1431 = vadd.f32 %v1430, %v1332
  %v1432 = vadd.f32 %v1431, %v1333
  %v1433 = vadd.f32 %v1432, %v1334
  %v1434 = vadd.f32 %v1433, %v1335
  %v1435 = vadd.f32 %v1434, %v1336
  %v1436 = vadd.f32 %v1435, %v1337
  %v1437 = vadd.f32 %v1436, %v1338
  %v1438 = vadd.f32 %v1437, %v1339
  %v1439 = vadd.f32 %v1438, %v1340
  %v1440 = vadd.f32 %v1439, %v1341
  %v1441 = vadd.f32 %v1440, %v1342
  %v1442 = vadd.f32 %v1441, %v1343
  %v1443 = vadd.f32 %v1442, %v1344
  %v1444 = vadd.f32 %v1443, %v1345
  %v1445 = vadd.f32 %v1444, %v1346
  %v1446 = vadd.f32 %v1445, %v1347
  %v1447 = vadd.f32 %v1446, %v1348
  %v1448 = vadd.f32 %v1447, %v1349
  %v1449 = vadd.f32 %v1448, %v1350
  %v1450 = vadd.f32 %v1449, %v1351
  %v1451 = vadd.f32 %v1450, %v1352
  %v1452 = vadd.f32 %v1451, %v1353
  %v1453 = vadd.f32 %v1452, %v1354
  %v1454 = vadd.f32 %v1453, %v1355
  %v1455 = vadd.f32 %v1454, %v1356
  %v1456 = vadd.f32 %v1455, %v1357
  %v1457 = vadd.f32 %v1456, %v1358
  %v1458 = vadd.f32 %v1457, %v1359
  %v1459 = vadd.f32 %v1458, %v1360
  %v1460 = vadd.f32 %v1459, %v1361
  %v1461 = vadd.f32 %v1460, %v1362
  %v1462 = vadd.f32 %v1461, %v1363
  %v1463 = vadd.f32 %v1462, %v1364
  %v1464 = vadd.f32 %v1463, %v1365
  %v1465 = vadd.f32 %v1464, %v1366
  %v1466 = vadd.f32 %v1465, %v1367
  %v1467 = vadd.f32 %v1466, %v1368
  %v1468 = vadd.f32 %v1467, %v1369
  %v1469 = vadd.f32 %v1468, %v1370
  %v1470 = vadd.f32 %v1469, %v1371
  %v1471 = vadd.f32 %v1470, %v1372
  %v1472 = vadd.f32 %v1471, %v1373
  %v1473 = vadd.f32 %v1472, %v1374
  %v1474 = vadd.f32 %v1473, %v1375
  %v1475 = vadd.f32 %v1474, %v1376
  %v1476 = vadd.f32 %v1475, %v1377
  %v1477 = vadd.f32 %v1476, %v1378
  %v1478 = vadd.f32 %v1477, %v1379
  %v1479 = vadd.f32 %v1478, %v1380
  %v1480 = vadd.f32 %v1479, %v1381
  %v1481 = vadd.f32 %v1480, %v1382
  %v1482 = vadd.f32 %v1481, %v1383
  %v1483 = vadd.f32 %v1482, %v1384
  %v1484 = vadd.f32 %v1483, %v1385
  %v1485 = vadd.f32 %v1484, %v1386
  %v1486 = vadd.f32 %v1485, %v1387
  %v1487 = vadd.f32 %v1486, %v1388
  %v1488 = vadd.f32 %v1487, %v1389
  %v1489 = vadd.f32 %v1488, %v1390
  %v1490 = vadd.f32 %v1489, %v1391
  %v1491 = vadd.f32 %v1490, %v1392
  %v1492 = vadd.f32 %v1491, %v1393
  %v1493 = vadd.f32 %v1492, %v1394
  %v1494 = vadd.f32 %v1493, %v1395
  %v1495 = vadd.f32 %v1494, %v1396
  %v1496 = vadd.f32 %v1495, %v1397
  %v1497 = vadd.f32 %v1496, %v1398
  %v1498 = vadd.f32 %v1497, %v1399
  %v1499 = vadd.f32 %v1498, %v1400
  %v1500 = vadd.f32 %v1499, %v1401
  %v1501 = vadd.f32 %v1500, %v1402
  %v1502 = vadd.f32 %v1501, %v1403
  %v1503 = vrot.slane %v1502, 4
  %v1504 = vadd.f32 %v1502, %v1503
  %v1505 = vrot.slane %v1504, 2
  %v1506 = vadd.f32 %v1504, %v1505
  %v1507 = vrot.slane %v1506, 1
  %v1508 = vadd.f32 %v1506, %v1507
  %v1509 = vmul.f32 %v1303, 0.005
  %v1510 = vmul.f32 %v1508, 0.005
  %v1511 = vmul.f32 %v1509, %v1509
  %v1512 = vsub.f32 %v1510, %v1511
  %v1513 = vld [vmem:[%s2] sm:$0x1]
  %v1514 = vadd.f32 %v1512, 1e-05
  %v1515 = vrsqrt.pop %v1514
  %v1516 = vmul.f32 %v1513, %v1515
  %v1517 = vld [vmem:[%s3] sm:$0x1]
  %v1518 = vmul.f32 %v1509, %v1516
  %v1519 = vsub.f32 %v1517, %v1518
  %vm1520 = vcmp.ge.f32.partialorder %v1516, 0.0
  %v1521 = vmax.f32 %v801, %v900
  %v1522 = vmax.f32 %v1001, %v1100
  %v1523 = vmax.f32 %v1521, %v1522
  %v1524 = vmin.f32 %v801, %v900
  %v1525 = vmin.f32 %v1001, %v1100
  %v1526 = vmin.f32 %v1524, %v1525
  %v1527 = vsel %vm1520, 1, 0
  %v1528 = vlaneseq
  %v1529 = vshrl.u32 %v1528, 7
  %v1530 = vsub.s32 0, %v1529
  %v1531 = vrot.slane %v1527, %v1530
  %vm1532 = vcmp.eq.s32.totalorder %v1531, 1
  %v1533 = vsel %vm1532, %v1523, %v1526
  %v1535 = vlaneseq
  %v1536 = vshrl.u32 %v1535, 7
  %v1537 = vsub.s32 0, %v1536
  %v1538 = vrot.slane %v1516, %v1537
  %v1540 = vmul.f32 %v1533, %v1538
  %v1542 = vlaneseq
  %v1543 = vshrl.u32 %v1542, 7
  %v1544 = vsub.s32 0, %v1543
  %v1545 = vrot.slane %v1519, %v1544
  %v1547 = vadd.f32 %v1540, %v1545
  %v1548 = vmax.f32 %v1547, 0.0
  %1549 = vst [vmem:[#allocation2] sm:$0xff] %v1548
  %v1550 = vmax.f32 %v804, %v905
  %v1551 = vmax.f32 %v1004, %v1105
  %v1552 = vmax.f32 %v1550, %v1551
  %v1553 = vmin.f32 %v804, %v905
  %v1554 = vmin.f32 %v1004, %v1105
  %v1555 = vmin.f32 %v1553, %v1554
  %v1556 = vsel %vm1532, %v1552, %v1555
  %v1557 = vmul.f32 %v1556, %v1538
  %v1558 = vadd.f32 %v1557, %v1545
  %v1559 = vmax.f32 %v1558, 0.0
  %1560 = vst [vmem:[#allocation2 + $0x8] sm:$0xff] %v1559
  %v1561 = vmax.f32 %v809, %v908
  %v1562 = vmax.f32 %v1009, %v1108
  %v1563 = vmax.f32 %v1561, %v1562
  %v1564 = vmin.f32 %v809, %v908
  %v1565 = vmin.f32 %v1009, %v1108
  %v1566 = vmin.f32 %v1564, %v1565
  %v1567 = vsel %vm1532, %v1563, %v1566
  %v1568 = vmul.f32 %v1567, %v1538
  %v1569 = vadd.f32 %v1568, %v1545
  %v1570 = vmax.f32 %v1569, 0.0
  %1571 = vst [vmem:[#allocation2 + $0x10] sm:$0xff] %v1570
  %v1572 = vmax.f32 %v812, %v913
  %v1573 = vmax.f32 %v1012, %v1113
  %v1574 = vmax.f32 %v1572, %v1573
  %v1575 = vmin.f32 %v812, %v913
  %v1576 = vmin.f32 %v1012, %v1113
  %v1577 = vmin.f32 %v1575, %v1576
  %v1578 = vsel %vm1532, %v1574, %v1577
  %v1579 = vmul.f32 %v1578, %v1538
  %v1580 = vadd.f32 %v1579, %v1545
  %v1581 = vmax.f32 %v1580, 0.0
  %1582 = vst [vmem:[#allocation2 + $0x18] sm:$0xff] %v1581
  %v1583 = vmax.f32 %v817, %v916
  %v1584 = vmax.f32 %v1017, %v1116
  %v1585 = vmax.f32 %v1583, %v1584
  %v1586 = vmin.f32 %v817, %v916
  %v1587 = vmin.f32 %v1017, %v1116
  %v1588 = vmin.f32 %v1586, %v1587
  %v1589 = vsel %vm1532, %v1585, %v1588
  %v1590 = vmul.f32 %v1589, %v1538
  %v1591 = vadd.f32 %v1590, %v1545
  %v1592 = vmax.f32 %v1591, 0.0
  %1593 = vst [vmem:[#allocation2 + $0x20] sm:$0xff] %v1592
  %v1594 = vmax.f32 %v820, %v921
  %v1595 = vmax.f32 %v1020, %v1121
  %v1596 = vmax.f32 %v1594, %v1595
  %v1597 = vmin.f32 %v820, %v921
  %v1598 = vmin.f32 %v1020, %v1121
  %v1599 = vmin.f32 %v1597, %v1598
  %v1600 = vsel %vm1532, %v1596, %v1599
  %v1601 = vmul.f32 %v1600, %v1538
  %v1602 = vadd.f32 %v1601, %v1545
  %v1603 = vmax.f32 %v1602, 0.0
  %1604 = vst [vmem:[#allocation2 + $0x28] sm:$0xff] %v1603
  %v1605 = vmax.f32 %v825, %v924
  %v1606 = vmax.f32 %v1025, %v1124
  %v1607 = vmax.f32 %v1605, %v1606
  %v1608 = vmin.f32 %v825, %v924
  %v1609 = vmin.f32 %v1025, %v1124
  %v1610 = vmin.f32 %v1608, %v1609
  %v1611 = vsel %vm1532, %v1607, %v1610
  %v1612 = vmul.f32 %v1611, %v1538
  %v1613 = vadd.f32 %v1612, %v1545
  %v1614 = vmax.f32 %v1613, 0.0
  %1615 = vst [vmem:[#allocation2 + $0x30] sm:$0xff] %v1614
  %v1616 = vmax.f32 %v828, %v929
  %v1617 = vmax.f32 %v1028, %v1129
  %v1618 = vmax.f32 %v1616, %v1617
  %v1619 = vmin.f32 %v828, %v929
  %v1620 = vmin.f32 %v1028, %v1129
  %v1621 = vmin.f32 %v1619, %v1620
  %v1622 = vsel %vm1532, %v1618, %v1621
  %v1623 = vmul.f32 %v1622, %v1538
  %v1624 = vadd.f32 %v1623, %v1545
  %v1625 = vmax.f32 %v1624, 0.0
  %1626 = vst [vmem:[#allocation2 + $0x38] sm:$0xff] %v1625
  %v1627 = vmax.f32 %v833, %v932
  %v1628 = vmax.f32 %v1033, %v1132
  %v1629 = vmax.f32 %v1627, %v1628
  %v1630 = vmin.f32 %v833, %v932
  %v1631 = vmin.f32 %v1033, %v1132
  %v1632 = vmin.f32 %v1630, %v1631
  %v1633 = vsel %vm1532, %v1629, %v1632
  %v1634 = vmul.f32 %v1633, %v1538
  %v1635 = vadd.f32 %v1634, %v1545
  %v1636 = vmax.f32 %v1635, 0.0
  %1637 = vst [vmem:[#allocation2 + $0x40] sm:$0xff] %v1636
  %v1638 = vmax.f32 %v836, %v937
  %v1639 = vmax.f32 %v1036, %v1137
  %v1640 = vmax.f32 %v1638, %v1639
  %v1641 = vmin.f32 %v836, %v937
  %v1642 = vmin.f32 %v1036, %v1137
  %v1643 = vmin.f32 %v1641, %v1642
  %v1644 = vsel %vm1532, %v1640, %v1643
  %v1645 = vmul.f32 %v1644, %v1538
  %v1646 = vadd.f32 %v1645, %v1545
  %v1647 = vmax.f32 %v1646, 0.0
  %1648 = vst [vmem:[#allocation2 + $0x48] sm:$0xff] %v1647
  %v1649 = vmax.f32 %v841, %v940
  %v1650 = vmax.f32 %v1041, %v1140
  %v1651 = vmax.f32 %v1649, %v1650
  %v1652 = vmin.f32 %v841, %v940
  %v1653 = vmin.f32 %v1041, %v1140
  %v1654 = vmin.f32 %v1652, %v1653
  %v1655 = vsel %vm1532, %v1651, %v1654
  %v1656 = vmul.f32 %v1655, %v1538
  %v1657 = vadd.f32 %v1656, %v1545
  %v1658 = vmax.f32 %v1657, 0.0
  %1659 = vst [vmem:[#allocation2 + $0x50] sm:$0xff] %v1658
  %v1660 = vmax.f32 %v844, %v945
  %v1661 = vmax.f32 %v1044, %v1145
  %v1662 = vmax.f32 %v1660, %v1661
  %v1663 = vmin.f32 %v844, %v945
  %v1664 = vmin.f32 %v1044, %v1145
  %v1665 = vmin.f32 %v1663, %v1664
  %v1666 = vsel %vm1532, %v1662, %v1665
  %v1667 = vmul.f32 %v1666, %v1538
  %v1668 = vadd.f32 %v1667, %v1545
  %v1669 = vmax.f32 %v1668, 0.0
  %1670 = vst [vmem:[#allocation2 + $0x58] sm:$0xff] %v1669
  %v1671 = vmax.f32 %v849, %v948
  %v1672 = vmax.f32 %v1049, %v1148
  %v1673 = vmax.f32 %v1671, %v1672
  %v1674 = vmin.f32 %v849, %v948
  %v1675 = vmin.f32 %v1049, %v1148
  %v1676 = vmin.f32 %v1674, %v1675
  %v1677 = vsel %vm1532, %v1673, %v1676
  %v1678 = vmul.f32 %v1677, %v1538
  %v1679 = vadd.f32 %v1678, %v1545
  %v1680 = vmax.f32 %v1679, 0.0
  %1681 = vst [vmem:[#allocation2 + $0x60] sm:$0xff] %v1680
  %v1682 = vmax.f32 %v852, %v953
  %v1683 = vmax.f32 %v1052, %v1153
  %v1684 = vmax.f32 %v1682, %v1683
  %v1685 = vmin.f32 %v852, %v953
  %v1686 = vmin.f32 %v1052, %v1153
  %v1687 = vmin.f32 %v1685, %v1686
  %v1688 = vsel %vm1532, %v1684, %v1687
  %v1689 = vmul.f32 %v1688, %v1538
  %v1690 = vadd.f32 %v1689, %v1545
  %v1691 = vmax.f32 %v1690, 0.0
  %1692 = vst [vmem:[#allocation2 + $0x68] sm:$0xff] %v1691
  %v1693 = vmax.f32 %v857, %v956
  %v1694 = vmax.f32 %v1057, %v1156
  %v1695 = vmax.f32 %v1693, %v1694
  %v1696 = vmin.f32 %v857, %v956
  %v1697 = vmin.f32 %v1057, %v1156
  %v1698 = vmin.f32 %v1696, %v1697
  %v1699 = vsel %vm1532, %v1695, %v1698
  %v1700 = vmul.f32 %v1699, %v1538
  %v1701 = vadd.f32 %v1700, %v1545
  %v1702 = vmax.f32 %v1701, 0.0
  %1703 = vst [vmem:[#allocation2 + $0x70] sm:$0xff] %v1702
  %v1704 = vmax.f32 %v860, %v961
  %v1705 = vmax.f32 %v1060, %v1161
  %v1706 = vmax.f32 %v1704, %v1705
  %v1707 = vmin.f32 %v860, %v961
  %v1708 = vmin.f32 %v1060, %v1161
  %v1709 = vmin.f32 %v1707, %v1708
  %v1710 = vsel %vm1532, %v1706, %v1709
  %v1711 = vmul.f32 %v1710, %v1538
  %v1712 = vadd.f32 %v1711, %v1545
  %v1713 = vmax.f32 %v1712, 0.0
  %1714 = vst [vmem:[#allocation2 + $0x78] sm:$0xff] %v1713
  %v1715 = vmax.f32 %v865, %v964
  %v1716 = vmax.f32 %v1065, %v1164
  %v1717 = vmax.f32 %v1715, %v1716
  %v1718 = vmin.f32 %v865, %v964
  %v1719 = vmin.f32 %v1065, %v1164
  %v1720 = vmin.f32 %v1718, %v1719
  %v1721 = vsel %vm1532, %v1717, %v1720
  %v1722 = vmul.f32 %v1721, %v1538
  %v1723 = vadd.f32 %v1722, %v1545
  %v1724 = vmax.f32 %v1723, 0.0
  %1725 = vst [vmem:[#allocation2 + $0x80] sm:$0xff] %v1724
  %v1726 = vmax.f32 %v868, %v969
  %v1727 = vmax.f32 %v1068, %v1169
  %v1728 = vmax.f32 %v1726, %v1727
  %v1729 = vmin.f32 %v868, %v969
  %v1730 = vmin.f32 %v1068, %v1169
  %v1731 = vmin.f32 %v1729, %v1730
  %v1732 = vsel %vm1532, %v1728, %v1731
  %v1733 = vmul.f32 %v1732, %v1538
  %v1734 = vadd.f32 %v1733, %v1545
  %v1735 = vmax.f32 %v1734, 0.0
  %1736 = vst [vmem:[#allocation2 + $0x88] sm:$0xff] %v1735
  %v1737 = vmax.f32 %v873, %v972
  %v1738 = vmax.f32 %v1073, %v1172
  %v1739 = vmax.f32 %v1737, %v1738
  %v1740 = vmin.f32 %v873, %v972
  %v1741 = vmin.f32 %v1073, %v1172
  %v1742 = vmin.f32 %v1740, %v1741
  %v1743 = vsel %vm1532, %v1739, %v1742
  %v1744 = vmul.f32 %v1743, %v1538
  %v1745 = vadd.f32 %v1744, %v1545
  %v1746 = vmax.f32 %v1745, 0.0
  %1747 = vst [vmem:[#allocation2 + $0x90] sm:$0xff] %v1746
  %v1748 = vmax.f32 %v876, %v977
  %v1749 = vmax.f32 %v1076, %v1177
  %v1750 = vmax.f32 %v1748, %v1749
  %v1751 = vmin.f32 %v876, %v977
  %v1752 = vmin.f32 %v1076, %v1177
  %v1753 = vmin.f32 %v1751, %v1752
  %v1754 = vsel %vm1532, %v1750, %v1753
  %v1755 = vmul.f32 %v1754, %v1538
  %v1756 = vadd.f32 %v1755, %v1545
  %v1757 = vmax.f32 %v1756, 0.0
  %1758 = vst [vmem:[#allocation2 + $0x98] sm:$0xff] %v1757
  %v1759 = vmax.f32 %v881, %v980
  %v1760 = vmax.f32 %v1081, %v1180
  %v1761 = vmax.f32 %v1759, %v1760
  %v1762 = vmin.f32 %v881, %v980
  %v1763 = vmin.f32 %v1081, %v1180
  %v1764 = vmin.f32 %v1762, %v1763
  %v1765 = vsel %vm1532, %v1761, %v1764
  %v1766 = vmul.f32 %v1765, %v1538
  %v1767 = vadd.f32 %v1766, %v1545
  %v1768 = vmax.f32 %v1767, 0.0
  %1769 = vst [vmem:[#allocation2 + $0xa0] sm:$0xff] %v1768
  %v1770 = vmax.f32 %v884, %v985
  %v1771 = vmax.f32 %v1084, %v1185
  %v1772 = vmax.f32 %v1770, %v1771
  %v1773 = vmin.f32 %v884, %v985
  %v1774 = vmin.f32 %v1084, %v1185
  %v1775 = vmin.f32 %v1773, %v1774
  %v1776 = vsel %vm1532, %v1772, %v1775
  %v1777 = vmul.f32 %v1776, %v1538
  %v1778 = vadd.f32 %v1777, %v1545
  %v1779 = vmax.f32 %v1778, 0.0
  %1780 = vst [vmem:[#allocation2 + $0xa8] sm:$0xff] %v1779
  %v1781 = vmax.f32 %v889, %v988
  %v1782 = vmax.f32 %v1089, %v1188
  %v1783 = vmax.f32 %v1781, %v1782
  %v1784 = vmin.f32 %v889, %v988
  %v1785 = vmin.f32 %v1089, %v1188
  %v1786 = vmin.f32 %v1784, %v1785
  %v1787 = vsel %vm1532, %v1783, %v1786
  %v1788 = vmul.f32 %v1787, %v1538
  %v1789 = vadd.f32 %v1788, %v1545
  %v1790 = vmax.f32 %v1789, 0.0
  %1791 = vst [vmem:[#allocation2 + $0xb0] sm:$0xff] %v1790
  %v1792 = vmax.f32 %v892, %v993
  %v1793 = vmax.f32 %v1092, %v1193
  %v1794 = vmax.f32 %v1792, %v1793
  %v1795 = vmin.f32 %v892, %v993
  %v1796 = vmin.f32 %v1092, %v1193
  %v1797 = vmin.f32 %v1795, %v1796
  %v1798 = vsel %vm1532, %v1794, %v1797
  %v1799 = vmul.f32 %v1798, %v1538
  %v1800 = vadd.f32 %v1799, %v1545
  %v1801 = vmax.f32 %v1800, 0.0
  %1802 = vst [vmem:[#allocation2 + $0xb8] sm:$0xff] %v1801
  %v1803 = vmax.f32 %v897, %v996
  %v1804 = vmax.f32 %v1097, %v1196
  %v1805 = vmax.f32 %v1803, %v1804
  %v1806 = vmin.f32 %v897, %v996
  %v1807 = vmin.f32 %v1097, %v1196
  %v1808 = vmin.f32 %v1806, %v1807
  %v1809 = vsel %vm1532, %v1805, %v1808
  %v1810 = vmul.f32 %v1809, %v1538
  %v1811 = vadd.f32 %v1810, %v1545
  %v1812 = vmax.f32 %v1811, 0.0
  %1813 = vst [vmem:[#allocation2 + $0xc0] sm:$0xff] %v1812
  %v1814 = vld [vmem:[#allocation2] sm:$0xff]
  %v1815 = vld [vmem:[#allocation2 + $0x8] sm:$0xff]
  %v1816 = vld [vmem:[#allocation2 + $0x10] sm:$0xff]
  %v1817 = vld [vmem:[#allocation2 + $0x18] sm:$0xff]
  %v1818 = vld [vmem:[#allocation2 + $0x20] sm:$0xff]
  %v1819 = vld [vmem:[#allocation2 + $0x28] sm:$0xff]
  %v1820 = vld [vmem:[#allocation2 + $0x30] sm:$0xff]
  %v1821 = vld [vmem:[#allocation2 + $0x38] sm:$0xff]
  %v1822 = vld [vmem:[#allocation2 + $0x40] sm:$0xff]
  %v1823 = vld [vmem:[#allocation2 + $0x48] sm:$0xff]
  %v1824 = vld [vmem:[#allocation2 + $0x50] sm:$0xff]
  %v1825 = vld [vmem:[#allocation2 + $0x58] sm:$0xff]
  %v1826 = vld [vmem:[#allocation2 + $0x60] sm:$0xff]
  %v1827 = vld [vmem:[#allocation2 + $0x68] sm:$0xff]
  %v1828 = vld [vmem:[#allocation2 + $0x70] sm:$0xff]
  %v1829 = vld [vmem:[#allocation2 + $0x78] sm:$0xff]
  %v1830 = vld [vmem:[#allocation2 + $0x80] sm:$0xff]
  %v1831 = vld [vmem:[#allocation2 + $0x88] sm:$0xff]
  %v1832 = vld [vmem:[#allocation2 + $0x90] sm:$0xff]
  %v1833 = vld [vmem:[#allocation2 + $0x98] sm:$0xff]
  %v1834 = vld [vmem:[#allocation2 + $0xa0] sm:$0xff]
  %v1835 = vld [vmem:[#allocation2 + $0xa8] sm:$0xff]
  %v1836 = vld [vmem:[#allocation2 + $0xb0] sm:$0xff]
  %v1837 = vld [vmem:[#allocation2 + $0xb8] sm:$0xff]
  %v1838 = vld [vmem:[#allocation2 + $0xc0] sm:$0xff]
  %v1839 = vpack.c.bf16 %v1814, %v1814
  %v1840 = vpack.c.bf16 %v1815, %v1815
  %v1841 = vpack.c.bf16 %v1816, %v1816
  %v1842 = vpack.c.bf16 %v1817, %v1817
  %v1843 = vpack.c.bf16 %v1818, %v1818
  %v1844 = vpack.c.bf16 %v1819, %v1819
  %v1845 = vpack.c.bf16 %v1820, %v1820
  %v1846 = vpack.c.bf16 %v1821, %v1821
  %v1847 = vpack.c.bf16 %v1822, %v1822
  %v1848 = vpack.c.bf16 %v1823, %v1823
  %v1849 = vpack.c.bf16 %v1824, %v1824
  %v1850 = vpack.c.bf16 %v1825, %v1825
  %v1851 = vpack.c.bf16 %v1826, %v1826
  %v1852 = vpack.c.bf16 %v1827, %v1827
  %v1853 = vpack.c.bf16 %v1828, %v1828
  %v1854 = vpack.c.bf16 %v1829, %v1829
  %v1855 = vpack.c.bf16 %v1830, %v1830
  %v1856 = vpack.c.bf16 %v1831, %v1831
  %v1857 = vpack.c.bf16 %v1832, %v1832
  %v1858 = vpack.c.bf16 %v1833, %v1833
  %v1859 = vpack.c.bf16 %v1834, %v1834
  %v1860 = vpack.c.bf16 %v1835, %v1835
  %v1861 = vpack.c.bf16 %v1836, %v1836
  %v1862 = vpack.c.bf16 %v1837, %v1837
  %v1863 = vpack.c.bf16 %v1838, %v1838
  %v1864 = vld [vmem:[%s4] sm:$0xf]
  %v1865 = vld [vmem:[%s4 + $0x4] sm:$0xf]
  %v1866 = vld [vmem:[%s4 + $0x8] sm:$0xf]
  %v1867 = vld [vmem:[%s4 + $0xc] sm:$0xf]
  %v1868 = vld [vmem:[%s4 + $0x10] sm:$0xf]
  %v1869 = vld [vmem:[%s4 + $0x14] sm:$0xf]
  %v1870 = vld [vmem:[%s4 + $0x18] sm:$0xf]
  %v1871 = vld [vmem:[%s4 + $0x1c] sm:$0xf]
  %v1872 = vld [vmem:[%s4 + $0x20] sm:$0xf]
  %v1873 = vld [vmem:[%s4 + $0x24] sm:$0xf]
  %v1874 = vld [vmem:[%s4 + $0x28] sm:$0xf]
  %v1875 = vld [vmem:[%s4 + $0x2c] sm:$0xf]
  %v1876 = vld [vmem:[%s4 + $0x30] sm:$0xf]
  %v1877 = vld [vmem:[%s4 + $0x34] sm:$0xf]
  %v1878 = vld [vmem:[%s4 + $0x38] sm:$0xf]
  %v1879 = vld [vmem:[%s4 + $0x3c] sm:$0xf]
  %v1880 = vld [vmem:[%s4 + $0x40] sm:$0xf]
  %v1881 = vld [vmem:[%s4 + $0x44] sm:$0xf]
  %v1882 = vld [vmem:[%s4 + $0x48] sm:$0xf]
  %v1883 = vld [vmem:[%s4 + $0x4c] sm:$0xf]
  %v1884 = vld [vmem:[%s4 + $0x50] sm:$0xf]
  %v1885 = vld [vmem:[%s4 + $0x54] sm:$0xf]
  %v1886 = vld [vmem:[%s4 + $0x58] sm:$0xf]
  %v1887 = vld [vmem:[%s4 + $0x5c] sm:$0xf]
  %v1888 = vld [vmem:[%s4 + $0x60] sm:$0xf]
  %v1889 = vld [vmem:[%s4 + $0x64] sm:$0xf]
  %v1890 = vld [vmem:[%s4 + $0x68] sm:$0xf]
  %v1891 = vld [vmem:[%s4 + $0x6c] sm:$0xf]
  %v1892 = vld [vmem:[%s4 + $0x70] sm:$0xf]
  %v1893 = vld [vmem:[%s4 + $0x74] sm:$0xf]
  %v1894 = vld [vmem:[%s4 + $0x78] sm:$0xf]
  %v1895 = vld [vmem:[%s4 + $0x7c] sm:$0xf]
  %v1896 = vld [vmem:[%s4 + $0x80] sm:$0xf]
  %v1897 = vld [vmem:[%s4 + $0x84] sm:$0xf]
  %v1898 = vld [vmem:[%s4 + $0x88] sm:$0xf]
  %v1899 = vld [vmem:[%s4 + $0x8c] sm:$0xf]
  %v1900 = vld [vmem:[%s4 + $0x90] sm:$0xf]
  %v1901 = vld [vmem:[%s4 + $0x94] sm:$0xf]
  %v1902 = vld [vmem:[%s4 + $0x98] sm:$0xf]
  %v1903 = vld [vmem:[%s4 + $0x9c] sm:$0xf]
  %v1904 = vld [vmem:[%s4 + $0xa0] sm:$0xf]
  %v1905 = vld [vmem:[%s4 + $0xa4] sm:$0xf]
  %v1906 = vld [vmem:[%s4 + $0xa8] sm:$0xf]
  %v1907 = vld [vmem:[%s4 + $0xac] sm:$0xf]
  %v1908 = vld [vmem:[%s4 + $0xb0] sm:$0xf]
  %v1909 = vld [vmem:[%s4 + $0xb4] sm:$0xf]
  %v1910 = vld [vmem:[%s4 + $0xb8] sm:$0xf]
  %v1911 = vld [vmem:[%s4 + $0xbc] sm:$0xf]
  %v1912 = vld [vmem:[%s4 + $0xc0] sm:$0xf]
  %v1913 = vld [vmem:[%s4 + $0xc4] sm:$0xf]
  %v1914 = vld [vmem:[%s4 + $0xc8] sm:$0xf]
  %v1915 = vld [vmem:[%s4 + $0xcc] sm:$0xf]
  %v1916 = vld [vmem:[%s4 + $0xd0] sm:$0xf]
  %v1917 = vld [vmem:[%s4 + $0xd4] sm:$0xf]
  %v1918 = vld [vmem:[%s4 + $0xd8] sm:$0xf]
  %v1919 = vld [vmem:[%s4 + $0xdc] sm:$0xf]
  %v1920 = vld [vmem:[%s4 + $0xe0] sm:$0xf]
  %v1921 = vld [vmem:[%s4 + $0xe4] sm:$0xf]
  %v1922 = vld [vmem:[%s4 + $0xe8] sm:$0xf]
  %v1923 = vld [vmem:[%s4 + $0xec] sm:$0xf]
  %v1924 = vld [vmem:[%s4 + $0xf0] sm:$0xf]
  %v1925 = vld [vmem:[%s4 + $0xf4] sm:$0xf]
  %v1926 = vld [vmem:[%s4 + $0xf8] sm:$0xf]
  %v1927 = vld [vmem:[%s4 + $0xfc] sm:$0xf]
  %v1928 = vld [vmem:[%s4 + $0x100] sm:$0xf]
  %v1929 = vld [vmem:[%s4 + $0x104] sm:$0xf]
  %v1930 = vld [vmem:[%s4 + $0x108] sm:$0xf]
  %v1931 = vld [vmem:[%s4 + $0x10c] sm:$0xf]
  %v1932 = vld [vmem:[%s4 + $0x110] sm:$0xf]
  %v1933 = vld [vmem:[%s4 + $0x114] sm:$0xf]
  %v1934 = vld [vmem:[%s4 + $0x118] sm:$0xf]
  %v1935 = vld [vmem:[%s4 + $0x11c] sm:$0xf]
  %v1936 = vld [vmem:[%s4 + $0x120] sm:$0xf]
  %v1937 = vld [vmem:[%s4 + $0x124] sm:$0xf]
  %v1938 = vld [vmem:[%s4 + $0x128] sm:$0xf]
  %v1939 = vld [vmem:[%s4 + $0x12c] sm:$0xf]
  %v1940 = vld [vmem:[%s4 + $0x130] sm:$0xf]
  %v1941 = vld [vmem:[%s4 + $0x134] sm:$0xf]
  %v1942 = vld [vmem:[%s4 + $0x138] sm:$0xf]
  %v1943 = vld [vmem:[%s4 + $0x13c] sm:$0xf]
  %v1944 = vld [vmem:[%s4 + $0x140] sm:$0xf]
  %v1945 = vld [vmem:[%s4 + $0x144] sm:$0xf]
  %v1946 = vld [vmem:[%s4 + $0x148] sm:$0xf]
  %v1947 = vld [vmem:[%s4 + $0x14c] sm:$0xf]
  %v1948 = vld [vmem:[%s4 + $0x150] sm:$0xf]
  %v1949 = vld [vmem:[%s4 + $0x154] sm:$0xf]
  %v1950 = vld [vmem:[%s4 + $0x158] sm:$0xf]
  %v1951 = vld [vmem:[%s4 + $0x15c] sm:$0xf]
  %v1952 = vld [vmem:[%s4 + $0x160] sm:$0xf]
  %v1953 = vld [vmem:[%s4 + $0x164] sm:$0xf]
  %v1954 = vld [vmem:[%s4 + $0x168] sm:$0xf]
  %v1955 = vld [vmem:[%s4 + $0x16c] sm:$0xf]
  %v1956 = vld [vmem:[%s4 + $0x170] sm:$0xf]
  %v1957 = vld [vmem:[%s4 + $0x174] sm:$0xf]
  %v1958 = vld [vmem:[%s4 + $0x178] sm:$0xf]
  %v1959 = vld [vmem:[%s4 + $0x17c] sm:$0xf]
  %v1960 = vld [vmem:[%s4 + $0x180] sm:$0xf]
  %v1961 = vld [vmem:[%s4 + $0x184] sm:$0xf]
  %v1962 = vld [vmem:[%s4 + $0x188] sm:$0xf]
  %v1963 = vld [vmem:[%s4 + $0x18c] sm:$0xf]
  %v1964 = vld [vmem:[%s4 + $0x190] sm:$0xf]
  %v1965 = vld [vmem:[%s4 + $0x194] sm:$0xf]
  %v1966 = vld [vmem:[%s4 + $0x198] sm:$0xf]
  %v1967 = vld [vmem:[%s4 + $0x19c] sm:$0xf]
  %v1968 = vld [vmem:[%s4 + $0x1a0] sm:$0xf]
  %v1969 = vld [vmem:[%s4 + $0x1a4] sm:$0xf]
  %v1970 = vld [vmem:[%s4 + $0x1a8] sm:$0xf]
  %v1971 = vld [vmem:[%s4 + $0x1ac] sm:$0xf]
  %v1972 = vld [vmem:[%s4 + $0x1b0] sm:$0xf]
  %v1973 = vld [vmem:[%s4 + $0x1b4] sm:$0xf]
  %v1974 = vld [vmem:[%s4 + $0x1b8] sm:$0xf]
  %v1975 = vld [vmem:[%s4 + $0x1bc] sm:$0xf]
  %v1976 = vld [vmem:[%s4 + $0x1c0] sm:$0xf]
  %v1977 = vld [vmem:[%s4 + $0x1c4] sm:$0xf]
  %v1978 = vld [vmem:[%s4 + $0x1c8] sm:$0xf]
  %v1979 = vld [vmem:[%s4 + $0x1cc] sm:$0xf]
  %v1980 = vld [vmem:[%s4 + $0x1d0] sm:$0xf]
  %v1981 = vld [vmem:[%s4 + $0x1d4] sm:$0xf]
  %v1982 = vld [vmem:[%s4 + $0x1d8] sm:$0xf]
  %v1983 = vld [vmem:[%s4 + $0x1dc] sm:$0xf]
  %v1984 = vld [vmem:[%s4 + $0x1e0] sm:$0xf]
  %v1985 = vld [vmem:[%s4 + $0x1e4] sm:$0xf]
  %v1986 = vld [vmem:[%s4 + $0x1e8] sm:$0xf]
  %v1987 = vld [vmem:[%s4 + $0x1ec] sm:$0xf]
  %v1988 = vld [vmem:[%s4 + $0x1f0] sm:$0xf]
  %v1989 = vld [vmem:[%s4 + $0x1f4] sm:$0xf]
  %v1990 = vld [vmem:[%s4 + $0x1f8] sm:$0xf]
  %v1991 = vld [vmem:[%s4 + $0x1fc] sm:$0xf]
  %v1992 = vld [vmem:[%s4 + $0x200] sm:$0xf]
  %v1993 = vld [vmem:[%s4 + $0x204] sm:$0xf]
  %v1994 = vld [vmem:[%s4 + $0x208] sm:$0xf]
  %v1995 = vld [vmem:[%s4 + $0x20c] sm:$0xf]
  %v1996 = vld [vmem:[%s4 + $0x210] sm:$0xf]
  %v1997 = vld [vmem:[%s4 + $0x214] sm:$0xf]
  %v1998 = vld [vmem:[%s4 + $0x218] sm:$0xf]
  %v1999 = vld [vmem:[%s4 + $0x21c] sm:$0xf]
  %v2000 = vld [vmem:[%s4 + $0x220] sm:$0xf]
  %v2001 = vld [vmem:[%s4 + $0x224] sm:$0xf]
  %v2002 = vld [vmem:[%s4 + $0x228] sm:$0xf]
  %v2003 = vld [vmem:[%s4 + $0x22c] sm:$0xf]
  %v2004 = vld [vmem:[%s4 + $0x230] sm:$0xf]
  %v2005 = vld [vmem:[%s4 + $0x234] sm:$0xf]
  %v2006 = vld [vmem:[%s4 + $0x238] sm:$0xf]
  %v2007 = vld [vmem:[%s4 + $0x23c] sm:$0xf]
  %v2008 = vld [vmem:[%s4 + $0x240] sm:$0xf]
  %v2009 = vld [vmem:[%s4 + $0x244] sm:$0xf]
  %v2010 = vld [vmem:[%s4 + $0x248] sm:$0xf]
  %v2011 = vld [vmem:[%s4 + $0x24c] sm:$0xf]
  %v2012 = vld [vmem:[%s4 + $0x250] sm:$0xf]
  %v2013 = vld [vmem:[%s4 + $0x254] sm:$0xf]
  %v2014 = vld [vmem:[%s4 + $0x258] sm:$0xf]
  %v2015 = vld [vmem:[%s4 + $0x25c] sm:$0xf]
  %v2016 = vld [vmem:[%s4 + $0x260] sm:$0xf]
  %v2017 = vld [vmem:[%s4 + $0x264] sm:$0xf]
  %v2018 = vld [vmem:[%s4 + $0x268] sm:$0xf]
  %v2019 = vld [vmem:[%s4 + $0x26c] sm:$0xf]
  %v2020 = vld [vmem:[%s4 + $0x270] sm:$0xf]
  %v2021 = vld [vmem:[%s4 + $0x274] sm:$0xf]
  %v2022 = vld [vmem:[%s4 + $0x278] sm:$0xf]
  %v2023 = vld [vmem:[%s4 + $0x27c] sm:$0xf]
  %v2024 = vld [vmem:[%s4 + $0x280] sm:$0xf]
  %v2025 = vld [vmem:[%s4 + $0x284] sm:$0xf]
  %v2026 = vld [vmem:[%s4 + $0x288] sm:$0xf]
  %v2027 = vld [vmem:[%s4 + $0x28c] sm:$0xf]
  %v2028 = vld [vmem:[%s4 + $0x290] sm:$0xf]
  %v2029 = vld [vmem:[%s4 + $0x294] sm:$0xf]
  %v2030 = vld [vmem:[%s4 + $0x298] sm:$0xf]
  %v2031 = vld [vmem:[%s4 + $0x29c] sm:$0xf]
  %v2032 = vld [vmem:[%s4 + $0x2a0] sm:$0xf]
  %v2033 = vld [vmem:[%s4 + $0x2a4] sm:$0xf]
  %v2034 = vld [vmem:[%s4 + $0x2a8] sm:$0xf]
  %v2035 = vld [vmem:[%s4 + $0x2ac] sm:$0xf]
  %v2036 = vld [vmem:[%s4 + $0x2b0] sm:$0xf]
  %v2037 = vld [vmem:[%s4 + $0x2b4] sm:$0xf]
  %v2038 = vld [vmem:[%s4 + $0x2b8] sm:$0xf]
  %v2039 = vld [vmem:[%s4 + $0x2bc] sm:$0xf]
  %v2040 = vld [vmem:[%s4 + $0x2c0] sm:$0xf]
  %v2041 = vld [vmem:[%s4 + $0x2c4] sm:$0xf]
  %v2042 = vld [vmem:[%s4 + $0x2c8] sm:$0xf]
  %v2043 = vld [vmem:[%s4 + $0x2cc] sm:$0xf]
  %v2044 = vld [vmem:[%s4 + $0x2d0] sm:$0xf]
  %v2045 = vld [vmem:[%s4 + $0x2d4] sm:$0xf]
  %v2046 = vld [vmem:[%s4 + $0x2d8] sm:$0xf]
  %v2047 = vld [vmem:[%s4 + $0x2dc] sm:$0xf]
  %v2048 = vld [vmem:[%s4 + $0x2e0] sm:$0xf]
  %v2049 = vld [vmem:[%s4 + $0x2e4] sm:$0xf]
  %v2050 = vld [vmem:[%s4 + $0x2e8] sm:$0xf]
  %v2051 = vld [vmem:[%s4 + $0x2ec] sm:$0xf]
  %v2052 = vld [vmem:[%s4 + $0x2f0] sm:$0xf]
  %v2053 = vld [vmem:[%s4 + $0x2f4] sm:$0xf]
  %v2054 = vld [vmem:[%s4 + $0x2f8] sm:$0xf]
  %v2055 = vld [vmem:[%s4 + $0x2fc] sm:$0xf]
  %v2056 = vld [vmem:[%s4 + $0x300] sm:$0xf]
  %v2057 = vld [vmem:[%s4 + $0x304] sm:$0xf]
  %v2058 = vld [vmem:[%s4 + $0x308] sm:$0xf]
  %v2059 = vld [vmem:[%s4 + $0x30c] sm:$0xf]
  %v2060 = vld [vmem:[%s4 + $0x310] sm:$0xf]
  %v2061 = vld [vmem:[%s4 + $0x314] sm:$0xf]
  %v2062 = vld [vmem:[%s4 + $0x318] sm:$0xf]
  %v2063 = vld [vmem:[%s4 + $0x31c] sm:$0xf]
  %v2064 = vld [vmem:[%s4 + $0x320] sm:$0xf]
  %v2065 = vld [vmem:[%s4 + $0x324] sm:$0xf]
  %v2066 = vld [vmem:[%s4 + $0x328] sm:$0xf]
  %v2067 = vld [vmem:[%s4 + $0x32c] sm:$0xf]
  %v2068 = vld [vmem:[%s4 + $0x330] sm:$0xf]
  %v2069 = vld [vmem:[%s4 + $0x334] sm:$0xf]
  %v2070 = vld [vmem:[%s4 + $0x338] sm:$0xf]
  %v2071 = vld [vmem:[%s4 + $0x33c] sm:$0xf]
  %v2072 = vld [vmem:[%s4 + $0x340] sm:$0xf]
  %v2073 = vld [vmem:[%s4 + $0x344] sm:$0xf]
  %v2074 = vld [vmem:[%s4 + $0x348] sm:$0xf]
  %v2075 = vld [vmem:[%s4 + $0x34c] sm:$0xf]
  %v2076 = vld [vmem:[%s4 + $0x350] sm:$0xf]
  %v2077 = vld [vmem:[%s4 + $0x354] sm:$0xf]
  %v2078 = vld [vmem:[%s4 + $0x358] sm:$0xf]
  %v2079 = vld [vmem:[%s4 + $0x35c] sm:$0xf]
  %v2080 = vld [vmem:[%s4 + $0x360] sm:$0xf]
  %v2081 = vld [vmem:[%s4 + $0x364] sm:$0xf]
  %v2082 = vld [vmem:[%s4 + $0x368] sm:$0xf]
  %v2083 = vld [vmem:[%s4 + $0x36c] sm:$0xf]
  %v2084 = vld [vmem:[%s4 + $0x370] sm:$0xf]
  %v2085 = vld [vmem:[%s4 + $0x374] sm:$0xf]
  %v2086 = vld [vmem:[%s4 + $0x378] sm:$0xf]
  %v2087 = vld [vmem:[%s4 + $0x37c] sm:$0xf]
  %v2088 = vld [vmem:[%s4 + $0x380] sm:$0xf]
  %v2089 = vld [vmem:[%s4 + $0x384] sm:$0xf]
  %v2090 = vld [vmem:[%s4 + $0x388] sm:$0xf]
  %v2091 = vld [vmem:[%s4 + $0x38c] sm:$0xf]
  %v2092 = vld [vmem:[%s4 + $0x390] sm:$0xf]
  %v2093 = vld [vmem:[%s4 + $0x394] sm:$0xf]
  %v2094 = vld [vmem:[%s4 + $0x398] sm:$0xf]
  %v2095 = vld [vmem:[%s4 + $0x39c] sm:$0xf]
  %v2096 = vld [vmem:[%s4 + $0x3a0] sm:$0xf]
  %v2097 = vld [vmem:[%s4 + $0x3a4] sm:$0xf]
  %v2098 = vld [vmem:[%s4 + $0x3a8] sm:$0xf]
  %v2099 = vld [vmem:[%s4 + $0x3ac] sm:$0xf]
  %v2100 = vld [vmem:[%s4 + $0x3b0] sm:$0xf]
  %v2101 = vld [vmem:[%s4 + $0x3b4] sm:$0xf]
  %v2102 = vld [vmem:[%s4 + $0x3b8] sm:$0xf]
  %v2103 = vld [vmem:[%s4 + $0x3bc] sm:$0xf]
  %v2104 = vld [vmem:[%s4 + $0x3c0] sm:$0xf]
  %v2105 = vld [vmem:[%s4 + $0x3c4] sm:$0xf]
  %v2106 = vld [vmem:[%s4 + $0x3c8] sm:$0xf]
  %v2107 = vld [vmem:[%s4 + $0x3cc] sm:$0xf]
  %v2108 = vld [vmem:[%s4 + $0x3d0] sm:$0xf]
  %v2109 = vld [vmem:[%s4 + $0x3d4] sm:$0xf]
  %v2110 = vld [vmem:[%s4 + $0x3d8] sm:$0xf]
  %v2111 = vld [vmem:[%s4 + $0x3dc] sm:$0xf]
  %v2112 = vld [vmem:[%s4 + $0x3e0] sm:$0xf]
  %v2113 = vld [vmem:[%s4 + $0x3e4] sm:$0xf]
  %v2114 = vld [vmem:[%s4 + $0x3e8] sm:$0xf]
  %v2115 = vld [vmem:[%s4 + $0x3ec] sm:$0xf]
  %v2116 = vld [vmem:[%s4 + $0x3f0] sm:$0xf]
  %v2117 = vld [vmem:[%s4 + $0x3f4] sm:$0xf]
  %v2118 = vld [vmem:[%s4 + $0x3f8] sm:$0xf]
  %v2119 = vld [vmem:[%s4 + $0x3fc] sm:$0xf]
  %v2120 = vld [vmem:[%s4 + $0x400] sm:$0xf]
  %v2121 = vld [vmem:[%s4 + $0x404] sm:$0xf]
  %v2122 = vld [vmem:[%s4 + $0x408] sm:$0xf]
  %v2123 = vld [vmem:[%s4 + $0x40c] sm:$0xf]
  %v2124 = vld [vmem:[%s4 + $0x410] sm:$0xf]
  %v2125 = vld [vmem:[%s4 + $0x414] sm:$0xf]
  %v2126 = vld [vmem:[%s4 + $0x418] sm:$0xf]
  %v2127 = vld [vmem:[%s4 + $0x41c] sm:$0xf]
  %v2128 = vld [vmem:[%s4 + $0x420] sm:$0xf]
  %v2129 = vld [vmem:[%s4 + $0x424] sm:$0xf]
  %v2130 = vld [vmem:[%s4 + $0x428] sm:$0xf]
  %v2131 = vld [vmem:[%s4 + $0x42c] sm:$0xf]
  %v2132 = vld [vmem:[%s4 + $0x430] sm:$0xf]
  %v2133 = vld [vmem:[%s4 + $0x434] sm:$0xf]
  %v2134 = vld [vmem:[%s4 + $0x438] sm:$0xf]
  %v2135 = vld [vmem:[%s4 + $0x43c] sm:$0xf]
  %v2136 = vld [vmem:[%s4 + $0x440] sm:$0xf]
  %v2137 = vld [vmem:[%s4 + $0x444] sm:$0xf]
  %v2138 = vld [vmem:[%s4 + $0x448] sm:$0xf]
  %v2139 = vld [vmem:[%s4 + $0x44c] sm:$0xf]
  %v2140 = vld [vmem:[%s4 + $0x450] sm:$0xf]
  %v2141 = vld [vmem:[%s4 + $0x454] sm:$0xf]
  %v2142 = vld [vmem:[%s4 + $0x458] sm:$0xf]
  %v2143 = vld [vmem:[%s4 + $0x45c] sm:$0xf]
  %v2144 = vld [vmem:[%s4 + $0x460] sm:$0xf]
  %v2145 = vld [vmem:[%s4 + $0x464] sm:$0xf]
  %v2146 = vld [vmem:[%s4 + $0x468] sm:$0xf]
  %v2147 = vld [vmem:[%s4 + $0x46c] sm:$0xf]
  %v2148 = vld [vmem:[%s4 + $0x470] sm:$0xf]
  %v2149 = vld [vmem:[%s4 + $0x474] sm:$0xf]
  %v2150 = vld [vmem:[%s4 + $0x478] sm:$0xf]
  %v2151 = vld [vmem:[%s4 + $0x47c] sm:$0xf]
  %v2152 = vld [vmem:[%s4 + $0x480] sm:$0xf]
  %v2153 = vld [vmem:[%s4 + $0x484] sm:$0xf]
  %v2154 = vld [vmem:[%s4 + $0x488] sm:$0xf]
  %v2155 = vld [vmem:[%s4 + $0x48c] sm:$0xf]
  %v2156 = vld [vmem:[%s4 + $0x490] sm:$0xf]
  %v2157 = vld [vmem:[%s4 + $0x494] sm:$0xf]
  %v2158 = vld [vmem:[%s4 + $0x498] sm:$0xf]
  %v2159 = vld [vmem:[%s4 + $0x49c] sm:$0xf]
  %v2160 = vld [vmem:[%s4 + $0x4a0] sm:$0xf]
  %v2161 = vld [vmem:[%s4 + $0x4a4] sm:$0xf]
  %v2162 = vld [vmem:[%s4 + $0x4a8] sm:$0xf]
  %v2163 = vld [vmem:[%s4 + $0x4ac] sm:$0xf]
  %v2164 = vld [vmem:[%s4 + $0x4b0] sm:$0xf]
  %v2165 = vld [vmem:[%s4 + $0x4b4] sm:$0xf]
  %v2166 = vld [vmem:[%s4 + $0x4b8] sm:$0xf]
  %v2167 = vld [vmem:[%s4 + $0x4bc] sm:$0xf]
  %v2168 = vld [vmem:[%s4 + $0x4c0] sm:$0xf]
  %v2169 = vld [vmem:[%s4 + $0x4c4] sm:$0xf]
  %v2170 = vld [vmem:[%s4 + $0x4c8] sm:$0xf]
  %v2171 = vld [vmem:[%s4 + $0x4cc] sm:$0xf]
  %v2172 = vld [vmem:[%s4 + $0x4d0] sm:$0xf]
  %v2173 = vld [vmem:[%s4 + $0x4d4] sm:$0xf]
  %v2174 = vld [vmem:[%s4 + $0x4d8] sm:$0xf]
  %v2175 = vld [vmem:[%s4 + $0x4dc] sm:$0xf]
  %v2176 = vld [vmem:[%s4 + $0x4e0] sm:$0xf]
  %v2177 = vld [vmem:[%s4 + $0x4e4] sm:$0xf]
  %v2178 = vld [vmem:[%s4 + $0x4e8] sm:$0xf]
  %v2179 = vld [vmem:[%s4 + $0x4ec] sm:$0xf]
  %v2180 = vld [vmem:[%s4 + $0x4f0] sm:$0xf]
  %v2181 = vld [vmem:[%s4 + $0x4f4] sm:$0xf]
  %v2182 = vld [vmem:[%s4 + $0x4f8] sm:$0xf]
  %v2183 = vld [vmem:[%s4 + $0x4fc] sm:$0xf]
  %v2184 = vld [vmem:[%s4 + $0x500] sm:$0xf]
  %v2185 = vld [vmem:[%s4 + $0x504] sm:$0xf]
  %v2186 = vld [vmem:[%s4 + $0x508] sm:$0xf]
  %v2187 = vld [vmem:[%s4 + $0x50c] sm:$0xf]
  %v2188 = vld [vmem:[%s4 + $0x510] sm:$0xf]
  %v2189 = vld [vmem:[%s4 + $0x514] sm:$0xf]
  %v2190 = vld [vmem:[%s4 + $0x518] sm:$0xf]
  %v2191 = vld [vmem:[%s4 + $0x51c] sm:$0xf]
  %v2192 = vld [vmem:[%s4 + $0x520] sm:$0xf]
  %v2193 = vld [vmem:[%s4 + $0x524] sm:$0xf]
  %v2194 = vld [vmem:[%s4 + $0x528] sm:$0xf]
  %v2195 = vld [vmem:[%s4 + $0x52c] sm:$0xf]
  %v2196 = vld [vmem:[%s4 + $0x530] sm:$0xf]
  %v2197 = vld [vmem:[%s4 + $0x534] sm:$0xf]
  %v2198 = vld [vmem:[%s4 + $0x538] sm:$0xf]
  %v2199 = vld [vmem:[%s4 + $0x53c] sm:$0xf]
  %v2200 = vld [vmem:[%s4 + $0x540] sm:$0xf]
  %v2201 = vld [vmem:[%s4 + $0x544] sm:$0xf]
  %v2202 = vld [vmem:[%s4 + $0x548] sm:$0xf]
  %v2203 = vld [vmem:[%s4 + $0x54c] sm:$0xf]
  %v2204 = vld [vmem:[%s4 + $0x550] sm:$0xf]
  %v2205 = vld [vmem:[%s4 + $0x554] sm:$0xf]
  %v2206 = vld [vmem:[%s4 + $0x558] sm:$0xf]
  %v2207 = vld [vmem:[%s4 + $0x55c] sm:$0xf]
  %v2208 = vld [vmem:[%s4 + $0x560] sm:$0xf]
  %v2209 = vld [vmem:[%s4 + $0x564] sm:$0xf]
  %v2210 = vld [vmem:[%s4 + $0x568] sm:$0xf]
  %v2211 = vld [vmem:[%s4 + $0x56c] sm:$0xf]
  %v2212 = vld [vmem:[%s4 + $0x570] sm:$0xf]
  %v2213 = vld [vmem:[%s4 + $0x574] sm:$0xf]
  %v2214 = vld [vmem:[%s4 + $0x578] sm:$0xf]
  %v2215 = vld [vmem:[%s4 + $0x57c] sm:$0xf]
  %v2216 = vld [vmem:[%s4 + $0x580] sm:$0xf]
  %v2217 = vld [vmem:[%s4 + $0x584] sm:$0xf]
  %v2218 = vld [vmem:[%s4 + $0x588] sm:$0xf]
  %v2219 = vld [vmem:[%s4 + $0x58c] sm:$0xf]
  %v2220 = vld [vmem:[%s4 + $0x590] sm:$0xf]
  %v2221 = vld [vmem:[%s4 + $0x594] sm:$0xf]
  %v2222 = vld [vmem:[%s4 + $0x598] sm:$0xf]
  %v2223 = vld [vmem:[%s4 + $0x59c] sm:$0xf]
  %v2224 = vld [vmem:[%s4 + $0x5a0] sm:$0xf]
  %v2225 = vld [vmem:[%s4 + $0x5a4] sm:$0xf]
  %v2226 = vld [vmem:[%s4 + $0x5a8] sm:$0xf]
  %v2227 = vld [vmem:[%s4 + $0x5ac] sm:$0xf]
  %v2228 = vld [vmem:[%s4 + $0x5b0] sm:$0xf]
  %v2229 = vld [vmem:[%s4 + $0x5b4] sm:$0xf]
  %v2230 = vld [vmem:[%s4 + $0x5b8] sm:$0xf]
  %v2231 = vld [vmem:[%s4 + $0x5bc] sm:$0xf]
  %v2232 = vld [vmem:[%s4 + $0x5c0] sm:$0xf]
  %v2233 = vld [vmem:[%s4 + $0x5c4] sm:$0xf]
  %v2234 = vld [vmem:[%s4 + $0x5c8] sm:$0xf]
  %v2235 = vld [vmem:[%s4 + $0x5cc] sm:$0xf]
  %v2236 = vld [vmem:[%s4 + $0x5d0] sm:$0xf]
  %v2237 = vld [vmem:[%s4 + $0x5d4] sm:$0xf]
  %v2238 = vld [vmem:[%s4 + $0x5d8] sm:$0xf]
  %v2239 = vld [vmem:[%s4 + $0x5dc] sm:$0xf]
  %v2240 = vld [vmem:[%s4 + $0x5e0] sm:$0xf]
  %v2241 = vld [vmem:[%s4 + $0x5e4] sm:$0xf]
  %v2242 = vld [vmem:[%s4 + $0x5e8] sm:$0xf]
  %v2243 = vld [vmem:[%s4 + $0x5ec] sm:$0xf]
  %v2244 = vld [vmem:[%s4 + $0x5f0] sm:$0xf]
  %v2245 = vld [vmem:[%s4 + $0x5f4] sm:$0xf]
  %v2246 = vld [vmem:[%s4 + $0x5f8] sm:$0xf]
  %v2247 = vld [vmem:[%s4 + $0x5fc] sm:$0xf]
  %v2248 = vld [vmem:[%s4 + $0x600] sm:$0xf]
  %v2249 = vld [vmem:[%s4 + $0x604] sm:$0xf]
  %v2250 = vld [vmem:[%s4 + $0x608] sm:$0xf]
  %v2251 = vld [vmem:[%s4 + $0x60c] sm:$0xf]
  %v2252 = vld [vmem:[%s4 + $0x610] sm:$0xf]
  %v2253 = vld [vmem:[%s4 + $0x614] sm:$0xf]
  %v2254 = vld [vmem:[%s4 + $0x618] sm:$0xf]
  %v2255 = vld [vmem:[%s4 + $0x61c] sm:$0xf]
  %v2256 = vld [vmem:[%s4 + $0x620] sm:$0xf]
  %v2257 = vld [vmem:[%s4 + $0x624] sm:$0xf]
  %v2258 = vld [vmem:[%s4 + $0x628] sm:$0xf]
  %v2259 = vld [vmem:[%s4 + $0x62c] sm:$0xf]
  %v2260 = vld [vmem:[%s4 + $0x630] sm:$0xf]
  %v2261 = vld [vmem:[%s4 + $0x634] sm:$0xf]
  %v2262 = vld [vmem:[%s4 + $0x638] sm:$0xf]
  %v2263 = vld [vmem:[%s4 + $0x63c] sm:$0xf]
  %v2264 = vld [vmem:[%s5] sm:$0x1]
  %v2266 = vlaneseq
  %v2267 = vshrl.u32 %v2266, 7
  %v2268 = vsub.s32 0, %v2267
  %v2269 = vrot.slane %v2264, %v2268
  %v2671 = vunpack.c.l.b16 %v1864
  %v2672 = vunpack.c.l.b16 %v1865
  %v2673 = vunpack.c.l.b16 %v1866
  %v2674 = vunpack.c.l.b16 %v1867
  %v2675 = vunpack.c.l.b16 %v1868
  %v2676 = vunpack.c.l.b16 %v1869
  %v2677 = vunpack.c.l.b16 %v1870
  %v2678 = vunpack.c.l.b16 %v1871
  %v2679 = vunpack.c.l.b16 %v1872
  %v2680 = vunpack.c.l.b16 %v1873
  %v2681 = vunpack.c.l.b16 %v1874
  %v2682 = vunpack.c.l.b16 %v1875
  %v2683 = vunpack.c.l.b16 %v1876
  %v2684 = vunpack.c.l.b16 %v1877
  %v2685 = vunpack.c.l.b16 %v1878
  %v2686 = vunpack.c.l.b16 %v1879
  %v2687 = vunpack.c.l.b16 %v1880
  %v2688 = vunpack.c.l.b16 %v1881
  %v2689 = vunpack.c.l.b16 %v1882
  %v2690 = vunpack.c.l.b16 %v1883
  %v2691 = vunpack.c.l.b16 %v1884
  %v2692 = vunpack.c.l.b16 %v1885
  %v2693 = vunpack.c.l.b16 %v1886
  %v2694 = vunpack.c.l.b16 %v1887
  %v2695 = vunpack.c.l.b16 %v1888
  %v2696 = vunpack.c.l.b16 %v1889
  %v2697 = vunpack.c.l.b16 %v1890
  %v2698 = vunpack.c.l.b16 %v1891
  %v2699 = vunpack.c.l.b16 %v1892
  %v2700 = vunpack.c.l.b16 %v1893
  %v2701 = vunpack.c.l.b16 %v1894
  %v2702 = vunpack.c.l.b16 %v1895
  %v2703 = vunpack.c.l.b16 %v1896
  %v2704 = vunpack.c.l.b16 %v1897
  %v2705 = vunpack.c.l.b16 %v1898
  %v2706 = vunpack.c.l.b16 %v1899
  %v2707 = vunpack.c.l.b16 %v1900
  %v2708 = vunpack.c.l.b16 %v1901
  %v2709 = vunpack.c.l.b16 %v1902
  %v2710 = vunpack.c.l.b16 %v1903
  %v2711 = vunpack.c.l.b16 %v1904
  %v2712 = vunpack.c.l.b16 %v1905
  %v2713 = vunpack.c.l.b16 %v1906
  %v2714 = vunpack.c.l.b16 %v1907
  %v2715 = vunpack.c.l.b16 %v1908
  %v2716 = vunpack.c.l.b16 %v1909
  %v2717 = vunpack.c.l.b16 %v1910
  %v2718 = vunpack.c.l.b16 %v1911
  %v2719 = vunpack.c.l.b16 %v1912
  %v2720 = vunpack.c.l.b16 %v1913
  %v2721 = vunpack.c.l.b16 %v1914
  %v2722 = vunpack.c.l.b16 %v1915
  %v2723 = vunpack.c.l.b16 %v1916
  %v2724 = vunpack.c.l.b16 %v1917
  %v2725 = vunpack.c.l.b16 %v1918
  %v2726 = vunpack.c.l.b16 %v1919
  %v2727 = vunpack.c.l.b16 %v1920
  %v2728 = vunpack.c.l.b16 %v1921
  %v2729 = vunpack.c.l.b16 %v1922
  %v2730 = vunpack.c.l.b16 %v1923
  %v2731 = vunpack.c.l.b16 %v1924
  %v2732 = vunpack.c.l.b16 %v1925
  %v2733 = vunpack.c.l.b16 %v1926
  %v2734 = vunpack.c.l.b16 %v1927
  %v2735 = vunpack.c.l.b16 %v1928
  %v2736 = vunpack.c.l.b16 %v1929
  %v2737 = vunpack.c.l.b16 %v1930
  %v2738 = vunpack.c.l.b16 %v1931
  %v2739 = vunpack.c.l.b16 %v1932
  %v2740 = vunpack.c.l.b16 %v1933
  %v2741 = vunpack.c.l.b16 %v1934
  %v2742 = vunpack.c.l.b16 %v1935
  %v2743 = vunpack.c.l.b16 %v1936
  %v2744 = vunpack.c.l.b16 %v1937
  %v2745 = vunpack.c.l.b16 %v1938
  %v2746 = vunpack.c.l.b16 %v1939
  %v2747 = vunpack.c.l.b16 %v1940
  %v2748 = vunpack.c.l.b16 %v1941
  %v2749 = vunpack.c.l.b16 %v1942
  %v2750 = vunpack.c.l.b16 %v1943
  %v2751 = vunpack.c.l.b16 %v1944
  %v2752 = vunpack.c.l.b16 %v1945
  %v2753 = vunpack.c.l.b16 %v1946
  %v2754 = vunpack.c.l.b16 %v1947
  %v2755 = vunpack.c.l.b16 %v1948
  %v2756 = vunpack.c.l.b16 %v1949
  %v2757 = vunpack.c.l.b16 %v1950
  %v2758 = vunpack.c.l.b16 %v1951
  %v2759 = vunpack.c.l.b16 %v1952
  %v2760 = vunpack.c.l.b16 %v1953
  %v2761 = vunpack.c.l.b16 %v1954
  %v2762 = vunpack.c.l.b16 %v1955
  %v2763 = vunpack.c.l.b16 %v1956
  %v2764 = vunpack.c.l.b16 %v1957
  %v2765 = vunpack.c.l.b16 %v1958
  %v2766 = vunpack.c.l.b16 %v1959
  %v2767 = vunpack.c.l.b16 %v1960
  %v2768 = vunpack.c.l.b16 %v1961
  %v2769 = vunpack.c.l.b16 %v1962
  %v2770 = vunpack.c.l.b16 %v1963
  %v2771 = vunpack.c.l.b16 %v1964
  %v2772 = vunpack.c.l.b16 %v1965
  %v2773 = vunpack.c.l.b16 %v1966
  %v2774 = vunpack.c.l.b16 %v1967
  %v2775 = vunpack.c.l.b16 %v1968
  %v2776 = vunpack.c.l.b16 %v1969
  %v2777 = vunpack.c.l.b16 %v1970
  %v2778 = vunpack.c.l.b16 %v1971
  %v2779 = vunpack.c.l.b16 %v1972
  %v2780 = vunpack.c.l.b16 %v1973
  %v2781 = vunpack.c.l.b16 %v1974
  %v2782 = vunpack.c.l.b16 %v1975
  %v2783 = vunpack.c.l.b16 %v1976
  %v2784 = vunpack.c.l.b16 %v1977
  %v2785 = vunpack.c.l.b16 %v1978
  %v2786 = vunpack.c.l.b16 %v1979
  %v2787 = vunpack.c.l.b16 %v1980
  %v2788 = vunpack.c.l.b16 %v1981
  %v2789 = vunpack.c.l.b16 %v1982
  %v2790 = vunpack.c.l.b16 %v1983
  %v2791 = vunpack.c.l.b16 %v1984
  %v2792 = vunpack.c.l.b16 %v1985
  %v2793 = vunpack.c.l.b16 %v1986
  %v2794 = vunpack.c.l.b16 %v1987
  %v2795 = vunpack.c.l.b16 %v1988
  %v2796 = vunpack.c.l.b16 %v1989
  %v2797 = vunpack.c.l.b16 %v1990
  %v2798 = vunpack.c.l.b16 %v1991
  %v2799 = vunpack.c.l.b16 %v1992
  %v2800 = vunpack.c.l.b16 %v1993
  %v2801 = vunpack.c.l.b16 %v1994
  %v2802 = vunpack.c.l.b16 %v1995
  %v2803 = vunpack.c.l.b16 %v1996
  %v2804 = vunpack.c.l.b16 %v1997
  %v2805 = vunpack.c.l.b16 %v1998
  %v2806 = vunpack.c.l.b16 %v1999
  %v2807 = vunpack.c.l.b16 %v2000
  %v2808 = vunpack.c.l.b16 %v2001
  %v2809 = vunpack.c.l.b16 %v2002
  %v2810 = vunpack.c.l.b16 %v2003
  %v2811 = vunpack.c.l.b16 %v2004
  %v2812 = vunpack.c.l.b16 %v2005
  %v2813 = vunpack.c.l.b16 %v2006
  %v2814 = vunpack.c.l.b16 %v2007
  %v2815 = vunpack.c.l.b16 %v2008
  %v2816 = vunpack.c.l.b16 %v2009
  %v2817 = vunpack.c.l.b16 %v2010
  %v2818 = vunpack.c.l.b16 %v2011
  %v2819 = vunpack.c.l.b16 %v2012
  %v2820 = vunpack.c.l.b16 %v2013
  %v2821 = vunpack.c.l.b16 %v2014
  %v2822 = vunpack.c.l.b16 %v2015
  %v2823 = vunpack.c.l.b16 %v2016
  %v2824 = vunpack.c.l.b16 %v2017
  %v2825 = vunpack.c.l.b16 %v2018
  %v2826 = vunpack.c.l.b16 %v2019
  %v2827 = vunpack.c.l.b16 %v2020
  %v2828 = vunpack.c.l.b16 %v2021
  %v2829 = vunpack.c.l.b16 %v2022
  %v2830 = vunpack.c.l.b16 %v2023
  %v2831 = vunpack.c.l.b16 %v2024
  %v2832 = vunpack.c.l.b16 %v2025
  %v2833 = vunpack.c.l.b16 %v2026
  %v2834 = vunpack.c.l.b16 %v2027
  %v2835 = vunpack.c.l.b16 %v2028
  %v2836 = vunpack.c.l.b16 %v2029
  %v2837 = vunpack.c.l.b16 %v2030
  %v2838 = vunpack.c.l.b16 %v2031
  %v2839 = vunpack.c.l.b16 %v2032
  %v2840 = vunpack.c.l.b16 %v2033
  %v2841 = vunpack.c.l.b16 %v2034
  %v2842 = vunpack.c.l.b16 %v2035
  %v2843 = vunpack.c.l.b16 %v2036
  %v2844 = vunpack.c.l.b16 %v2037
  %v2845 = vunpack.c.l.b16 %v2038
  %v2846 = vunpack.c.l.b16 %v2039
  %v2847 = vunpack.c.l.b16 %v2040
  %v2848 = vunpack.c.l.b16 %v2041
  %v2849 = vunpack.c.l.b16 %v2042
  %v2850 = vunpack.c.l.b16 %v2043
  %v2851 = vunpack.c.l.b16 %v2044
  %v2852 = vunpack.c.l.b16 %v2045
  %v2853 = vunpack.c.l.b16 %v2046
  %v2854 = vunpack.c.l.b16 %v2047
  %v2855 = vunpack.c.l.b16 %v2048
  %v2856 = vunpack.c.l.b16 %v2049
  %v2857 = vunpack.c.l.b16 %v2050
  %v2858 = vunpack.c.l.b16 %v2051
  %v2859 = vunpack.c.l.b16 %v2052
  %v2860 = vunpack.c.l.b16 %v2053
  %v2861 = vunpack.c.l.b16 %v2054
  %v2862 = vunpack.c.l.b16 %v2055
  %v2863 = vunpack.c.l.b16 %v2056
  %v2864 = vunpack.c.l.b16 %v2057
  %v2865 = vunpack.c.l.b16 %v2058
  %v2866 = vunpack.c.l.b16 %v2059
  %v2867 = vunpack.c.l.b16 %v2060
  %v2868 = vunpack.c.l.b16 %v2061
  %v2869 = vunpack.c.l.b16 %v2062
  %v2870 = vunpack.c.l.b16 %v2063
  %v2871 = vunpack.c.l.b16 %v2064
  %v2872 = vunpack.c.l.b16 %v2065
  %v2873 = vunpack.c.l.b16 %v2066
  %v2874 = vunpack.c.l.b16 %v2067
  %v2875 = vunpack.c.l.b16 %v2068
  %v2876 = vunpack.c.l.b16 %v2069
  %v2877 = vunpack.c.l.b16 %v2070
  %v2878 = vunpack.c.l.b16 %v2071
  %v2879 = vunpack.c.l.b16 %v2072
  %v2880 = vunpack.c.l.b16 %v2073
  %v2881 = vunpack.c.l.b16 %v2074
  %v2882 = vunpack.c.l.b16 %v2075
  %v2883 = vunpack.c.l.b16 %v2076
  %v2884 = vunpack.c.l.b16 %v2077
  %v2885 = vunpack.c.l.b16 %v2078
  %v2886 = vunpack.c.l.b16 %v2079
  %v2887 = vunpack.c.l.b16 %v2080
  %v2888 = vunpack.c.l.b16 %v2081
  %v2889 = vunpack.c.l.b16 %v2082
  %v2890 = vunpack.c.l.b16 %v2083
  %v2891 = vunpack.c.l.b16 %v2084
  %v2892 = vunpack.c.l.b16 %v2085
  %v2893 = vunpack.c.l.b16 %v2086
  %v2894 = vunpack.c.l.b16 %v2087
  %v2895 = vunpack.c.l.b16 %v2088
  %v2896 = vunpack.c.l.b16 %v2089
  %v2897 = vunpack.c.l.b16 %v2090
  %v2898 = vunpack.c.l.b16 %v2091
  %v2899 = vunpack.c.l.b16 %v2092
  %v2900 = vunpack.c.l.b16 %v2093
  %v2901 = vunpack.c.l.b16 %v2094
  %v2902 = vunpack.c.l.b16 %v2095
  %v2903 = vunpack.c.l.b16 %v2096
  %v2904 = vunpack.c.l.b16 %v2097
  %v2905 = vunpack.c.l.b16 %v2098
  %v2906 = vunpack.c.l.b16 %v2099
  %v2907 = vunpack.c.l.b16 %v2100
  %v2908 = vunpack.c.l.b16 %v2101
  %v2909 = vunpack.c.l.b16 %v2102
  %v2910 = vunpack.c.l.b16 %v2103
  %v2911 = vunpack.c.l.b16 %v2104
  %v2912 = vunpack.c.l.b16 %v2105
  %v2913 = vunpack.c.l.b16 %v2106
  %v2914 = vunpack.c.l.b16 %v2107
  %v2915 = vunpack.c.l.b16 %v2108
  %v2916 = vunpack.c.l.b16 %v2109
  %v2917 = vunpack.c.l.b16 %v2110
  %v2918 = vunpack.c.l.b16 %v2111
  %v2919 = vunpack.c.l.b16 %v2112
  %v2920 = vunpack.c.l.b16 %v2113
  %v2921 = vunpack.c.l.b16 %v2114
  %v2922 = vunpack.c.l.b16 %v2115
  %v2923 = vunpack.c.l.b16 %v2116
  %v2924 = vunpack.c.l.b16 %v2117
  %v2925 = vunpack.c.l.b16 %v2118
  %v2926 = vunpack.c.l.b16 %v2119
  %v2927 = vunpack.c.l.b16 %v2120
  %v2928 = vunpack.c.l.b16 %v2121
  %v2929 = vunpack.c.l.b16 %v2122
  %v2930 = vunpack.c.l.b16 %v2123
  %v2931 = vunpack.c.l.b16 %v2124
  %v2932 = vunpack.c.l.b16 %v2125
  %v2933 = vunpack.c.l.b16 %v2126
  %v2934 = vunpack.c.l.b16 %v2127
  %v2935 = vunpack.c.l.b16 %v2128
  %v2936 = vunpack.c.l.b16 %v2129
  %v2937 = vunpack.c.l.b16 %v2130
  %v2938 = vunpack.c.l.b16 %v2131
  %v2939 = vunpack.c.l.b16 %v2132
  %v2940 = vunpack.c.l.b16 %v2133
  %v2941 = vunpack.c.l.b16 %v2134
  %v2942 = vunpack.c.l.b16 %v2135
  %v2943 = vunpack.c.l.b16 %v2136
  %v2944 = vunpack.c.l.b16 %v2137
  %v2945 = vunpack.c.l.b16 %v2138
  %v2946 = vunpack.c.l.b16 %v2139
  %v2947 = vunpack.c.l.b16 %v2140
  %v2948 = vunpack.c.l.b16 %v2141
  %v2949 = vunpack.c.l.b16 %v2142
  %v2950 = vunpack.c.l.b16 %v2143
  %v2951 = vunpack.c.l.b16 %v2144
  %v2952 = vunpack.c.l.b16 %v2145
  %v2953 = vunpack.c.l.b16 %v2146
  %v2954 = vunpack.c.l.b16 %v2147
  %v2955 = vunpack.c.l.b16 %v2148
  %v2956 = vunpack.c.l.b16 %v2149
  %v2957 = vunpack.c.l.b16 %v2150
  %v2958 = vunpack.c.l.b16 %v2151
  %v2959 = vunpack.c.l.b16 %v2152
  %v2960 = vunpack.c.l.b16 %v2153
  %v2961 = vunpack.c.l.b16 %v2154
  %v2962 = vunpack.c.l.b16 %v2155
  %v2963 = vunpack.c.l.b16 %v2156
  %v2964 = vunpack.c.l.b16 %v2157
  %v2965 = vunpack.c.l.b16 %v2158
  %v2966 = vunpack.c.l.b16 %v2159
  %v2967 = vunpack.c.l.b16 %v2160
  %v2968 = vunpack.c.l.b16 %v2161
  %v2969 = vunpack.c.l.b16 %v2162
  %v2970 = vunpack.c.l.b16 %v2163
  %v2971 = vunpack.c.l.b16 %v2164
  %v2972 = vunpack.c.l.b16 %v2165
  %v2973 = vunpack.c.l.b16 %v2166
  %v2974 = vunpack.c.l.b16 %v2167
  %v2975 = vunpack.c.l.b16 %v2168
  %v2976 = vunpack.c.l.b16 %v2169
  %v2977 = vunpack.c.l.b16 %v2170
  %v2978 = vunpack.c.l.b16 %v2171
  %v2979 = vunpack.c.l.b16 %v2172
  %v2980 = vunpack.c.l.b16 %v2173
  %v2981 = vunpack.c.l.b16 %v2174
  %v2982 = vunpack.c.l.b16 %v2175
  %v2983 = vunpack.c.l.b16 %v2176
  %v2984 = vunpack.c.l.b16 %v2177
  %v2985 = vunpack.c.l.b16 %v2178
  %v2986 = vunpack.c.l.b16 %v2179
  %v2987 = vunpack.c.l.b16 %v2180
  %v2988 = vunpack.c.l.b16 %v2181
  %v2989 = vunpack.c.l.b16 %v2182
  %v2990 = vunpack.c.l.b16 %v2183
  %v2991 = vunpack.c.l.b16 %v2184
  %v2992 = vunpack.c.l.b16 %v2185
  %v2993 = vunpack.c.l.b16 %v2186
  %v2994 = vunpack.c.l.b16 %v2187
  %v2995 = vunpack.c.l.b16 %v2188
  %v2996 = vunpack.c.l.b16 %v2189
  %v2997 = vunpack.c.l.b16 %v2190
  %v2998 = vunpack.c.l.b16 %v2191
  %v2999 = vunpack.c.l.b16 %v2192
  %v3000 = vunpack.c.l.b16 %v2193
  %v3001 = vunpack.c.l.b16 %v2194
  %v3002 = vunpack.c.l.b16 %v2195
  %v3003 = vunpack.c.l.b16 %v2196
  %v3004 = vunpack.c.l.b16 %v2197
  %v3005 = vunpack.c.l.b16 %v2198
  %v3006 = vunpack.c.l.b16 %v2199
  %v3007 = vunpack.c.l.b16 %v2200
  %v3008 = vunpack.c.l.b16 %v2201
  %v3009 = vunpack.c.l.b16 %v2202
  %v3010 = vunpack.c.l.b16 %v2203
  %v3011 = vunpack.c.l.b16 %v2204
  %v3012 = vunpack.c.l.b16 %v2205
  %v3013 = vunpack.c.l.b16 %v2206
  %v3014 = vunpack.c.l.b16 %v2207
  %v3015 = vunpack.c.l.b16 %v2208
  %v3016 = vunpack.c.l.b16 %v2209
  %v3017 = vunpack.c.l.b16 %v2210
  %v3018 = vunpack.c.l.b16 %v2211
  %v3019 = vunpack.c.l.b16 %v2212
  %v3020 = vunpack.c.l.b16 %v2213
  %v3021 = vunpack.c.l.b16 %v2214
  %v3022 = vunpack.c.l.b16 %v2215
  %v3023 = vunpack.c.l.b16 %v2216
  %v3024 = vunpack.c.l.b16 %v2217
  %v3025 = vunpack.c.l.b16 %v2218
  %v3026 = vunpack.c.l.b16 %v2219
  %v3027 = vunpack.c.l.b16 %v2220
  %v3028 = vunpack.c.l.b16 %v2221
  %v3029 = vunpack.c.l.b16 %v2222
  %v3030 = vunpack.c.l.b16 %v2223
  %v3031 = vunpack.c.l.b16 %v2224
  %v3032 = vunpack.c.l.b16 %v2225
  %v3033 = vunpack.c.l.b16 %v2226
  %v3034 = vunpack.c.l.b16 %v2227
  %v3035 = vunpack.c.l.b16 %v2228
  %v3036 = vunpack.c.l.b16 %v2229
  %v3037 = vunpack.c.l.b16 %v2230
  %v3038 = vunpack.c.l.b16 %v2231
  %v3039 = vunpack.c.l.b16 %v2232
  %v3040 = vunpack.c.l.b16 %v2233
  %v3041 = vunpack.c.l.b16 %v2234
  %v3042 = vunpack.c.l.b16 %v2235
  %v3043 = vunpack.c.l.b16 %v2236
  %v3044 = vunpack.c.l.b16 %v2237
  %v3045 = vunpack.c.l.b16 %v2238
  %v3046 = vunpack.c.l.b16 %v2239
  %v3047 = vunpack.c.l.b16 %v2240
  %v3048 = vunpack.c.l.b16 %v2241
  %v3049 = vunpack.c.l.b16 %v2242
  %v3050 = vunpack.c.l.b16 %v2243
  %v3051 = vunpack.c.l.b16 %v2244
  %v3052 = vunpack.c.l.b16 %v2245
  %v3053 = vunpack.c.l.b16 %v2246
  %v3054 = vunpack.c.l.b16 %v2247
  %v3055 = vunpack.c.l.b16 %v2248
  %v3056 = vunpack.c.l.b16 %v2249
  %v3057 = vunpack.c.l.b16 %v2250
  %v3058 = vunpack.c.l.b16 %v2251
  %v3059 = vunpack.c.l.b16 %v2252
  %v3060 = vunpack.c.l.b16 %v2253
  %v3061 = vunpack.c.l.b16 %v2254
  %v3062 = vunpack.c.l.b16 %v2255
  %v3063 = vunpack.c.l.b16 %v2256
  %v3064 = vunpack.c.l.b16 %v2257
  %v3065 = vunpack.c.l.b16 %v2258
  %v3066 = vunpack.c.l.b16 %v2259
  %v3067 = vunpack.c.l.b16 %v2260
  %v3068 = vunpack.c.l.b16 %v2261
  %v3069 = vunpack.c.l.b16 %v2262
  %v3070 = vunpack.c.l.b16 %v2263
  %v3071 = vpack.c.b16 %v2672, %v2671
  %v3072 = vpack.c.b16 %v2674, %v2673
  %v3073 = vpack.c.b16 %v2676, %v2675
  %v3074 = vpack.c.b16 %v2678, %v2677
  %v3075 = vpack.c.b16 %v2680, %v2679
  %v3076 = vpack.c.b16 %v2682, %v2681
  %v3077 = vpack.c.b16 %v2684, %v2683
  %v3078 = vpack.c.b16 %v2686, %v2685
  %v3079 = vpack.c.b16 %v2688, %v2687
  %v3080 = vpack.c.b16 %v2690, %v2689
  %v3081 = vpack.c.b16 %v2692, %v2691
  %v3082 = vpack.c.b16 %v2694, %v2693
  %v3083 = vpack.c.b16 %v2696, %v2695
  %v3084 = vpack.c.b16 %v2698, %v2697
  %v3085 = vpack.c.b16 %v2700, %v2699
  %v3086 = vpack.c.b16 %v2702, %v2701
  %v3087 = vpack.c.b16 %v2704, %v2703
  %v3088 = vpack.c.b16 %v2706, %v2705
  %v3089 = vpack.c.b16 %v2708, %v2707
  %v3090 = vpack.c.b16 %v2710, %v2709
  %v3091 = vpack.c.b16 %v2712, %v2711
  %v3092 = vpack.c.b16 %v2714, %v2713
  %v3093 = vpack.c.b16 %v2716, %v2715
  %v3094 = vpack.c.b16 %v2718, %v2717
  %v3095 = vpack.c.b16 %v2720, %v2719
  %v3096 = vpack.c.b16 %v2722, %v2721
  %v3097 = vpack.c.b16 %v2724, %v2723
  %v3098 = vpack.c.b16 %v2726, %v2725
  %v3099 = vpack.c.b16 %v2728, %v2727
  %v3100 = vpack.c.b16 %v2730, %v2729
  %v3101 = vpack.c.b16 %v2732, %v2731
  %v3102 = vpack.c.b16 %v2734, %v2733
  %v3103 = vpack.c.b16 %v2736, %v2735
  %v3104 = vpack.c.b16 %v2738, %v2737
  %v3105 = vpack.c.b16 %v2740, %v2739
  %v3106 = vpack.c.b16 %v2742, %v2741
  %v3107 = vpack.c.b16 %v2744, %v2743
  %v3108 = vpack.c.b16 %v2746, %v2745
  %v3109 = vpack.c.b16 %v2748, %v2747
  %v3110 = vpack.c.b16 %v2750, %v2749
  %v3111 = vpack.c.b16 %v2752, %v2751
  %v3112 = vpack.c.b16 %v2754, %v2753
  %v3113 = vpack.c.b16 %v2756, %v2755
  %v3114 = vpack.c.b16 %v2758, %v2757
  %v3115 = vpack.c.b16 %v2760, %v2759
  %v3116 = vpack.c.b16 %v2762, %v2761
  %v3117 = vpack.c.b16 %v2764, %v2763
  %v3118 = vpack.c.b16 %v2766, %v2765
  %v3119 = vpack.c.b16 %v2768, %v2767
  %v3120 = vpack.c.b16 %v2770, %v2769
  %v3121 = vpack.c.b16 %v2772, %v2771
  %v3122 = vpack.c.b16 %v2774, %v2773
  %v3123 = vpack.c.b16 %v2776, %v2775
  %v3124 = vpack.c.b16 %v2778, %v2777
  %v3125 = vpack.c.b16 %v2780, %v2779
  %v3126 = vpack.c.b16 %v2782, %v2781
  %v3127 = vpack.c.b16 %v2784, %v2783
  %v3128 = vpack.c.b16 %v2786, %v2785
  %v3129 = vpack.c.b16 %v2788, %v2787
  %v3130 = vpack.c.b16 %v2790, %v2789
  %v3131 = vpack.c.b16 %v2792, %v2791
  %v3132 = vpack.c.b16 %v2794, %v2793
  %v3133 = vpack.c.b16 %v2796, %v2795
  %v3134 = vpack.c.b16 %v2798, %v2797
  %v3135 = vpack.c.b16 %v2800, %v2799
  %v3136 = vpack.c.b16 %v2802, %v2801
  %v3137 = vpack.c.b16 %v2804, %v2803
  %v3138 = vpack.c.b16 %v2806, %v2805
  %v3139 = vpack.c.b16 %v2808, %v2807
  %v3140 = vpack.c.b16 %v2810, %v2809
  %v3141 = vpack.c.b16 %v2812, %v2811
  %v3142 = vpack.c.b16 %v2814, %v2813
  %v3143 = vpack.c.b16 %v2816, %v2815
  %v3144 = vpack.c.b16 %v2818, %v2817
  %v3145 = vpack.c.b16 %v2820, %v2819
  %v3146 = vpack.c.b16 %v2822, %v2821
  %v3147 = vpack.c.b16 %v2824, %v2823
  %v3148 = vpack.c.b16 %v2826, %v2825
  %v3149 = vpack.c.b16 %v2828, %v2827
  %v3150 = vpack.c.b16 %v2830, %v2829
  %v3151 = vpack.c.b16 %v2832, %v2831
  %v3152 = vpack.c.b16 %v2834, %v2833
  %v3153 = vpack.c.b16 %v2836, %v2835
  %v3154 = vpack.c.b16 %v2838, %v2837
  %v3155 = vpack.c.b16 %v2840, %v2839
  %v3156 = vpack.c.b16 %v2842, %v2841
  %v3157 = vpack.c.b16 %v2844, %v2843
  %v3158 = vpack.c.b16 %v2846, %v2845
  %v3159 = vpack.c.b16 %v2848, %v2847
  %v3160 = vpack.c.b16 %v2850, %v2849
  %v3161 = vpack.c.b16 %v2852, %v2851
  %v3162 = vpack.c.b16 %v2854, %v2853
  %v3163 = vpack.c.b16 %v2856, %v2855
  %v3164 = vpack.c.b16 %v2858, %v2857
  %v3165 = vpack.c.b16 %v2860, %v2859
  %v3166 = vpack.c.b16 %v2862, %v2861
  %v3167 = vpack.c.b16 %v2864, %v2863
  %v3168 = vpack.c.b16 %v2866, %v2865
  %v3169 = vpack.c.b16 %v2868, %v2867
  %v3170 = vpack.c.b16 %v2870, %v2869
  %v3171 = vpack.c.b16 %v2872, %v2871
  %v3172 = vpack.c.b16 %v2874, %v2873
  %v3173 = vpack.c.b16 %v2876, %v2875
  %v3174 = vpack.c.b16 %v2878, %v2877
  %v3175 = vpack.c.b16 %v2880, %v2879
  %v3176 = vpack.c.b16 %v2882, %v2881
  %v3177 = vpack.c.b16 %v2884, %v2883
  %v3178 = vpack.c.b16 %v2886, %v2885
  %v3179 = vpack.c.b16 %v2888, %v2887
  %v3180 = vpack.c.b16 %v2890, %v2889
  %v3181 = vpack.c.b16 %v2892, %v2891
  %v3182 = vpack.c.b16 %v2894, %v2893
  %v3183 = vpack.c.b16 %v2896, %v2895
  %v3184 = vpack.c.b16 %v2898, %v2897
  %v3185 = vpack.c.b16 %v2900, %v2899
  %v3186 = vpack.c.b16 %v2902, %v2901
  %v3187 = vpack.c.b16 %v2904, %v2903
  %v3188 = vpack.c.b16 %v2906, %v2905
  %v3189 = vpack.c.b16 %v2908, %v2907
  %v3190 = vpack.c.b16 %v2910, %v2909
  %v3191 = vpack.c.b16 %v2912, %v2911
  %v3192 = vpack.c.b16 %v2914, %v2913
  %v3193 = vpack.c.b16 %v2916, %v2915
  %v3194 = vpack.c.b16 %v2918, %v2917
  %v3195 = vpack.c.b16 %v2920, %v2919
  %v3196 = vpack.c.b16 %v2922, %v2921
  %v3197 = vpack.c.b16 %v2924, %v2923
  %v3198 = vpack.c.b16 %v2926, %v2925
  %v3199 = vpack.c.b16 %v2928, %v2927
  %v3200 = vpack.c.b16 %v2930, %v2929
  %v3201 = vpack.c.b16 %v2932, %v2931
  %v3202 = vpack.c.b16 %v2934, %v2933
  %v3203 = vpack.c.b16 %v2936, %v2935
  %v3204 = vpack.c.b16 %v2938, %v2937
  %v3205 = vpack.c.b16 %v2940, %v2939
  %v3206 = vpack.c.b16 %v2942, %v2941
  %v3207 = vpack.c.b16 %v2944, %v2943
  %v3208 = vpack.c.b16 %v2946, %v2945
  %v3209 = vpack.c.b16 %v2948, %v2947
  %v3210 = vpack.c.b16 %v2950, %v2949
  %v3211 = vpack.c.b16 %v2952, %v2951
  %v3212 = vpack.c.b16 %v2954, %v2953
  %v3213 = vpack.c.b16 %v2956, %v2955
  %v3214 = vpack.c.b16 %v2958, %v2957
  %v3215 = vpack.c.b16 %v2960, %v2959
  %v3216 = vpack.c.b16 %v2962, %v2961
  %v3217 = vpack.c.b16 %v2964, %v2963
  %v3218 = vpack.c.b16 %v2966, %v2965
  %v3219 = vpack.c.b16 %v2968, %v2967
  %v3220 = vpack.c.b16 %v2970, %v2969
  %v3221 = vpack.c.b16 %v2972, %v2971
  %v3222 = vpack.c.b16 %v2974, %v2973
  %v3223 = vpack.c.b16 %v2976, %v2975
  %v3224 = vpack.c.b16 %v2978, %v2977
  %v3225 = vpack.c.b16 %v2980, %v2979
  %v3226 = vpack.c.b16 %v2982, %v2981
  %v3227 = vpack.c.b16 %v2984, %v2983
  %v3228 = vpack.c.b16 %v2986, %v2985
  %v3229 = vpack.c.b16 %v2988, %v2987
  %v3230 = vpack.c.b16 %v2990, %v2989
  %v3231 = vpack.c.b16 %v2992, %v2991
  %v3232 = vpack.c.b16 %v2994, %v2993
  %v3233 = vpack.c.b16 %v2996, %v2995
  %v3234 = vpack.c.b16 %v2998, %v2997
  %v3235 = vpack.c.b16 %v3000, %v2999
  %v3236 = vpack.c.b16 %v3002, %v3001
  %v3237 = vpack.c.b16 %v3004, %v3003
  %v3238 = vpack.c.b16 %v3006, %v3005
  %v3239 = vpack.c.b16 %v3008, %v3007
  %v3240 = vpack.c.b16 %v3010, %v3009
  %v3241 = vpack.c.b16 %v3012, %v3011
  %v3242 = vpack.c.b16 %v3014, %v3013
  %v3243 = vpack.c.b16 %v3016, %v3015
  %v3244 = vpack.c.b16 %v3018, %v3017
  %v3245 = vpack.c.b16 %v3020, %v3019
  %v3246 = vpack.c.b16 %v3022, %v3021
  %v3247 = vpack.c.b16 %v3024, %v3023
  %v3248 = vpack.c.b16 %v3026, %v3025
  %v3249 = vpack.c.b16 %v3028, %v3027
  %v3250 = vpack.c.b16 %v3030, %v3029
  %v3251 = vpack.c.b16 %v3032, %v3031
  %v3252 = vpack.c.b16 %v3034, %v3033
  %v3253 = vpack.c.b16 %v3036, %v3035
  %v3254 = vpack.c.b16 %v3038, %v3037
  %v3255 = vpack.c.b16 %v3040, %v3039
  %v3256 = vpack.c.b16 %v3042, %v3041
  %v3257 = vpack.c.b16 %v3044, %v3043
  %v3258 = vpack.c.b16 %v3046, %v3045
  %v3259 = vpack.c.b16 %v3048, %v3047
  %v3260 = vpack.c.b16 %v3050, %v3049
  %v3261 = vpack.c.b16 %v3052, %v3051
  %v3262 = vpack.c.b16 %v3054, %v3053
  %v3263 = vpack.c.b16 %v3056, %v3055
  %v3264 = vpack.c.b16 %v3058, %v3057
  %v3265 = vpack.c.b16 %v3060, %v3059
  %v3266 = vpack.c.b16 %v3062, %v3061
  %v3267 = vpack.c.b16 %v3064, %v3063
  %v3268 = vpack.c.b16 %v3066, %v3065
  %v3269 = vpack.c.b16 %v3068, %v3067
  %v3270 = vpack.c.b16 %v3070, %v3069
  %3471 = vmatprep.subr.bf16.mxu0 0
  %3472 = vmatpush1.bf16.msra.mxu0 %v3078
  %3473 = vmatprep.subr.bf16.mxu0 0
  %3474 = vmatpush1.bf16.msra.mxu0 %v3077
  %3475 = vmatprep.subr.bf16.mxu0 0
  %3476 = vmatpush1.bf16.msra.mxu0 %v3076
  %3477 = vmatprep.subr.bf16.mxu0 0
  %3478 = vmatpush1.bf16.msra.mxu0 %v3075
  %3479 = vmatprep.subr.bf16.mxu0 0
  %3480 = vmatpush1.bf16.msra.mxu0 %v3074
  %3481 = vmatprep.subr.bf16.mxu0 0
  %3482 = vmatpush1.bf16.msra.mxu0 %v3073
  %3483 = vmatprep.subr.bf16.mxu0 0
  %3484 = vmatpush1.bf16.msra.mxu0 %v3072
  %3485 = vmatprep.subr.bf16.mxu0 0
  %3486 = vmatpush1.bf16.msra.mxu0 %v3071
  %3487 = vmatprep.subr.bf16.mxu0 0
  %3488 = vmatpush2.bf16.msra.mxu0 %v3086
  %3489 = vmatprep.subr.bf16.mxu0 0
  %3490 = vmatpush2.bf16.msra.mxu0 %v3085
  %3491 = vmatprep.subr.bf16.mxu0 0
  %3492 = vmatpush2.bf16.msra.mxu0 %v3084
  %3493 = vmatprep.subr.bf16.mxu0 0
  %3494 = vmatpush2.bf16.msra.mxu0 %v3083
  %3495 = vmatprep.subr.bf16.mxu0 0
  %3496 = vmatpush2.bf16.msra.mxu0 %v3082
  %3497 = vmatprep.subr.bf16.mxu0 0
  %3498 = vmatpush2.bf16.msra.mxu0 %v3081
  %3499 = vmatprep.subr.bf16.mxu0 0
  %3500 = vmatpush2.bf16.msra.mxu0 %v3080
  %3501 = vmatprep.subr.bf16.mxu0 0
  %3502 = vmatpush2.bf16.msra.mxu0 %v3079
  %3503 = vmatprep.mubr.bf16.mxu0 %v1840
  %3504 = vmatmul.mubr.bf16.gmra.mxu0 %v1839
  %v3505 = vpop.f32.mrf.mxu0
  %v3506 = vadd.f32 %v2269, %v3505
  %v3507 = vpop.f32.mrf.mxu0
  %v3508 = vpop.f32.mrf.mxu0
  %v3509 = vpop.f32.mrf.mxu0
  %3510 = vdwg.mxu0
  %3511 = vmatprep.subr.bf16.mxu0 0
  %3512 = vmatpush1.bf16.msra.mxu0 %v3094
  %3513 = vmatprep.subr.bf16.mxu0 0
  %3514 = vmatpush1.bf16.msra.mxu0 %v3093
  %3515 = vmatprep.subr.bf16.mxu0 0
  %3516 = vmatpush1.bf16.msra.mxu0 %v3092
  %3517 = vmatprep.subr.bf16.mxu0 0
  %3518 = vmatpush1.bf16.msra.mxu0 %v3091
  %3519 = vmatprep.subr.bf16.mxu0 0
  %3520 = vmatpush1.bf16.msra.mxu0 %v3090
  %3521 = vmatprep.subr.bf16.mxu0 0
  %3522 = vmatpush1.bf16.msra.mxu0 %v3089
  %3523 = vmatprep.subr.bf16.mxu0 0
  %3524 = vmatpush1.bf16.msra.mxu0 %v3088
  %3525 = vmatprep.subr.bf16.mxu0 0
  %3526 = vmatpush1.bf16.msra.mxu0 %v3087
  %3527 = vmatprep.subr.bf16.mxu0 0
  %3528 = vmatpush2.bf16.msra.mxu0 %v3102
  %3529 = vmatprep.subr.bf16.mxu0 0
  %3530 = vmatpush2.bf16.msra.mxu0 %v3101
  %3531 = vmatprep.subr.bf16.mxu0 0
  %3532 = vmatpush2.bf16.msra.mxu0 %v3100
  %3533 = vmatprep.subr.bf16.mxu0 0
  %3534 = vmatpush2.bf16.msra.mxu0 %v3099
  %3535 = vmatprep.subr.bf16.mxu0 0
  %3536 = vmatpush2.bf16.msra.mxu0 %v3098
  %3537 = vmatprep.subr.bf16.mxu0 0
  %3538 = vmatpush2.bf16.msra.mxu0 %v3097
  %3539 = vmatprep.subr.bf16.mxu0 0
  %3540 = vmatpush2.bf16.msra.mxu0 %v3096
  %3541 = vmatprep.subr.bf16.mxu0 0
  %3542 = vmatpush2.bf16.msra.mxu0 %v3095
  %3543 = vmatprep.mubr.bf16.mxu0 %v1842
  %3544 = vmatmul.mubr.bf16.gmra.mxu0 %v1841
  %v3545 = vpop.f32.mrf.mxu0
  %v3546 = vadd.f32 %v3506, %v3545
  %v3547 = vpop.f32.mrf.mxu0
  %v3548 = vpop.f32.mrf.mxu0
  %v3549 = vpop.f32.mrf.mxu0
  %3550 = vdwg.mxu0
  %3551 = vmatprep.subr.bf16.mxu0 0
  %3552 = vmatpush1.bf16.msra.mxu0 %v3110
  %3553 = vmatprep.subr.bf16.mxu0 0
  %3554 = vmatpush1.bf16.msra.mxu0 %v3109
  %3555 = vmatprep.subr.bf16.mxu0 0
  %3556 = vmatpush1.bf16.msra.mxu0 %v3108
  %3557 = vmatprep.subr.bf16.mxu0 0
  %3558 = vmatpush1.bf16.msra.mxu0 %v3107
  %3559 = vmatprep.subr.bf16.mxu0 0
  %3560 = vmatpush1.bf16.msra.mxu0 %v3106
  %3561 = vmatprep.subr.bf16.mxu0 0
  %3562 = vmatpush1.bf16.msra.mxu0 %v3105
  %3563 = vmatprep.subr.bf16.mxu0 0
  %3564 = vmatpush1.bf16.msra.mxu0 %v3104
  %3565 = vmatprep.subr.bf16.mxu0 0
  %3566 = vmatpush1.bf16.msra.mxu0 %v3103
  %3567 = vmatprep.subr.bf16.mxu0 0
  %3568 = vmatpush2.bf16.msra.mxu0 %v3118
  %3569 = vmatprep.subr.bf16.mxu0 0
  %3570 = vmatpush2.bf16.msra.mxu0 %v3117
  %3571 = vmatprep.subr.bf16.mxu0 0
  %3572 = vmatpush2.bf16.msra.mxu0 %v3116
  %3573 = vmatprep.subr.bf16.mxu0 0
  %3574 = vmatpush2.bf16.msra.mxu0 %v3115
  %3575 = vmatprep.subr.bf16.mxu0 0
  %3576 = vmatpush2.bf16.msra.mxu0 %v3114
  %3577 = vmatprep.subr.bf16.mxu0 0
  %3578 = vmatpush2.bf16.msra.mxu0 %v3113
  %3579 = vmatprep.subr.bf16.mxu0 0
  %3580 = vmatpush2.bf16.msra.mxu0 %v3112
  %3581 = vmatprep.subr.bf16.mxu0 0
  %3582 = vmatpush2.bf16.msra.mxu0 %v3111
  %3583 = vmatprep.mubr.bf16.mxu0 %v1844
  %3584 = vmatmul.mubr.bf16.gmra.mxu0 %v1843
  %v3585 = vpop.f32.mrf.mxu0
  %v3586 = vadd.f32 %v3546, %v3585
  %v3587 = vpop.f32.mrf.mxu0
  %v3588 = vpop.f32.mrf.mxu0
  %v3589 = vpop.f32.mrf.mxu0
  %3590 = vdwg.mxu0
  %3591 = vmatprep.subr.bf16.mxu0 0
  %3592 = vmatpush1.bf16.msra.mxu0 %v3126
  %3593 = vmatprep.subr.bf16.mxu0 0
  %3594 = vmatpush1.bf16.msra.mxu0 %v3125
  %3595 = vmatprep.subr.bf16.mxu0 0
  %3596 = vmatpush1.bf16.msra.mxu0 %v3124
  %3597 = vmatprep.subr.bf16.mxu0 0
  %3598 = vmatpush1.bf16.msra.mxu0 %v3123
  %3599 = vmatprep.subr.bf16.mxu0 0
  %3600 = vmatpush1.bf16.msra.mxu0 %v3122
  %3601 = vmatprep.subr.bf16.mxu0 0
  %3602 = vmatpush1.bf16.msra.mxu0 %v3121
  %3603 = vmatprep.subr.bf16.mxu0 0
  %3604 = vmatpush1.bf16.msra.mxu0 %v3120
  %3605 = vmatprep.subr.bf16.mxu0 0
  %3606 = vmatpush1.bf16.msra.mxu0 %v3119
  %3607 = vmatprep.subr.bf16.mxu0 0
  %3608 = vmatpush2.bf16.msra.mxu0 %v3134
  %3609 = vmatprep.subr.bf16.mxu0 0
  %3610 = vmatpush2.bf16.msra.mxu0 %v3133
  %3611 = vmatprep.subr.bf16.mxu0 0
  %3612 = vmatpush2.bf16.msra.mxu0 %v3132
  %3613 = vmatprep.subr.bf16.mxu0 0
  %3614 = vmatpush2.bf16.msra.mxu0 %v3131
  %3615 = vmatprep.subr.bf16.mxu0 0
  %3616 = vmatpush2.bf16.msra.mxu0 %v3130
  %3617 = vmatprep.subr.bf16.mxu0 0
  %3618 = vmatpush2.bf16.msra.mxu0 %v3129
  %3619 = vmatprep.subr.bf16.mxu0 0
  %3620 = vmatpush2.bf16.msra.mxu0 %v3128
  %3621 = vmatprep.subr.bf16.mxu0 0
  %3622 = vmatpush2.bf16.msra.mxu0 %v3127
  %3623 = vmatprep.mubr.bf16.mxu0 %v1846
  %3624 = vmatmul.mubr.bf16.gmra.mxu0 %v1845
  %v3625 = vpop.f32.mrf.mxu0
  %v3626 = vadd.f32 %v3586, %v3625
  %v3627 = vpop.f32.mrf.mxu0
  %v3628 = vpop.f32.mrf.mxu0
  %v3629 = vpop.f32.mrf.mxu0
  %3630 = vdwg.mxu0
  %3631 = vmatprep.subr.bf16.mxu0 0
  %3632 = vmatpush1.bf16.msra.mxu0 %v3142
  %3633 = vmatprep.subr.bf16.mxu0 0
  %3634 = vmatpush1.bf16.msra.mxu0 %v3141
  %3635 = vmatprep.subr.bf16.mxu0 0
  %3636 = vmatpush1.bf16.msra.mxu0 %v3140
  %3637 = vmatprep.subr.bf16.mxu0 0
  %3638 = vmatpush1.bf16.msra.mxu0 %v3139
  %3639 = vmatprep.subr.bf16.mxu0 0
  %3640 = vmatpush1.bf16.msra.mxu0 %v3138
  %3641 = vmatprep.subr.bf16.mxu0 0
  %3642 = vmatpush1.bf16.msra.mxu0 %v3137
  %3643 = vmatprep.subr.bf16.mxu0 0
  %3644 = vmatpush1.bf16.msra.mxu0 %v3136
  %3645 = vmatprep.subr.bf16.mxu0 0
  %3646 = vmatpush1.bf16.msra.mxu0 %v3135
  %3647 = vmatprep.subr.bf16.mxu0 0
  %3648 = vmatpush2.bf16.msra.mxu0 %v3150
  %3649 = vmatprep.subr.bf16.mxu0 0
  %3650 = vmatpush2.bf16.msra.mxu0 %v3149
  %3651 = vmatprep.subr.bf16.mxu0 0
  %3652 = vmatpush2.bf16.msra.mxu0 %v3148
  %3653 = vmatprep.subr.bf16.mxu0 0
  %3654 = vmatpush2.bf16.msra.mxu0 %v3147
  %3655 = vmatprep.subr.bf16.mxu0 0
  %3656 = vmatpush2.bf16.msra.mxu0 %v3146
  %3657 = vmatprep.subr.bf16.mxu0 0
  %3658 = vmatpush2.bf16.msra.mxu0 %v3145
  %3659 = vmatprep.subr.bf16.mxu0 0
  %3660 = vmatpush2.bf16.msra.mxu0 %v3144
  %3661 = vmatprep.subr.bf16.mxu0 0
  %3662 = vmatpush2.bf16.msra.mxu0 %v3143
  %3663 = vmatprep.mubr.bf16.mxu0 %v1848
  %3664 = vmatmul.mubr.bf16.gmra.mxu0 %v1847
  %v3665 = vpop.f32.mrf.mxu0
  %v3666 = vadd.f32 %v3626, %v3665
  %v3667 = vpop.f32.mrf.mxu0
  %v3668 = vpop.f32.mrf.mxu0
  %v3669 = vpop.f32.mrf.mxu0
  %3670 = vdwg.mxu0
  %3671 = vmatprep.subr.bf16.mxu0 0
  %3672 = vmatpush1.bf16.msra.mxu0 %v3158
  %3673 = vmatprep.subr.bf16.mxu0 0
  %3674 = vmatpush1.bf16.msra.mxu0 %v3157
  %3675 = vmatprep.subr.bf16.mxu0 0
  %3676 = vmatpush1.bf16.msra.mxu0 %v3156
  %3677 = vmatprep.subr.bf16.mxu0 0
  %3678 = vmatpush1.bf16.msra.mxu0 %v3155
  %3679 = vmatprep.subr.bf16.mxu0 0
  %3680 = vmatpush1.bf16.msra.mxu0 %v3154
  %3681 = vmatprep.subr.bf16.mxu0 0
  %3682 = vmatpush1.bf16.msra.mxu0 %v3153
  %3683 = vmatprep.subr.bf16.mxu0 0
  %3684 = vmatpush1.bf16.msra.mxu0 %v3152
  %3685 = vmatprep.subr.bf16.mxu0 0
  %3686 = vmatpush1.bf16.msra.mxu0 %v3151
  %3687 = vmatprep.subr.bf16.mxu0 0
  %3688 = vmatpush2.bf16.msra.mxu0 %v3166
  %3689 = vmatprep.subr.bf16.mxu0 0
  %3690 = vmatpush2.bf16.msra.mxu0 %v3165
  %3691 = vmatprep.subr.bf16.mxu0 0
  %3692 = vmatpush2.bf16.msra.mxu0 %v3164
  %3693 = vmatprep.subr.bf16.mxu0 0
  %3694 = vmatpush2.bf16.msra.mxu0 %v3163
  %3695 = vmatprep.subr.bf16.mxu0 0
  %3696 = vmatpush2.bf16.msra.mxu0 %v3162
  %3697 = vmatprep.subr.bf16.mxu0 0
  %3698 = vmatpush2.bf16.msra.mxu0 %v3161
  %3699 = vmatprep.subr.bf16.mxu0 0
  %3700 = vmatpush2.bf16.msra.mxu0 %v3160
  %3701 = vmatprep.subr.bf16.mxu0 0
  %3702 = vmatpush2.bf16.msra.mxu0 %v3159
  %3703 = vmatprep.mubr.bf16.mxu0 %v1850
  %3704 = vmatmul.mubr.bf16.gmra.mxu0 %v1849
  %v3705 = vpop.f32.mrf.mxu0
  %v3706 = vadd.f32 %v3666, %v3705
  %v3707 = vpop.f32.mrf.mxu0
  %v3708 = vpop.f32.mrf.mxu0
  %v3709 = vpop.f32.mrf.mxu0
  %3710 = vdwg.mxu0
  %3711 = vmatprep.subr.bf16.mxu0 0
  %3712 = vmatpush1.bf16.msra.mxu0 %v3174
  %3713 = vmatprep.subr.bf16.mxu0 0
  %3714 = vmatpush1.bf16.msra.mxu0 %v3173
  %3715 = vmatprep.subr.bf16.mxu0 0
  %3716 = vmatpush1.bf16.msra.mxu0 %v3172
  %3717 = vmatprep.subr.bf16.mxu0 0
  %3718 = vmatpush1.bf16.msra.mxu0 %v3171
  %3719 = vmatprep.subr.bf16.mxu0 0
  %3720 = vmatpush1.bf16.msra.mxu0 %v3170
  %3721 = vmatprep.subr.bf16.mxu0 0
  %3722 = vmatpush1.bf16.msra.mxu0 %v3169
  %3723 = vmatprep.subr.bf16.mxu0 0
  %3724 = vmatpush1.bf16.msra.mxu0 %v3168
  %3725 = vmatprep.subr.bf16.mxu0 0
  %3726 = vmatpush1.bf16.msra.mxu0 %v3167
  %3727 = vmatprep.subr.bf16.mxu0 0
  %3728 = vmatpush2.bf16.msra.mxu0 %v3182
  %3729 = vmatprep.subr.bf16.mxu0 0
  %3730 = vmatpush2.bf16.msra.mxu0 %v3181
  %3731 = vmatprep.subr.bf16.mxu0 0
  %3732 = vmatpush2.bf16.msra.mxu0 %v3180
  %3733 = vmatprep.subr.bf16.mxu0 0
  %3734 = vmatpush2.bf16.msra.mxu0 %v3179
  %3735 = vmatprep.subr.bf16.mxu0 0
  %3736 = vmatpush2.bf16.msra.mxu0 %v3178
  %3737 = vmatprep.subr.bf16.mxu0 0
  %3738 = vmatpush2.bf16.msra.mxu0 %v3177
  %3739 = vmatprep.subr.bf16.mxu0 0
  %3740 = vmatpush2.bf16.msra.mxu0 %v3176
  %3741 = vmatprep.subr.bf16.mxu0 0
  %3742 = vmatpush2.bf16.msra.mxu0 %v3175
  %3743 = vmatprep.mubr.bf16.mxu0 %v1852
  %3744 = vmatmul.mubr.bf16.gmra.mxu0 %v1851
  %v3745 = vpop.f32.mrf.mxu0
  %v3746 = vadd.f32 %v3706, %v3745
  %v3747 = vpop.f32.mrf.mxu0
  %v3748 = vpop.f32.mrf.mxu0
  %v3749 = vpop.f32.mrf.mxu0
  %3750 = vdwg.mxu0
  %3751 = vmatprep.subr.bf16.mxu0 0
  %3752 = vmatpush1.bf16.msra.mxu0 %v3190
  %3753 = vmatprep.subr.bf16.mxu0 0
  %3754 = vmatpush1.bf16.msra.mxu0 %v3189
  %3755 = vmatprep.subr.bf16.mxu0 0
  %3756 = vmatpush1.bf16.msra.mxu0 %v3188
  %3757 = vmatprep.subr.bf16.mxu0 0
  %3758 = vmatpush1.bf16.msra.mxu0 %v3187
  %3759 = vmatprep.subr.bf16.mxu0 0
  %3760 = vmatpush1.bf16.msra.mxu0 %v3186
  %3761 = vmatprep.subr.bf16.mxu0 0
  %3762 = vmatpush1.bf16.msra.mxu0 %v3185
  %3763 = vmatprep.subr.bf16.mxu0 0
  %3764 = vmatpush1.bf16.msra.mxu0 %v3184
  %3765 = vmatprep.subr.bf16.mxu0 0
  %3766 = vmatpush1.bf16.msra.mxu0 %v3183
  %3767 = vmatprep.subr.bf16.mxu0 0
  %3768 = vmatpush2.bf16.msra.mxu0 %v3198
  %3769 = vmatprep.subr.bf16.mxu0 0
  %3770 = vmatpush2.bf16.msra.mxu0 %v3197
  %3771 = vmatprep.subr.bf16.mxu0 0
  %3772 = vmatpush2.bf16.msra.mxu0 %v3196
  %3773 = vmatprep.subr.bf16.mxu0 0
  %3774 = vmatpush2.bf16.msra.mxu0 %v3195
  %3775 = vmatprep.subr.bf16.mxu0 0
  %3776 = vmatpush2.bf16.msra.mxu0 %v3194
  %3777 = vmatprep.subr.bf16.mxu0 0
  %3778 = vmatpush2.bf16.msra.mxu0 %v3193
  %3779 = vmatprep.subr.bf16.mxu0 0
  %3780 = vmatpush2.bf16.msra.mxu0 %v3192
  %3781 = vmatprep.subr.bf16.mxu0 0
  %3782 = vmatpush2.bf16.msra.mxu0 %v3191
  %3783 = vmatprep.mubr.bf16.mxu0 %v1854
  %3784 = vmatmul.mubr.bf16.gmra.mxu0 %v1853
  %v3785 = vpop.f32.mrf.mxu0
  %v3786 = vadd.f32 %v3746, %v3785
  %v3787 = vpop.f32.mrf.mxu0
  %v3788 = vpop.f32.mrf.mxu0
  %v3789 = vpop.f32.mrf.mxu0
  %3790 = vdwg.mxu0
  %3791 = vmatprep.subr.bf16.mxu0 0
  %3792 = vmatpush1.bf16.msra.mxu0 %v3206
  %3793 = vmatprep.subr.bf16.mxu0 0
  %3794 = vmatpush1.bf16.msra.mxu0 %v3205
  %3795 = vmatprep.subr.bf16.mxu0 0
  %3796 = vmatpush1.bf16.msra.mxu0 %v3204
  %3797 = vmatprep.subr.bf16.mxu0 0
  %3798 = vmatpush1.bf16.msra.mxu0 %v3203
  %3799 = vmatprep.subr.bf16.mxu0 0
  %3800 = vmatpush1.bf16.msra.mxu0 %v3202
  %3801 = vmatprep.subr.bf16.mxu0 0
  %3802 = vmatpush1.bf16.msra.mxu0 %v3201
  %3803 = vmatprep.subr.bf16.mxu0 0
  %3804 = vmatpush1.bf16.msra.mxu0 %v3200
  %3805 = vmatprep.subr.bf16.mxu0 0
  %3806 = vmatpush1.bf16.msra.mxu0 %v3199
  %3807 = vmatprep.subr.bf16.mxu0 0
  %3808 = vmatpush2.bf16.msra.mxu0 %v3214
  %3809 = vmatprep.subr.bf16.mxu0 0
  %3810 = vmatpush2.bf16.msra.mxu0 %v3213
  %3811 = vmatprep.subr.bf16.mxu0 0
  %3812 = vmatpush2.bf16.msra.mxu0 %v3212
  %3813 = vmatprep.subr.bf16.mxu0 0
  %3814 = vmatpush2.bf16.msra.mxu0 %v3211
  %3815 = vmatprep.subr.bf16.mxu0 0
  %3816 = vmatpush2.bf16.msra.mxu0 %v3210
  %3817 = vmatprep.subr.bf16.mxu0 0
  %3818 = vmatpush2.bf16.msra.mxu0 %v3209
  %3819 = vmatprep.subr.bf16.mxu0 0
  %3820 = vmatpush2.bf16.msra.mxu0 %v3208
  %3821 = vmatprep.subr.bf16.mxu0 0
  %3822 = vmatpush2.bf16.msra.mxu0 %v3207
  %3823 = vmatprep.mubr.bf16.mxu0 %v1856
  %3824 = vmatmul.mubr.bf16.gmra.mxu0 %v1855
  %v3825 = vpop.f32.mrf.mxu0
  %v3826 = vadd.f32 %v3786, %v3825
  %v3827 = vpop.f32.mrf.mxu0
  %v3828 = vpop.f32.mrf.mxu0
  %v3829 = vpop.f32.mrf.mxu0
  %3830 = vdwg.mxu0
  %3831 = vmatprep.subr.bf16.mxu0 0
  %3832 = vmatpush1.bf16.msra.mxu0 %v3222
  %3833 = vmatprep.subr.bf16.mxu0 0
  %3834 = vmatpush1.bf16.msra.mxu0 %v3221
  %3835 = vmatprep.subr.bf16.mxu0 0
  %3836 = vmatpush1.bf16.msra.mxu0 %v3220
  %3837 = vmatprep.subr.bf16.mxu0 0
  %3838 = vmatpush1.bf16.msra.mxu0 %v3219
  %3839 = vmatprep.subr.bf16.mxu0 0
  %3840 = vmatpush1.bf16.msra.mxu0 %v3218
  %3841 = vmatprep.subr.bf16.mxu0 0
  %3842 = vmatpush1.bf16.msra.mxu0 %v3217
  %3843 = vmatprep.subr.bf16.mxu0 0
  %3844 = vmatpush1.bf16.msra.mxu0 %v3216
  %3845 = vmatprep.subr.bf16.mxu0 0
  %3846 = vmatpush1.bf16.msra.mxu0 %v3215
  %3847 = vmatprep.subr.bf16.mxu0 0
  %3848 = vmatpush2.bf16.msra.mxu0 %v3230
  %3849 = vmatprep.subr.bf16.mxu0 0
  %3850 = vmatpush2.bf16.msra.mxu0 %v3229
  %3851 = vmatprep.subr.bf16.mxu0 0
  %3852 = vmatpush2.bf16.msra.mxu0 %v3228
  %3853 = vmatprep.subr.bf16.mxu0 0
  %3854 = vmatpush2.bf16.msra.mxu0 %v3227
  %3855 = vmatprep.subr.bf16.mxu0 0
  %3856 = vmatpush2.bf16.msra.mxu0 %v3226
  %3857 = vmatprep.subr.bf16.mxu0 0
  %3858 = vmatpush2.bf16.msra.mxu0 %v3225
  %3859 = vmatprep.subr.bf16.mxu0 0
  %3860 = vmatpush2.bf16.msra.mxu0 %v3224
  %3861 = vmatprep.subr.bf16.mxu0 0
  %3862 = vmatpush2.bf16.msra.mxu0 %v3223
  %3863 = vmatprep.mubr.bf16.mxu0 %v1858
  %3864 = vmatmul.mubr.bf16.gmra.mxu0 %v1857
  %v3865 = vpop.f32.mrf.mxu0
  %v3866 = vadd.f32 %v3826, %v3865
  %v3867 = vpop.f32.mrf.mxu0
  %v3868 = vpop.f32.mrf.mxu0
  %v3869 = vpop.f32.mrf.mxu0
  %3870 = vdwg.mxu0
  %3871 = vmatprep.subr.bf16.mxu0 0
  %3872 = vmatpush1.bf16.msra.mxu0 %v3238
  %3873 = vmatprep.subr.bf16.mxu0 0
  %3874 = vmatpush1.bf16.msra.mxu0 %v3237
  %3875 = vmatprep.subr.bf16.mxu0 0
  %3876 = vmatpush1.bf16.msra.mxu0 %v3236
  %3877 = vmatprep.subr.bf16.mxu0 0
  %3878 = vmatpush1.bf16.msra.mxu0 %v3235
  %3879 = vmatprep.subr.bf16.mxu0 0
  %3880 = vmatpush1.bf16.msra.mxu0 %v3234
  %3881 = vmatprep.subr.bf16.mxu0 0
  %3882 = vmatpush1.bf16.msra.mxu0 %v3233
  %3883 = vmatprep.subr.bf16.mxu0 0
  %3884 = vmatpush1.bf16.msra.mxu0 %v3232
  %3885 = vmatprep.subr.bf16.mxu0 0
  %3886 = vmatpush1.bf16.msra.mxu0 %v3231
  %3887 = vmatprep.subr.bf16.mxu0 0
  %3888 = vmatpush2.bf16.msra.mxu0 %v3246
  %3889 = vmatprep.subr.bf16.mxu0 0
  %3890 = vmatpush2.bf16.msra.mxu0 %v3245
  %3891 = vmatprep.subr.bf16.mxu0 0
  %3892 = vmatpush2.bf16.msra.mxu0 %v3244
  %3893 = vmatprep.subr.bf16.mxu0 0
  %3894 = vmatpush2.bf16.msra.mxu0 %v3243
  %3895 = vmatprep.subr.bf16.mxu0 0
  %3896 = vmatpush2.bf16.msra.mxu0 %v3242
  %3897 = vmatprep.subr.bf16.mxu0 0
  %3898 = vmatpush2.bf16.msra.mxu0 %v3241
  %3899 = vmatprep.subr.bf16.mxu0 0
  %3900 = vmatpush2.bf16.msra.mxu0 %v3240
  %3901 = vmatprep.subr.bf16.mxu0 0
  %3902 = vmatpush2.bf16.msra.mxu0 %v3239
  %3903 = vmatprep.mubr.bf16.mxu0 %v1860
  %3904 = vmatmul.mubr.bf16.gmra.mxu0 %v1859
  %v3905 = vpop.f32.mrf.mxu0
  %v3906 = vadd.f32 %v3866, %v3905
  %v3907 = vpop.f32.mrf.mxu0
  %v3908 = vpop.f32.mrf.mxu0
  %v3909 = vpop.f32.mrf.mxu0
  %3910 = vdwg.mxu0
  %3911 = vmatprep.subr.bf16.mxu0 0
  %3912 = vmatpush1.bf16.msra.mxu0 %v3254
  %3913 = vmatprep.subr.bf16.mxu0 0
  %3914 = vmatpush1.bf16.msra.mxu0 %v3253
  %3915 = vmatprep.subr.bf16.mxu0 0
  %3916 = vmatpush1.bf16.msra.mxu0 %v3252
  %3917 = vmatprep.subr.bf16.mxu0 0
  %3918 = vmatpush1.bf16.msra.mxu0 %v3251
  %3919 = vmatprep.subr.bf16.mxu0 0
  %3920 = vmatpush1.bf16.msra.mxu0 %v3250
  %3921 = vmatprep.subr.bf16.mxu0 0
  %3922 = vmatpush1.bf16.msra.mxu0 %v3249
  %3923 = vmatprep.subr.bf16.mxu0 0
  %3924 = vmatpush1.bf16.msra.mxu0 %v3248
  %3925 = vmatprep.subr.bf16.mxu0 0
  %3926 = vmatpush1.bf16.msra.mxu0 %v3247
  %3927 = vmatprep.subr.bf16.mxu0 0
  %3928 = vmatpush2.bf16.msra.mxu0 %v3262
  %3929 = vmatprep.subr.bf16.mxu0 0
  %3930 = vmatpush2.bf16.msra.mxu0 %v3261
  %3931 = vmatprep.subr.bf16.mxu0 0
  %3932 = vmatpush2.bf16.msra.mxu0 %v3260
  %3933 = vmatprep.subr.bf16.mxu0 0
  %3934 = vmatpush2.bf16.msra.mxu0 %v3259
  %3935 = vmatprep.subr.bf16.mxu0 0
  %3936 = vmatpush2.bf16.msra.mxu0 %v3258
  %3937 = vmatprep.subr.bf16.mxu0 0
  %3938 = vmatpush2.bf16.msra.mxu0 %v3257
  %3939 = vmatprep.subr.bf16.mxu0 0
  %3940 = vmatpush2.bf16.msra.mxu0 %v3256
  %3941 = vmatprep.subr.bf16.mxu0 0
  %3942 = vmatpush2.bf16.msra.mxu0 %v3255
  %3943 = vmatprep.mubr.bf16.mxu0 %v1862
  %3944 = vmatmul.mubr.bf16.gmra.mxu0 %v1861
  %v3945 = vpop.f32.mrf.mxu0
  %v3946 = vadd.f32 %v3906, %v3945
  %v3947 = vpop.f32.mrf.mxu0
  %v3948 = vpop.f32.mrf.mxu0
  %v3949 = vpop.f32.mrf.mxu0
  %3950 = vdwg.mxu0
  %3951 = vmatprep.subr.bf16.mxu0 0
  %3952 = vmatpush1.bf16.msra.mxu0 %v3270
  %3953 = vmatprep.subr.bf16.mxu0 0
  %3954 = vmatpush1.bf16.msra.mxu0 %v3269
  %3955 = vmatprep.subr.bf16.mxu0 0
  %3956 = vmatpush1.bf16.msra.mxu0 %v3268
  %3957 = vmatprep.subr.bf16.mxu0 0
  %3958 = vmatpush1.bf16.msra.mxu0 %v3267
  %3959 = vmatprep.subr.bf16.mxu0 0
  %3960 = vmatpush1.bf16.msra.mxu0 %v3266
  %3961 = vmatprep.subr.bf16.mxu0 0
  %3962 = vmatpush1.bf16.msra.mxu0 %v3265
  %3963 = vmatprep.subr.bf16.mxu0 0
  %3964 = vmatpush1.bf16.msra.mxu0 %v3264
  %3965 = vmatprep.subr.bf16.mxu0 0
  %3966 = vmatpush1.bf16.msra.mxu0 %v3263
  %3967 = vmatprep.subr.bf16.mxu0 0
  %3968 = vmatpush2.bf16.msra.mxu0 0
  %3969 = vmatprep.subr.bf16.mxu0 0
  %3970 = vmatpush2.bf16.msra.mxu0 0
  %3971 = vmatprep.subr.bf16.mxu0 0
  %3972 = vmatpush2.bf16.msra.mxu0 0
  %3973 = vmatprep.subr.bf16.mxu0 0
  %3974 = vmatpush2.bf16.msra.mxu0 0
  %3975 = vmatprep.subr.bf16.mxu0 0
  %3976 = vmatpush2.bf16.msra.mxu0 0
  %3977 = vmatprep.subr.bf16.mxu0 0
  %3978 = vmatpush2.bf16.msra.mxu0 0
  %3979 = vmatprep.subr.bf16.mxu0 0
  %3980 = vmatpush2.bf16.msra.mxu0 0
  %3981 = vmatprep.subr.bf16.mxu0 0
  %3982 = vmatpush2.bf16.msra.mxu0 0
  %3983 = vmatprep.mubr.bf16.mxu0 0
  %3984 = vmatmul.mubr.bf16.gmra.mxu0 %v1863
  %v3985 = vpop.f32.mrf.mxu0
  %v3986 = vadd.f32 %v3946, %v3985
  %v3987 = vpop.f32.mrf.mxu0
  %v3988 = vpop.f32.mrf.mxu0
  %v3989 = vpop.f32.mrf.mxu0
  %3990 = vdwg.mxu0
  %v3991 = vmax.f32 %v3986, 0.0
  %v3992 = vpack.c.bf16 %v3991, %v3991
  %v3993 = vld [vmem:[%s6] sm:$0xf]
  %v3994 = vld [vmem:[%s6 + $0x4] sm:$0xf]
  %v3995 = vld [vmem:[%s6 + $0x8] sm:$0xf]
  %v3996 = vld [vmem:[%s6 + $0xc] sm:$0xf]
  %v3997 = vld [vmem:[%s6 + $0x10] sm:$0xf]
  %v3998 = vld [vmem:[%s6 + $0x14] sm:$0xf]
  %v3999 = vld [vmem:[%s6 + $0x18] sm:$0xf]
  %v4000 = vld [vmem:[%s6 + $0x1c] sm:$0xf]
  %v4001 = vld [vmem:[%s6 + $0x20] sm:$0xf]
  %v4002 = vld [vmem:[%s6 + $0x24] sm:$0xf]
  %v4003 = vld [vmem:[%s6 + $0x28] sm:$0xf]
  %v4004 = vld [vmem:[%s6 + $0x2c] sm:$0xf]
  %v4005 = vld [vmem:[%s6 + $0x30] sm:$0xf]
  %v4006 = vld [vmem:[%s6 + $0x34] sm:$0xf]
  %v4007 = vld [vmem:[%s6 + $0x38] sm:$0xf]
  %v4008 = vld [vmem:[%s6 + $0x3c] sm:$0xf]
  %v4009 = vld [vmem:[%s7] sm:$0x1]
  %v4011 = vlaneseq
  %v4012 = vshrl.u32 %v4011, 7
  %v4013 = vsub.s32 0, %v4012
  %v4014 = vrot.slane %v4009, %v4013
  %v4032 = vunpack.c.l.b16 %v3993
  %v4033 = vunpack.c.l.b16 %v3994
  %v4034 = vunpack.c.l.b16 %v3995
  %v4035 = vunpack.c.l.b16 %v3996
  %v4036 = vunpack.c.l.b16 %v3997
  %v4037 = vunpack.c.l.b16 %v3998
  %v4038 = vunpack.c.l.b16 %v3999
  %v4039 = vunpack.c.l.b16 %v4000
  %v4040 = vunpack.c.l.b16 %v4001
  %v4041 = vunpack.c.l.b16 %v4002
  %v4042 = vunpack.c.l.b16 %v4003
  %v4043 = vunpack.c.l.b16 %v4004
  %v4044 = vunpack.c.l.b16 %v4005
  %v4045 = vunpack.c.l.b16 %v4006
  %v4046 = vunpack.c.l.b16 %v4007
  %v4047 = vunpack.c.l.b16 %v4008
  %v4048 = vpack.c.b16 %v4033, %v4032
  %v4049 = vpack.c.b16 %v4035, %v4034
  %v4050 = vpack.c.b16 %v4037, %v4036
  %v4051 = vpack.c.b16 %v4039, %v4038
  %v4052 = vpack.c.b16 %v4041, %v4040
  %v4053 = vpack.c.b16 %v4043, %v4042
  %v4054 = vpack.c.b16 %v4045, %v4044
  %v4055 = vpack.c.b16 %v4047, %v4046
  %4064 = vmatprep.subr.bf16.mxu0 0
  %4065 = vmatpush1.bf16.msra.mxu0 %v4055
  %4066 = vmatprep.subr.bf16.mxu0 0
  %4067 = vmatpush1.bf16.msra.mxu0 %v4054
  %4068 = vmatprep.subr.bf16.mxu0 0
  %4069 = vmatpush1.bf16.msra.mxu0 %v4053
  %4070 = vmatprep.subr.bf16.mxu0 0
  %4071 = vmatpush1.bf16.msra.mxu0 %v4052
  %4072 = vmatprep.subr.bf16.mxu0 0
  %4073 = vmatpush1.bf16.msra.mxu0 %v4051
  %4074 = vmatprep.subr.bf16.mxu0 0
  %4075 = vmatpush1.bf16.msra.mxu0 %v4050
  %4076 = vmatprep.subr.bf16.mxu0 0
  %4077 = vmatpush1.bf16.msra.mxu0 %v4049
  %4078 = vmatprep.subr.bf16.mxu0 0
  %4079 = vmatpush1.bf16.msra.mxu0 %v4048
  %4080 = vmatprep.subr.bf16.mxu0 0
  %4081 = vmatpush2.bf16.msra.mxu0 0
  %4082 = vmatprep.subr.bf16.mxu0 0
  %4083 = vmatpush2.bf16.msra.mxu0 0
  %4084 = vmatprep.subr.bf16.mxu0 0
  %4085 = vmatpush2.bf16.msra.mxu0 0
  %4086 = vmatprep.subr.bf16.mxu0 0
  %4087 = vmatpush2.bf16.msra.mxu0 0
  %4088 = vmatprep.subr.bf16.mxu0 0
  %4089 = vmatpush2.bf16.msra.mxu0 0
  %4090 = vmatprep.subr.bf16.mxu0 0
  %4091 = vmatpush2.bf16.msra.mxu0 0
  %4092 = vmatprep.subr.bf16.mxu0 0
  %4093 = vmatpush2.bf16.msra.mxu0 0
  %4094 = vmatprep.subr.bf16.mxu0 0
  %4095 = vmatpush2.bf16.msra.mxu0 0
  %4096 = vmatprep.mubr.bf16.mxu0 0
  %4097 = vmatmul.mubr.bf16.gmra.mxu0 %v3992
  %v4098 = vpop.f32.mrf.mxu0
  %v4099 = vadd.f32 %v4014, %v4098
  %v4100 = vpop.f32.mrf.mxu0
  %v4101 = vpop.f32.mrf.mxu0
  %v4102 = vpop.f32.mrf.mxu0
  %4103 = vdwg.mxu0
  %v4104 = vmax.f32 %v4099, 0.0
  %4105 = vst [vmem:[%s10] sm:$0xff] %v4104
  %v4106 = vpack.c.bf16 %v4104, %v4104
  %v4107 = vld [vmem:[%s8] sm:$0xf]
  %v4108 = vld [vmem:[%s8 + $0x4] sm:$0xf]
  %v4109 = vld [vmem:[%s8 + $0x8] sm:$0xf]
  %v4110 = vld [vmem:[%s8 + $0xc] sm:$0xf]
  %v4111 = vld [vmem:[%s8 + $0x10] sm:$0xf]
  %v4112 = vld [vmem:[%s8 + $0x14] sm:$0xf]
  %v4113 = vld [vmem:[%s8 + $0x18] sm:$0xf]
  %v4114 = vld [vmem:[%s8 + $0x1c] sm:$0xf]
  %v4115 = vld [vmem:[%s8 + $0x20] sm:$0xf]
  %v4116 = vld [vmem:[%s8 + $0x24] sm:$0xf]
  %v4117 = vld [vmem:[%s8 + $0x28] sm:$0xf]
  %v4118 = vld [vmem:[%s8 + $0x2c] sm:$0xf]
  %v4119 = vld [vmem:[%s8 + $0x30] sm:$0xf]
  %v4120 = vld [vmem:[%s8 + $0x34] sm:$0xf]
  %v4121 = vld [vmem:[%s8 + $0x38] sm:$0xf]
  %v4122 = vld [vmem:[%s8 + $0x3c] sm:$0xf]
  %v4123 = vld [vmem:[%s9] sm:$0x1]
  %v4125 = vlaneseq
  %v4126 = vshrl.u32 %v4125, 7
  %v4127 = vsub.s32 0, %v4126
  %v4128 = vrot.slane %v4123, %v4127
  %v4146 = vunpack.c.l.b16 %v4107
  %v4147 = vunpack.c.l.b16 %v4108
  %v4148 = vunpack.c.l.b16 %v4109
  %v4149 = vunpack.c.l.b16 %v4110
  %v4150 = vunpack.c.l.b16 %v4111
  %v4151 = vunpack.c.l.b16 %v4112
  %v4152 = vunpack.c.l.b16 %v4113
  %v4153 = vunpack.c.l.b16 %v4114
  %v4154 = vunpack.c.l.b16 %v4115
  %v4155 = vunpack.c.l.b16 %v4116
  %v4156 = vunpack.c.l.b16 %v4117
  %v4157 = vunpack.c.l.b16 %v4118
  %v4158 = vunpack.c.l.b16 %v4119
  %v4159 = vunpack.c.l.b16 %v4120
  %v4160 = vunpack.c.l.b16 %v4121
  %v4161 = vunpack.c.l.b16 %v4122
  %v4162 = vpack.c.b16 %v4147, %v4146
  %v4163 = vpack.c.b16 %v4149, %v4148
  %v4164 = vpack.c.b16 %v4151, %v4150
  %v4165 = vpack.c.b16 %v4153, %v4152
  %v4166 = vpack.c.b16 %v4155, %v4154
  %v4167 = vpack.c.b16 %v4157, %v4156
  %v4168 = vpack.c.b16 %v4159, %v4158
  %v4169 = vpack.c.b16 %v4161, %v4160
  %4178 = vmatprep.subr.bf16.mxu0 0
  %4179 = vmatpush1.bf16.msra.mxu0 %v4169
  %4180 = vmatprep.subr.bf16.mxu0 0
  %4181 = vmatpush1.bf16.msra.mxu0 %v4168
  %4182 = vmatprep.subr.bf16.mxu0 0
  %4183 = vmatpush1.bf16.msra.mxu0 %v4167
  %4184 = vmatprep.subr.bf16.mxu0 0
  %4185 = vmatpush1.bf16.msra.mxu0 %v4166
  %4186 = vmatprep.subr.bf16.mxu0 0
  %4187 = vmatpush1.bf16.msra.mxu0 %v4165
  %4188 = vmatprep.subr.bf16.mxu0 0
  %4189 = vmatpush1.bf16.msra.mxu0 %v4164
  %4190 = vmatprep.subr.bf16.mxu0 0
  %4191 = vmatpush1.bf16.msra.mxu0 %v4163
  %4192 = vmatprep.subr.bf16.mxu0 0
  %4193 = vmatpush1.bf16.msra.mxu0 %v4162
  %4194 = vmatprep.subr.bf16.mxu0 0
  %4195 = vmatpush2.bf16.msra.mxu0 0
  %4196 = vmatprep.subr.bf16.mxu0 0
  %4197 = vmatpush2.bf16.msra.mxu0 0
  %4198 = vmatprep.subr.bf16.mxu0 0
  %4199 = vmatpush2.bf16.msra.mxu0 0
  %4200 = vmatprep.subr.bf16.mxu0 0
  %4201 = vmatpush2.bf16.msra.mxu0 0
  %4202 = vmatprep.subr.bf16.mxu0 0
  %4203 = vmatpush2.bf16.msra.mxu0 0
  %4204 = vmatprep.subr.bf16.mxu0 0
  %4205 = vmatpush2.bf16.msra.mxu0 0
  %4206 = vmatprep.subr.bf16.mxu0 0
  %4207 = vmatpush2.bf16.msra.mxu0 0
  %4208 = vmatprep.subr.bf16.mxu0 0
  %4209 = vmatpush2.bf16.msra.mxu0 0
  %4210 = vmatprep.mubr.bf16.mxu0 0
  %4211 = vmatmul.mubr.bf16.gmra.mxu0 %v4106
  %v4212 = vpop.f32.mrf.mxu0
  %v4213 = vadd.f32 %v4128, %v4212
  %v4214 = vpop.f32.mrf.mxu0
  %v4215 = vpop.f32.mrf.mxu0
  %v4216 = vpop.f32.mrf.mxu0
  %4217 = vdwg.mxu0
  %4218 = vst [vmem:[%s11] sm:$0xff] %v4213
  // Predicated region
  $region42: #{lenet5_forward.3} parent=0 // pred_check
    _
  $region43: #{lenet5_forward.3} parent=0 // pred_check_branch
    %4220 = sbr.rel (0) target = $region45
  $region44: #{lenet5_forward.3} parent=0 // pred_region
    _
  $region45: #{lenet5_forward.3} parent=0 // pred_fallthru
    _
  // Predicated region
  $region46: #{lenet5_forward.3} parent=0 // pred_check
    _
  $region47: #{lenet5_forward.3} parent=0 // pred_check_branch
    %4222 = sbr.rel (0) target = $region49
  $region48: #{lenet5_forward.3} parent=0 // pred_region
    _
  $region49: #{lenet5_forward.3} parent=0 // pred_fallthru
    _
  // Predicated region
  $region50: #{lenet5_forward.3} parent=0 // pred_check
    _
  $region51: #{lenet5_forward.3} parent=0 // pred_check_branch
    %4224 = sbr.rel (0) target = $region53
  $region52: #{lenet5_forward.3} parent=0 // pred_region
    _
  $region53: #{lenet5_forward.3} parent=0 // pred_fallthru
    _
  // Predicated region
  $region54: #{lenet5_forward.3} parent=0 // pred_check
    _
  $region55: #{lenet5_forward.3} parent=0 // pred_check_branch
    %4226 = sbr.rel (0) target = $region57
  $region56: #{lenet5_forward.3} parent=0 // pred_region
    _
  $region57: #{lenet5_forward.3} parent=0 // pred_fallthru
    _

</llo_original>
